<compile_context>
chip_gen: v7x
topology: tpu7x:2x2x1
jax: 0.10.0
libtpu: 0.0.40
codegen_flags: <defaults>
</compile_context>

<pallas_src>
import math
from functools import partial
from typing import Tuple, Union

import jax
import jax.numpy as jnp
from jax.experimental import pallas as pl
from jax.experimental.pallas import tpu as pltpu

IntOrPair = Union[int, Tuple[int, int]]


def force_pair(v: IntOrPair) -> Tuple[int, int]:
    if isinstance(v, tuple):
        if len(v) != 2:
            raise ValueError(v)
        return (int(v[0]), int(v[1]))
    elif isinstance(v, int):
        return (v, v)
    raise ValueError(v)


def _round_up(x: int, m: int) -> int:
    return ((x + m - 1) // m) * m


@partial(jax.jit, static_argnames=("stride", "padding"))
def conv2d_forward(x: jax.Array, weight: jax.Array, *,
                   stride: Tuple[int, int], padding: Tuple[int, int]) -> jax.Array:
    """NCHW conv2d, bias=False.  x: (B, IC, H, W) f32, weight: (OC, IC, KH, KW) f32."""
    B, IC, H, W = x.shape
    OC, IC_w, KH, KW = weight.shape
    assert IC == IC_w
    sY, sX = stride
    pY, pX = padding

    HP = H + 2 * pY
    WP = W + 2 * pX
    OH = 1 + (HP - KH) // sY
    OW = 1 + (WP - KW) // sX

    # ---- padded / aligned sizes (all zero padding, sliced away afterwards) ----
    ICp = _round_up(IC, 8)            # contracted dim -> sublane multiple
    OCp = _round_up(OC, 128)          # output channels -> lane multiple (dense stores)
    TN = 256 if OCp % 256 == 0 else 128
    HP2 = _round_up(HP, sY)           # phase decomposition needs stride multiples
    WP2 = _round_up(WP, 8 * sX)       # and WPq (= WP2//sX) a multiple of 8
    HPq, WPq = HP2 // sY, WP2 // sX
    P = sY * sX                       # number of stride phases
    KK = KH * KW

    # ---- wrapper-side layout glue (single pass over the small input) ----
    x_nhwc = jnp.transpose(x, (0, 2, 3, 1)).astype(jnp.float32)        # (B,H,W,IC)
    x_nhwc = jnp.pad(
        x_nhwc,
        ((0, 0), (pY, HP2 - H - pY), (pX, WP2 - W - pX), (0, ICp - IC)),
    )                                                                   # (B,HP2,WP2,ICp)
    if sY == 1 and sX == 1:
        x_ph = x_nhwc.reshape(B, 1, HP2 * WP2, ICp)
    else:
        # x_ph[b, pr*sX+pc, r*WPq+c, :] = x_padded[b, r*sY+pr, c*sX+pc, :]
        x_ph = x_nhwc.reshape(B, HPq, sY, WPq, sX, ICp)
        x_ph = jnp.transpose(x_ph, (0, 2, 4, 1, 3, 5)).reshape(B, P, HPq * WPq, ICp)

    # weight (OC, IC, KH, KW) -> (KH*KW, ICp, OCp); padded rows/cols are zero.
    w2 = jnp.transpose(weight, (2, 3, 1, 0)).reshape(KK, IC, OC).astype(jnp.float32)
    w2 = jnp.pad(w2, ((0, 0), (0, ICp - IC), (0, OCp - OC)))

    # ---- Pallas kernel: direct conv = sum over kernel taps of MXU matmuls ----
    def kernel(x_ref, w_ref, o_ref, acc_ref):
        # x_ref : (1, P, HPq*WPq, ICp)   padded image, all stride phases
        # w_ref : (KK, ICp, TN)          one OC tile of the weights
        # o_ref : (1, OH, OW, TN)        lane-dense NHWC output tile
        # acc_ref: VMEM (OH, OW, TN) f32 accumulator
        acc_ref[...] = jnp.zeros_like(acc_ref)
        for i in range(KH):
            for j in range(KW):
                ph = (i % sY) * sX + (j % sX)
                r0, c0 = i // sY, j // sX
                # (HPq*WPq, ICp) @ (ICp, TN) on the MXU, f32 accumulate.
                y = jnp.dot(x_ref[0, ph], w_ref[i * KW + j],
                            preferred_element_type=jnp.float32)
                y3 = y.reshape(HPq, WPq, TN)
                acc_ref[...] += y3[r0:r0 + OH, c0:c0 + OW, :]
        o_ref[0] = acc_ref[...].astype(o_ref.dtype)

    # Advisory cost for XLA's scheduler around the custom call.
    flops = 2 * B * KK * HPq * WPq * ICp * OCp
    bytes_accessed = 4 * (x_ph.size + w2.size + B * OH * OW * OCp)
    cost = pl.CostEstimate(flops=flops, transcendentals=0,
                           bytes_accessed=bytes_accessed)

    # Rough double-buffered VMEM footprint (lane/sublane padded); only raise the
    # scoped limit when the blocks actually need it (v7x has 64 MiB total).
    x_blk = HPq * WPq * _round_up(ICp, 128) * 4
    w_blk = KK * _round_up(ICp, 8) * TN * 4
    o_blk = OH * _round_up(OW, 8) * TN * 4
    vmem_need = 2 * (x_blk + w_blk + o_blk) + o_blk
    vmem_limit = None
    if vmem_need > 12 * 1024 * 1024:
        vmem_limit = min(int(1.5 * vmem_need), 96 * 1024 * 1024)

    out_nhwc = pl.pallas_call(
        kernel,
        out_shape=jax.ShapeDtypeStruct((B, OH, OW, OCp), jnp.float32),
        grid=(B, OCp // TN),                      # OC tile innermost -> image stays resident
        in_specs=[
            pl.BlockSpec((1, P, HPq * WPq, ICp), lambda b, n: (b, 0, 0, 0)),
            pl.BlockSpec((KK, ICp, TN), lambda b, n: (0, 0, n)),
        ],
        out_specs=pl.BlockSpec((1, OH, OW, TN), lambda b, n: (b, 0, 0, n)),
        scratch_shapes=[pltpu.VMEM((OH, OW, TN), jnp.float32)],
        compiler_params=pltpu.CompilerParams(
            dimension_semantics=("parallel", "parallel"),
            vmem_limit_bytes=vmem_limit,
        ),
        cost_estimate=cost,
    )(x_ph, w2)

    # Slice off OC padding, return NCHW to match the PyTorch module's contract.
    out = out_nhwc[:, :, :, :OC]
    return jnp.transpose(out, (0, 3, 1, 2))


class Conv2d:
    """Same forward semantics as the PyTorch Conv2d reference module (bias=False)."""

    def __init__(self, in_channels: int, out_channels: int,
                 kernel_size: IntOrPair, stride: IntOrPair = 1,
                 padding: IntOrPair = 0, *, key: jax.Array):
        self.in_channels = in_channels
        self.out_channels = out_channels
        self.kh, self.kw = force_pair(kernel_size)
        self.strideY, self.strideX = force_pair(stride)
        self.paddingY, self.paddingX = force_pair(padding)
        sf = 1.0 / math.sqrt(in_channels * self.kh * self.kw)
        # Mirrors sf * (2*rand - 1): uniform in [-sf, sf).
        self.weight = jax.random.uniform(
            key, (out_channels, in_channels, self.kh, self.kw),
            dtype=jnp.float32, minval=-sf, maxval=sf,
        )

    def __call__(self, x: jax.Array) -> jax.Array:
        return conv2d_forward(
            x, self.weight,
            stride=(self.strideY, self.strideX),
            padding=(self.paddingY, self.paddingX),
        )


# ---------------- pure-JAX reference for a sanity check ----------------

def _conv2d_ref(x, weight, stride, padding):
    sy, sx = stride
    py, px = padding
    return jax.lax.conv_general_dilated(
        x, weight,
        window_strides=(sy, sx),
        padding=((py, py), (px, px)),
        dimension_numbers=("NCHW", "OIHW", "NCHW"),
    )


if __name__ == "__main__":
    key = jax.random.PRNGKey(0)
    kx, kw = jax.random.split(key)

    B, IC, H, W = 2, 4, 16, 16
    OC, KSIZE, STRIDE, PAD = 8, 3, 1, 1

    x = jax.random.normal(kx, (B, IC, H, W), dtype=jnp.float32)
    conv = Conv2d(IC, OC, KSIZE, stride=STRIDE, padding=PAD, key=kw)

    out = jax.block_until_ready(conv(x))

    ref = _conv2d_ref(x, conv.weight, (conv.strideY, conv.strideX),
                      (conv.paddingY, conv.paddingX))
    assert out.shape == (B, OC, H, W), out.shape
    assert jnp.allclose(out, ref, atol=1e-4, rtol=1e-4), float(
        jnp.max(jnp.abs(out - ref)))

    print("KERNEL_OK")
</pallas_src>

<mosaic_0001>
module attributes {stable_mosaic.version = 11 : i64} {
  func.func @kernel(%arg0: i32, %arg1: i32, %arg2: memref<1x1x432x8xf32, #tpu.memory_space<vmem>>, %arg3: memref<9x8x128xf32, #tpu.memory_space<vmem>>, %arg4: memref<1x16x16x128xf32, #tpu.memory_space<vmem>>, %arg5: memref<16x16x128xf32, #tpu.memory_space<vmem>>) attributes {dimension_semantics = [#tpu.dimension_semantics<parallel>, #tpu.dimension_semantics<parallel>], iteration_bounds = array<i64: 2, 1>, scalar_prefetch = 0 : i64, scratch_operands = 1 : i64, tpu.core_type = #tpu.core_type<tc>, window_params = [{transform_indices = @transform_0, window_bounds = array<i64: 1, 1, 432, 8>}, {transform_indices = @transform_1, window_bounds = array<i64: 9, 8, 128>}, {transform_indices = @transform_2, window_bounds = array<i64: 1, 16, 16, 128>}]} {
    %cst = arith.constant 0.000000e+00 : f32
    %0 = vector.broadcast %cst : f32 to vector<16x16x128xf32>
    %c0 = arith.constant 0 : index
    %c0_0 = arith.constant 0 : index
    %c0_1 = arith.constant 0 : index
    %1 = vector.load %arg5[%c0, %c0_0, %c0_1] : memref<16x16x128xf32, #tpu.memory_space<vmem>>, vector<16x16x128xf32>
    tpu.vector_store %arg5[%c0, %c0_0, %c0_1], %0 {strides = array<i32>} : memref<16x16x128xf32, #tpu.memory_space<vmem>>, vector<16x16x128xf32>,
    %c0_2 = arith.constant 0 : index
    %c0_3 = arith.constant 0 : index
    %c0_4 = arith.constant 0 : index
    %c0_5 = arith.constant 0 : index
    %2 = vector.load %arg2[%c0_2, %c0_3, %c0_4, %c0_5] : memref<1x1x432x8xf32, #tpu.memory_space<vmem>>, vector<1x1x432x8xf32>
    %3 = vector.shape_cast %2 : vector<1x1x432x8xf32> to vector<432x8xf32>
    %c0_6 = arith.constant 0 : index
    %c0_7 = arith.constant 0 : index
    %c0_8 = arith.constant 0 : index
    %4 = vector.load %arg3[%c0_6, %c0_7, %c0_8] : memref<9x8x128xf32, #tpu.memory_space<vmem>>, vector<1x8x128xf32>
    %5 = vector.shape_cast %4 : vector<1x8x128xf32> to vector<8x128xf32>
    %cst_9 = arith.constant dense<0.000000e+00> : vector<432x128xf32>
    %6 = tpu.matmul %3, %5, %cst_9 {dimension_numbers = #tpu.dot_dimension_numbers<[1], [0], [0], [1], [0, 0, 1, 1], [], []>} : vector<432x8xf32>, vector<8x128xf32>, vector<432x128xf32> -> vector<432x128xf32>
    %7 = vector.shape_cast %6 : vector<432x128xf32> to vector<18x24x128xf32>
    %c0_10 = arith.constant 0 : index
    %c0_11 = arith.constant 0 : index
    %c0_12 = arith.constant 0 : index
    %8 = vector.load %arg5[%c0_10, %c0_11, %c0_12] : memref<16x16x128xf32, #tpu.memory_space<vmem>>, vector<16x16x128xf32>
    %9 = vector.extract_strided_slice %7 {offsets = [0, 0, 0], sizes = [16, 16, 128], strides = [1, 1, 1]} : vector<18x24x128xf32> to vector<16x16x128xf32>
    %10 = arith.addf %8, %9 : vector<16x16x128xf32>
    %c0_13 = arith.constant 0 : index
    %c0_14 = arith.constant 0 : index
    %c0_15 = arith.constant 0 : index
    %11 = vector.load %arg5[%c0_13, %c0_14, %c0_15] : memref<16x16x128xf32, #tpu.memory_space<vmem>>, vector<16x16x128xf32>
    tpu.vector_store %arg5[%c0_13, %c0_14, %c0_15], %10 {strides = array<i32>} : memref<16x16x128xf32, #tpu.memory_space<vmem>>, vector<16x16x128xf32>,
    %c0_16 = arith.constant 0 : index
    %c0_17 = arith.constant 0 : index
    %c0_18 = arith.constant 0 : index
    %c0_19 = arith.constant 0 : index
    %12 = vector.load %arg2[%c0_16, %c0_17, %c0_18, %c0_19] : memref<1x1x432x8xf32, #tpu.memory_space<vmem>>, vector<1x1x432x8xf32>
    %13 = vector.shape_cast %12 : vector<1x1x432x8xf32> to vector<432x8xf32>
    %c1 = arith.constant 1 : index
    %c0_20 = arith.constant 0 : index
    %c0_21 = arith.constant 0 : index
    %14 = vector.load %arg3[%c1, %c0_20, %c0_21] : memref<9x8x128xf32, #tpu.memory_space<vmem>>, vector<1x8x128xf32>
    %15 = vector.shape_cast %14 : vector<1x8x128xf32> to vector<8x128xf32>
    %cst_22 = arith.constant dense<0.000000e+00> : vector<432x128xf32>
    %16 = tpu.matmul %13, %15, %cst_22 {dimension_numbers = #tpu.dot_dimension_numbers<[1], [0], [0], [1], [0, 0, 1, 1], [], []>} : vector<432x8xf32>, vector<8x128xf32>, vector<432x128xf32> -> vector<432x128xf32>
    %17 = vector.shape_cast %16 : vector<432x128xf32> to vector<18x24x128xf32>
    %c0_23 = arith.constant 0 : index
    %c0_24 = arith.constant 0 : index
    %c0_25 = arith.constant 0 : index
    %18 = vector.load %arg5[%c0_23, %c0_24, %c0_25] : memref<16x16x128xf32, #tpu.memory_space<vmem>>, vector<16x16x128xf32>
    %19 = vector.extract_strided_slice %17 {offsets = [0, 1, 0], sizes = [16, 16, 128], strides = [1, 1, 1]} : vector<18x24x128xf32> to vector<16x16x128xf32>
    %20 = arith.addf %18, %19 : vector<16x16x128xf32>
    %c0_26 = arith.constant 0 : index
    %c0_27 = arith.constant 0 : index
    %c0_28 = arith.constant 0 : index
    %21 = vector.load %arg5[%c0_26, %c0_27, %c0_28] : memref<16x16x128xf32, #tpu.memory_space<vmem>>, vector<16x16x128xf32>
    tpu.vector_store %arg5[%c0_26, %c0_27, %c0_28], %20 {strides = array<i32>} : memref<16x16x128xf32, #tpu.memory_space<vmem>>, vector<16x16x128xf32>,
    %c0_29 = arith.constant 0 : index
    %c0_30 = arith.constant 0 : index
    %c0_31 = arith.constant 0 : index
    %c0_32 = arith.constant 0 : index
    %22 = vector.load %arg2[%c0_29, %c0_30, %c0_31, %c0_32] : memref<1x1x432x8xf32, #tpu.memory_space<vmem>>, vector<1x1x432x8xf32>
    %23 = vector.shape_cast %22 : vector<1x1x432x8xf32> to vector<432x8xf32>
    %c2 = arith.constant 2 : index
    %c0_33 = arith.constant 0 : index
    %c0_34 = arith.constant 0 : index
    %24 = vector.load %arg3[%c2, %c0_33, %c0_34] : memref<9x8x128xf32, #tpu.memory_space<vmem>>, vector<1x8x128xf32>
    %25 = vector.shape_cast %24 : vector<1x8x128xf32> to vector<8x128xf32>
    %cst_35 = arith.constant dense<0.000000e+00> : vector<432x128xf32>
    %26 = tpu.matmul %23, %25, %cst_35 {dimension_numbers = #tpu.dot_dimension_numbers<[1], [0], [0], [1], [0, 0, 1, 1], [], []>} : vector<432x8xf32>, vector<8x128xf32>, vector<432x128xf32> -> vector<432x128xf32>
    %27 = vector.shape_cast %26 : vector<432x128xf32> to vector<18x24x128xf32>
    %c0_36 = arith.constant 0 : index
    %c0_37 = arith.constant 0 : index
    %c0_38 = arith.constant 0 : index
    %28 = vector.load %arg5[%c0_36, %c0_37, %c0_38] : memref<16x16x128xf32, #tpu.memory_space<vmem>>, vector<16x16x128xf32>
    %29 = vector.extract_strided_slice %27 {offsets = [0, 2, 0], sizes = [16, 16, 128], strides = [1, 1, 1]} : vector<18x24x128xf32> to vector<16x16x128xf32>
    %30 = arith.addf %28, %29 : vector<16x16x128xf32>
    %c0_39 = arith.constant 0 : index
    %c0_40 = arith.constant 0 : index
    %c0_41 = arith.constant 0 : index
    %31 = vector.load %arg5[%c0_39, %c0_40, %c0_41] : memref<16x16x128xf32, #tpu.memory_space<vmem>>, vector<16x16x128xf32>
    tpu.vector_store %arg5[%c0_39, %c0_40, %c0_41], %30 {strides = array<i32>} : memref<16x16x128xf32, #tpu.memory_space<vmem>>, vector<16x16x128xf32>,
    %c0_42 = arith.constant 0 : index
    %c0_43 = arith.constant 0 : index
    %c0_44 = arith.constant 0 : index
    %c0_45 = arith.constant 0 : index
    %32 = vector.load %arg2[%c0_42, %c0_43, %c0_44, %c0_45] : memref<1x1x432x8xf32, #tpu.memory_space<vmem>>, vector<1x1x432x8xf32>
    %33 = vector.shape_cast %32 : vector<1x1x432x8xf32> to vector<432x8xf32>
    %c3 = arith.constant 3 : index
    %c0_46 = arith.constant 0 : index
    %c0_47 = arith.constant 0 : index
    %34 = vector.load %arg3[%c3, %c0_46, %c0_47] : memref<9x8x128xf32, #tpu.memory_space<vmem>>, vector<1x8x128xf32>
    %35 = vector.shape_cast %34 : vector<1x8x128xf32> to vector<8x128xf32>
    %cst_48 = arith.constant dense<0.000000e+00> : vector<432x128xf32>
    %36 = tpu.matmul %33, %35, %cst_48 {dimension_numbers = #tpu.dot_dimension_numbers<[1], [0], [0], [1], [0, 0, 1, 1], [], []>} : vector<432x8xf32>, vector<8x128xf32>, vector<432x128xf32> -> vector<432x128xf32>
    %37 = vector.shape_cast %36 : vector<432x128xf32> to vector<18x24x128xf32>
    %c0_49 = arith.constant 0 : index
    %c0_50 = arith.constant 0 : index
    %c0_51 = arith.constant 0 : index
    %38 = vector.load %arg5[%c0_49, %c0_50, %c0_51] : memref<16x16x128xf32, #tpu.memory_space<vmem>>, vector<16x16x128xf32>
    %39 = vector.extract_strided_slice %37 {offsets = [1, 0, 0], sizes = [16, 16, 128], strides = [1, 1, 1]} : vector<18x24x128xf32> to vector<16x16x128xf32>
    %40 = arith.addf %38, %39 : vector<16x16x128xf32>
    %c0_52 = arith.constant 0 : index
    %c0_53 = arith.constant 0 : index
    %c0_54 = arith.constant 0 : index
    %41 = vector.load %arg5[%c0_52, %c0_53, %c0_54] : memref<16x16x128xf32, #tpu.memory_space<vmem>>, vector<16x16x128xf32>
    tpu.vector_store %arg5[%c0_52, %c0_53, %c0_54], %40 {strides = array<i32>} : memref<16x16x128xf32, #tpu.memory_space<vmem>>, vector<16x16x128xf32>,
    %c0_55 = arith.constant 0 : index
    %c0_56 = arith.constant 0 : index
    %c0_57 = arith.constant 0 : index
    %c0_58 = arith.constant 0 : index
    %42 = vector.load %arg2[%c0_55, %c0_56, %c0_57, %c0_58] : memref<1x1x432x8xf32, #tpu.memory_space<vmem>>, vector<1x1x432x8xf32>
    %43 = vector.shape_cast %42 : vector<1x1x432x8xf32> to vector<432x8xf32>
    %c4 = arith.constant 4 : index
    %c0_59 = arith.constant 0 : index
    %c0_60 = arith.constant 0 : index
    %44 = vector.load %arg3[%c4, %c0_59, %c0_60] : memref<9x8x128xf32, #tpu.memory_space<vmem>>, vector<1x8x128xf32>
    %45 = vector.shape_cast %44 : vector<1x8x128xf32> to vector<8x128xf32>
    %cst_61 = arith.constant dense<0.000000e+00> : vector<432x128xf32>
    %46 = tpu.matmul %43, %45, %cst_61 {dimension_numbers = #tpu.dot_dimension_numbers<[1], [0], [0], [1], [0, 0, 1, 1], [], []>} : vector<432x8xf32>, vector<8x128xf32>, vector<432x128xf32> -> vector<432x128xf32>
    %47 = vector.shape_cast %46 : vector<432x128xf32> to vector<18x24x128xf32>
    %c0_62 = arith.constant 0 : index
    %c0_63 = arith.constant 0 : index
    %c0_64 = arith.constant 0 : index
    %48 = vector.load %arg5[%c0_62, %c0_63, %c0_64] : memref<16x16x128xf32, #tpu.memory_space<vmem>>, vector<16x16x128xf32>
    %49 = vector.extract_strided_slice %47 {offsets = [1, 1, 0], sizes = [16, 16, 128], strides = [1, 1, 1]} : vector<18x24x128xf32> to vector<16x16x128xf32>
    %50 = arith.addf %48, %49 : vector<16x16x128xf32>
    %c0_65 = arith.constant 0 : index
    %c0_66 = arith.constant 0 : index
    %c0_67 = arith.constant 0 : index
    %51 = vector.load %arg5[%c0_65, %c0_66, %c0_67] : memref<16x16x128xf32, #tpu.memory_space<vmem>>, vector<16x16x128xf32>
    tpu.vector_store %arg5[%c0_65, %c0_66, %c0_67], %50 {strides = array<i32>} : memref<16x16x128xf32, #tpu.memory_space<vmem>>, vector<16x16x128xf32>,
    %c0_68 = arith.constant 0 : index
    %c0_69 = arith.constant 0 : index
    %c0_70 = arith.constant 0 : index
    %c0_71 = arith.constant 0 : index
    %52 = vector.load %arg2[%c0_68, %c0_69, %c0_70, %c0_71] : memref<1x1x432x8xf32, #tpu.memory_space<vmem>>, vector<1x1x432x8xf32>
    %53 = vector.shape_cast %52 : vector<1x1x432x8xf32> to vector<432x8xf32>
    %c5 = arith.constant 5 : index
    %c0_72 = arith.constant 0 : index
    %c0_73 = arith.constant 0 : index
    %54 = vector.load %arg3[%c5, %c0_72, %c0_73] : memref<9x8x128xf32, #tpu.memory_space<vmem>>, vector<1x8x128xf32>
    %55 = vector.shape_cast %54 : vector<1x8x128xf32> to vector<8x128xf32>
    %cst_74 = arith.constant dense<0.000000e+00> : vector<432x128xf32>
    %56 = tpu.matmul %53, %55, %cst_74 {dimension_numbers = #tpu.dot_dimension_numbers<[1], [0], [0], [1], [0, 0, 1, 1], [], []>} : vector<432x8xf32>, vector<8x128xf32>, vector<432x128xf32> -> vector<432x128xf32>
    %57 = vector.shape_cast %56 : vector<432x128xf32> to vector<18x24x128xf32>
    %c0_75 = arith.constant 0 : index
    %c0_76 = arith.constant 0 : index
    %c0_77 = arith.constant 0 : index
    %58 = vector.load %arg5[%c0_75, %c0_76, %c0_77] : memref<16x16x128xf32, #tpu.memory_space<vmem>>, vector<16x16x128xf32>
    %59 = vector.extract_strided_slice %57 {offsets = [1, 2, 0], sizes = [16, 16, 128], strides = [1, 1, 1]} : vector<18x24x128xf32> to vector<16x16x128xf32>
    %60 = arith.addf %58, %59 : vector<16x16x128xf32>
    %c0_78 = arith.constant 0 : index
    %c0_79 = arith.constant 0 : index
    %c0_80 = arith.constant 0 : index
    %61 = vector.load %arg5[%c0_78, %c0_79, %c0_80] : memref<16x16x128xf32, #tpu.memory_space<vmem>>, vector<16x16x128xf32>
    tpu.vector_store %arg5[%c0_78, %c0_79, %c0_80], %60 {strides = array<i32>} : memref<16x16x128xf32, #tpu.memory_space<vmem>>, vector<16x16x128xf32>,
    %c0_81 = arith.constant 0 : index
    %c0_82 = arith.constant 0 : index
    %c0_83 = arith.constant 0 : index
    %c0_84 = arith.constant 0 : index
    %62 = vector.load %arg2[%c0_81, %c0_82, %c0_83, %c0_84] : memref<1x1x432x8xf32, #tpu.memory_space<vmem>>, vector<1x1x432x8xf32>
    %63 = vector.shape_cast %62 : vector<1x1x432x8xf32> to vector<432x8xf32>
    %c6 = arith.constant 6 : index
    %c0_85 = arith.constant 0 : index
    %c0_86 = arith.constant 0 : index
    %64 = vector.load %arg3[%c6, %c0_85, %c0_86] : memref<9x8x128xf32, #tpu.memory_space<vmem>>, vector<1x8x128xf32>
    %65 = vector.shape_cast %64 : vector<1x8x128xf32> to vector<8x128xf32>
    %cst_87 = arith.constant dense<0.000000e+00> : vector<432x128xf32>
    %66 = tpu.matmul %63, %65, %cst_87 {dimension_numbers = #tpu.dot_dimension_numbers<[1], [0], [0], [1], [0, 0, 1, 1], [], []>} : vector<432x8xf32>, vector<8x128xf32>, vector<432x128xf32> -> vector<432x128xf32>
    %67 = vector.shape_cast %66 : vector<432x128xf32> to vector<18x24x128xf32>
    %c0_88 = arith.constant 0 : index
    %c0_89 = arith.constant 0 : index
    %c0_90 = arith.constant 0 : index
    %68 = vector.load %arg5[%c0_88, %c0_89, %c0_90] : memref<16x16x128xf32, #tpu.memory_space<vmem>>, vector<16x16x128xf32>
    %69 = vector.extract_strided_slice %67 {offsets = [2, 0, 0], sizes = [16, 16, 128], strides = [1, 1, 1]} : vector<18x24x128xf32> to vector<16x16x128xf32>
    %70 = arith.addf %68, %69 : vector<16x16x128xf32>
    %c0_91 = arith.constant 0 : index
    %c0_92 = arith.constant 0 : index
    %c0_93 = arith.constant 0 : index
    %71 = vector.load %arg5[%c0_91, %c0_92, %c0_93] : memref<16x16x128xf32, #tpu.memory_space<vmem>>, vector<16x16x128xf32>
    tpu.vector_store %arg5[%c0_91, %c0_92, %c0_93], %70 {strides = array<i32>} : memref<16x16x128xf32, #tpu.memory_space<vmem>>, vector<16x16x128xf32>,
    %c0_94 = arith.constant 0 : index
    %c0_95 = arith.constant 0 : index
    %c0_96 = arith.constant 0 : index
    %c0_97 = arith.constant 0 : index
    %72 = vector.load %arg2[%c0_94, %c0_95, %c0_96, %c0_97] : memref<1x1x432x8xf32, #tpu.memory_space<vmem>>, vector<1x1x432x8xf32>
    %73 = vector.shape_cast %72 : vector<1x1x432x8xf32> to vector<432x8xf32>
    %c7 = arith.constant 7 : index
    %c0_98 = arith.constant 0 : index
    %c0_99 = arith.constant 0 : index
    %74 = vector.load %arg3[%c7, %c0_98, %c0_99] : memref<9x8x128xf32, #tpu.memory_space<vmem>>, vector<1x8x128xf32>
    %75 = vector.shape_cast %74 : vector<1x8x128xf32> to vector<8x128xf32>
    %cst_100 = arith.constant dense<0.000000e+00> : vector<432x128xf32>
    %76 = tpu.matmul %73, %75, %cst_100 {dimension_numbers = #tpu.dot_dimension_numbers<[1], [0], [0], [1], [0, 0, 1, 1], [], []>} : vector<432x8xf32>, vector<8x128xf32>, vector<432x128xf32> -> vector<432x128xf32>
    %77 = vector.shape_cast %76 : vector<432x128xf32> to vector<18x24x128xf32>
    %c0_101 = arith.constant 0 : index
    %c0_102 = arith.constant 0 : index
    %c0_103 = arith.constant 0 : index
    %78 = vector.load %arg5[%c0_101, %c0_102, %c0_103] : memref<16x16x128xf32, #tpu.memory_space<vmem>>, vector<16x16x128xf32>
    %79 = vector.extract_strided_slice %77 {offsets = [2, 1, 0], sizes = [16, 16, 128], strides = [1, 1, 1]} : vector<18x24x128xf32> to vector<16x16x128xf32>
    %80 = arith.addf %78, %79 : vector<16x16x128xf32>
    %c0_104 = arith.constant 0 : index
    %c0_105 = arith.constant 0 : index
    %c0_106 = arith.constant 0 : index
    %81 = vector.load %arg5[%c0_104, %c0_105, %c0_106] : memref<16x16x128xf32, #tpu.memory_space<vmem>>, vector<16x16x128xf32>
    tpu.vector_store %arg5[%c0_104, %c0_105, %c0_106], %80 {strides = array<i32>} : memref<16x16x128xf32, #tpu.memory_space<vmem>>, vector<16x16x128xf32>,
    %c0_107 = arith.constant 0 : index
    %c0_108 = arith.constant 0 : index
    %c0_109 = arith.constant 0 : index
    %c0_110 = arith.constant 0 : index
    %82 = vector.load %arg2[%c0_107, %c0_108, %c0_109, %c0_110] : memref<1x1x432x8xf32, #tpu.memory_space<vmem>>, vector<1x1x432x8xf32>
    %83 = vector.shape_cast %82 : vector<1x1x432x8xf32> to vector<432x8xf32>
    %c8 = arith.constant 8 : index
    %c0_111 = arith.constant 0 : index
    %c0_112 = arith.constant 0 : index
    %84 = vector.load %arg3[%c8, %c0_111, %c0_112] : memref<9x8x128xf32, #tpu.memory_space<vmem>>, vector<1x8x128xf32>
    %85 = vector.shape_cast %84 : vector<1x8x128xf32> to vector<8x128xf32>
    %cst_113 = arith.constant dense<0.000000e+00> : vector<432x128xf32>
    %86 = tpu.matmul %83, %85, %cst_113 {dimension_numbers = #tpu.dot_dimension_numbers<[1], [0], [0], [1], [0, 0, 1, 1], [], []>} : vector<432x8xf32>, vector<8x128xf32>, vector<432x128xf32> -> vector<432x128xf32>
    %87 = vector.shape_cast %86 : vector<432x128xf32> to vector<18x24x128xf32>
    %c0_114 = arith.constant 0 : index
    %c0_115 = arith.constant 0 : index
    %c0_116 = arith.constant 0 : index
    %88 = vector.load %arg5[%c0_114, %c0_115, %c0_116] : memref<16x16x128xf32, #tpu.memory_space<vmem>>, vector<16x16x128xf32>
    %89 = vector.extract_strided_slice %87 {offsets = [2, 2, 0], sizes = [16, 16, 128], strides = [1, 1, 1]} : vector<18x24x128xf32> to vector<16x16x128xf32>
    %90 = arith.addf %88, %89 : vector<16x16x128xf32>
    %c0_117 = arith.constant 0 : index
    %c0_118 = arith.constant 0 : index
    %c0_119 = arith.constant 0 : index
    %91 = vector.load %arg5[%c0_117, %c0_118, %c0_119] : memref<16x16x128xf32, #tpu.memory_space<vmem>>, vector<16x16x128xf32>
    tpu.vector_store %arg5[%c0_117, %c0_118, %c0_119], %90 {strides = array<i32>} : memref<16x16x128xf32, #tpu.memory_space<vmem>>, vector<16x16x128xf32>,
    %c0_120 = arith.constant 0 : index
    %c0_121 = arith.constant 0 : index
    %c0_122 = arith.constant 0 : index
    %92 = vector.load %arg5[%c0_120, %c0_121, %c0_122] : memref<16x16x128xf32, #tpu.memory_space<vmem>>, vector<16x16x128xf32>
    %c0_123 = arith.constant 0 : index
    %c0_124 = arith.constant 0 : index
    %c0_125 = arith.constant 0 : index
    %c0_126 = arith.constant 0 : index
    %93 = vector.load %arg4[%c0_123, %c0_124, %c0_125, %c0_126] : memref<1x16x16x128xf32, #tpu.memory_space<vmem>>, vector<1x16x16x128xf32>
    %94 = vector.shape_cast %93 : vector<1x16x16x128xf32> to vector<16x16x128xf32>
    %95 = vector.shape_cast %92 : vector<16x16x128xf32> to vector<1x16x16x128xf32>
    tpu.vector_store %arg4[%c0_123, %c0_124, %c0_125, %c0_126], %95 {strides = array<i32>} : memref<1x16x16x128xf32, #tpu.memory_space<vmem>>, vector<1x16x16x128xf32>,
    return
  }
  func.func @transform_0(%arg0: i32, %arg1: i32) -> (i32, i32, i32, i32) {
    %c0_i32 = arith.constant 0 : i32
    %c0_i32_0 = arith.constant 0 : i32
    %c0_i32_1 = arith.constant 0 : i32
    %c0_i32_2 = arith.constant 0 : i32
    return %arg0, %c0_i32, %c0_i32_0, %c0_i32_1 : i32, i32, i32, i32
  }
  func.func @transform_1(%arg0: i32, %arg1: i32) -> (i32, i32, i32) {
    %c0_i32 = arith.constant 0 : i32
    %c0_i32_0 = arith.constant 0 : i32
    %c0_i32_1 = arith.constant 0 : i32
    return %c0_i32, %c0_i32_0, %arg1 : i32, i32, i32
  }
  func.func @transform_2(%arg0: i32, %arg1: i32) -> (i32, i32, i32, i32) {
    %c0_i32 = arith.constant 0 : i32
    %c0_i32_0 = arith.constant 0 : i32
    %c0_i32_1 = arith.constant 0 : i32
    return %arg0, %c0_i32, %c0_i32_0, %arg1 : i32, i32, i32, i32
  }
}

</mosaic_0001>

<llo_original>
// kernel: conv2d_forward.1
$region0: #{conv2d_forward.1}
  #allocation0 [shape = 'u32[]', space=smem, size = 0x4, offset = 0x4, fixed_abs, tag = 'smem constant byte address 0x4 - core index']
  #allocation1 [shape = 'u32[144,128]{1,0:T(1,128)}', space=vmem, size = 0x12000, scoped, tag = 'internal scratch']
  #allocation2 [shape = 'f32[16,16,128]{2,1,0:T(8,128)}', space=vmem, size = 0x20000, scoped, tag = 'scratch operand']
  %s0 = inlined_call_operand.vmem [shape: f32[2,1,432,8], index: 0, kind: input, shape index: {}]
  %s1 = inlined_call_operand.vmem [shape: f32[9,8,128], index: 1, kind: input, shape index: {}]
  %s2 = inlined_call_operand.vmem [shape: f32[2,16,16,128], index: 2, kind: output, shape index: {}]
  %s3 = sld [smem:[#allocation0]]
  $region41: #{conv2d_forward.1} parent=0
    _
  %s5 = ssub.s32 1, %s3
  %s6 = scalar_select 0, %s5, %s3
  loop: start=0, step=1, limit=4
  $region2: #{conv2d_forward.1} parent=0 // loop_pre_header
    _
  $region3: #{conv2d_forward.1} parent=0 // loop_header
    %s8 = sphi 0, %s12
    %p9 = scmp.ge.s32.totalorder %s8, 4
    %s15 = sphi 0, %s27
    %s16 = sphi 0, %s23
    %s17 = sphi 0, %s15
    %s18 = sphi 0, %s16
    %s19 = sphi 0, %s17
    %s20 = sphi 0, %s18
    %s30 = sphi 0, %s32
    %s33 = sphi 0, %s30
    %s34 = sphi 0, %s33
    %s50 = sphi 0, %s34
    %s56 = sphi 0, %s58
    %s59 = sphi 0, %s56
    %s60 = sphi 0, %s59
    %s76 = sphi 0, %s60
    %s84 = sphi 0, %s86
    %s87 = sphi 0, %s84
    %s88 = sphi 0, %s87
    %s104 = sphi 0, %s88
  $region4: #{conv2d_forward.1} parent=0 // loop_header_branch
    %11 = sbr.rel (%p9) target = $region8
  $region5: #{conv2d_forward.1} parent=0 // loop_body
    %s13 = ssub.s32 %s8, 1
    %s14 = ssub.s32 %s8, 2
    %s21 = sadd.s32 1, %s16
    %p22 = scmp.ge.s32.totalorder %s21, 1
    %s23 = scalar_select %p22, 0, %s21
    %s24 = sadd.s32 1, %s15
    %s25 = scalar_select %p22, %s24, %s15
    %p26 = scmp.ge.s32.totalorder %s25, 2
    %s27 = scalar_select %p26, 0, %s25
    %s28 = ssub.s32 %s15, %s27
    %p29 = scmp.eq.s32.totalorder %s28, 0
    %s31 = sadd.s32 %s30, 1
    %s32 = scalar_select %p29, %s30, %s31
    %p35 = pneg %p29
    %p36 = scmp.eq.s32.totalorder %s8, 1
    %p37 = por %p35, %p36
    %p38 = scmp.ne.s32.totalorder %s30, %s33
    %p39 = scmp.eq.s32.totalorder %s8, 0
    %p40 = por %p38, %p39
    %p41 = scmp.ne.s32.totalorder %s30, %s33
    %p42 = scmp.eq.s32.totalorder %s13, 1
    %p43 = por %p41, %p42
    %p44 = scmp.ne.s32.totalorder %s33, %s34
    %p45 = scmp.eq.s32.totalorder %s13, 0
    %p46 = por %p44, %p45
    %p47 = scmp.ne.s32.totalorder %s33, %s34
    %p48 = scmp.eq.s32.totalorder %s14, 1
    %p49 = por %p47, %p48
    %p51 = scmp.ne.s32.totalorder %s34, %s50
    %p52 = scmp.eq.s32.totalorder %s14, 0
    %p53 = por %p51, %p52
    %s54 = ssub.s32 %s16, %s23
    %p55 = scmp.eq.s32.totalorder %s54, 0
    %s57 = sadd.s32 %s56, 1
    %s58 = scalar_select %p55, %s56, %s57
    %p61 = pneg %p55
    %p62 = scmp.eq.s32.totalorder %s8, 1
    %p63 = por %p61, %p62
    %p64 = scmp.ne.s32.totalorder %s56, %s59
    %p65 = scmp.eq.s32.totalorder %s8, 0
    %p66 = por %p64, %p65
    %p67 = scmp.ne.s32.totalorder %s56, %s59
    %p68 = scmp.eq.s32.totalorder %s13, 1
    %p69 = por %p67, %p68
    %p70 = scmp.ne.s32.totalorder %s59, %s60
    %p71 = scmp.eq.s32.totalorder %s13, 0
    %p72 = por %p70, %p71
    %p73 = scmp.ne.s32.totalorder %s59, %s60
    %p74 = scmp.eq.s32.totalorder %s14, 1
    %p75 = por %p73, %p74
    %p77 = scmp.ne.s32.totalorder %s60, %s76
    %p78 = scmp.eq.s32.totalorder %s14, 0
    %p79 = por %p77, %p78
    %s80 = ssub.s32 %s15, %s27
    %s81 = ssub.s32 %s16, %s23
    %s82 = sor.u32 %s80, %s81
    %p83 = scmp.eq.s32.totalorder %s82, 0
    %s85 = sadd.s32 %s84, 1
    %s86 = scalar_select %p83, %s84, %s85
    %p89 = pneg %p83
    %p90 = scmp.eq.s32.totalorder %s8, 1
    %p91 = por %p89, %p90
    %p92 = scmp.ne.s32.totalorder %s84, %s87
    %p93 = scmp.eq.s32.totalorder %s8, 0
    %p94 = por %p92, %p93
    %p95 = scmp.ne.s32.totalorder %s84, %s87
    %p96 = scmp.eq.s32.totalorder %s13, 1
    %p97 = por %p95, %p96
    %p98 = scmp.ne.s32.totalorder %s87, %s88
    %p99 = scmp.eq.s32.totalorder %s13, 0
    %p100 = por %p98, %p99
    %p101 = scmp.ne.s32.totalorder %s87, %s88
    %p102 = scmp.eq.s32.totalorder %s14, 1
    %p103 = por %p101, %p102
    %p105 = scmp.ne.s32.totalorder %s88, %s104
    %p106 = scmp.eq.s32.totalorder %s14, 0
    %p107 = por %p105, %p106
    %p108 = scmp.le.s32.totalorder 1, %s8
    %p109 = scmp.lt.s32.totalorder %s8, 3
    %p110 = pnand %p108, %p109
    %p111 = pneg %p110
    // Predicated region
    $region9: #{conv2d_forward.1} parent=5 // pred_check
      _
    $region10: #{conv2d_forward.1} parent=5 // pred_check_branch
      %113 = sbr.rel (%p110) target = $region12
    $region11: #{conv2d_forward.1} parent=5 // pred_region
      %s114 = ssub.s32 %s8, 1
      // Predicated region
      $region13: #{conv2d_forward.1} parent=11 // pred_check
        %p115 = pneg %p72
      $region14: #{conv2d_forward.1} parent=11 // pred_check_branch
        %117 = sbr.rel (%p115) target = $region16
      $region15: #{conv2d_forward.1} parent=11 // pred_region
        %p118 = scmp.lt.s32.totalorder %s18, 0
        %s119 = scalar_select %p118, %s18, 0
        %s120 = smul.addr %s119, 8
        %s121 = scalar_lea.vmem %s1, %s120
      $region16: #{conv2d_forward.1} parent=11 // pred_fallthru
        _
    $region12: #{conv2d_forward.1} parent=5 // pred_fallthru
      _
    %p122 = scmp.lt.s32.totalorder %s8, 2
    // Predicated region
    $region17: #{conv2d_forward.1} parent=5 // pred_check
      %p123 = pneg %p122
    $region18: #{conv2d_forward.1} parent=5 // pred_check_branch
      %125 = sbr.rel (%p123) target = $region20
    $region19: #{conv2d_forward.1} parent=5 // pred_region
      // Predicated region
      $region21: #{conv2d_forward.1} parent=19 // pred_check
        %p126 = pneg %p40
      $region22: #{conv2d_forward.1} parent=19 // pred_check_branch
        %128 = sbr.rel (%p126) target = $region24
      $region23: #{conv2d_forward.1} parent=19 // pred_region
        %p129 = scmp.lt.s32.totalorder %s15, 1
        %s130 = scalar_select %p129, %s15, 1
        %s131 = smul.addr %s130, 54
        %s132 = smul.addr %s131, 8
        %s133 = scalar_lea.vmem %s0, %s132
      $region24: #{conv2d_forward.1} parent=19 // pred_fallthru
        _
    $region20: #{conv2d_forward.1} parent=5 // pred_fallthru
      _
    %p134 = scmp.le.s32.totalorder 1, %s8
    %p135 = scmp.lt.s32.totalorder %s8, 3
    %p136 = pnand %p134, %p135
    %p137 = pneg %p136
    // Predicated region
    $region25: #{conv2d_forward.1} parent=5 // pred_check
      _
    $region26: #{conv2d_forward.1} parent=5 // pred_check_branch
      %139 = sbr.rel (%p136) target = $region28
    $region27: #{conv2d_forward.1} parent=5 // pred_region
      %s140 = ssub.s32 %s8, 1
      %p141 = scmp.lt.s32.totalorder %s17, 1
      %s142 = scalar_select %p141, %s17, 1
      %s143 = smul.addr %s142, 54
      %s144 = smul.addr %s143, 8
      %s145 = scalar_lea.vmem %s0, %s144
      %p146 = pneg %p46
      %p147 = pneg %p43
      %p148 = scmp.lt.s32.totalorder %s18, 0
      %s149 = scalar_select %p148, %s18, 0
      %s150 = smul.addr %s149, 8
      %s151 = scalar_lea.vmem %s1, %s150
      %p152 = pneg %p72
      %p153 = pneg %p69
      %p154 = pneg %p100
      %p155 = pneg %p97
      %p156 = scmp.lt.s32.totalorder %s17, 1
      %s157 = scalar_select %p156, %s17, 1
      %p158 = scmp.lt.s32.totalorder %s18, 0
      %s159 = scalar_select %p158, %s18, 0
      %s160 = smul.addr %s157, 32
      %s161 = sadd.s32 %s159, %s160
      %s162 = smul.addr %s161, 8
      %s163 = scalar_lea.vmem %s2, %s162
      %p164 = scmp.lt.s32.totalorder %s17, 1
      %s165 = scalar_select %p164, %s17, 1
      %s166 = smul.addr %s165, 54
      %s167 = smul.addr %s166, 8
      %s168 = scalar_lea.vmem %s0, %s167
      %p169 = scmp.lt.s32.totalorder %s18, 0
      %s170 = scalar_select %p169, %s18, 0
      %s171 = smul.addr %s170, 8
      %s172 = scalar_lea.vmem %s1, %s171
      %p173 = scmp.lt.s32.totalorder %s17, 1
      %s174 = scalar_select %p173, %s17, 1
      %p175 = scmp.lt.s32.totalorder %s18, 0
      %s176 = scalar_select %p175, %s18, 0
      %s177 = smul.addr %s174, 32
      %s178 = sadd.s32 %s176, %s177
      %s179 = smul.addr %s178, 8
      %s180 = scalar_lea.vmem %s2, %s179
      %181 = vst [vmem:[#allocation2] sm:$0xff] 0.0
      %182 = vst [vmem:[#allocation2 + $0x8] sm:$0xff] 0.0
      %183 = vst [vmem:[#allocation2 + $0x10] sm:$0xff] 0.0
      %184 = vst [vmem:[#allocation2 + $0x18] sm:$0xff] 0.0
      %185 = vst [vmem:[#allocation2 + $0x20] sm:$0xff] 0.0
      %186 = vst [vmem:[#allocation2 + $0x28] sm:$0xff] 0.0
      %187 = vst [vmem:[#allocation2 + $0x30] sm:$0xff] 0.0
      %188 = vst [vmem:[#allocation2 + $0x38] sm:$0xff] 0.0
      %189 = vst [vmem:[#allocation2 + $0x40] sm:$0xff] 0.0
      %190 = vst [vmem:[#allocation2 + $0x48] sm:$0xff] 0.0
      %191 = vst [vmem:[#allocation2 + $0x50] sm:$0xff] 0.0
      %192 = vst [vmem:[#allocation2 + $0x58] sm:$0xff] 0.0
      %193 = vst [vmem:[#allocation2 + $0x60] sm:$0xff] 0.0
      %194 = vst [vmem:[#allocation2 + $0x68] sm:$0xff] 0.0
      %195 = vst [vmem:[#allocation2 + $0x70] sm:$0xff] 0.0
      %196 = vst [vmem:[#allocation2 + $0x78] sm:$0xff] 0.0
      %197 = vst [vmem:[#allocation2 + $0x80] sm:$0xff] 0.0
      %198 = vst [vmem:[#allocation2 + $0x88] sm:$0xff] 0.0
      %199 = vst [vmem:[#allocation2 + $0x90] sm:$0xff] 0.0
      %200 = vst [vmem:[#allocation2 + $0x98] sm:$0xff] 0.0
      %201 = vst [vmem:[#allocation2 + $0xa0] sm:$0xff] 0.0
      %202 = vst [vmem:[#allocation2 + $0xa8] sm:$0xff] 0.0
      %203 = vst [vmem:[#allocation2 + $0xb0] sm:$0xff] 0.0
      %204 = vst [vmem:[#allocation2 + $0xb8] sm:$0xff] 0.0
      %205 = vst [vmem:[#allocation2 + $0xc0] sm:$0xff] 0.0
      %206 = vst [vmem:[#allocation2 + $0xc8] sm:$0xff] 0.0
      %207 = vst [vmem:[#allocation2 + $0xd0] sm:$0xff] 0.0
      %208 = vst [vmem:[#allocation2 + $0xd8] sm:$0xff] 0.0
      %209 = vst [vmem:[#allocation2 + $0xe0] sm:$0xff] 0.0
      %210 = vst [vmem:[#allocation2 + $0xe8] sm:$0xff] 0.0
      %211 = vst [vmem:[#allocation2 + $0xf0] sm:$0xff] 0.0
      %212 = vst [vmem:[#allocation2 + $0xf8] sm:$0xff] 0.0
      %v213 = vld [vmem:[%s168] sm:$0xff]
      %v214 = vld [vmem:[%s168 + $0x8] sm:$0xff]
      %v215 = vld [vmem:[%s168 + $0x10] sm:$0xff]
      %v216 = vld [vmem:[%s168 + $0x18] sm:$0xff]
      %v217 = vld [vmem:[%s168 + $0x20] sm:$0xff]
      %v218 = vld [vmem:[%s168 + $0x28] sm:$0xff]
      %v219 = vld [vmem:[%s168 + $0x30] sm:$0xff]
      %v220 = vld [vmem:[%s168 + $0x38] sm:$0xff]
      %v221 = vld [vmem:[%s168 + $0x40] sm:$0xff]
      %v222 = vld [vmem:[%s168 + $0x48] sm:$0xff]
      %v223 = vld [vmem:[%s168 + $0x50] sm:$0xff]
      %v224 = vld [vmem:[%s168 + $0x58] sm:$0xff]
      %v225 = vld [vmem:[%s168 + $0x60] sm:$0xff]
      %v226 = vld [vmem:[%s168 + $0x68] sm:$0xff]
      %v227 = vld [vmem:[%s168 + $0x70] sm:$0xff]
      %v228 = vld [vmem:[%s168 + $0x78] sm:$0xff]
      %v229 = vld [vmem:[%s168 + $0x80] sm:$0xff]
      %v230 = vld [vmem:[%s168 + $0x88] sm:$0xff]
      %v231 = vld [vmem:[%s168 + $0x90] sm:$0xff]
      %v232 = vld [vmem:[%s168 + $0x98] sm:$0xff]
      %v233 = vld [vmem:[%s168 + $0xa0] sm:$0xff]
      %v234 = vld [vmem:[%s168 + $0xa8] sm:$0xff]
      %v235 = vld [vmem:[%s168 + $0xb0] sm:$0xff]
      %v236 = vld [vmem:[%s168 + $0xb8] sm:$0xff]
      %v237 = vld [vmem:[%s168 + $0xc0] sm:$0xff]
      %v238 = vld [vmem:[%s168 + $0xc8] sm:$0xff]
      %v239 = vld [vmem:[%s168 + $0xd0] sm:$0xff]
      %v240 = vld [vmem:[%s168 + $0xd8] sm:$0xff]
      %v241 = vld [vmem:[%s168 + $0xe0] sm:$0xff]
      %v242 = vld [vmem:[%s168 + $0xe8] sm:$0xff]
      %v243 = vld [vmem:[%s168 + $0xf0] sm:$0xff]
      %v244 = vld [vmem:[%s168 + $0xf8] sm:$0xff]
      %v245 = vld [vmem:[%s168 + $0x100] sm:$0xff]
      %v246 = vld [vmem:[%s168 + $0x108] sm:$0xff]
      %v247 = vld [vmem:[%s168 + $0x110] sm:$0xff]
      %v248 = vld [vmem:[%s168 + $0x118] sm:$0xff]
      %v249 = vld [vmem:[%s168 + $0x120] sm:$0xff]
      %v250 = vld [vmem:[%s168 + $0x128] sm:$0xff]
      %v251 = vld [vmem:[%s168 + $0x130] sm:$0xff]
      %v252 = vld [vmem:[%s168 + $0x138] sm:$0xff]
      %v253 = vld [vmem:[%s168 + $0x140] sm:$0xff]
      %v254 = vld [vmem:[%s168 + $0x148] sm:$0xff]
      %v255 = vld [vmem:[%s168 + $0x150] sm:$0xff]
      %v256 = vld [vmem:[%s168 + $0x158] sm:$0xff]
      %v257 = vld [vmem:[%s168 + $0x160] sm:$0xff]
      %v258 = vld [vmem:[%s168 + $0x168] sm:$0xff]
      %v259 = vld [vmem:[%s168 + $0x170] sm:$0xff]
      %v260 = vld [vmem:[%s168 + $0x178] sm:$0xff]
      %v261 = vld [vmem:[%s168 + $0x180] sm:$0xff]
      %v262 = vld [vmem:[%s168 + $0x188] sm:$0xff]
      %v263 = vld [vmem:[%s168 + $0x190] sm:$0xff]
      %v264 = vld [vmem:[%s168 + $0x198] sm:$0xff]
      %v265 = vld [vmem:[%s168 + $0x1a0] sm:$0xff]
      %v266 = vld [vmem:[%s168 + $0x1a8] sm:$0xff]
      %v267 = vld [vmem:[%s172] sm:$0xff]
      %vm268 = vcmask 64512
      %v270 = vsel %vm268, %v213, 0
      %v273 = vsel %vm268, %v214, 0
      %v276 = vsel %vm268, %v215, 0
      %v279 = vsel %vm268, %v216, 0
      %v282 = vsel %vm268, %v217, 0
      %v285 = vsel %vm268, %v218, 0
      %v288 = vsel %vm268, %v219, 0
      %v291 = vsel %vm268, %v220, 0
      %v294 = vsel %vm268, %v221, 0
      %v297 = vsel %vm268, %v222, 0
      %v300 = vsel %vm268, %v223, 0
      %v303 = vsel %vm268, %v224, 0
      %v306 = vsel %vm268, %v225, 0
      %v309 = vsel %vm268, %v226, 0
      %v312 = vsel %vm268, %v227, 0
      %v315 = vsel %vm268, %v228, 0
      %v318 = vsel %vm268, %v229, 0
      %v321 = vsel %vm268, %v230, 0
      %v324 = vsel %vm268, %v231, 0
      %v327 = vsel %vm268, %v232, 0
      %v330 = vsel %vm268, %v233, 0
      %v333 = vsel %vm268, %v234, 0
      %v336 = vsel %vm268, %v235, 0
      %v339 = vsel %vm268, %v236, 0
      %v342 = vsel %vm268, %v237, 0
      %v345 = vsel %vm268, %v238, 0
      %v348 = vsel %vm268, %v239, 0
      %v351 = vsel %vm268, %v240, 0
      %v354 = vsel %vm268, %v241, 0
      %v357 = vsel %vm268, %v242, 0
      %v360 = vsel %vm268, %v243, 0
      %v363 = vsel %vm268, %v244, 0
      %v366 = vsel %vm268, %v245, 0
      %v369 = vsel %vm268, %v246, 0
      %v372 = vsel %vm268, %v247, 0
      %v375 = vsel %vm268, %v248, 0
      %v378 = vsel %vm268, %v249, 0
      %v381 = vsel %vm268, %v250, 0
      %v384 = vsel %vm268, %v251, 0
      %v387 = vsel %vm268, %v252, 0
      %v390 = vsel %vm268, %v253, 0
      %v393 = vsel %vm268, %v254, 0
      %v396 = vsel %vm268, %v255, 0
      %v399 = vsel %vm268, %v256, 0
      %v402 = vsel %vm268, %v257, 0
      %v405 = vsel %vm268, %v258, 0
      %v408 = vsel %vm268, %v259, 0
      %v411 = vsel %vm268, %v260, 0
      %v414 = vsel %vm268, %v261, 0
      %v417 = vsel %vm268, %v262, 0
      %v420 = vsel %vm268, %v263, 0
      %v423 = vsel %vm268, %v264, 0
      %v426 = vsel %vm268, %v265, 0
      %v429 = vsel %vm268, %v266, 0
      %431 = vmatprep.subr.mxu0 0.0
      %432 = vmatpush1.msra.mxu0 %v267
      %433 = vmatprep.subr.mxu0 0.0
      %434 = vmatpush1.msra.mxu0 0.0
      %435 = vmatprep.subr.mxu0 0.0
      %436 = vmatpush1.msra.mxu0 0.0
      %437 = vmatprep.subr.mxu0 0.0
      %438 = vmatpush1.msra.mxu0 0.0
      %439 = vmatprep.subr.mxu0 0.0
      %440 = vmatpush1.msra.mxu0 0.0
      %441 = vmatprep.subr.mxu0 0.0
      %442 = vmatpush1.msra.mxu0 0.0
      %443 = vmatprep.subr.mxu0 0.0
      %444 = vmatpush1.msra.mxu0 0.0
      %445 = vmatprep.subr.mxu0 0.0
      %446 = vmatpush1.msra.mxu0 0.0
      %447 = vmatprep.subr.mxu0 0.0
      %448 = vmatpush1.msra.mxu0 0.0
      %449 = vmatprep.subr.mxu0 0.0
      %450 = vmatpush1.msra.mxu0 0.0
      %451 = vmatprep.subr.mxu0 0.0
      %452 = vmatpush1.msra.mxu0 0.0
      %453 = vmatprep.subr.mxu0 0.0
      %454 = vmatpush1.msra.mxu0 0.0
      %455 = vmatprep.subr.mxu0 0.0
      %456 = vmatpush1.msra.mxu0 0.0
      %457 = vmatprep.subr.mxu0 0.0
      %458 = vmatpush1.msra.mxu0 0.0
      %459 = vmatprep.subr.mxu0 0.0
      %460 = vmatpush1.msra.mxu0 0.0
      %461 = vmatprep.subr.mxu0 0.0
      %462 = vmatpush1.msra.mxu0 0.0
      %463 = vmatprep.subr.mxu0 0.0
      %464 = vmatpush1.msra.mxu0 0.0
      %465 = vmatprep.subr.mxu0 0.0
      %466 = vmatpush1.msra.mxu0 0.0
      %467 = vmatprep.subr.mxu0 0.0
      %468 = vmatpush1.msra.mxu0 0.0
      %469 = vmatprep.subr.mxu0 0.0
      %470 = vmatpush1.msra.mxu0 0.0
      %471 = vmatprep.subr.mxu0 0.0
      %472 = vmatpush1.msra.mxu0 0.0
      %473 = vmatprep.subr.mxu0 0.0
      %474 = vmatpush1.msra.mxu0 0.0
      %475 = vmatprep.subr.mxu0 0.0
      %476 = vmatpush1.msra.mxu0 0.0
      %477 = vmatprep.subr.mxu0 0.0
      %478 = vmatpush1.msra.mxu0 0.0
      %479 = vmatprep.subr.mxu0 0.0
      %480 = vmatpush1.msra.mxu0 0.0
      %481 = vmatprep.subr.mxu0 0.0
      %482 = vmatpush1.msra.mxu0 0.0
      %483 = vmatprep.subr.mxu0 0.0
      %484 = vmatpush1.msra.mxu0 0.0
      %485 = vmatprep.subr.mxu0 0.0
      %486 = vmatpush1.msra.mxu0 0.0
      %487 = vmatprep.subr.mxu0 0.0
      %488 = vmatpush1.msra.mxu0 0.0
      %489 = vmatprep.subr.mxu0 0.0
      %490 = vmatpush1.msra.mxu0 0.0
      %491 = vmatprep.subr.mxu0 0.0
      %492 = vmatpush1.msra.mxu0 0.0
      %493 = vmatprep.subr.mxu0 0.0
      %494 = vmatpush1.msra.mxu0 0.0
      %495 = vmatprep.mubr.f32.mxu0 0.0
      %496 = vmatmul.mubr.f32.gmra.mrb[0].mxu0 %v270
      %v497 = vpop.f32.mrb[0].mxu0
      %v498 = vadd.f32 0.0, %v497
      %v499 = vpop.f32.mrb[0].mxu0
      %500 = vmatprep.mubr.f32.mxu0 0.0
      %501 = vmatmul.mubr.f32.gmra.mrb[0].mxu0 %v273
      %v502 = vpop.f32.mrb[0].mxu0
      %v503 = vadd.f32 0.0, %v502
      %v504 = vpop.f32.mrb[0].mxu0
      %505 = vmatprep.mubr.f32.mxu0 0.0
      %506 = vmatmul.mubr.f32.gmra.mrb[0].mxu0 %v276
      %v507 = vpop.f32.mrb[0].mxu0
      %v508 = vpop.f32.mrb[0].mxu0
      %509 = vmatprep.mubr.f32.mxu0 0.0
      %510 = vmatmul.mubr.f32.gmra.mrb[0].mxu0 %v279
      %v511 = vpop.f32.mrb[0].mxu0
      %v512 = vadd.f32 0.0, %v511
      %v513 = vpop.f32.mrb[0].mxu0
      %514 = vmatprep.mubr.f32.mxu0 0.0
      %515 = vmatmul.mubr.f32.gmra.mrb[0].mxu0 %v282
      %v516 = vpop.f32.mrb[0].mxu0
      %v517 = vadd.f32 0.0, %v516
      %v518 = vpop.f32.mrb[0].mxu0
      %519 = vmatprep.mubr.f32.mxu0 0.0
      %520 = vmatmul.mubr.f32.gmra.mrb[0].mxu0 %v285
      %v521 = vpop.f32.mrb[0].mxu0
      %v522 = vpop.f32.mrb[0].mxu0
      %523 = vmatprep.mubr.f32.mxu0 0.0
      %524 = vmatmul.mubr.f32.gmra.mrb[0].mxu0 %v288
      %v525 = vpop.f32.mrb[0].mxu0
      %v526 = vadd.f32 0.0, %v525
      %v527 = vpop.f32.mrb[0].mxu0
      %528 = vmatprep.mubr.f32.mxu0 0.0
      %529 = vmatmul.mubr.f32.gmra.mrb[0].mxu0 %v291
      %v530 = vpop.f32.mrb[0].mxu0
      %v531 = vadd.f32 0.0, %v530
      %v532 = vpop.f32.mrb[0].mxu0
      %533 = vmatprep.mubr.f32.mxu0 0.0
      %534 = vmatmul.mubr.f32.gmra.mrb[0].mxu0 %v294
      %v535 = vpop.f32.mrb[0].mxu0
      %v536 = vpop.f32.mrb[0].mxu0
      %537 = vmatprep.mubr.f32.mxu0 0.0
      %538 = vmatmul.mubr.f32.gmra.mrb[0].mxu0 %v297
      %v539 = vpop.f32.mrb[0].mxu0
      %v540 = vadd.f32 0.0, %v539
      %v541 = vpop.f32.mrb[0].mxu0
      %542 = vmatprep.mubr.f32.mxu0 0.0
      %543 = vmatmul.mubr.f32.gmra.mrb[0].mxu0 %v300
      %v544 = vpop.f32.mrb[0].mxu0
      %v545 = vadd.f32 0.0, %v544
      %v546 = vpop.f32.mrb[0].mxu0
      %547 = vmatprep.mubr.f32.mxu0 0.0
      %548 = vmatmul.mubr.f32.gmra.mrb[0].mxu0 %v303
      %v549 = vpop.f32.mrb[0].mxu0
      %v550 = vpop.f32.mrb[0].mxu0
      %551 = vmatprep.mubr.f32.mxu0 0.0
      %552 = vmatmul.mubr.f32.gmra.mrb[0].mxu0 %v306
      %v553 = vpop.f32.mrb[0].mxu0
      %v554 = vadd.f32 0.0, %v553
      %v555 = vpop.f32.mrb[0].mxu0
      %556 = vmatprep.mubr.f32.mxu0 0.0
      %557 = vmatmul.mubr.f32.gmra.mrb[0].mxu0 %v309
      %v558 = vpop.f32.mrb[0].mxu0
      %v559 = vadd.f32 0.0, %v558
      %v560 = vpop.f32.mrb[0].mxu0
      %561 = vmatprep.mubr.f32.mxu0 0.0
      %562 = vmatmul.mubr.f32.gmra.mrb[0].mxu0 %v312
      %v563 = vpop.f32.mrb[0].mxu0
      %v564 = vpop.f32.mrb[0].mxu0
      %565 = vmatprep.mubr.f32.mxu0 0.0
      %566 = vmatmul.mubr.f32.gmra.mrb[0].mxu0 %v315
      %v567 = vpop.f32.mrb[0].mxu0
      %v568 = vadd.f32 0.0, %v567
      %v569 = vpop.f32.mrb[0].mxu0
      %570 = vmatprep.mubr.f32.mxu0 0.0
      %571 = vmatmul.mubr.f32.gmra.mrb[0].mxu0 %v318
      %v572 = vpop.f32.mrb[0].mxu0
      %v573 = vadd.f32 0.0, %v572
      %v574 = vpop.f32.mrb[0].mxu0
      %575 = vmatprep.mubr.f32.mxu0 0.0
      %576 = vmatmul.mubr.f32.gmra.mrb[0].mxu0 %v321
      %v577 = vpop.f32.mrb[0].mxu0
      %v578 = vpop.f32.mrb[0].mxu0
      %579 = vmatprep.mubr.f32.mxu0 0.0
      %580 = vmatmul.mubr.f32.gmra.mrb[0].mxu0 %v324
      %v581 = vpop.f32.mrb[0].mxu0
      %v582 = vadd.f32 0.0, %v581
      %v583 = vpop.f32.mrb[0].mxu0
      %584 = vmatprep.mubr.f32.mxu0 0.0
      %585 = vmatmul.mubr.f32.gmra.mrb[0].mxu0 %v327
      %v586 = vpop.f32.mrb[0].mxu0
      %v587 = vadd.f32 0.0, %v586
      %v588 = vpop.f32.mrb[0].mxu0
      %589 = vmatprep.mubr.f32.mxu0 0.0
      %590 = vmatmul.mubr.f32.gmra.mrb[0].mxu0 %v330
      %v591 = vpop.f32.mrb[0].mxu0
      %v592 = vpop.f32.mrb[0].mxu0
      %593 = vmatprep.mubr.f32.mxu0 0.0
      %594 = vmatmul.mubr.f32.gmra.mrb[0].mxu0 %v333
      %v595 = vpop.f32.mrb[0].mxu0
      %v596 = vadd.f32 0.0, %v595
      %v597 = vpop.f32.mrb[0].mxu0
      %598 = vmatprep.mubr.f32.mxu0 0.0
      %599 = vmatmul.mubr.f32.gmra.mrb[0].mxu0 %v336
      %v600 = vpop.f32.mrb[0].mxu0
      %v601 = vadd.f32 0.0, %v600
      %v602 = vpop.f32.mrb[0].mxu0
      %603 = vmatprep.mubr.f32.mxu0 0.0
      %604 = vmatmul.mubr.f32.gmra.mrb[0].mxu0 %v339
      %v605 = vpop.f32.mrb[0].mxu0
      %v606 = vpop.f32.mrb[0].mxu0
      %607 = vmatprep.mubr.f32.mxu0 0.0
      %608 = vmatmul.mubr.f32.gmra.mrb[0].mxu0 %v342
      %v609 = vpop.f32.mrb[0].mxu0
      %v610 = vadd.f32 0.0, %v609
      %v611 = vpop.f32.mrb[0].mxu0
      %612 = vmatprep.mubr.f32.mxu0 0.0
      %613 = vmatmul.mubr.f32.gmra.mrb[0].mxu0 %v345
      %v614 = vpop.f32.mrb[0].mxu0
      %v615 = vadd.f32 0.0, %v614
      %v616 = vpop.f32.mrb[0].mxu0
      %617 = vmatprep.mubr.f32.mxu0 0.0
      %618 = vmatmul.mubr.f32.gmra.mrb[0].mxu0 %v348
      %v619 = vpop.f32.mrb[0].mxu0
      %v620 = vpop.f32.mrb[0].mxu0
      %621 = vmatprep.mubr.f32.mxu0 0.0
      %622 = vmatmul.mubr.f32.gmra.mrb[0].mxu0 %v351
      %v623 = vpop.f32.mrb[0].mxu0
      %v624 = vadd.f32 0.0, %v623
      %v625 = vpop.f32.mrb[0].mxu0
      %626 = vmatprep.mubr.f32.mxu0 0.0
      %627 = vmatmul.mubr.f32.gmra.mrb[0].mxu0 %v354
      %v628 = vpop.f32.mrb[0].mxu0
      %v629 = vadd.f32 0.0, %v628
      %v630 = vpop.f32.mrb[0].mxu0
      %631 = vmatprep.mubr.f32.mxu0 0.0
      %632 = vmatmul.mubr.f32.gmra.mrb[0].mxu0 %v357
      %v633 = vpop.f32.mrb[0].mxu0
      %v634 = vpop.f32.mrb[0].mxu0
      %635 = vmatprep.mubr.f32.mxu0 0.0
      %636 = vmatmul.mubr.f32.gmra.mrb[0].mxu0 %v360
      %v637 = vpop.f32.mrb[0].mxu0
      %v638 = vadd.f32 0.0, %v637
      %v639 = vpop.f32.mrb[0].mxu0
      %640 = vmatprep.mubr.f32.mxu0 0.0
      %641 = vmatmul.mubr.f32.gmra.mrb[0].mxu0 %v363
      %v642 = vpop.f32.mrb[0].mxu0
      %v643 = vadd.f32 0.0, %v642
      %v644 = vpop.f32.mrb[0].mxu0
      %645 = vmatprep.mubr.f32.mxu0 0.0
      %646 = vmatmul.mubr.f32.gmra.mrb[0].mxu0 %v366
      %v647 = vpop.f32.mrb[0].mxu0
      %v648 = vpop.f32.mrb[0].mxu0
      %649 = vmatprep.mubr.f32.mxu0 0.0
      %650 = vmatmul.mubr.f32.gmra.mrb[0].mxu0 %v369
      %v651 = vpop.f32.mrb[0].mxu0
      %v652 = vadd.f32 0.0, %v651
      %v653 = vpop.f32.mrb[0].mxu0
      %654 = vmatprep.mubr.f32.mxu0 0.0
      %655 = vmatmul.mubr.f32.gmra.mrb[0].mxu0 %v372
      %v656 = vpop.f32.mrb[0].mxu0
      %v657 = vadd.f32 0.0, %v656
      %v658 = vpop.f32.mrb[0].mxu0
      %659 = vmatprep.mubr.f32.mxu0 0.0
      %660 = vmatmul.mubr.f32.gmra.mrb[0].mxu0 %v375
      %v661 = vpop.f32.mrb[0].mxu0
      %v662 = vpop.f32.mrb[0].mxu0
      %663 = vmatprep.mubr.f32.mxu0 0.0
      %664 = vmatmul.mubr.f32.gmra.mrb[0].mxu0 %v378
      %v665 = vpop.f32.mrb[0].mxu0
      %v666 = vadd.f32 0.0, %v665
      %v667 = vpop.f32.mrb[0].mxu0
      %668 = vmatprep.mubr.f32.mxu0 0.0
      %669 = vmatmul.mubr.f32.gmra.mrb[0].mxu0 %v381
      %v670 = vpop.f32.mrb[0].mxu0
      %v671 = vadd.f32 0.0, %v670
      %v672 = vpop.f32.mrb[0].mxu0
      %673 = vmatprep.mubr.f32.mxu0 0.0
      %674 = vmatmul.mubr.f32.gmra.mrb[0].mxu0 %v384
      %v675 = vpop.f32.mrb[0].mxu0
      %v676 = vpop.f32.mrb[0].mxu0
      %677 = vmatprep.mubr.f32.mxu0 0.0
      %678 = vmatmul.mubr.f32.gmra.mrb[0].mxu0 %v387
      %v679 = vpop.f32.mrb[0].mxu0
      %v680 = vadd.f32 0.0, %v679
      %v681 = vpop.f32.mrb[0].mxu0
      %682 = vmatprep.mubr.f32.mxu0 0.0
      %683 = vmatmul.mubr.f32.gmra.mrb[0].mxu0 %v390
      %v684 = vpop.f32.mrb[0].mxu0
      %v685 = vadd.f32 0.0, %v684
      %v686 = vpop.f32.mrb[0].mxu0
      %687 = vmatprep.mubr.f32.mxu0 0.0
      %688 = vmatmul.mubr.f32.gmra.mrb[0].mxu0 %v393
      %v689 = vpop.f32.mrb[0].mxu0
      %v690 = vpop.f32.mrb[0].mxu0
      %691 = vmatprep.mubr.f32.mxu0 0.0
      %692 = vmatmul.mubr.f32.gmra.mrb[0].mxu0 %v396
      %v693 = vpop.f32.mrb[0].mxu0
      %v694 = vadd.f32 0.0, %v693
      %v695 = vpop.f32.mrb[0].mxu0
      %696 = vmatprep.mubr.f32.mxu0 0.0
      %697 = vmatmul.mubr.f32.gmra.mrb[0].mxu0 %v399
      %v698 = vpop.f32.mrb[0].mxu0
      %v699 = vadd.f32 0.0, %v698
      %v700 = vpop.f32.mrb[0].mxu0
      %701 = vmatprep.mubr.f32.mxu0 0.0
      %702 = vmatmul.mubr.f32.gmra.mrb[0].mxu0 %v402
      %v703 = vpop.f32.mrb[0].mxu0
      %v704 = vpop.f32.mrb[0].mxu0
      %705 = vmatprep.mubr.f32.mxu0 0.0
      %706 = vmatmul.mubr.f32.gmra.mrb[0].mxu0 %v405
      %v707 = vpop.f32.mrb[0].mxu0
      %v708 = vadd.f32 0.0, %v707
      %v709 = vpop.f32.mrb[0].mxu0
      %710 = vmatprep.mubr.f32.mxu0 0.0
      %711 = vmatmul.mubr.f32.gmra.mrb[0].mxu0 %v408
      %v712 = vpop.f32.mrb[0].mxu0
      %v713 = vadd.f32 0.0, %v712
      %v714 = vpop.f32.mrb[0].mxu0
      %715 = vmatprep.mubr.f32.mxu0 0.0
      %716 = vmatmul.mubr.f32.gmra.mrb[0].mxu0 %v411
      %v717 = vpop.f32.mrb[0].mxu0
      %v718 = vpop.f32.mrb[0].mxu0
      %719 = vmatprep.mubr.f32.mxu0 0.0
      %720 = vmatmul.mubr.f32.gmra.mrb[0].mxu0 %v414
      %v721 = vpop.f32.mrb[0].mxu0
      %v722 = vpop.f32.mrb[0].mxu0
      %723 = vmatprep.mubr.f32.mxu0 0.0
      %724 = vmatmul.mubr.f32.gmra.mrb[0].mxu0 %v417
      %v725 = vpop.f32.mrb[0].mxu0
      %v726 = vpop.f32.mrb[0].mxu0
      %727 = vmatprep.mubr.f32.mxu0 0.0
      %728 = vmatmul.mubr.f32.gmra.mrb[0].mxu0 %v420
      %v729 = vpop.f32.mrb[0].mxu0
      %v730 = vpop.f32.mrb[0].mxu0
      %731 = vmatprep.mubr.f32.mxu0 0.0
      %732 = vmatmul.mubr.f32.gmra.mrb[0].mxu0 %v423
      %v733 = vpop.f32.mrb[0].mxu0
      %v734 = vpop.f32.mrb[0].mxu0
      %735 = vmatprep.mubr.f32.mxu0 0.0
      %736 = vmatmul.mubr.f32.gmra.mrb[0].mxu0 %v426
      %v737 = vpop.f32.mrb[0].mxu0
      %v738 = vpop.f32.mrb[0].mxu0
      %739 = vmatprep.mubr.f32.mxu0 0.0
      %740 = vmatmul.mubr.f32.gmra.mrb[0].mxu0 %v429
      %v741 = vpop.f32.mrb[0].mxu0
      %v742 = vpop.f32.mrb[0].mxu0
      %743 = vdwg.mxu0
      %v744 = vld [vmem:[#allocation2] sm:$0xff]
      %v745 = vld [vmem:[#allocation2 + $0x8] sm:$0xff]
      %v746 = vld [vmem:[#allocation2 + $0x10] sm:$0xff]
      %v747 = vld [vmem:[#allocation2 + $0x18] sm:$0xff]
      %v748 = vld [vmem:[#allocation2 + $0x20] sm:$0xff]
      %v749 = vld [vmem:[#allocation2 + $0x28] sm:$0xff]
      %v750 = vld [vmem:[#allocation2 + $0x30] sm:$0xff]
      %v751 = vld [vmem:[#allocation2 + $0x38] sm:$0xff]
      %v752 = vld [vmem:[#allocation2 + $0x40] sm:$0xff]
      %v753 = vld [vmem:[#allocation2 + $0x48] sm:$0xff]
      %v754 = vld [vmem:[#allocation2 + $0x50] sm:$0xff]
      %v755 = vld [vmem:[#allocation2 + $0x58] sm:$0xff]
      %v756 = vld [vmem:[#allocation2 + $0x60] sm:$0xff]
      %v757 = vld [vmem:[#allocation2 + $0x68] sm:$0xff]
      %v758 = vld [vmem:[#allocation2 + $0x70] sm:$0xff]
      %v759 = vld [vmem:[#allocation2 + $0x78] sm:$0xff]
      %v760 = vld [vmem:[#allocation2 + $0x80] sm:$0xff]
      %v761 = vld [vmem:[#allocation2 + $0x88] sm:$0xff]
      %v762 = vld [vmem:[#allocation2 + $0x90] sm:$0xff]
      %v763 = vld [vmem:[#allocation2 + $0x98] sm:$0xff]
      %v764 = vld [vmem:[#allocation2 + $0xa0] sm:$0xff]
      %v765 = vld [vmem:[#allocation2 + $0xa8] sm:$0xff]
      %v766 = vld [vmem:[#allocation2 + $0xb0] sm:$0xff]
      %v767 = vld [vmem:[#allocation2 + $0xb8] sm:$0xff]
      %v768 = vld [vmem:[#allocation2 + $0xc0] sm:$0xff]
      %v769 = vld [vmem:[#allocation2 + $0xc8] sm:$0xff]
      %v770 = vld [vmem:[#allocation2 + $0xd0] sm:$0xff]
      %v771 = vld [vmem:[#allocation2 + $0xd8] sm:$0xff]
      %v772 = vld [vmem:[#allocation2 + $0xe0] sm:$0xff]
      %v773 = vld [vmem:[#allocation2 + $0xe8] sm:$0xff]
      %v774 = vld [vmem:[#allocation2 + $0xf0] sm:$0xff]
      %v775 = vld [vmem:[#allocation2 + $0xf8] sm:$0xff]
      %v776 = vadd.f32 %v744, %v498
      %v777 = vadd.f32 %v745, %v503
      %v778 = vadd.f32 %v746, %v512
      %v779 = vadd.f32 %v747, %v517
      %v780 = vadd.f32 %v748, %v526
      %v781 = vadd.f32 %v749, %v531
      %v782 = vadd.f32 %v750, %v540
      %v783 = vadd.f32 %v751, %v545
      %v784 = vadd.f32 %v752, %v554
      %v785 = vadd.f32 %v753, %v559
      %v786 = vadd.f32 %v754, %v568
      %v787 = vadd.f32 %v755, %v573
      %v788 = vadd.f32 %v756, %v582
      %v789 = vadd.f32 %v757, %v587
      %v790 = vadd.f32 %v758, %v596
      %v791 = vadd.f32 %v759, %v601
      %v792 = vadd.f32 %v760, %v610
      %v793 = vadd.f32 %v761, %v615
      %v794 = vadd.f32 %v762, %v624
      %v795 = vadd.f32 %v763, %v629
      %v796 = vadd.f32 %v764, %v638
      %v797 = vadd.f32 %v765, %v643
      %v798 = vadd.f32 %v766, %v652
      %v799 = vadd.f32 %v767, %v657
      %v800 = vadd.f32 %v768, %v666
      %v801 = vadd.f32 %v769, %v671
      %v802 = vadd.f32 %v770, %v680
      %v803 = vadd.f32 %v771, %v685
      %v804 = vadd.f32 %v772, %v694
      %v805 = vadd.f32 %v773, %v699
      %v806 = vadd.f32 %v774, %v708
      %v807 = vadd.f32 %v775, %v713
      %808 = vst [vmem:[#allocation2] sm:$0xff] %v776
      %809 = vst [vmem:[#allocation2 + $0x8] sm:$0xff] %v777
      %810 = vst [vmem:[#allocation2 + $0x10] sm:$0xff] %v778
      %811 = vst [vmem:[#allocation2 + $0x18] sm:$0xff] %v779
      %812 = vst [vmem:[#allocation2 + $0x20] sm:$0xff] %v780
      %813 = vst [vmem:[#allocation2 + $0x28] sm:$0xff] %v781
      %814 = vst [vmem:[#allocation2 + $0x30] sm:$0xff] %v782
      %815 = vst [vmem:[#allocation2 + $0x38] sm:$0xff] %v783
      %816 = vst [vmem:[#allocation2 + $0x40] sm:$0xff] %v784
      %817 = vst [vmem:[#allocation2 + $0x48] sm:$0xff] %v785
      %818 = vst [vmem:[#allocation2 + $0x50] sm:$0xff] %v786
      %819 = vst [vmem:[#allocation2 + $0x58] sm:$0xff] %v787
      %820 = vst [vmem:[#allocation2 + $0x60] sm:$0xff] %v788
      %821 = vst [vmem:[#allocation2 + $0x68] sm:$0xff] %v789
      %822 = vst [vmem:[#allocation2 + $0x70] sm:$0xff] %v790
      %823 = vst [vmem:[#allocation2 + $0x78] sm:$0xff] %v791
      %824 = vst [vmem:[#allocation2 + $0x80] sm:$0xff] %v792
      %825 = vst [vmem:[#allocation2 + $0x88] sm:$0xff] %v793
      %826 = vst [vmem:[#allocation2 + $0x90] sm:$0xff] %v794
      %827 = vst [vmem:[#allocation2 + $0x98] sm:$0xff] %v795
      %828 = vst [vmem:[#allocation2 + $0xa0] sm:$0xff] %v796
      %829 = vst [vmem:[#allocation2 + $0xa8] sm:$0xff] %v797
      %830 = vst [vmem:[#allocation2 + $0xb0] sm:$0xff] %v798
      %831 = vst [vmem:[#allocation2 + $0xb8] sm:$0xff] %v799
      %832 = vst [vmem:[#allocation2 + $0xc0] sm:$0xff] %v800
      %833 = vst [vmem:[#allocation2 + $0xc8] sm:$0xff] %v801
      %834 = vst [vmem:[#allocation2 + $0xd0] sm:$0xff] %v802
      %835 = vst [vmem:[#allocation2 + $0xd8] sm:$0xff] %v803
      %836 = vst [vmem:[#allocation2 + $0xe0] sm:$0xff] %v804
      %837 = vst [vmem:[#allocation2 + $0xe8] sm:$0xff] %v805
      %838 = vst [vmem:[#allocation2 + $0xf0] sm:$0xff] %v806
      %839 = vst [vmem:[#allocation2 + $0xf8] sm:$0xff] %v807
      %v840 = vld [vmem:[%s168] sm:$0xff]
      %v841 = vld [vmem:[%s168 + $0x8] sm:$0xff]
      %v842 = vld [vmem:[%s168 + $0x10] sm:$0xff]
      %v843 = vld [vmem:[%s168 + $0x18] sm:$0xff]
      %v844 = vld [vmem:[%s168 + $0x20] sm:$0xff]
      %v845 = vld [vmem:[%s168 + $0x28] sm:$0xff]
      %v846 = vld [vmem:[%s168 + $0x30] sm:$0xff]
      %v847 = vld [vmem:[%s168 + $0x38] sm:$0xff]
      %v848 = vld [vmem:[%s168 + $0x40] sm:$0xff]
      %v849 = vld [vmem:[%s168 + $0x48] sm:$0xff]
      %v850 = vld [vmem:[%s168 + $0x50] sm:$0xff]
      %v851 = vld [vmem:[%s168 + $0x58] sm:$0xff]
      %v852 = vld [vmem:[%s168 + $0x60] sm:$0xff]
      %v853 = vld [vmem:[%s168 + $0x68] sm:$0xff]
      %v854 = vld [vmem:[%s168 + $0x70] sm:$0xff]
      %v855 = vld [vmem:[%s168 + $0x78] sm:$0xff]
      %v856 = vld [vmem:[%s168 + $0x80] sm:$0xff]
      %v857 = vld [vmem:[%s168 + $0x88] sm:$0xff]
      %v858 = vld [vmem:[%s168 + $0x90] sm:$0xff]
      %v859 = vld [vmem:[%s168 + $0x98] sm:$0xff]
      %v860 = vld [vmem:[%s168 + $0xa0] sm:$0xff]
      %v861 = vld [vmem:[%s168 + $0xa8] sm:$0xff]
      %v862 = vld [vmem:[%s168 + $0xb0] sm:$0xff]
      %v863 = vld [vmem:[%s168 + $0xb8] sm:$0xff]
      %v864 = vld [vmem:[%s168 + $0xc0] sm:$0xff]
      %v865 = vld [vmem:[%s168 + $0xc8] sm:$0xff]
      %v866 = vld [vmem:[%s168 + $0xd0] sm:$0xff]
      %v867 = vld [vmem:[%s168 + $0xd8] sm:$0xff]
      %v868 = vld [vmem:[%s168 + $0xe0] sm:$0xff]
      %v869 = vld [vmem:[%s168 + $0xe8] sm:$0xff]
      %v870 = vld [vmem:[%s168 + $0xf0] sm:$0xff]
      %v871 = vld [vmem:[%s168 + $0xf8] sm:$0xff]
      %v872 = vld [vmem:[%s168 + $0x100] sm:$0xff]
      %v873 = vld [vmem:[%s168 + $0x108] sm:$0xff]
      %v874 = vld [vmem:[%s168 + $0x110] sm:$0xff]
      %v875 = vld [vmem:[%s168 + $0x118] sm:$0xff]
      %v876 = vld [vmem:[%s168 + $0x120] sm:$0xff]
      %v877 = vld [vmem:[%s168 + $0x128] sm:$0xff]
      %v878 = vld [vmem:[%s168 + $0x130] sm:$0xff]
      %v879 = vld [vmem:[%s168 + $0x138] sm:$0xff]
      %v880 = vld [vmem:[%s168 + $0x140] sm:$0xff]
      %v881 = vld [vmem:[%s168 + $0x148] sm:$0xff]
      %v882 = vld [vmem:[%s168 + $0x150] sm:$0xff]
      %v883 = vld [vmem:[%s168 + $0x158] sm:$0xff]
      %v884 = vld [vmem:[%s168 + $0x160] sm:$0xff]
      %v885 = vld [vmem:[%s168 + $0x168] sm:$0xff]
      %v886 = vld [vmem:[%s168 + $0x170] sm:$0xff]
      %v887 = vld [vmem:[%s168 + $0x178] sm:$0xff]
      %v888 = vld [vmem:[%s168 + $0x180] sm:$0xff]
      %v889 = vld [vmem:[%s168 + $0x188] sm:$0xff]
      %v890 = vld [vmem:[%s168 + $0x190] sm:$0xff]
      %v891 = vld [vmem:[%s168 + $0x198] sm:$0xff]
      %v892 = vld [vmem:[%s168 + $0x1a0] sm:$0xff]
      %v893 = vld [vmem:[%s168 + $0x1a8] sm:$0xff]
      %s894 = scalar_lea.vmem %s172, 8
      %v895 = vld [vmem:[%s894] sm:$0xff]
      %v897 = vsel %vm268, %v840, 0
      %v900 = vsel %vm268, %v841, 0
      %v903 = vsel %vm268, %v842, 0
      %v906 = vsel %vm268, %v843, 0
      %v909 = vsel %vm268, %v844, 0
      %v912 = vsel %vm268, %v845, 0
      %v915 = vsel %vm268, %v846, 0
      %v918 = vsel %vm268, %v847, 0
      %v921 = vsel %vm268, %v848, 0
      %v924 = vsel %vm268, %v849, 0
      %v927 = vsel %vm268, %v850, 0
      %v930 = vsel %vm268, %v851, 0
      %v933 = vsel %vm268, %v852, 0
      %v936 = vsel %vm268, %v853, 0
      %v939 = vsel %vm268, %v854, 0
      %v942 = vsel %vm268, %v855, 0
      %v945 = vsel %vm268, %v856, 0
      %v948 = vsel %vm268, %v857, 0
      %v951 = vsel %vm268, %v858, 0
      %v954 = vsel %vm268, %v859, 0
      %v957 = vsel %vm268, %v860, 0
      %v960 = vsel %vm268, %v861, 0
      %v963 = vsel %vm268, %v862, 0
      %v966 = vsel %vm268, %v863, 0
      %v969 = vsel %vm268, %v864, 0
      %v972 = vsel %vm268, %v865, 0
      %v975 = vsel %vm268, %v866, 0
      %v978 = vsel %vm268, %v867, 0
      %v981 = vsel %vm268, %v868, 0
      %v984 = vsel %vm268, %v869, 0
      %v987 = vsel %vm268, %v870, 0
      %v990 = vsel %vm268, %v871, 0
      %v993 = vsel %vm268, %v872, 0
      %v996 = vsel %vm268, %v873, 0
      %v999 = vsel %vm268, %v874, 0
      %v1002 = vsel %vm268, %v875, 0
      %v1005 = vsel %vm268, %v876, 0
      %v1008 = vsel %vm268, %v877, 0
      %v1011 = vsel %vm268, %v878, 0
      %v1014 = vsel %vm268, %v879, 0
      %v1017 = vsel %vm268, %v880, 0
      %v1020 = vsel %vm268, %v881, 0
      %v1023 = vsel %vm268, %v882, 0
      %v1026 = vsel %vm268, %v883, 0
      %v1029 = vsel %vm268, %v884, 0
      %v1032 = vsel %vm268, %v885, 0
      %v1035 = vsel %vm268, %v886, 0
      %v1038 = vsel %vm268, %v887, 0
      %v1041 = vsel %vm268, %v888, 0
      %v1044 = vsel %vm268, %v889, 0
      %v1047 = vsel %vm268, %v890, 0
      %v1050 = vsel %vm268, %v891, 0
      %v1053 = vsel %vm268, %v892, 0
      %v1056 = vsel %vm268, %v893, 0
      %1058 = vmatprep.subr.mxu0 0.0
      %1059 = vmatpush1.msra.mxu0 %v895
      %1060 = vmatprep.subr.mxu0 0.0
      %1061 = vmatpush1.msra.mxu0 0.0
      %1062 = vmatprep.subr.mxu0 0.0
      %1063 = vmatpush1.msra.mxu0 0.0
      %1064 = vmatprep.subr.mxu0 0.0
      %1065 = vmatpush1.msra.mxu0 0.0
      %1066 = vmatprep.subr.mxu0 0.0
      %1067 = vmatpush1.msra.mxu0 0.0
      %1068 = vmatprep.subr.mxu0 0.0
      %1069 = vmatpush1.msra.mxu0 0.0
      %1070 = vmatprep.subr.mxu0 0.0
      %1071 = vmatpush1.msra.mxu0 0.0
      %1072 = vmatprep.subr.mxu0 0.0
      %1073 = vmatpush1.msra.mxu0 0.0
      %1074 = vmatprep.subr.mxu0 0.0
      %1075 = vmatpush1.msra.mxu0 0.0
      %1076 = vmatprep.subr.mxu0 0.0
      %1077 = vmatpush1.msra.mxu0 0.0
      %1078 = vmatprep.subr.mxu0 0.0
      %1079 = vmatpush1.msra.mxu0 0.0
      %1080 = vmatprep.subr.mxu0 0.0
      %1081 = vmatpush1.msra.mxu0 0.0
      %1082 = vmatprep.subr.mxu0 0.0
      %1083 = vmatpush1.msra.mxu0 0.0
      %1084 = vmatprep.subr.mxu0 0.0
      %1085 = vmatpush1.msra.mxu0 0.0
      %1086 = vmatprep.subr.mxu0 0.0
      %1087 = vmatpush1.msra.mxu0 0.0
      %1088 = vmatprep.subr.mxu0 0.0
      %1089 = vmatpush1.msra.mxu0 0.0
      %1090 = vmatprep.subr.mxu0 0.0
      %1091 = vmatpush1.msra.mxu0 0.0
      %1092 = vmatprep.subr.mxu0 0.0
      %1093 = vmatpush1.msra.mxu0 0.0
      %1094 = vmatprep.subr.mxu0 0.0
      %1095 = vmatpush1.msra.mxu0 0.0
      %1096 = vmatprep.subr.mxu0 0.0
      %1097 = vmatpush1.msra.mxu0 0.0
      %1098 = vmatprep.subr.mxu0 0.0
      %1099 = vmatpush1.msra.mxu0 0.0
      %1100 = vmatprep.subr.mxu0 0.0
      %1101 = vmatpush1.msra.mxu0 0.0
      %1102 = vmatprep.subr.mxu0 0.0
      %1103 = vmatpush1.msra.mxu0 0.0
      %1104 = vmatprep.subr.mxu0 0.0
      %1105 = vmatpush1.msra.mxu0 0.0
      %1106 = vmatprep.subr.mxu0 0.0
      %1107 = vmatpush1.msra.mxu0 0.0
      %1108 = vmatprep.subr.mxu0 0.0
      %1109 = vmatpush1.msra.mxu0 0.0
      %1110 = vmatprep.subr.mxu0 0.0
      %1111 = vmatpush1.msra.mxu0 0.0
      %1112 = vmatprep.subr.mxu0 0.0
      %1113 = vmatpush1.msra.mxu0 0.0
      %1114 = vmatprep.subr.mxu0 0.0
      %1115 = vmatpush1.msra.mxu0 0.0
      %1116 = vmatprep.subr.mxu0 0.0
      %1117 = vmatpush1.msra.mxu0 0.0
      %1118 = vmatprep.subr.mxu0 0.0
      %1119 = vmatpush1.msra.mxu0 0.0
      %1120 = vmatprep.subr.mxu0 0.0
      %1121 = vmatpush1.msra.mxu0 0.0
      %1122 = vmatprep.mubr.f32.mxu0 0.0
      %1123 = vmatmul.mubr.f32.gmra.mrb[0].mxu0 %v897
      %v1124 = vpop.f32.mrb[0].mxu0
      %v1125 = vadd.f32 0.0, %v1124
      %v1126 = vpop.f32.mrb[0].mxu0
      %1127 = vmatprep.mubr.f32.mxu0 0.0
      %1128 = vmatmul.mubr.f32.gmra.mrb[0].mxu0 %v900
      %v1129 = vpop.f32.mrb[0].mxu0
      %v1130 = vadd.f32 0.0, %v1129
      %v1131 = vpop.f32.mrb[0].mxu0
      %1132 = vmatprep.mubr.f32.mxu0 0.0
      %1133 = vmatmul.mubr.f32.gmra.mrb[0].mxu0 %v903
      %v1134 = vpop.f32.mrb[0].mxu0
      %v1135 = vadd.f32 0.0, %v1134
      %v1136 = vpop.f32.mrb[0].mxu0
      %1137 = vmatprep.mubr.f32.mxu0 0.0
      %1138 = vmatmul.mubr.f32.gmra.mrb[0].mxu0 %v906
      %v1139 = vpop.f32.mrb[0].mxu0
      %v1140 = vadd.f32 0.0, %v1139
      %v1141 = vpop.f32.mrb[0].mxu0
      %1142 = vmatprep.mubr.f32.mxu0 0.0
      %1143 = vmatmul.mubr.f32.gmra.mrb[0].mxu0 %v909
      %v1144 = vpop.f32.mrb[0].mxu0
      %v1145 = vadd.f32 0.0, %v1144
      %v1146 = vpop.f32.mrb[0].mxu0
      %1147 = vmatprep.mubr.f32.mxu0 0.0
      %1148 = vmatmul.mubr.f32.gmra.mrb[0].mxu0 %v912
      %v1149 = vpop.f32.mrb[0].mxu0
      %v1150 = vadd.f32 0.0, %v1149
      %v1151 = vpop.f32.mrb[0].mxu0
      %1152 = vmatprep.mubr.f32.mxu0 0.0
      %1153 = vmatmul.mubr.f32.gmra.mrb[0].mxu0 %v915
      %v1154 = vpop.f32.mrb[0].mxu0
      %v1155 = vadd.f32 0.0, %v1154
      %v1156 = vpop.f32.mrb[0].mxu0
      %1157 = vmatprep.mubr.f32.mxu0 0.0
      %1158 = vmatmul.mubr.f32.gmra.mrb[0].mxu0 %v918
      %v1159 = vpop.f32.mrb[0].mxu0
      %v1160 = vadd.f32 0.0, %v1159
      %v1161 = vpop.f32.mrb[0].mxu0
      %1162 = vmatprep.mubr.f32.mxu0 0.0
      %1163 = vmatmul.mubr.f32.gmra.mrb[0].mxu0 %v921
      %v1164 = vpop.f32.mrb[0].mxu0
      %v1165 = vadd.f32 0.0, %v1164
      %v1166 = vpop.f32.mrb[0].mxu0
      %1167 = vmatprep.mubr.f32.mxu0 0.0
      %1168 = vmatmul.mubr.f32.gmra.mrb[0].mxu0 %v924
      %v1169 = vpop.f32.mrb[0].mxu0
      %v1170 = vadd.f32 0.0, %v1169
      %v1171 = vpop.f32.mrb[0].mxu0
      %1172 = vmatprep.mubr.f32.mxu0 0.0
      %1173 = vmatmul.mubr.f32.gmra.mrb[0].mxu0 %v927
      %v1174 = vpop.f32.mrb[0].mxu0
      %v1175 = vadd.f32 0.0, %v1174
      %v1176 = vpop.f32.mrb[0].mxu0
      %1177 = vmatprep.mubr.f32.mxu0 0.0
      %1178 = vmatmul.mubr.f32.gmra.mrb[0].mxu0 %v930
      %v1179 = vpop.f32.mrb[0].mxu0
      %v1180 = vadd.f32 0.0, %v1179
      %v1181 = vpop.f32.mrb[0].mxu0
      %1182 = vmatprep.mubr.f32.mxu0 0.0
      %1183 = vmatmul.mubr.f32.gmra.mrb[0].mxu0 %v933
      %v1184 = vpop.f32.mrb[0].mxu0
      %v1185 = vadd.f32 0.0, %v1184
      %v1186 = vpop.f32.mrb[0].mxu0
      %1187 = vmatprep.mubr.f32.mxu0 0.0
      %1188 = vmatmul.mubr.f32.gmra.mrb[0].mxu0 %v936
      %v1189 = vpop.f32.mrb[0].mxu0
      %v1190 = vadd.f32 0.0, %v1189
      %v1191 = vpop.f32.mrb[0].mxu0
      %1192 = vmatprep.mubr.f32.mxu0 0.0
      %1193 = vmatmul.mubr.f32.gmra.mrb[0].mxu0 %v939
      %v1194 = vpop.f32.mrb[0].mxu0
      %v1195 = vadd.f32 0.0, %v1194
      %v1196 = vpop.f32.mrb[0].mxu0
      %1197 = vmatprep.mubr.f32.mxu0 0.0
      %1198 = vmatmul.mubr.f32.gmra.mrb[0].mxu0 %v942
      %v1199 = vpop.f32.mrb[0].mxu0
      %v1200 = vadd.f32 0.0, %v1199
      %v1201 = vpop.f32.mrb[0].mxu0
      %1202 = vmatprep.mubr.f32.mxu0 0.0
      %1203 = vmatmul.mubr.f32.gmra.mrb[0].mxu0 %v945
      %v1204 = vpop.f32.mrb[0].mxu0
      %v1205 = vadd.f32 0.0, %v1204
      %v1206 = vpop.f32.mrb[0].mxu0
      %1207 = vmatprep.mubr.f32.mxu0 0.0
      %1208 = vmatmul.mubr.f32.gmra.mrb[0].mxu0 %v948
      %v1209 = vpop.f32.mrb[0].mxu0
      %v1210 = vadd.f32 0.0, %v1209
      %v1211 = vpop.f32.mrb[0].mxu0
      %1212 = vmatprep.mubr.f32.mxu0 0.0
      %1213 = vmatmul.mubr.f32.gmra.mrb[0].mxu0 %v951
      %v1214 = vpop.f32.mrb[0].mxu0
      %v1215 = vadd.f32 0.0, %v1214
      %v1216 = vpop.f32.mrb[0].mxu0
      %1217 = vmatprep.mubr.f32.mxu0 0.0
      %1218 = vmatmul.mubr.f32.gmra.mrb[0].mxu0 %v954
      %v1219 = vpop.f32.mrb[0].mxu0
      %v1220 = vadd.f32 0.0, %v1219
      %v1221 = vpop.f32.mrb[0].mxu0
      %1222 = vmatprep.mubr.f32.mxu0 0.0
      %1223 = vmatmul.mubr.f32.gmra.mrb[0].mxu0 %v957
      %v1224 = vpop.f32.mrb[0].mxu0
      %v1225 = vadd.f32 0.0, %v1224
      %v1226 = vpop.f32.mrb[0].mxu0
      %1227 = vmatprep.mubr.f32.mxu0 0.0
      %1228 = vmatmul.mubr.f32.gmra.mrb[0].mxu0 %v960
      %v1229 = vpop.f32.mrb[0].mxu0
      %v1230 = vadd.f32 0.0, %v1229
      %v1231 = vpop.f32.mrb[0].mxu0
      %1232 = vmatprep.mubr.f32.mxu0 0.0
      %1233 = vmatmul.mubr.f32.gmra.mrb[0].mxu0 %v963
      %v1234 = vpop.f32.mrb[0].mxu0
      %v1235 = vadd.f32 0.0, %v1234
      %v1236 = vpop.f32.mrb[0].mxu0
      %1237 = vmatprep.mubr.f32.mxu0 0.0
      %1238 = vmatmul.mubr.f32.gmra.mrb[0].mxu0 %v966
      %v1239 = vpop.f32.mrb[0].mxu0
      %v1240 = vadd.f32 0.0, %v1239
      %v1241 = vpop.f32.mrb[0].mxu0
      %1242 = vmatprep.mubr.f32.mxu0 0.0
      %1243 = vmatmul.mubr.f32.gmra.mrb[0].mxu0 %v969
      %v1244 = vpop.f32.mrb[0].mxu0
      %v1245 = vadd.f32 0.0, %v1244
      %v1246 = vpop.f32.mrb[0].mxu0
      %1247 = vmatprep.mubr.f32.mxu0 0.0
      %1248 = vmatmul.mubr.f32.gmra.mrb[0].mxu0 %v972
      %v1249 = vpop.f32.mrb[0].mxu0
      %v1250 = vadd.f32 0.0, %v1249
      %v1251 = vpop.f32.mrb[0].mxu0
      %1252 = vmatprep.mubr.f32.mxu0 0.0
      %1253 = vmatmul.mubr.f32.gmra.mrb[0].mxu0 %v975
      %v1254 = vpop.f32.mrb[0].mxu0
      %v1255 = vadd.f32 0.0, %v1254
      %v1256 = vpop.f32.mrb[0].mxu0
      %1257 = vmatprep.mubr.f32.mxu0 0.0
      %1258 = vmatmul.mubr.f32.gmra.mrb[0].mxu0 %v978
      %v1259 = vpop.f32.mrb[0].mxu0
      %v1260 = vadd.f32 0.0, %v1259
      %v1261 = vpop.f32.mrb[0].mxu0
      %1262 = vmatprep.mubr.f32.mxu0 0.0
      %1263 = vmatmul.mubr.f32.gmra.mrb[0].mxu0 %v981
      %v1264 = vpop.f32.mrb[0].mxu0
      %v1265 = vadd.f32 0.0, %v1264
      %v1266 = vpop.f32.mrb[0].mxu0
      %1267 = vmatprep.mubr.f32.mxu0 0.0
      %1268 = vmatmul.mubr.f32.gmra.mrb[0].mxu0 %v984
      %v1269 = vpop.f32.mrb[0].mxu0
      %v1270 = vadd.f32 0.0, %v1269
      %v1271 = vpop.f32.mrb[0].mxu0
      %1272 = vmatprep.mubr.f32.mxu0 0.0
      %1273 = vmatmul.mubr.f32.gmra.mrb[0].mxu0 %v987
      %v1274 = vpop.f32.mrb[0].mxu0
      %v1275 = vadd.f32 0.0, %v1274
      %v1276 = vpop.f32.mrb[0].mxu0
      %1277 = vmatprep.mubr.f32.mxu0 0.0
      %1278 = vmatmul.mubr.f32.gmra.mrb[0].mxu0 %v990
      %v1279 = vpop.f32.mrb[0].mxu0
      %v1280 = vadd.f32 0.0, %v1279
      %v1281 = vpop.f32.mrb[0].mxu0
      %1282 = vmatprep.mubr.f32.mxu0 0.0
      %1283 = vmatmul.mubr.f32.gmra.mrb[0].mxu0 %v993
      %v1284 = vpop.f32.mrb[0].mxu0
      %v1285 = vadd.f32 0.0, %v1284
      %v1286 = vpop.f32.mrb[0].mxu0
      %1287 = vmatprep.mubr.f32.mxu0 0.0
      %1288 = vmatmul.mubr.f32.gmra.mrb[0].mxu0 %v996
      %v1289 = vpop.f32.mrb[0].mxu0
      %v1290 = vadd.f32 0.0, %v1289
      %v1291 = vpop.f32.mrb[0].mxu0
      %1292 = vmatprep.mubr.f32.mxu0 0.0
      %1293 = vmatmul.mubr.f32.gmra.mrb[0].mxu0 %v999
      %v1294 = vpop.f32.mrb[0].mxu0
      %v1295 = vadd.f32 0.0, %v1294
      %v1296 = vpop.f32.mrb[0].mxu0
      %1297 = vmatprep.mubr.f32.mxu0 0.0
      %1298 = vmatmul.mubr.f32.gmra.mrb[0].mxu0 %v1002
      %v1299 = vpop.f32.mrb[0].mxu0
      %v1300 = vadd.f32 0.0, %v1299
      %v1301 = vpop.f32.mrb[0].mxu0
      %1302 = vmatprep.mubr.f32.mxu0 0.0
      %1303 = vmatmul.mubr.f32.gmra.mrb[0].mxu0 %v1005
      %v1304 = vpop.f32.mrb[0].mxu0
      %v1305 = vadd.f32 0.0, %v1304
      %v1306 = vpop.f32.mrb[0].mxu0
      %1307 = vmatprep.mubr.f32.mxu0 0.0
      %1308 = vmatmul.mubr.f32.gmra.mrb[0].mxu0 %v1008
      %v1309 = vpop.f32.mrb[0].mxu0
      %v1310 = vadd.f32 0.0, %v1309
      %v1311 = vpop.f32.mrb[0].mxu0
      %1312 = vmatprep.mubr.f32.mxu0 0.0
      %1313 = vmatmul.mubr.f32.gmra.mrb[0].mxu0 %v1011
      %v1314 = vpop.f32.mrb[0].mxu0
      %v1315 = vadd.f32 0.0, %v1314
      %v1316 = vpop.f32.mrb[0].mxu0
      %1317 = vmatprep.mubr.f32.mxu0 0.0
      %1318 = vmatmul.mubr.f32.gmra.mrb[0].mxu0 %v1014
      %v1319 = vpop.f32.mrb[0].mxu0
      %v1320 = vadd.f32 0.0, %v1319
      %v1321 = vpop.f32.mrb[0].mxu0
      %1322 = vmatprep.mubr.f32.mxu0 0.0
      %1323 = vmatmul.mubr.f32.gmra.mrb[0].mxu0 %v1017
      %v1324 = vpop.f32.mrb[0].mxu0
      %v1325 = vadd.f32 0.0, %v1324
      %v1326 = vpop.f32.mrb[0].mxu0
      %1327 = vmatprep.mubr.f32.mxu0 0.0
      %1328 = vmatmul.mubr.f32.gmra.mrb[0].mxu0 %v1020
      %v1329 = vpop.f32.mrb[0].mxu0
      %v1330 = vadd.f32 0.0, %v1329
      %v1331 = vpop.f32.mrb[0].mxu0
      %1332 = vmatprep.mubr.f32.mxu0 0.0
      %1333 = vmatmul.mubr.f32.gmra.mrb[0].mxu0 %v1023
      %v1334 = vpop.f32.mrb[0].mxu0
      %v1335 = vadd.f32 0.0, %v1334
      %v1336 = vpop.f32.mrb[0].mxu0
      %1337 = vmatprep.mubr.f32.mxu0 0.0
      %1338 = vmatmul.mubr.f32.gmra.mrb[0].mxu0 %v1026
      %v1339 = vpop.f32.mrb[0].mxu0
      %v1340 = vadd.f32 0.0, %v1339
      %v1341 = vpop.f32.mrb[0].mxu0
      %1342 = vmatprep.mubr.f32.mxu0 0.0
      %1343 = vmatmul.mubr.f32.gmra.mrb[0].mxu0 %v1029
      %v1344 = vpop.f32.mrb[0].mxu0
      %v1345 = vadd.f32 0.0, %v1344
      %v1346 = vpop.f32.mrb[0].mxu0
      %1347 = vmatprep.mubr.f32.mxu0 0.0
      %1348 = vmatmul.mubr.f32.gmra.mrb[0].mxu0 %v1032
      %v1349 = vpop.f32.mrb[0].mxu0
      %v1350 = vadd.f32 0.0, %v1349
      %v1351 = vpop.f32.mrb[0].mxu0
      %1352 = vmatprep.mubr.f32.mxu0 0.0
      %1353 = vmatmul.mubr.f32.gmra.mrb[0].mxu0 %v1035
      %v1354 = vpop.f32.mrb[0].mxu0
      %v1355 = vadd.f32 0.0, %v1354
      %v1356 = vpop.f32.mrb[0].mxu0
      %1357 = vmatprep.mubr.f32.mxu0 0.0
      %1358 = vmatmul.mubr.f32.gmra.mrb[0].mxu0 %v1038
      %v1359 = vpop.f32.mrb[0].mxu0
      %v1360 = vadd.f32 0.0, %v1359
      %v1361 = vpop.f32.mrb[0].mxu0
      %1362 = vmatprep.mubr.f32.mxu0 0.0
      %1363 = vmatmul.mubr.f32.gmra.mrb[0].mxu0 %v1041
      %v1364 = vpop.f32.mrb[0].mxu0
      %v1365 = vpop.f32.mrb[0].mxu0
      %1366 = vmatprep.mubr.f32.mxu0 0.0
      %1367 = vmatmul.mubr.f32.gmra.mrb[0].mxu0 %v1044
      %v1368 = vpop.f32.mrb[0].mxu0
      %v1369 = vpop.f32.mrb[0].mxu0
      %1370 = vmatprep.mubr.f32.mxu0 0.0
      %1371 = vmatmul.mubr.f32.gmra.mrb[0].mxu0 %v1047
      %v1372 = vpop.f32.mrb[0].mxu0
      %v1373 = vpop.f32.mrb[0].mxu0
      %1374 = vmatprep.mubr.f32.mxu0 0.0
      %1375 = vmatmul.mubr.f32.gmra.mrb[0].mxu0 %v1050
      %v1376 = vpop.f32.mrb[0].mxu0
      %v1377 = vpop.f32.mrb[0].mxu0
      %1378 = vmatprep.mubr.f32.mxu0 0.0
      %1379 = vmatmul.mubr.f32.gmra.mrb[0].mxu0 %v1053
      %v1380 = vpop.f32.mrb[0].mxu0
      %v1381 = vpop.f32.mrb[0].mxu0
      %1382 = vmatprep.mubr.f32.mxu0 0.0
      %1383 = vmatmul.mubr.f32.gmra.mrb[0].mxu0 %v1056
      %v1384 = vpop.f32.mrb[0].mxu0
      %v1385 = vpop.f32.mrb[0].mxu0
      %1386 = vdwg.mxu0
      %v1387 = vld [vmem:[#allocation2] sm:$0xff]
      %v1388 = vld [vmem:[#allocation2 + $0x8] sm:$0xff]
      %v1389 = vld [vmem:[#allocation2 + $0x10] sm:$0xff]
      %v1390 = vld [vmem:[#allocation2 + $0x18] sm:$0xff]
      %v1391 = vld [vmem:[#allocation2 + $0x20] sm:$0xff]
      %v1392 = vld [vmem:[#allocation2 + $0x28] sm:$0xff]
      %v1393 = vld [vmem:[#allocation2 + $0x30] sm:$0xff]
      %v1394 = vld [vmem:[#allocation2 + $0x38] sm:$0xff]
      %v1395 = vld [vmem:[#allocation2 + $0x40] sm:$0xff]
      %v1396 = vld [vmem:[#allocation2 + $0x48] sm:$0xff]
      %v1397 = vld [vmem:[#allocation2 + $0x50] sm:$0xff]
      %v1398 = vld [vmem:[#allocation2 + $0x58] sm:$0xff]
      %v1399 = vld [vmem:[#allocation2 + $0x60] sm:$0xff]
      %v1400 = vld [vmem:[#allocation2 + $0x68] sm:$0xff]
      %v1401 = vld [vmem:[#allocation2 + $0x70] sm:$0xff]
      %v1402 = vld [vmem:[#allocation2 + $0x78] sm:$0xff]
      %v1403 = vld [vmem:[#allocation2 + $0x80] sm:$0xff]
      %v1404 = vld [vmem:[#allocation2 + $0x88] sm:$0xff]
      %v1405 = vld [vmem:[#allocation2 + $0x90] sm:$0xff]
      %v1406 = vld [vmem:[#allocation2 + $0x98] sm:$0xff]
      %v1407 = vld [vmem:[#allocation2 + $0xa0] sm:$0xff]
      %v1408 = vld [vmem:[#allocation2 + $0xa8] sm:$0xff]
      %v1409 = vld [vmem:[#allocation2 + $0xb0] sm:$0xff]
      %v1410 = vld [vmem:[#allocation2 + $0xb8] sm:$0xff]
      %v1411 = vld [vmem:[#allocation2 + $0xc0] sm:$0xff]
      %v1412 = vld [vmem:[#allocation2 + $0xc8] sm:$0xff]
      %v1413 = vld [vmem:[#allocation2 + $0xd0] sm:$0xff]
      %v1414 = vld [vmem:[#allocation2 + $0xd8] sm:$0xff]
      %v1415 = vld [vmem:[#allocation2 + $0xe0] sm:$0xff]
      %v1416 = vld [vmem:[#allocation2 + $0xe8] sm:$0xff]
      %v1417 = vld [vmem:[#allocation2 + $0xf0] sm:$0xff]
      %v1418 = vld [vmem:[#allocation2 + $0xf8] sm:$0xff]
      %vm1467 = vcmask 1046528
      %v1468 = vrot.slane %v1125, 1
      %v1469 = vrot.slane %v1130, 1
      %v1470 = vsel %vm1467, %v1468, %v1469
      %v1471 = vrot.slane %v1135, 1
      %v1472 = vsel %vm1467, %v1469, %v1471
      %v1473 = vrot.slane %v1140, 1
      %v1474 = vrot.slane %v1145, 1
      %v1475 = vsel %vm1467, %v1473, %v1474
      %v1476 = vrot.slane %v1150, 1
      %v1477 = vsel %vm1467, %v1474, %v1476
      %v1478 = vrot.slane %v1155, 1
      %v1479 = vrot.slane %v1160, 1
      %v1480 = vsel %vm1467, %v1478, %v1479
      %v1481 = vrot.slane %v1165, 1
      %v1482 = vsel %vm1467, %v1479, %v1481
      %v1483 = vrot.slane %v1170, 1
      %v1484 = vrot.slane %v1175, 1
      %v1485 = vsel %vm1467, %v1483, %v1484
      %v1486 = vrot.slane %v1180, 1
      %v1487 = vsel %vm1467, %v1484, %v1486
      %v1488 = vrot.slane %v1185, 1
      %v1489 = vrot.slane %v1190, 1
      %v1490 = vsel %vm1467, %v1488, %v1489
      %v1491 = vrot.slane %v1195, 1
      %v1492 = vsel %vm1467, %v1489, %v1491
      %v1493 = vrot.slane %v1200, 1
      %v1494 = vrot.slane %v1205, 1
      %v1495 = vsel %vm1467, %v1493, %v1494
      %v1496 = vrot.slane %v1210, 1
      %v1497 = vsel %vm1467, %v1494, %v1496
      %v1498 = vrot.slane %v1215, 1
      %v1499 = vrot.slane %v1220, 1
      %v1500 = vsel %vm1467, %v1498, %v1499
      %v1501 = vrot.slane %v1225, 1
      %v1502 = vsel %vm1467, %v1499, %v1501
      %v1503 = vrot.slane %v1230, 1
      %v1504 = vrot.slane %v1235, 1
      %v1505 = vsel %vm1467, %v1503, %v1504
      %v1506 = vrot.slane %v1240, 1
      %v1507 = vsel %vm1467, %v1504, %v1506
      %v1508 = vrot.slane %v1245, 1
      %v1509 = vrot.slane %v1250, 1
      %v1510 = vsel %vm1467, %v1508, %v1509
      %v1511 = vrot.slane %v1255, 1
      %v1512 = vsel %vm1467, %v1509, %v1511
      %v1513 = vrot.slane %v1260, 1
      %v1514 = vrot.slane %v1265, 1
      %v1515 = vsel %vm1467, %v1513, %v1514
      %v1516 = vrot.slane %v1270, 1
      %v1517 = vsel %vm1467, %v1514, %v1516
      %v1518 = vrot.slane %v1275, 1
      %v1519 = vrot.slane %v1280, 1
      %v1520 = vsel %vm1467, %v1518, %v1519
      %v1521 = vrot.slane %v1285, 1
      %v1522 = vsel %vm1467, %v1519, %v1521
      %v1523 = vrot.slane %v1290, 1
      %v1524 = vrot.slane %v1295, 1
      %v1525 = vsel %vm1467, %v1523, %v1524
      %v1526 = vrot.slane %v1300, 1
      %v1527 = vsel %vm1467, %v1524, %v1526
      %v1528 = vrot.slane %v1305, 1
      %v1529 = vrot.slane %v1310, 1
      %v1530 = vsel %vm1467, %v1528, %v1529
      %v1531 = vrot.slane %v1315, 1
      %v1532 = vsel %vm1467, %v1529, %v1531
      %v1533 = vrot.slane %v1320, 1
      %v1534 = vrot.slane %v1325, 1
      %v1535 = vsel %vm1467, %v1533, %v1534
      %v1536 = vrot.slane %v1330, 1
      %v1537 = vsel %vm1467, %v1534, %v1536
      %v1538 = vrot.slane %v1335, 1
      %v1539 = vrot.slane %v1340, 1
      %v1540 = vsel %vm1467, %v1538, %v1539
      %v1541 = vrot.slane %v1345, 1
      %v1542 = vsel %vm1467, %v1539, %v1541
      %v1543 = vrot.slane %v1350, 1
      %v1544 = vrot.slane %v1355, 1
      %v1545 = vsel %vm1467, %v1543, %v1544
      %v1546 = vrot.slane %v1360, 1
      %v1547 = vsel %vm1467, %v1544, %v1546
      %v1580 = vadd.f32 %v1387, %v1470
      %v1581 = vadd.f32 %v1388, %v1472
      %v1582 = vadd.f32 %v1389, %v1475
      %v1583 = vadd.f32 %v1390, %v1477
      %v1584 = vadd.f32 %v1391, %v1480
      %v1585 = vadd.f32 %v1392, %v1482
      %v1586 = vadd.f32 %v1393, %v1485
      %v1587 = vadd.f32 %v1394, %v1487
      %v1588 = vadd.f32 %v1395, %v1490
      %v1589 = vadd.f32 %v1396, %v1492
      %v1590 = vadd.f32 %v1397, %v1495
      %v1591 = vadd.f32 %v1398, %v1497
      %v1592 = vadd.f32 %v1399, %v1500
      %v1593 = vadd.f32 %v1400, %v1502
      %v1594 = vadd.f32 %v1401, %v1505
      %v1595 = vadd.f32 %v1402, %v1507
      %v1596 = vadd.f32 %v1403, %v1510
      %v1597 = vadd.f32 %v1404, %v1512
      %v1598 = vadd.f32 %v1405, %v1515
      %v1599 = vadd.f32 %v1406, %v1517
      %v1600 = vadd.f32 %v1407, %v1520
      %v1601 = vadd.f32 %v1408, %v1522
      %v1602 = vadd.f32 %v1409, %v1525
      %v1603 = vadd.f32 %v1410, %v1527
      %v1604 = vadd.f32 %v1411, %v1530
      %v1605 = vadd.f32 %v1412, %v1532
      %v1606 = vadd.f32 %v1413, %v1535
      %v1607 = vadd.f32 %v1414, %v1537
      %v1608 = vadd.f32 %v1415, %v1540
      %v1609 = vadd.f32 %v1416, %v1542
      %v1610 = vadd.f32 %v1417, %v1545
      %v1611 = vadd.f32 %v1418, %v1547
      %1612 = vst [vmem:[#allocation2] sm:$0xff] %v1580
      %1613 = vst [vmem:[#allocation2 + $0x8] sm:$0xff] %v1581
      %1614 = vst [vmem:[#allocation2 + $0x10] sm:$0xff] %v1582
      %1615 = vst [vmem:[#allocation2 + $0x18] sm:$0xff] %v1583
      %1616 = vst [vmem:[#allocation2 + $0x20] sm:$0xff] %v1584
      %1617 = vst [vmem:[#allocation2 + $0x28] sm:$0xff] %v1585
      %1618 = vst [vmem:[#allocation2 + $0x30] sm:$0xff] %v1586
      %1619 = vst [vmem:[#allocation2 + $0x38] sm:$0xff] %v1587
      %1620 = vst [vmem:[#allocation2 + $0x40] sm:$0xff] %v1588
      %1621 = vst [vmem:[#allocation2 + $0x48] sm:$0xff] %v1589
      %1622 = vst [vmem:[#allocation2 + $0x50] sm:$0xff] %v1590
      %1623 = vst [vmem:[#allocation2 + $0x58] sm:$0xff] %v1591
      %1624 = vst [vmem:[#allocation2 + $0x60] sm:$0xff] %v1592
      %1625 = vst [vmem:[#allocation2 + $0x68] sm:$0xff] %v1593
      %1626 = vst [vmem:[#allocation2 + $0x70] sm:$0xff] %v1594
      %1627 = vst [vmem:[#allocation2 + $0x78] sm:$0xff] %v1595
      %1628 = vst [vmem:[#allocation2 + $0x80] sm:$0xff] %v1596
      %1629 = vst [vmem:[#allocation2 + $0x88] sm:$0xff] %v1597
      %1630 = vst [vmem:[#allocation2 + $0x90] sm:$0xff] %v1598
      %1631 = vst [vmem:[#allocation2 + $0x98] sm:$0xff] %v1599
      %1632 = vst [vmem:[#allocation2 + $0xa0] sm:$0xff] %v1600
      %1633 = vst [vmem:[#allocation2 + $0xa8] sm:$0xff] %v1601
      %1634 = vst [vmem:[#allocation2 + $0xb0] sm:$0xff] %v1602
      %1635 = vst [vmem:[#allocation2 + $0xb8] sm:$0xff] %v1603
      %1636 = vst [vmem:[#allocation2 + $0xc0] sm:$0xff] %v1604
      %1637 = vst [vmem:[#allocation2 + $0xc8] sm:$0xff] %v1605
      %1638 = vst [vmem:[#allocation2 + $0xd0] sm:$0xff] %v1606
      %1639 = vst [vmem:[#allocation2 + $0xd8] sm:$0xff] %v1607
      %1640 = vst [vmem:[#allocation2 + $0xe0] sm:$0xff] %v1608
      %1641 = vst [vmem:[#allocation2 + $0xe8] sm:$0xff] %v1609
      %1642 = vst [vmem:[#allocation2 + $0xf0] sm:$0xff] %v1610
      %1643 = vst [vmem:[#allocation2 + $0xf8] sm:$0xff] %v1611
      %v1644 = vld [vmem:[%s168] sm:$0xff]
      %v1645 = vld [vmem:[%s168 + $0x8] sm:$0xff]
      %v1646 = vld [vmem:[%s168 + $0x10] sm:$0xff]
      %v1647 = vld [vmem:[%s168 + $0x18] sm:$0xff]
      %v1648 = vld [vmem:[%s168 + $0x20] sm:$0xff]
      %v1649 = vld [vmem:[%s168 + $0x28] sm:$0xff]
      %v1650 = vld [vmem:[%s168 + $0x30] sm:$0xff]
      %v1651 = vld [vmem:[%s168 + $0x38] sm:$0xff]
      %v1652 = vld [vmem:[%s168 + $0x40] sm:$0xff]
      %v1653 = vld [vmem:[%s168 + $0x48] sm:$0xff]
      %v1654 = vld [vmem:[%s168 + $0x50] sm:$0xff]
      %v1655 = vld [vmem:[%s168 + $0x58] sm:$0xff]
      %v1656 = vld [vmem:[%s168 + $0x60] sm:$0xff]
      %v1657 = vld [vmem:[%s168 + $0x68] sm:$0xff]
      %v1658 = vld [vmem:[%s168 + $0x70] sm:$0xff]
      %v1659 = vld [vmem:[%s168 + $0x78] sm:$0xff]
      %v1660 = vld [vmem:[%s168 + $0x80] sm:$0xff]
      %v1661 = vld [vmem:[%s168 + $0x88] sm:$0xff]
      %v1662 = vld [vmem:[%s168 + $0x90] sm:$0xff]
      %v1663 = vld [vmem:[%s168 + $0x98] sm:$0xff]
      %v1664 = vld [vmem:[%s168 + $0xa0] sm:$0xff]
      %v1665 = vld [vmem:[%s168 + $0xa8] sm:$0xff]
      %v1666 = vld [vmem:[%s168 + $0xb0] sm:$0xff]
      %v1667 = vld [vmem:[%s168 + $0xb8] sm:$0xff]
      %v1668 = vld [vmem:[%s168 + $0xc0] sm:$0xff]
      %v1669 = vld [vmem:[%s168 + $0xc8] sm:$0xff]
      %v1670 = vld [vmem:[%s168 + $0xd0] sm:$0xff]
      %v1671 = vld [vmem:[%s168 + $0xd8] sm:$0xff]
      %v1672 = vld [vmem:[%s168 + $0xe0] sm:$0xff]
      %v1673 = vld [vmem:[%s168 + $0xe8] sm:$0xff]
      %v1674 = vld [vmem:[%s168 + $0xf0] sm:$0xff]
      %v1675 = vld [vmem:[%s168 + $0xf8] sm:$0xff]
      %v1676 = vld [vmem:[%s168 + $0x100] sm:$0xff]
      %v1677 = vld [vmem:[%s168 + $0x108] sm:$0xff]
      %v1678 = vld [vmem:[%s168 + $0x110] sm:$0xff]
      %v1679 = vld [vmem:[%s168 + $0x118] sm:$0xff]
      %v1680 = vld [vmem:[%s168 + $0x120] sm:$0xff]
      %v1681 = vld [vmem:[%s168 + $0x128] sm:$0xff]
      %v1682 = vld [vmem:[%s168 + $0x130] sm:$0xff]
      %v1683 = vld [vmem:[%s168 + $0x138] sm:$0xff]
      %v1684 = vld [vmem:[%s168 + $0x140] sm:$0xff]
      %v1685 = vld [vmem:[%s168 + $0x148] sm:$0xff]
      %v1686 = vld [vmem:[%s168 + $0x150] sm:$0xff]
      %v1687 = vld [vmem:[%s168 + $0x158] sm:$0xff]
      %v1688 = vld [vmem:[%s168 + $0x160] sm:$0xff]
      %v1689 = vld [vmem:[%s168 + $0x168] sm:$0xff]
      %v1690 = vld [vmem:[%s168 + $0x170] sm:$0xff]
      %v1691 = vld [vmem:[%s168 + $0x178] sm:$0xff]
      %v1692 = vld [vmem:[%s168 + $0x180] sm:$0xff]
      %v1693 = vld [vmem:[%s168 + $0x188] sm:$0xff]
      %v1694 = vld [vmem:[%s168 + $0x190] sm:$0xff]
      %v1695 = vld [vmem:[%s168 + $0x198] sm:$0xff]
      %v1696 = vld [vmem:[%s168 + $0x1a0] sm:$0xff]
      %v1697 = vld [vmem:[%s168 + $0x1a8] sm:$0xff]
      %s1698 = scalar_lea.vmem %s172, 16
      %v1699 = vld [vmem:[%s1698] sm:$0xff]
      %v1701 = vsel %vm268, %v1644, 0
      %v1704 = vsel %vm268, %v1645, 0
      %v1707 = vsel %vm268, %v1646, 0
      %v1710 = vsel %vm268, %v1647, 0
      %v1713 = vsel %vm268, %v1648, 0
      %v1716 = vsel %vm268, %v1649, 0
      %v1719 = vsel %vm268, %v1650, 0
      %v1722 = vsel %vm268, %v1651, 0
      %v1725 = vsel %vm268, %v1652, 0
      %v1728 = vsel %vm268, %v1653, 0
      %v1731 = vsel %vm268, %v1654, 0
      %v1734 = vsel %vm268, %v1655, 0
      %v1737 = vsel %vm268, %v1656, 0
      %v1740 = vsel %vm268, %v1657, 0
      %v1743 = vsel %vm268, %v1658, 0
      %v1746 = vsel %vm268, %v1659, 0
      %v1749 = vsel %vm268, %v1660, 0
      %v1752 = vsel %vm268, %v1661, 0
      %v1755 = vsel %vm268, %v1662, 0
      %v1758 = vsel %vm268, %v1663, 0
      %v1761 = vsel %vm268, %v1664, 0
      %v1764 = vsel %vm268, %v1665, 0
      %v1767 = vsel %vm268, %v1666, 0
      %v1770 = vsel %vm268, %v1667, 0
      %v1773 = vsel %vm268, %v1668, 0
      %v1776 = vsel %vm268, %v1669, 0
      %v1779 = vsel %vm268, %v1670, 0
      %v1782 = vsel %vm268, %v1671, 0
      %v1785 = vsel %vm268, %v1672, 0
      %v1788 = vsel %vm268, %v1673, 0
      %v1791 = vsel %vm268, %v1674, 0
      %v1794 = vsel %vm268, %v1675, 0
      %v1797 = vsel %vm268, %v1676, 0
      %v1800 = vsel %vm268, %v1677, 0
      %v1803 = vsel %vm268, %v1678, 0
      %v1806 = vsel %vm268, %v1679, 0
      %v1809 = vsel %vm268, %v1680, 0
      %v1812 = vsel %vm268, %v1681, 0
      %v1815 = vsel %vm268, %v1682, 0
      %v1818 = vsel %vm268, %v1683, 0
      %v1821 = vsel %vm268, %v1684, 0
      %v1824 = vsel %vm268, %v1685, 0
      %v1827 = vsel %vm268, %v1686, 0
      %v1830 = vsel %vm268, %v1687, 0
      %v1833 = vsel %vm268, %v1688, 0
      %v1836 = vsel %vm268, %v1689, 0
      %v1839 = vsel %vm268, %v1690, 0
      %v1842 = vsel %vm268, %v1691, 0
      %v1845 = vsel %vm268, %v1692, 0
      %v1848 = vsel %vm268, %v1693, 0
      %v1851 = vsel %vm268, %v1694, 0
      %v1854 = vsel %vm268, %v1695, 0
      %v1857 = vsel %vm268, %v1696, 0
      %v1860 = vsel %vm268, %v1697, 0
      %1862 = vmatprep.subr.mxu0 0.0
      %1863 = vmatpush1.msra.mxu0 %v1699
      %1864 = vmatprep.subr.mxu0 0.0
      %1865 = vmatpush1.msra.mxu0 0.0
      %1866 = vmatprep.subr.mxu0 0.0
      %1867 = vmatpush1.msra.mxu0 0.0
      %1868 = vmatprep.subr.mxu0 0.0
      %1869 = vmatpush1.msra.mxu0 0.0
      %1870 = vmatprep.subr.mxu0 0.0
      %1871 = vmatpush1.msra.mxu0 0.0
      %1872 = vmatprep.subr.mxu0 0.0
      %1873 = vmatpush1.msra.mxu0 0.0
      %1874 = vmatprep.subr.mxu0 0.0
      %1875 = vmatpush1.msra.mxu0 0.0
      %1876 = vmatprep.subr.mxu0 0.0
      %1877 = vmatpush1.msra.mxu0 0.0
      %1878 = vmatprep.subr.mxu0 0.0
      %1879 = vmatpush1.msra.mxu0 0.0
      %1880 = vmatprep.subr.mxu0 0.0
      %1881 = vmatpush1.msra.mxu0 0.0
      %1882 = vmatprep.subr.mxu0 0.0
      %1883 = vmatpush1.msra.mxu0 0.0
      %1884 = vmatprep.subr.mxu0 0.0
      %1885 = vmatpush1.msra.mxu0 0.0
      %1886 = vmatprep.subr.mxu0 0.0
      %1887 = vmatpush1.msra.mxu0 0.0
      %1888 = vmatprep.subr.mxu0 0.0
      %1889 = vmatpush1.msra.mxu0 0.0
      %1890 = vmatprep.subr.mxu0 0.0
      %1891 = vmatpush1.msra.mxu0 0.0
      %1892 = vmatprep.subr.mxu0 0.0
      %1893 = vmatpush1.msra.mxu0 0.0
      %1894 = vmatprep.subr.mxu0 0.0
      %1895 = vmatpush1.msra.mxu0 0.0
      %1896 = vmatprep.subr.mxu0 0.0
      %1897 = vmatpush1.msra.mxu0 0.0
      %1898 = vmatprep.subr.mxu0 0.0
      %1899 = vmatpush1.msra.mxu0 0.0
      %1900 = vmatprep.subr.mxu0 0.0
      %1901 = vmatpush1.msra.mxu0 0.0
      %1902 = vmatprep.subr.mxu0 0.0
      %1903 = vmatpush1.msra.mxu0 0.0
      %1904 = vmatprep.subr.mxu0 0.0
      %1905 = vmatpush1.msra.mxu0 0.0
      %1906 = vmatprep.subr.mxu0 0.0
      %1907 = vmatpush1.msra.mxu0 0.0
      %1908 = vmatprep.subr.mxu0 0.0
      %1909 = vmatpush1.msra.mxu0 0.0
      %1910 = vmatprep.subr.mxu0 0.0
      %1911 = vmatpush1.msra.mxu0 0.0
      %1912 = vmatprep.subr.mxu0 0.0
      %1913 = vmatpush1.msra.mxu0 0.0
      %1914 = vmatprep.subr.mxu0 0.0
      %1915 = vmatpush1.msra.mxu0 0.0
      %1916 = vmatprep.subr.mxu0 0.0
      %1917 = vmatpush1.msra.mxu0 0.0
      %1918 = vmatprep.subr.mxu0 0.0
      %1919 = vmatpush1.msra.mxu0 0.0
      %1920 = vmatprep.subr.mxu0 0.0
      %1921 = vmatpush1.msra.mxu0 0.0
      %1922 = vmatprep.subr.mxu0 0.0
      %1923 = vmatpush1.msra.mxu0 0.0
      %1924 = vmatprep.subr.mxu0 0.0
      %1925 = vmatpush1.msra.mxu0 0.0
      %1926 = vmatprep.mubr.f32.mxu0 0.0
      %1927 = vmatmul.mubr.f32.gmra.mrb[0].mxu0 %v1701
      %v1928 = vpop.f32.mrb[0].mxu0
      %v1929 = vadd.f32 0.0, %v1928
      %v1930 = vpop.f32.mrb[0].mxu0
      %1931 = vmatprep.mubr.f32.mxu0 0.0
      %1932 = vmatmul.mubr.f32.gmra.mrb[0].mxu0 %v1704
      %v1933 = vpop.f32.mrb[0].mxu0
      %v1934 = vadd.f32 0.0, %v1933
      %v1935 = vpop.f32.mrb[0].mxu0
      %1936 = vmatprep.mubr.f32.mxu0 0.0
      %1937 = vmatmul.mubr.f32.gmra.mrb[0].mxu0 %v1707
      %v1938 = vpop.f32.mrb[0].mxu0
      %v1939 = vadd.f32 0.0, %v1938
      %v1940 = vpop.f32.mrb[0].mxu0
      %1941 = vmatprep.mubr.f32.mxu0 0.0
      %1942 = vmatmul.mubr.f32.gmra.mrb[0].mxu0 %v1710
      %v1943 = vpop.f32.mrb[0].mxu0
      %v1944 = vadd.f32 0.0, %v1943
      %v1945 = vpop.f32.mrb[0].mxu0
      %1946 = vmatprep.mubr.f32.mxu0 0.0
      %1947 = vmatmul.mubr.f32.gmra.mrb[0].mxu0 %v1713
      %v1948 = vpop.f32.mrb[0].mxu0
      %v1949 = vadd.f32 0.0, %v1948
      %v1950 = vpop.f32.mrb[0].mxu0
      %1951 = vmatprep.mubr.f32.mxu0 0.0
      %1952 = vmatmul.mubr.f32.gmra.mrb[0].mxu0 %v1716
      %v1953 = vpop.f32.mrb[0].mxu0
      %v1954 = vadd.f32 0.0, %v1953
      %v1955 = vpop.f32.mrb[0].mxu0
      %1956 = vmatprep.mubr.f32.mxu0 0.0
      %1957 = vmatmul.mubr.f32.gmra.mrb[0].mxu0 %v1719
      %v1958 = vpop.f32.mrb[0].mxu0
      %v1959 = vadd.f32 0.0, %v1958
      %v1960 = vpop.f32.mrb[0].mxu0
      %1961 = vmatprep.mubr.f32.mxu0 0.0
      %1962 = vmatmul.mubr.f32.gmra.mrb[0].mxu0 %v1722
      %v1963 = vpop.f32.mrb[0].mxu0
      %v1964 = vadd.f32 0.0, %v1963
      %v1965 = vpop.f32.mrb[0].mxu0
      %1966 = vmatprep.mubr.f32.mxu0 0.0
      %1967 = vmatmul.mubr.f32.gmra.mrb[0].mxu0 %v1725
      %v1968 = vpop.f32.mrb[0].mxu0
      %v1969 = vadd.f32 0.0, %v1968
      %v1970 = vpop.f32.mrb[0].mxu0
      %1971 = vmatprep.mubr.f32.mxu0 0.0
      %1972 = vmatmul.mubr.f32.gmra.mrb[0].mxu0 %v1728
      %v1973 = vpop.f32.mrb[0].mxu0
      %v1974 = vadd.f32 0.0, %v1973
      %v1975 = vpop.f32.mrb[0].mxu0
      %1976 = vmatprep.mubr.f32.mxu0 0.0
      %1977 = vmatmul.mubr.f32.gmra.mrb[0].mxu0 %v1731
      %v1978 = vpop.f32.mrb[0].mxu0
      %v1979 = vadd.f32 0.0, %v1978
      %v1980 = vpop.f32.mrb[0].mxu0
      %1981 = vmatprep.mubr.f32.mxu0 0.0
      %1982 = vmatmul.mubr.f32.gmra.mrb[0].mxu0 %v1734
      %v1983 = vpop.f32.mrb[0].mxu0
      %v1984 = vadd.f32 0.0, %v1983
      %v1985 = vpop.f32.mrb[0].mxu0
      %1986 = vmatprep.mubr.f32.mxu0 0.0
      %1987 = vmatmul.mubr.f32.gmra.mrb[0].mxu0 %v1737
      %v1988 = vpop.f32.mrb[0].mxu0
      %v1989 = vadd.f32 0.0, %v1988
      %v1990 = vpop.f32.mrb[0].mxu0
      %1991 = vmatprep.mubr.f32.mxu0 0.0
      %1992 = vmatmul.mubr.f32.gmra.mrb[0].mxu0 %v1740
      %v1993 = vpop.f32.mrb[0].mxu0
      %v1994 = vadd.f32 0.0, %v1993
      %v1995 = vpop.f32.mrb[0].mxu0
      %1996 = vmatprep.mubr.f32.mxu0 0.0
      %1997 = vmatmul.mubr.f32.gmra.mrb[0].mxu0 %v1743
      %v1998 = vpop.f32.mrb[0].mxu0
      %v1999 = vadd.f32 0.0, %v1998
      %v2000 = vpop.f32.mrb[0].mxu0
      %2001 = vmatprep.mubr.f32.mxu0 0.0
      %2002 = vmatmul.mubr.f32.gmra.mrb[0].mxu0 %v1746
      %v2003 = vpop.f32.mrb[0].mxu0
      %v2004 = vadd.f32 0.0, %v2003
      %v2005 = vpop.f32.mrb[0].mxu0
      %2006 = vmatprep.mubr.f32.mxu0 0.0
      %2007 = vmatmul.mubr.f32.gmra.mrb[0].mxu0 %v1749
      %v2008 = vpop.f32.mrb[0].mxu0
      %v2009 = vadd.f32 0.0, %v2008
      %v2010 = vpop.f32.mrb[0].mxu0
      %2011 = vmatprep.mubr.f32.mxu0 0.0
      %2012 = vmatmul.mubr.f32.gmra.mrb[0].mxu0 %v1752
      %v2013 = vpop.f32.mrb[0].mxu0
      %v2014 = vadd.f32 0.0, %v2013
      %v2015 = vpop.f32.mrb[0].mxu0
      %2016 = vmatprep.mubr.f32.mxu0 0.0
      %2017 = vmatmul.mubr.f32.gmra.mrb[0].mxu0 %v1755
      %v2018 = vpop.f32.mrb[0].mxu0
      %v2019 = vadd.f32 0.0, %v2018
      %v2020 = vpop.f32.mrb[0].mxu0
      %2021 = vmatprep.mubr.f32.mxu0 0.0
      %2022 = vmatmul.mubr.f32.gmra.mrb[0].mxu0 %v1758
      %v2023 = vpop.f32.mrb[0].mxu0
      %v2024 = vadd.f32 0.0, %v2023
      %v2025 = vpop.f32.mrb[0].mxu0
      %2026 = vmatprep.mubr.f32.mxu0 0.0
      %2027 = vmatmul.mubr.f32.gmra.mrb[0].mxu0 %v1761
      %v2028 = vpop.f32.mrb[0].mxu0
      %v2029 = vadd.f32 0.0, %v2028
      %v2030 = vpop.f32.mrb[0].mxu0
      %2031 = vmatprep.mubr.f32.mxu0 0.0
      %2032 = vmatmul.mubr.f32.gmra.mrb[0].mxu0 %v1764
      %v2033 = vpop.f32.mrb[0].mxu0
      %v2034 = vadd.f32 0.0, %v2033
      %v2035 = vpop.f32.mrb[0].mxu0
      %2036 = vmatprep.mubr.f32.mxu0 0.0
      %2037 = vmatmul.mubr.f32.gmra.mrb[0].mxu0 %v1767
      %v2038 = vpop.f32.mrb[0].mxu0
      %v2039 = vadd.f32 0.0, %v2038
      %v2040 = vpop.f32.mrb[0].mxu0
      %2041 = vmatprep.mubr.f32.mxu0 0.0
      %2042 = vmatmul.mubr.f32.gmra.mrb[0].mxu0 %v1770
      %v2043 = vpop.f32.mrb[0].mxu0
      %v2044 = vadd.f32 0.0, %v2043
      %v2045 = vpop.f32.mrb[0].mxu0
      %2046 = vmatprep.mubr.f32.mxu0 0.0
      %2047 = vmatmul.mubr.f32.gmra.mrb[0].mxu0 %v1773
      %v2048 = vpop.f32.mrb[0].mxu0
      %v2049 = vadd.f32 0.0, %v2048
      %v2050 = vpop.f32.mrb[0].mxu0
      %2051 = vmatprep.mubr.f32.mxu0 0.0
      %2052 = vmatmul.mubr.f32.gmra.mrb[0].mxu0 %v1776
      %v2053 = vpop.f32.mrb[0].mxu0
      %v2054 = vadd.f32 0.0, %v2053
      %v2055 = vpop.f32.mrb[0].mxu0
      %2056 = vmatprep.mubr.f32.mxu0 0.0
      %2057 = vmatmul.mubr.f32.gmra.mrb[0].mxu0 %v1779
      %v2058 = vpop.f32.mrb[0].mxu0
      %v2059 = vadd.f32 0.0, %v2058
      %v2060 = vpop.f32.mrb[0].mxu0
      %2061 = vmatprep.mubr.f32.mxu0 0.0
      %2062 = vmatmul.mubr.f32.gmra.mrb[0].mxu0 %v1782
      %v2063 = vpop.f32.mrb[0].mxu0
      %v2064 = vadd.f32 0.0, %v2063
      %v2065 = vpop.f32.mrb[0].mxu0
      %2066 = vmatprep.mubr.f32.mxu0 0.0
      %2067 = vmatmul.mubr.f32.gmra.mrb[0].mxu0 %v1785
      %v2068 = vpop.f32.mrb[0].mxu0
      %v2069 = vadd.f32 0.0, %v2068
      %v2070 = vpop.f32.mrb[0].mxu0
      %2071 = vmatprep.mubr.f32.mxu0 0.0
      %2072 = vmatmul.mubr.f32.gmra.mrb[0].mxu0 %v1788
      %v2073 = vpop.f32.mrb[0].mxu0
      %v2074 = vadd.f32 0.0, %v2073
      %v2075 = vpop.f32.mrb[0].mxu0
      %2076 = vmatprep.mubr.f32.mxu0 0.0
      %2077 = vmatmul.mubr.f32.gmra.mrb[0].mxu0 %v1791
      %v2078 = vpop.f32.mrb[0].mxu0
      %v2079 = vadd.f32 0.0, %v2078
      %v2080 = vpop.f32.mrb[0].mxu0
      %2081 = vmatprep.mubr.f32.mxu0 0.0
      %2082 = vmatmul.mubr.f32.gmra.mrb[0].mxu0 %v1794
      %v2083 = vpop.f32.mrb[0].mxu0
      %v2084 = vadd.f32 0.0, %v2083
      %v2085 = vpop.f32.mrb[0].mxu0
      %2086 = vmatprep.mubr.f32.mxu0 0.0
      %2087 = vmatmul.mubr.f32.gmra.mrb[0].mxu0 %v1797
      %v2088 = vpop.f32.mrb[0].mxu0
      %v2089 = vadd.f32 0.0, %v2088
      %v2090 = vpop.f32.mrb[0].mxu0
      %2091 = vmatprep.mubr.f32.mxu0 0.0
      %2092 = vmatmul.mubr.f32.gmra.mrb[0].mxu0 %v1800
      %v2093 = vpop.f32.mrb[0].mxu0
      %v2094 = vadd.f32 0.0, %v2093
      %v2095 = vpop.f32.mrb[0].mxu0
      %2096 = vmatprep.mubr.f32.mxu0 0.0
      %2097 = vmatmul.mubr.f32.gmra.mrb[0].mxu0 %v1803
      %v2098 = vpop.f32.mrb[0].mxu0
      %v2099 = vadd.f32 0.0, %v2098
      %v2100 = vpop.f32.mrb[0].mxu0
      %2101 = vmatprep.mubr.f32.mxu0 0.0
      %2102 = vmatmul.mubr.f32.gmra.mrb[0].mxu0 %v1806
      %v2103 = vpop.f32.mrb[0].mxu0
      %v2104 = vadd.f32 0.0, %v2103
      %v2105 = vpop.f32.mrb[0].mxu0
      %2106 = vmatprep.mubr.f32.mxu0 0.0
      %2107 = vmatmul.mubr.f32.gmra.mrb[0].mxu0 %v1809
      %v2108 = vpop.f32.mrb[0].mxu0
      %v2109 = vadd.f32 0.0, %v2108
      %v2110 = vpop.f32.mrb[0].mxu0
      %2111 = vmatprep.mubr.f32.mxu0 0.0
      %2112 = vmatmul.mubr.f32.gmra.mrb[0].mxu0 %v1812
      %v2113 = vpop.f32.mrb[0].mxu0
      %v2114 = vadd.f32 0.0, %v2113
      %v2115 = vpop.f32.mrb[0].mxu0
      %2116 = vmatprep.mubr.f32.mxu0 0.0
      %2117 = vmatmul.mubr.f32.gmra.mrb[0].mxu0 %v1815
      %v2118 = vpop.f32.mrb[0].mxu0
      %v2119 = vadd.f32 0.0, %v2118
      %v2120 = vpop.f32.mrb[0].mxu0
      %2121 = vmatprep.mubr.f32.mxu0 0.0
      %2122 = vmatmul.mubr.f32.gmra.mrb[0].mxu0 %v1818
      %v2123 = vpop.f32.mrb[0].mxu0
      %v2124 = vadd.f32 0.0, %v2123
      %v2125 = vpop.f32.mrb[0].mxu0
      %2126 = vmatprep.mubr.f32.mxu0 0.0
      %2127 = vmatmul.mubr.f32.gmra.mrb[0].mxu0 %v1821
      %v2128 = vpop.f32.mrb[0].mxu0
      %v2129 = vadd.f32 0.0, %v2128
      %v2130 = vpop.f32.mrb[0].mxu0
      %2131 = vmatprep.mubr.f32.mxu0 0.0
      %2132 = vmatmul.mubr.f32.gmra.mrb[0].mxu0 %v1824
      %v2133 = vpop.f32.mrb[0].mxu0
      %v2134 = vadd.f32 0.0, %v2133
      %v2135 = vpop.f32.mrb[0].mxu0
      %2136 = vmatprep.mubr.f32.mxu0 0.0
      %2137 = vmatmul.mubr.f32.gmra.mrb[0].mxu0 %v1827
      %v2138 = vpop.f32.mrb[0].mxu0
      %v2139 = vadd.f32 0.0, %v2138
      %v2140 = vpop.f32.mrb[0].mxu0
      %2141 = vmatprep.mubr.f32.mxu0 0.0
      %2142 = vmatmul.mubr.f32.gmra.mrb[0].mxu0 %v1830
      %v2143 = vpop.f32.mrb[0].mxu0
      %v2144 = vadd.f32 0.0, %v2143
      %v2145 = vpop.f32.mrb[0].mxu0
      %2146 = vmatprep.mubr.f32.mxu0 0.0
      %2147 = vmatmul.mubr.f32.gmra.mrb[0].mxu0 %v1833
      %v2148 = vpop.f32.mrb[0].mxu0
      %v2149 = vadd.f32 0.0, %v2148
      %v2150 = vpop.f32.mrb[0].mxu0
      %2151 = vmatprep.mubr.f32.mxu0 0.0
      %2152 = vmatmul.mubr.f32.gmra.mrb[0].mxu0 %v1836
      %v2153 = vpop.f32.mrb[0].mxu0
      %v2154 = vadd.f32 0.0, %v2153
      %v2155 = vpop.f32.mrb[0].mxu0
      %2156 = vmatprep.mubr.f32.mxu0 0.0
      %2157 = vmatmul.mubr.f32.gmra.mrb[0].mxu0 %v1839
      %v2158 = vpop.f32.mrb[0].mxu0
      %v2159 = vadd.f32 0.0, %v2158
      %v2160 = vpop.f32.mrb[0].mxu0
      %2161 = vmatprep.mubr.f32.mxu0 0.0
      %2162 = vmatmul.mubr.f32.gmra.mrb[0].mxu0 %v1842
      %v2163 = vpop.f32.mrb[0].mxu0
      %v2164 = vadd.f32 0.0, %v2163
      %v2165 = vpop.f32.mrb[0].mxu0
      %2166 = vmatprep.mubr.f32.mxu0 0.0
      %2167 = vmatmul.mubr.f32.gmra.mrb[0].mxu0 %v1845
      %v2168 = vpop.f32.mrb[0].mxu0
      %v2169 = vpop.f32.mrb[0].mxu0
      %2170 = vmatprep.mubr.f32.mxu0 0.0
      %2171 = vmatmul.mubr.f32.gmra.mrb[0].mxu0 %v1848
      %v2172 = vpop.f32.mrb[0].mxu0
      %v2173 = vpop.f32.mrb[0].mxu0
      %2174 = vmatprep.mubr.f32.mxu0 0.0
      %2175 = vmatmul.mubr.f32.gmra.mrb[0].mxu0 %v1851
      %v2176 = vpop.f32.mrb[0].mxu0
      %v2177 = vpop.f32.mrb[0].mxu0
      %2178 = vmatprep.mubr.f32.mxu0 0.0
      %2179 = vmatmul.mubr.f32.gmra.mrb[0].mxu0 %v1854
      %v2180 = vpop.f32.mrb[0].mxu0
      %v2181 = vpop.f32.mrb[0].mxu0
      %2182 = vmatprep.mubr.f32.mxu0 0.0
      %2183 = vmatmul.mubr.f32.gmra.mrb[0].mxu0 %v1857
      %v2184 = vpop.f32.mrb[0].mxu0
      %v2185 = vpop.f32.mrb[0].mxu0
      %2186 = vmatprep.mubr.f32.mxu0 0.0
      %2187 = vmatmul.mubr.f32.gmra.mrb[0].mxu0 %v1860
      %v2188 = vpop.f32.mrb[0].mxu0
      %v2189 = vpop.f32.mrb[0].mxu0
      %2190 = vdwg.mxu0
      %v2191 = vld [vmem:[#allocation2] sm:$0xff]
      %v2192 = vld [vmem:[#allocation2 + $0x8] sm:$0xff]
      %v2193 = vld [vmem:[#allocation2 + $0x10] sm:$0xff]
      %v2194 = vld [vmem:[#allocation2 + $0x18] sm:$0xff]
      %v2195 = vld [vmem:[#allocation2 + $0x20] sm:$0xff]
      %v2196 = vld [vmem:[#allocation2 + $0x28] sm:$0xff]
      %v2197 = vld [vmem:[#allocation2 + $0x30] sm:$0xff]
      %v2198 = vld [vmem:[#allocation2 + $0x38] sm:$0xff]
      %v2199 = vld [vmem:[#allocation2 + $0x40] sm:$0xff]
      %v2200 = vld [vmem:[#allocation2 + $0x48] sm:$0xff]
      %v2201 = vld [vmem:[#allocation2 + $0x50] sm:$0xff]
      %v2202 = vld [vmem:[#allocation2 + $0x58] sm:$0xff]
      %v2203 = vld [vmem:[#allocation2 + $0x60] sm:$0xff]
      %v2204 = vld [vmem:[#allocation2 + $0x68] sm:$0xff]
      %v2205 = vld [vmem:[#allocation2 + $0x70] sm:$0xff]
      %v2206 = vld [vmem:[#allocation2 + $0x78] sm:$0xff]
      %v2207 = vld [vmem:[#allocation2 + $0x80] sm:$0xff]
      %v2208 = vld [vmem:[#allocation2 + $0x88] sm:$0xff]
      %v2209 = vld [vmem:[#allocation2 + $0x90] sm:$0xff]
      %v2210 = vld [vmem:[#allocation2 + $0x98] sm:$0xff]
      %v2211 = vld [vmem:[#allocation2 + $0xa0] sm:$0xff]
      %v2212 = vld [vmem:[#allocation2 + $0xa8] sm:$0xff]
      %v2213 = vld [vmem:[#allocation2 + $0xb0] sm:$0xff]
      %v2214 = vld [vmem:[#allocation2 + $0xb8] sm:$0xff]
      %v2215 = vld [vmem:[#allocation2 + $0xc0] sm:$0xff]
      %v2216 = vld [vmem:[#allocation2 + $0xc8] sm:$0xff]
      %v2217 = vld [vmem:[#allocation2 + $0xd0] sm:$0xff]
      %v2218 = vld [vmem:[#allocation2 + $0xd8] sm:$0xff]
      %v2219 = vld [vmem:[#allocation2 + $0xe0] sm:$0xff]
      %v2220 = vld [vmem:[#allocation2 + $0xe8] sm:$0xff]
      %v2221 = vld [vmem:[#allocation2 + $0xf0] sm:$0xff]
      %v2222 = vld [vmem:[#allocation2 + $0xf8] sm:$0xff]
      %vm2271 = vcmask 1045504
      %v2272 = vrot.slane %v1929, 2
      %v2273 = vrot.slane %v1934, 2
      %v2274 = vsel %vm2271, %v2272, %v2273
      %v2275 = vrot.slane %v1939, 2
      %v2276 = vsel %vm2271, %v2273, %v2275
      %v2277 = vrot.slane %v1944, 2
      %v2278 = vrot.slane %v1949, 2
      %v2279 = vsel %vm2271, %v2277, %v2278
      %v2280 = vrot.slane %v1954, 2
      %v2281 = vsel %vm2271, %v2278, %v2280
      %v2282 = vrot.slane %v1959, 2
      %v2283 = vrot.slane %v1964, 2
      %v2284 = vsel %vm2271, %v2282, %v2283
      %v2285 = vrot.slane %v1969, 2
      %v2286 = vsel %vm2271, %v2283, %v2285
      %v2287 = vrot.slane %v1974, 2
      %v2288 = vrot.slane %v1979, 2
      %v2289 = vsel %vm2271, %v2287, %v2288
      %v2290 = vrot.slane %v1984, 2
      %v2291 = vsel %vm2271, %v2288, %v2290
      %v2292 = vrot.slane %v1989, 2
      %v2293 = vrot.slane %v1994, 2
      %v2294 = vsel %vm2271, %v2292, %v2293
      %v2295 = vrot.slane %v1999, 2
      %v2296 = vsel %vm2271, %v2293, %v2295
      %v2297 = vrot.slane %v2004, 2
      %v2298 = vrot.slane %v2009, 2
      %v2299 = vsel %vm2271, %v2297, %v2298
      %v2300 = vrot.slane %v2014, 2
      %v2301 = vsel %vm2271, %v2298, %v2300
      %v2302 = vrot.slane %v2019, 2
      %v2303 = vrot.slane %v2024, 2
      %v2304 = vsel %vm2271, %v2302, %v2303
      %v2305 = vrot.slane %v2029, 2
      %v2306 = vsel %vm2271, %v2303, %v2305
      %v2307 = vrot.slane %v2034, 2
      %v2308 = vrot.slane %v2039, 2
      %v2309 = vsel %vm2271, %v2307, %v2308
      %v2310 = vrot.slane %v2044, 2
      %v2311 = vsel %vm2271, %v2308, %v2310
      %v2312 = vrot.slane %v2049, 2
      %v2313 = vrot.slane %v2054, 2
      %v2314 = vsel %vm2271, %v2312, %v2313
      %v2315 = vrot.slane %v2059, 2
      %v2316 = vsel %vm2271, %v2313, %v2315
      %v2317 = vrot.slane %v2064, 2
      %v2318 = vrot.slane %v2069, 2
      %v2319 = vsel %vm2271, %v2317, %v2318
      %v2320 = vrot.slane %v2074, 2
      %v2321 = vsel %vm2271, %v2318, %v2320
      %v2322 = vrot.slane %v2079, 2
      %v2323 = vrot.slane %v2084, 2
      %v2324 = vsel %vm2271, %v2322, %v2323
      %v2325 = vrot.slane %v2089, 2
      %v2326 = vsel %vm2271, %v2323, %v2325
      %v2327 = vrot.slane %v2094, 2
      %v2328 = vrot.slane %v2099, 2
      %v2329 = vsel %vm2271, %v2327, %v2328
      %v2330 = vrot.slane %v2104, 2
      %v2331 = vsel %vm2271, %v2328, %v2330
      %v2332 = vrot.slane %v2109, 2
      %v2333 = vrot.slane %v2114, 2
      %v2334 = vsel %vm2271, %v2332, %v2333
      %v2335 = vrot.slane %v2119, 2
      %v2336 = vsel %vm2271, %v2333, %v2335
      %v2337 = vrot.slane %v2124, 2
      %v2338 = vrot.slane %v2129, 2
      %v2339 = vsel %vm2271, %v2337, %v2338
      %v2340 = vrot.slane %v2134, 2
      %v2341 = vsel %vm2271, %v2338, %v2340
      %v2342 = vrot.slane %v2139, 2
      %v2343 = vrot.slane %v2144, 2
      %v2344 = vsel %vm2271, %v2342, %v2343
      %v2345 = vrot.slane %v2149, 2
      %v2346 = vsel %vm2271, %v2343, %v2345
      %v2347 = vrot.slane %v2154, 2
      %v2348 = vrot.slane %v2159, 2
      %v2349 = vsel %vm2271, %v2347, %v2348
      %v2350 = vrot.slane %v2164, 2
      %v2351 = vsel %vm2271, %v2348, %v2350
      %v2384 = vadd.f32 %v2191, %v2274
      %v2385 = vadd.f32 %v2192, %v2276
      %v2386 = vadd.f32 %v2193, %v2279
      %v2387 = vadd.f32 %v2194, %v2281
      %v2388 = vadd.f32 %v2195, %v2284
      %v2389 = vadd.f32 %v2196, %v2286
      %v2390 = vadd.f32 %v2197, %v2289
      %v2391 = vadd.f32 %v2198, %v2291
      %v2392 = vadd.f32 %v2199, %v2294
      %v2393 = vadd.f32 %v2200, %v2296
      %v2394 = vadd.f32 %v2201, %v2299
      %v2395 = vadd.f32 %v2202, %v2301
      %v2396 = vadd.f32 %v2203, %v2304
      %v2397 = vadd.f32 %v2204, %v2306
      %v2398 = vadd.f32 %v2205, %v2309
      %v2399 = vadd.f32 %v2206, %v2311
      %v2400 = vadd.f32 %v2207, %v2314
      %v2401 = vadd.f32 %v2208, %v2316
      %v2402 = vadd.f32 %v2209, %v2319
      %v2403 = vadd.f32 %v2210, %v2321
      %v2404 = vadd.f32 %v2211, %v2324
      %v2405 = vadd.f32 %v2212, %v2326
      %v2406 = vadd.f32 %v2213, %v2329
      %v2407 = vadd.f32 %v2214, %v2331
      %v2408 = vadd.f32 %v2215, %v2334
      %v2409 = vadd.f32 %v2216, %v2336
      %v2410 = vadd.f32 %v2217, %v2339
      %v2411 = vadd.f32 %v2218, %v2341
      %v2412 = vadd.f32 %v2219, %v2344
      %v2413 = vadd.f32 %v2220, %v2346
      %v2414 = vadd.f32 %v2221, %v2349
      %v2415 = vadd.f32 %v2222, %v2351
      %2416 = vst [vmem:[#allocation2] sm:$0xff] %v2384
      %2417 = vst [vmem:[#allocation2 + $0x8] sm:$0xff] %v2385
      %2418 = vst [vmem:[#allocation2 + $0x10] sm:$0xff] %v2386
      %2419 = vst [vmem:[#allocation2 + $0x18] sm:$0xff] %v2387
      %2420 = vst [vmem:[#allocation2 + $0x20] sm:$0xff] %v2388
      %2421 = vst [vmem:[#allocation2 + $0x28] sm:$0xff] %v2389
      %2422 = vst [vmem:[#allocation2 + $0x30] sm:$0xff] %v2390
      %2423 = vst [vmem:[#allocation2 + $0x38] sm:$0xff] %v2391
      %2424 = vst [vmem:[#allocation2 + $0x40] sm:$0xff] %v2392
      %2425 = vst [vmem:[#allocation2 + $0x48] sm:$0xff] %v2393
      %2426 = vst [vmem:[#allocation2 + $0x50] sm:$0xff] %v2394
      %2427 = vst [vmem:[#allocation2 + $0x58] sm:$0xff] %v2395
      %2428 = vst [vmem:[#allocation2 + $0x60] sm:$0xff] %v2396
      %2429 = vst [vmem:[#allocation2 + $0x68] sm:$0xff] %v2397
      %2430 = vst [vmem:[#allocation2 + $0x70] sm:$0xff] %v2398
      %2431 = vst [vmem:[#allocation2 + $0x78] sm:$0xff] %v2399
      %2432 = vst [vmem:[#allocation2 + $0x80] sm:$0xff] %v2400
      %2433 = vst [vmem:[#allocation2 + $0x88] sm:$0xff] %v2401
      %2434 = vst [vmem:[#allocation2 + $0x90] sm:$0xff] %v2402
      %2435 = vst [vmem:[#allocation2 + $0x98] sm:$0xff] %v2403
      %2436 = vst [vmem:[#allocation2 + $0xa0] sm:$0xff] %v2404
      %2437 = vst [vmem:[#allocation2 + $0xa8] sm:$0xff] %v2405
      %2438 = vst [vmem:[#allocation2 + $0xb0] sm:$0xff] %v2406
      %2439 = vst [vmem:[#allocation2 + $0xb8] sm:$0xff] %v2407
      %2440 = vst [vmem:[#allocation2 + $0xc0] sm:$0xff] %v2408
      %2441 = vst [vmem:[#allocation2 + $0xc8] sm:$0xff] %v2409
      %2442 = vst [vmem:[#allocation2 + $0xd0] sm:$0xff] %v2410
      %2443 = vst [vmem:[#allocation2 + $0xd8] sm:$0xff] %v2411
      %2444 = vst [vmem:[#allocation2 + $0xe0] sm:$0xff] %v2412
      %2445 = vst [vmem:[#allocation2 + $0xe8] sm:$0xff] %v2413
      %2446 = vst [vmem:[#allocation2 + $0xf0] sm:$0xff] %v2414
      %2447 = vst [vmem:[#allocation2 + $0xf8] sm:$0xff] %v2415
      %v2448 = vld [vmem:[%s168] sm:$0xff]
      %v2449 = vld [vmem:[%s168 + $0x8] sm:$0xff]
      %v2450 = vld [vmem:[%s168 + $0x10] sm:$0xff]
      %v2451 = vld [vmem:[%s168 + $0x18] sm:$0xff]
      %v2452 = vld [vmem:[%s168 + $0x20] sm:$0xff]
      %v2453 = vld [vmem:[%s168 + $0x28] sm:$0xff]
      %v2454 = vld [vmem:[%s168 + $0x30] sm:$0xff]
      %v2455 = vld [vmem:[%s168 + $0x38] sm:$0xff]
      %v2456 = vld [vmem:[%s168 + $0x40] sm:$0xff]
      %v2457 = vld [vmem:[%s168 + $0x48] sm:$0xff]
      %v2458 = vld [vmem:[%s168 + $0x50] sm:$0xff]
      %v2459 = vld [vmem:[%s168 + $0x58] sm:$0xff]
      %v2460 = vld [vmem:[%s168 + $0x60] sm:$0xff]
      %v2461 = vld [vmem:[%s168 + $0x68] sm:$0xff]
      %v2462 = vld [vmem:[%s168 + $0x70] sm:$0xff]
      %v2463 = vld [vmem:[%s168 + $0x78] sm:$0xff]
      %v2464 = vld [vmem:[%s168 + $0x80] sm:$0xff]
      %v2465 = vld [vmem:[%s168 + $0x88] sm:$0xff]
      %v2466 = vld [vmem:[%s168 + $0x90] sm:$0xff]
      %v2467 = vld [vmem:[%s168 + $0x98] sm:$0xff]
      %v2468 = vld [vmem:[%s168 + $0xa0] sm:$0xff]
      %v2469 = vld [vmem:[%s168 + $0xa8] sm:$0xff]
      %v2470 = vld [vmem:[%s168 + $0xb0] sm:$0xff]
      %v2471 = vld [vmem:[%s168 + $0xb8] sm:$0xff]
      %v2472 = vld [vmem:[%s168 + $0xc0] sm:$0xff]
      %v2473 = vld [vmem:[%s168 + $0xc8] sm:$0xff]
      %v2474 = vld [vmem:[%s168 + $0xd0] sm:$0xff]
      %v2475 = vld [vmem:[%s168 + $0xd8] sm:$0xff]
      %v2476 = vld [vmem:[%s168 + $0xe0] sm:$0xff]
      %v2477 = vld [vmem:[%s168 + $0xe8] sm:$0xff]
      %v2478 = vld [vmem:[%s168 + $0xf0] sm:$0xff]
      %v2479 = vld [vmem:[%s168 + $0xf8] sm:$0xff]
      %v2480 = vld [vmem:[%s168 + $0x100] sm:$0xff]
      %v2481 = vld [vmem:[%s168 + $0x108] sm:$0xff]
      %v2482 = vld [vmem:[%s168 + $0x110] sm:$0xff]
      %v2483 = vld [vmem:[%s168 + $0x118] sm:$0xff]
      %v2484 = vld [vmem:[%s168 + $0x120] sm:$0xff]
      %v2485 = vld [vmem:[%s168 + $0x128] sm:$0xff]
      %v2486 = vld [vmem:[%s168 + $0x130] sm:$0xff]
      %v2487 = vld [vmem:[%s168 + $0x138] sm:$0xff]
      %v2488 = vld [vmem:[%s168 + $0x140] sm:$0xff]
      %v2489 = vld [vmem:[%s168 + $0x148] sm:$0xff]
      %v2490 = vld [vmem:[%s168 + $0x150] sm:$0xff]
      %v2491 = vld [vmem:[%s168 + $0x158] sm:$0xff]
      %v2492 = vld [vmem:[%s168 + $0x160] sm:$0xff]
      %v2493 = vld [vmem:[%s168 + $0x168] sm:$0xff]
      %v2494 = vld [vmem:[%s168 + $0x170] sm:$0xff]
      %v2495 = vld [vmem:[%s168 + $0x178] sm:$0xff]
      %v2496 = vld [vmem:[%s168 + $0x180] sm:$0xff]
      %v2497 = vld [vmem:[%s168 + $0x188] sm:$0xff]
      %v2498 = vld [vmem:[%s168 + $0x190] sm:$0xff]
      %v2499 = vld [vmem:[%s168 + $0x198] sm:$0xff]
      %v2500 = vld [vmem:[%s168 + $0x1a0] sm:$0xff]
      %v2501 = vld [vmem:[%s168 + $0x1a8] sm:$0xff]
      %s2502 = scalar_lea.vmem %s172, 24
      %v2503 = vld [vmem:[%s2502] sm:$0xff]
      %v2505 = vsel %vm268, %v2448, 0
      %v2508 = vsel %vm268, %v2449, 0
      %v2511 = vsel %vm268, %v2450, 0
      %v2514 = vsel %vm268, %v2451, 0
      %v2517 = vsel %vm268, %v2452, 0
      %v2520 = vsel %vm268, %v2453, 0
      %v2523 = vsel %vm268, %v2454, 0
      %v2526 = vsel %vm268, %v2455, 0
      %v2529 = vsel %vm268, %v2456, 0
      %v2532 = vsel %vm268, %v2457, 0
      %v2535 = vsel %vm268, %v2458, 0
      %v2538 = vsel %vm268, %v2459, 0
      %v2541 = vsel %vm268, %v2460, 0
      %v2544 = vsel %vm268, %v2461, 0
      %v2547 = vsel %vm268, %v2462, 0
      %v2550 = vsel %vm268, %v2463, 0
      %v2553 = vsel %vm268, %v2464, 0
      %v2556 = vsel %vm268, %v2465, 0
      %v2559 = vsel %vm268, %v2466, 0
      %v2562 = vsel %vm268, %v2467, 0
      %v2565 = vsel %vm268, %v2468, 0
      %v2568 = vsel %vm268, %v2469, 0
      %v2571 = vsel %vm268, %v2470, 0
      %v2574 = vsel %vm268, %v2471, 0
      %v2577 = vsel %vm268, %v2472, 0
      %v2580 = vsel %vm268, %v2473, 0
      %v2583 = vsel %vm268, %v2474, 0
      %v2586 = vsel %vm268, %v2475, 0
      %v2589 = vsel %vm268, %v2476, 0
      %v2592 = vsel %vm268, %v2477, 0
      %v2595 = vsel %vm268, %v2478, 0
      %v2598 = vsel %vm268, %v2479, 0
      %v2601 = vsel %vm268, %v2480, 0
      %v2604 = vsel %vm268, %v2481, 0
      %v2607 = vsel %vm268, %v2482, 0
      %v2610 = vsel %vm268, %v2483, 0
      %v2613 = vsel %vm268, %v2484, 0
      %v2616 = vsel %vm268, %v2485, 0
      %v2619 = vsel %vm268, %v2486, 0
      %v2622 = vsel %vm268, %v2487, 0
      %v2625 = vsel %vm268, %v2488, 0
      %v2628 = vsel %vm268, %v2489, 0
      %v2631 = vsel %vm268, %v2490, 0
      %v2634 = vsel %vm268, %v2491, 0
      %v2637 = vsel %vm268, %v2492, 0
      %v2640 = vsel %vm268, %v2493, 0
      %v2643 = vsel %vm268, %v2494, 0
      %v2646 = vsel %vm268, %v2495, 0
      %v2649 = vsel %vm268, %v2496, 0
      %v2652 = vsel %vm268, %v2497, 0
      %v2655 = vsel %vm268, %v2498, 0
      %v2658 = vsel %vm268, %v2499, 0
      %v2661 = vsel %vm268, %v2500, 0
      %v2664 = vsel %vm268, %v2501, 0
      %2666 = vmatprep.subr.mxu0 0.0
      %2667 = vmatpush1.msra.mxu0 %v2503
      %2668 = vmatprep.subr.mxu0 0.0
      %2669 = vmatpush1.msra.mxu0 0.0
      %2670 = vmatprep.subr.mxu0 0.0
      %2671 = vmatpush1.msra.mxu0 0.0
      %2672 = vmatprep.subr.mxu0 0.0
      %2673 = vmatpush1.msra.mxu0 0.0
      %2674 = vmatprep.subr.mxu0 0.0
      %2675 = vmatpush1.msra.mxu0 0.0
      %2676 = vmatprep.subr.mxu0 0.0
      %2677 = vmatpush1.msra.mxu0 0.0
      %2678 = vmatprep.subr.mxu0 0.0
      %2679 = vmatpush1.msra.mxu0 0.0
      %2680 = vmatprep.subr.mxu0 0.0
      %2681 = vmatpush1.msra.mxu0 0.0
      %2682 = vmatprep.subr.mxu0 0.0
      %2683 = vmatpush1.msra.mxu0 0.0
      %2684 = vmatprep.subr.mxu0 0.0
      %2685 = vmatpush1.msra.mxu0 0.0
      %2686 = vmatprep.subr.mxu0 0.0
      %2687 = vmatpush1.msra.mxu0 0.0
      %2688 = vmatprep.subr.mxu0 0.0
      %2689 = vmatpush1.msra.mxu0 0.0
      %2690 = vmatprep.subr.mxu0 0.0
      %2691 = vmatpush1.msra.mxu0 0.0
      %2692 = vmatprep.subr.mxu0 0.0
      %2693 = vmatpush1.msra.mxu0 0.0
      %2694 = vmatprep.subr.mxu0 0.0
      %2695 = vmatpush1.msra.mxu0 0.0
      %2696 = vmatprep.subr.mxu0 0.0
      %2697 = vmatpush1.msra.mxu0 0.0
      %2698 = vmatprep.subr.mxu0 0.0
      %2699 = vmatpush1.msra.mxu0 0.0
      %2700 = vmatprep.subr.mxu0 0.0
      %2701 = vmatpush1.msra.mxu0 0.0
      %2702 = vmatprep.subr.mxu0 0.0
      %2703 = vmatpush1.msra.mxu0 0.0
      %2704 = vmatprep.subr.mxu0 0.0
      %2705 = vmatpush1.msra.mxu0 0.0
      %2706 = vmatprep.subr.mxu0 0.0
      %2707 = vmatpush1.msra.mxu0 0.0
      %2708 = vmatprep.subr.mxu0 0.0
      %2709 = vmatpush1.msra.mxu0 0.0
      %2710 = vmatprep.subr.mxu0 0.0
      %2711 = vmatpush1.msra.mxu0 0.0
      %2712 = vmatprep.subr.mxu0 0.0
      %2713 = vmatpush1.msra.mxu0 0.0
      %2714 = vmatprep.subr.mxu0 0.0
      %2715 = vmatpush1.msra.mxu0 0.0
      %2716 = vmatprep.subr.mxu0 0.0
      %2717 = vmatpush1.msra.mxu0 0.0
      %2718 = vmatprep.subr.mxu0 0.0
      %2719 = vmatpush1.msra.mxu0 0.0
      %2720 = vmatprep.subr.mxu0 0.0
      %2721 = vmatpush1.msra.mxu0 0.0
      %2722 = vmatprep.subr.mxu0 0.0
      %2723 = vmatpush1.msra.mxu0 0.0
      %2724 = vmatprep.subr.mxu0 0.0
      %2725 = vmatpush1.msra.mxu0 0.0
      %2726 = vmatprep.subr.mxu0 0.0
      %2727 = vmatpush1.msra.mxu0 0.0
      %2728 = vmatprep.subr.mxu0 0.0
      %2729 = vmatpush1.msra.mxu0 0.0
      %2730 = vmatprep.mubr.f32.mxu0 0.0
      %2731 = vmatmul.mubr.f32.gmra.mrb[0].mxu0 %v2505
      %v2732 = vpop.f32.mrb[0].mxu0
      %v2733 = vpop.f32.mrb[0].mxu0
      %2734 = vmatprep.mubr.f32.mxu0 0.0
      %2735 = vmatmul.mubr.f32.gmra.mrb[0].mxu0 %v2508
      %v2736 = vpop.f32.mrb[0].mxu0
      %v2737 = vpop.f32.mrb[0].mxu0
      %2738 = vmatprep.mubr.f32.mxu0 0.0
      %2739 = vmatmul.mubr.f32.gmra.mrb[0].mxu0 %v2511
      %v2740 = vpop.f32.mrb[0].mxu0
      %v2741 = vpop.f32.mrb[0].mxu0
      %2742 = vmatprep.mubr.f32.mxu0 0.0
      %2743 = vmatmul.mubr.f32.gmra.mrb[0].mxu0 %v2514
      %v2744 = vpop.f32.mrb[0].mxu0
      %v2745 = vadd.f32 0.0, %v2744
      %v2746 = vpop.f32.mrb[0].mxu0
      %2747 = vmatprep.mubr.f32.mxu0 0.0
      %2748 = vmatmul.mubr.f32.gmra.mrb[0].mxu0 %v2517
      %v2749 = vpop.f32.mrb[0].mxu0
      %v2750 = vadd.f32 0.0, %v2749
      %v2751 = vpop.f32.mrb[0].mxu0
      %2752 = vmatprep.mubr.f32.mxu0 0.0
      %2753 = vmatmul.mubr.f32.gmra.mrb[0].mxu0 %v2520
      %v2754 = vpop.f32.mrb[0].mxu0
      %v2755 = vpop.f32.mrb[0].mxu0
      %2756 = vmatprep.mubr.f32.mxu0 0.0
      %2757 = vmatmul.mubr.f32.gmra.mrb[0].mxu0 %v2523
      %v2758 = vpop.f32.mrb[0].mxu0
      %v2759 = vadd.f32 0.0, %v2758
      %v2760 = vpop.f32.mrb[0].mxu0
      %2761 = vmatprep.mubr.f32.mxu0 0.0
      %2762 = vmatmul.mubr.f32.gmra.mrb[0].mxu0 %v2526
      %v2763 = vpop.f32.mrb[0].mxu0
      %v2764 = vadd.f32 0.0, %v2763
      %v2765 = vpop.f32.mrb[0].mxu0
      %2766 = vmatprep.mubr.f32.mxu0 0.0
      %2767 = vmatmul.mubr.f32.gmra.mrb[0].mxu0 %v2529
      %v2768 = vpop.f32.mrb[0].mxu0
      %v2769 = vpop.f32.mrb[0].mxu0
      %2770 = vmatprep.mubr.f32.mxu0 0.0
      %2771 = vmatmul.mubr.f32.gmra.mrb[0].mxu0 %v2532
      %v2772 = vpop.f32.mrb[0].mxu0
      %v2773 = vadd.f32 0.0, %v2772
      %v2774 = vpop.f32.mrb[0].mxu0
      %2775 = vmatprep.mubr.f32.mxu0 0.0
      %2776 = vmatmul.mubr.f32.gmra.mrb[0].mxu0 %v2535
      %v2777 = vpop.f32.mrb[0].mxu0
      %v2778 = vadd.f32 0.0, %v2777
      %v2779 = vpop.f32.mrb[0].mxu0
      %2780 = vmatprep.mubr.f32.mxu0 0.0
      %2781 = vmatmul.mubr.f32.gmra.mrb[0].mxu0 %v2538
      %v2782 = vpop.f32.mrb[0].mxu0
      %v2783 = vpop.f32.mrb[0].mxu0
      %2784 = vmatprep.mubr.f32.mxu0 0.0
      %2785 = vmatmul.mubr.f32.gmra.mrb[0].mxu0 %v2541
      %v2786 = vpop.f32.mrb[0].mxu0
      %v2787 = vadd.f32 0.0, %v2786
      %v2788 = vpop.f32.mrb[0].mxu0
      %2789 = vmatprep.mubr.f32.mxu0 0.0
      %2790 = vmatmul.mubr.f32.gmra.mrb[0].mxu0 %v2544
      %v2791 = vpop.f32.mrb[0].mxu0
      %v2792 = vadd.f32 0.0, %v2791
      %v2793 = vpop.f32.mrb[0].mxu0
      %2794 = vmatprep.mubr.f32.mxu0 0.0
      %2795 = vmatmul.mubr.f32.gmra.mrb[0].mxu0 %v2547
      %v2796 = vpop.f32.mrb[0].mxu0
      %v2797 = vpop.f32.mrb[0].mxu0
      %2798 = vmatprep.mubr.f32.mxu0 0.0
      %2799 = vmatmul.mubr.f32.gmra.mrb[0].mxu0 %v2550
      %v2800 = vpop.f32.mrb[0].mxu0
      %v2801 = vadd.f32 0.0, %v2800
      %v2802 = vpop.f32.mrb[0].mxu0
      %2803 = vmatprep.mubr.f32.mxu0 0.0
      %2804 = vmatmul.mubr.f32.gmra.mrb[0].mxu0 %v2553
      %v2805 = vpop.f32.mrb[0].mxu0
      %v2806 = vadd.f32 0.0, %v2805
      %v2807 = vpop.f32.mrb[0].mxu0
      %2808 = vmatprep.mubr.f32.mxu0 0.0
      %2809 = vmatmul.mubr.f32.gmra.mrb[0].mxu0 %v2556
      %v2810 = vpop.f32.mrb[0].mxu0
      %v2811 = vpop.f32.mrb[0].mxu0
      %2812 = vmatprep.mubr.f32.mxu0 0.0
      %2813 = vmatmul.mubr.f32.gmra.mrb[0].mxu0 %v2559
      %v2814 = vpop.f32.mrb[0].mxu0
      %v2815 = vadd.f32 0.0, %v2814
      %v2816 = vpop.f32.mrb[0].mxu0
      %2817 = vmatprep.mubr.f32.mxu0 0.0
      %2818 = vmatmul.mubr.f32.gmra.mrb[0].mxu0 %v2562
      %v2819 = vpop.f32.mrb[0].mxu0
      %v2820 = vadd.f32 0.0, %v2819
      %v2821 = vpop.f32.mrb[0].mxu0
      %2822 = vmatprep.mubr.f32.mxu0 0.0
      %2823 = vmatmul.mubr.f32.gmra.mrb[0].mxu0 %v2565
      %v2824 = vpop.f32.mrb[0].mxu0
      %v2825 = vpop.f32.mrb[0].mxu0
      %2826 = vmatprep.mubr.f32.mxu0 0.0
      %2827 = vmatmul.mubr.f32.gmra.mrb[0].mxu0 %v2568
      %v2828 = vpop.f32.mrb[0].mxu0
      %v2829 = vadd.f32 0.0, %v2828
      %v2830 = vpop.f32.mrb[0].mxu0
      %2831 = vmatprep.mubr.f32.mxu0 0.0
      %2832 = vmatmul.mubr.f32.gmra.mrb[0].mxu0 %v2571
      %v2833 = vpop.f32.mrb[0].mxu0
      %v2834 = vadd.f32 0.0, %v2833
      %v2835 = vpop.f32.mrb[0].mxu0
      %2836 = vmatprep.mubr.f32.mxu0 0.0
      %2837 = vmatmul.mubr.f32.gmra.mrb[0].mxu0 %v2574
      %v2838 = vpop.f32.mrb[0].mxu0
      %v2839 = vpop.f32.mrb[0].mxu0
      %2840 = vmatprep.mubr.f32.mxu0 0.0
      %2841 = vmatmul.mubr.f32.gmra.mrb[0].mxu0 %v2577
      %v2842 = vpop.f32.mrb[0].mxu0
      %v2843 = vadd.f32 0.0, %v2842
      %v2844 = vpop.f32.mrb[0].mxu0
      %2845 = vmatprep.mubr.f32.mxu0 0.0
      %2846 = vmatmul.mubr.f32.gmra.mrb[0].mxu0 %v2580
      %v2847 = vpop.f32.mrb[0].mxu0
      %v2848 = vadd.f32 0.0, %v2847
      %v2849 = vpop.f32.mrb[0].mxu0
      %2850 = vmatprep.mubr.f32.mxu0 0.0
      %2851 = vmatmul.mubr.f32.gmra.mrb[0].mxu0 %v2583
      %v2852 = vpop.f32.mrb[0].mxu0
      %v2853 = vpop.f32.mrb[0].mxu0
      %2854 = vmatprep.mubr.f32.mxu0 0.0
      %2855 = vmatmul.mubr.f32.gmra.mrb[0].mxu0 %v2586
      %v2856 = vpop.f32.mrb[0].mxu0
      %v2857 = vadd.f32 0.0, %v2856
      %v2858 = vpop.f32.mrb[0].mxu0
      %2859 = vmatprep.mubr.f32.mxu0 0.0
      %2860 = vmatmul.mubr.f32.gmra.mrb[0].mxu0 %v2589
      %v2861 = vpop.f32.mrb[0].mxu0
      %v2862 = vadd.f32 0.0, %v2861
      %v2863 = vpop.f32.mrb[0].mxu0
      %2864 = vmatprep.mubr.f32.mxu0 0.0
      %2865 = vmatmul.mubr.f32.gmra.mrb[0].mxu0 %v2592
      %v2866 = vpop.f32.mrb[0].mxu0
      %v2867 = vpop.f32.mrb[0].mxu0
      %2868 = vmatprep.mubr.f32.mxu0 0.0
      %2869 = vmatmul.mubr.f32.gmra.mrb[0].mxu0 %v2595
      %v2870 = vpop.f32.mrb[0].mxu0
      %v2871 = vadd.f32 0.0, %v2870
      %v2872 = vpop.f32.mrb[0].mxu0
      %2873 = vmatprep.mubr.f32.mxu0 0.0
      %2874 = vmatmul.mubr.f32.gmra.mrb[0].mxu0 %v2598
      %v2875 = vpop.f32.mrb[0].mxu0
      %v2876 = vadd.f32 0.0, %v2875
      %v2877 = vpop.f32.mrb[0].mxu0
      %2878 = vmatprep.mubr.f32.mxu0 0.0
      %2879 = vmatmul.mubr.f32.gmra.mrb[0].mxu0 %v2601
      %v2880 = vpop.f32.mrb[0].mxu0
      %v2881 = vpop.f32.mrb[0].mxu0
      %2882 = vmatprep.mubr.f32.mxu0 0.0
      %2883 = vmatmul.mubr.f32.gmra.mrb[0].mxu0 %v2604
      %v2884 = vpop.f32.mrb[0].mxu0
      %v2885 = vadd.f32 0.0, %v2884
      %v2886 = vpop.f32.mrb[0].mxu0
      %2887 = vmatprep.mubr.f32.mxu0 0.0
      %2888 = vmatmul.mubr.f32.gmra.mrb[0].mxu0 %v2607
      %v2889 = vpop.f32.mrb[0].mxu0
      %v2890 = vadd.f32 0.0, %v2889
      %v2891 = vpop.f32.mrb[0].mxu0
      %2892 = vmatprep.mubr.f32.mxu0 0.0
      %2893 = vmatmul.mubr.f32.gmra.mrb[0].mxu0 %v2610
      %v2894 = vpop.f32.mrb[0].mxu0
      %v2895 = vpop.f32.mrb[0].mxu0
      %2896 = vmatprep.mubr.f32.mxu0 0.0
      %2897 = vmatmul.mubr.f32.gmra.mrb[0].mxu0 %v2613
      %v2898 = vpop.f32.mrb[0].mxu0
      %v2899 = vadd.f32 0.0, %v2898
      %v2900 = vpop.f32.mrb[0].mxu0
      %2901 = vmatprep.mubr.f32.mxu0 0.0
      %2902 = vmatmul.mubr.f32.gmra.mrb[0].mxu0 %v2616
      %v2903 = vpop.f32.mrb[0].mxu0
      %v2904 = vadd.f32 0.0, %v2903
      %v2905 = vpop.f32.mrb[0].mxu0
      %2906 = vmatprep.mubr.f32.mxu0 0.0
      %2907 = vmatmul.mubr.f32.gmra.mrb[0].mxu0 %v2619
      %v2908 = vpop.f32.mrb[0].mxu0
      %v2909 = vpop.f32.mrb[0].mxu0
      %2910 = vmatprep.mubr.f32.mxu0 0.0
      %2911 = vmatmul.mubr.f32.gmra.mrb[0].mxu0 %v2622
      %v2912 = vpop.f32.mrb[0].mxu0
      %v2913 = vadd.f32 0.0, %v2912
      %v2914 = vpop.f32.mrb[0].mxu0
      %2915 = vmatprep.mubr.f32.mxu0 0.0
      %2916 = vmatmul.mubr.f32.gmra.mrb[0].mxu0 %v2625
      %v2917 = vpop.f32.mrb[0].mxu0
      %v2918 = vadd.f32 0.0, %v2917
      %v2919 = vpop.f32.mrb[0].mxu0
      %2920 = vmatprep.mubr.f32.mxu0 0.0
      %2921 = vmatmul.mubr.f32.gmra.mrb[0].mxu0 %v2628
      %v2922 = vpop.f32.mrb[0].mxu0
      %v2923 = vpop.f32.mrb[0].mxu0
      %2924 = vmatprep.mubr.f32.mxu0 0.0
      %2925 = vmatmul.mubr.f32.gmra.mrb[0].mxu0 %v2631
      %v2926 = vpop.f32.mrb[0].mxu0
      %v2927 = vadd.f32 0.0, %v2926
      %v2928 = vpop.f32.mrb[0].mxu0
      %2929 = vmatprep.mubr.f32.mxu0 0.0
      %2930 = vmatmul.mubr.f32.gmra.mrb[0].mxu0 %v2634
      %v2931 = vpop.f32.mrb[0].mxu0
      %v2932 = vadd.f32 0.0, %v2931
      %v2933 = vpop.f32.mrb[0].mxu0
      %2934 = vmatprep.mubr.f32.mxu0 0.0
      %2935 = vmatmul.mubr.f32.gmra.mrb[0].mxu0 %v2637
      %v2936 = vpop.f32.mrb[0].mxu0
      %v2937 = vpop.f32.mrb[0].mxu0
      %2938 = vmatprep.mubr.f32.mxu0 0.0
      %2939 = vmatmul.mubr.f32.gmra.mrb[0].mxu0 %v2640
      %v2940 = vpop.f32.mrb[0].mxu0
      %v2941 = vadd.f32 0.0, %v2940
      %v2942 = vpop.f32.mrb[0].mxu0
      %2943 = vmatprep.mubr.f32.mxu0 0.0
      %2944 = vmatmul.mubr.f32.gmra.mrb[0].mxu0 %v2643
      %v2945 = vpop.f32.mrb[0].mxu0
      %v2946 = vadd.f32 0.0, %v2945
      %v2947 = vpop.f32.mrb[0].mxu0
      %2948 = vmatprep.mubr.f32.mxu0 0.0
      %2949 = vmatmul.mubr.f32.gmra.mrb[0].mxu0 %v2646
      %v2950 = vpop.f32.mrb[0].mxu0
      %v2951 = vpop.f32.mrb[0].mxu0
      %2952 = vmatprep.mubr.f32.mxu0 0.0
      %2953 = vmatmul.mubr.f32.gmra.mrb[0].mxu0 %v2649
      %v2954 = vpop.f32.mrb[0].mxu0
      %v2955 = vadd.f32 0.0, %v2954
      %v2956 = vpop.f32.mrb[0].mxu0
      %2957 = vmatprep.mubr.f32.mxu0 0.0
      %2958 = vmatmul.mubr.f32.gmra.mrb[0].mxu0 %v2652
      %v2959 = vpop.f32.mrb[0].mxu0
      %v2960 = vadd.f32 0.0, %v2959
      %v2961 = vpop.f32.mrb[0].mxu0
      %2962 = vmatprep.mubr.f32.mxu0 0.0
      %2963 = vmatmul.mubr.f32.gmra.mrb[0].mxu0 %v2655
      %v2964 = vpop.f32.mrb[0].mxu0
      %v2965 = vpop.f32.mrb[0].mxu0
      %2966 = vmatprep.mubr.f32.mxu0 0.0
      %2967 = vmatmul.mubr.f32.gmra.mrb[0].mxu0 %v2658
      %v2968 = vpop.f32.mrb[0].mxu0
      %v2969 = vpop.f32.mrb[0].mxu0
      %2970 = vmatprep.mubr.f32.mxu0 0.0
      %2971 = vmatmul.mubr.f32.gmra.mrb[0].mxu0 %v2661
      %v2972 = vpop.f32.mrb[0].mxu0
      %v2973 = vpop.f32.mrb[0].mxu0
      %2974 = vmatprep.mubr.f32.mxu0 0.0
      %2975 = vmatmul.mubr.f32.gmra.mrb[0].mxu0 %v2664
      %v2976 = vpop.f32.mrb[0].mxu0
      %v2977 = vpop.f32.mrb[0].mxu0
      %2978 = vdwg.mxu0
      %v2979 = vld [vmem:[#allocation2] sm:$0xff]
      %v2980 = vld [vmem:[#allocation2 + $0x8] sm:$0xff]
      %v2981 = vld [vmem:[#allocation2 + $0x10] sm:$0xff]
      %v2982 = vld [vmem:[#allocation2 + $0x18] sm:$0xff]
      %v2983 = vld [vmem:[#allocation2 + $0x20] sm:$0xff]
      %v2984 = vld [vmem:[#allocation2 + $0x28] sm:$0xff]
      %v2985 = vld [vmem:[#allocation2 + $0x30] sm:$0xff]
      %v2986 = vld [vmem:[#allocation2 + $0x38] sm:$0xff]
      %v2987 = vld [vmem:[#allocation2 + $0x40] sm:$0xff]
      %v2988 = vld [vmem:[#allocation2 + $0x48] sm:$0xff]
      %v2989 = vld [vmem:[#allocation2 + $0x50] sm:$0xff]
      %v2990 = vld [vmem:[#allocation2 + $0x58] sm:$0xff]
      %v2991 = vld [vmem:[#allocation2 + $0x60] sm:$0xff]
      %v2992 = vld [vmem:[#allocation2 + $0x68] sm:$0xff]
      %v2993 = vld [vmem:[#allocation2 + $0x70] sm:$0xff]
      %v2994 = vld [vmem:[#allocation2 + $0x78] sm:$0xff]
      %v2995 = vld [vmem:[#allocation2 + $0x80] sm:$0xff]
      %v2996 = vld [vmem:[#allocation2 + $0x88] sm:$0xff]
      %v2997 = vld [vmem:[#allocation2 + $0x90] sm:$0xff]
      %v2998 = vld [vmem:[#allocation2 + $0x98] sm:$0xff]
      %v2999 = vld [vmem:[#allocation2 + $0xa0] sm:$0xff]
      %v3000 = vld [vmem:[#allocation2 + $0xa8] sm:$0xff]
      %v3001 = vld [vmem:[#allocation2 + $0xb0] sm:$0xff]
      %v3002 = vld [vmem:[#allocation2 + $0xb8] sm:$0xff]
      %v3003 = vld [vmem:[#allocation2 + $0xc0] sm:$0xff]
      %v3004 = vld [vmem:[#allocation2 + $0xc8] sm:$0xff]
      %v3005 = vld [vmem:[#allocation2 + $0xd0] sm:$0xff]
      %v3006 = vld [vmem:[#allocation2 + $0xd8] sm:$0xff]
      %v3007 = vld [vmem:[#allocation2 + $0xe0] sm:$0xff]
      %v3008 = vld [vmem:[#allocation2 + $0xe8] sm:$0xff]
      %v3009 = vld [vmem:[#allocation2 + $0xf0] sm:$0xff]
      %v3010 = vld [vmem:[#allocation2 + $0xf8] sm:$0xff]
      %v3011 = vadd.f32 %v2979, %v2745
      %v3012 = vadd.f32 %v2980, %v2750
      %v3013 = vadd.f32 %v2981, %v2759
      %v3014 = vadd.f32 %v2982, %v2764
      %v3015 = vadd.f32 %v2983, %v2773
      %v3016 = vadd.f32 %v2984, %v2778
      %v3017 = vadd.f32 %v2985, %v2787
      %v3018 = vadd.f32 %v2986, %v2792
      %v3019 = vadd.f32 %v2987, %v2801
      %v3020 = vadd.f32 %v2988, %v2806
      %v3021 = vadd.f32 %v2989, %v2815
      %v3022 = vadd.f32 %v2990, %v2820
      %v3023 = vadd.f32 %v2991, %v2829
      %v3024 = vadd.f32 %v2992, %v2834
      %v3025 = vadd.f32 %v2993, %v2843
      %v3026 = vadd.f32 %v2994, %v2848
      %v3027 = vadd.f32 %v2995, %v2857
      %v3028 = vadd.f32 %v2996, %v2862
      %v3029 = vadd.f32 %v2997, %v2871
      %v3030 = vadd.f32 %v2998, %v2876
      %v3031 = vadd.f32 %v2999, %v2885
      %v3032 = vadd.f32 %v3000, %v2890
      %v3033 = vadd.f32 %v3001, %v2899
      %v3034 = vadd.f32 %v3002, %v2904
      %v3035 = vadd.f32 %v3003, %v2913
      %v3036 = vadd.f32 %v3004, %v2918
      %v3037 = vadd.f32 %v3005, %v2927
      %v3038 = vadd.f32 %v3006, %v2932
      %v3039 = vadd.f32 %v3007, %v2941
      %v3040 = vadd.f32 %v3008, %v2946
      %v3041 = vadd.f32 %v3009, %v2955
      %v3042 = vadd.f32 %v3010, %v2960
      %3043 = vst [vmem:[#allocation2] sm:$0xff] %v3011
      %3044 = vst [vmem:[#allocation2 + $0x8] sm:$0xff] %v3012
      %3045 = vst [vmem:[#allocation2 + $0x10] sm:$0xff] %v3013
      %3046 = vst [vmem:[#allocation2 + $0x18] sm:$0xff] %v3014
      %3047 = vst [vmem:[#allocation2 + $0x20] sm:$0xff] %v3015
      %3048 = vst [vmem:[#allocation2 + $0x28] sm:$0xff] %v3016
      %3049 = vst [vmem:[#allocation2 + $0x30] sm:$0xff] %v3017
      %3050 = vst [vmem:[#allocation2 + $0x38] sm:$0xff] %v3018
      %3051 = vst [vmem:[#allocation2 + $0x40] sm:$0xff] %v3019
      %3052 = vst [vmem:[#allocation2 + $0x48] sm:$0xff] %v3020
      %3053 = vst [vmem:[#allocation2 + $0x50] sm:$0xff] %v3021
      %3054 = vst [vmem:[#allocation2 + $0x58] sm:$0xff] %v3022
      %3055 = vst [vmem:[#allocation2 + $0x60] sm:$0xff] %v3023
      %3056 = vst [vmem:[#allocation2 + $0x68] sm:$0xff] %v3024
      %3057 = vst [vmem:[#allocation2 + $0x70] sm:$0xff] %v3025
      %3058 = vst [vmem:[#allocation2 + $0x78] sm:$0xff] %v3026
      %3059 = vst [vmem:[#allocation2 + $0x80] sm:$0xff] %v3027
      %3060 = vst [vmem:[#allocation2 + $0x88] sm:$0xff] %v3028
      %3061 = vst [vmem:[#allocation2 + $0x90] sm:$0xff] %v3029
      %3062 = vst [vmem:[#allocation2 + $0x98] sm:$0xff] %v3030
      %3063 = vst [vmem:[#allocation2 + $0xa0] sm:$0xff] %v3031
      %3064 = vst [vmem:[#allocation2 + $0xa8] sm:$0xff] %v3032
      %3065 = vst [vmem:[#allocation2 + $0xb0] sm:$0xff] %v3033
      %3066 = vst [vmem:[#allocation2 + $0xb8] sm:$0xff] %v3034
      %3067 = vst [vmem:[#allocation2 + $0xc0] sm:$0xff] %v3035
      %3068 = vst [vmem:[#allocation2 + $0xc8] sm:$0xff] %v3036
      %3069 = vst [vmem:[#allocation2 + $0xd0] sm:$0xff] %v3037
      %3070 = vst [vmem:[#allocation2 + $0xd8] sm:$0xff] %v3038
      %3071 = vst [vmem:[#allocation2 + $0xe0] sm:$0xff] %v3039
      %3072 = vst [vmem:[#allocation2 + $0xe8] sm:$0xff] %v3040
      %3073 = vst [vmem:[#allocation2 + $0xf0] sm:$0xff] %v3041
      %3074 = vst [vmem:[#allocation2 + $0xf8] sm:$0xff] %v3042
      %v3075 = vld [vmem:[%s168] sm:$0xff]
      %v3076 = vld [vmem:[%s168 + $0x8] sm:$0xff]
      %v3077 = vld [vmem:[%s168 + $0x10] sm:$0xff]
      %v3078 = vld [vmem:[%s168 + $0x18] sm:$0xff]
      %v3079 = vld [vmem:[%s168 + $0x20] sm:$0xff]
      %v3080 = vld [vmem:[%s168 + $0x28] sm:$0xff]
      %v3081 = vld [vmem:[%s168 + $0x30] sm:$0xff]
      %v3082 = vld [vmem:[%s168 + $0x38] sm:$0xff]
      %v3083 = vld [vmem:[%s168 + $0x40] sm:$0xff]
      %v3084 = vld [vmem:[%s168 + $0x48] sm:$0xff]
      %v3085 = vld [vmem:[%s168 + $0x50] sm:$0xff]
      %v3086 = vld [vmem:[%s168 + $0x58] sm:$0xff]
      %v3087 = vld [vmem:[%s168 + $0x60] sm:$0xff]
      %v3088 = vld [vmem:[%s168 + $0x68] sm:$0xff]
      %v3089 = vld [vmem:[%s168 + $0x70] sm:$0xff]
      %v3090 = vld [vmem:[%s168 + $0x78] sm:$0xff]
      %v3091 = vld [vmem:[%s168 + $0x80] sm:$0xff]
      %v3092 = vld [vmem:[%s168 + $0x88] sm:$0xff]
      %v3093 = vld [vmem:[%s168 + $0x90] sm:$0xff]
      %v3094 = vld [vmem:[%s168 + $0x98] sm:$0xff]
      %v3095 = vld [vmem:[%s168 + $0xa0] sm:$0xff]
      %v3096 = vld [vmem:[%s168 + $0xa8] sm:$0xff]
      %v3097 = vld [vmem:[%s168 + $0xb0] sm:$0xff]
      %v3098 = vld [vmem:[%s168 + $0xb8] sm:$0xff]
      %v3099 = vld [vmem:[%s168 + $0xc0] sm:$0xff]
      %v3100 = vld [vmem:[%s168 + $0xc8] sm:$0xff]
      %v3101 = vld [vmem:[%s168 + $0xd0] sm:$0xff]
      %v3102 = vld [vmem:[%s168 + $0xd8] sm:$0xff]
      %v3103 = vld [vmem:[%s168 + $0xe0] sm:$0xff]
      %v3104 = vld [vmem:[%s168 + $0xe8] sm:$0xff]
      %v3105 = vld [vmem:[%s168 + $0xf0] sm:$0xff]
      %v3106 = vld [vmem:[%s168 + $0xf8] sm:$0xff]
      %v3107 = vld [vmem:[%s168 + $0x100] sm:$0xff]
      %v3108 = vld [vmem:[%s168 + $0x108] sm:$0xff]
      %v3109 = vld [vmem:[%s168 + $0x110] sm:$0xff]
      %v3110 = vld [vmem:[%s168 + $0x118] sm:$0xff]
      %v3111 = vld [vmem:[%s168 + $0x120] sm:$0xff]
      %v3112 = vld [vmem:[%s168 + $0x128] sm:$0xff]
      %v3113 = vld [vmem:[%s168 + $0x130] sm:$0xff]
      %v3114 = vld [vmem:[%s168 + $0x138] sm:$0xff]
      %v3115 = vld [vmem:[%s168 + $0x140] sm:$0xff]
      %v3116 = vld [vmem:[%s168 + $0x148] sm:$0xff]
      %v3117 = vld [vmem:[%s168 + $0x150] sm:$0xff]
      %v3118 = vld [vmem:[%s168 + $0x158] sm:$0xff]
      %v3119 = vld [vmem:[%s168 + $0x160] sm:$0xff]
      %v3120 = vld [vmem:[%s168 + $0x168] sm:$0xff]
      %v3121 = vld [vmem:[%s168 + $0x170] sm:$0xff]
      %v3122 = vld [vmem:[%s168 + $0x178] sm:$0xff]
      %v3123 = vld [vmem:[%s168 + $0x180] sm:$0xff]
      %v3124 = vld [vmem:[%s168 + $0x188] sm:$0xff]
      %v3125 = vld [vmem:[%s168 + $0x190] sm:$0xff]
      %v3126 = vld [vmem:[%s168 + $0x198] sm:$0xff]
      %v3127 = vld [vmem:[%s168 + $0x1a0] sm:$0xff]
      %v3128 = vld [vmem:[%s168 + $0x1a8] sm:$0xff]
      %s3129 = scalar_lea.vmem %s172, 32
      %v3130 = vld [vmem:[%s3129] sm:$0xff]
      %v3132 = vsel %vm268, %v3075, 0
      %v3135 = vsel %vm268, %v3076, 0
      %v3138 = vsel %vm268, %v3077, 0
      %v3141 = vsel %vm268, %v3078, 0
      %v3144 = vsel %vm268, %v3079, 0
      %v3147 = vsel %vm268, %v3080, 0
      %v3150 = vsel %vm268, %v3081, 0
      %v3153 = vsel %vm268, %v3082, 0
      %v3156 = vsel %vm268, %v3083, 0
      %v3159 = vsel %vm268, %v3084, 0
      %v3162 = vsel %vm268, %v3085, 0
      %v3165 = vsel %vm268, %v3086, 0
      %v3168 = vsel %vm268, %v3087, 0
      %v3171 = vsel %vm268, %v3088, 0
      %v3174 = vsel %vm268, %v3089, 0
      %v3177 = vsel %vm268, %v3090, 0
      %v3180 = vsel %vm268, %v3091, 0
      %v3183 = vsel %vm268, %v3092, 0
      %v3186 = vsel %vm268, %v3093, 0
      %v3189 = vsel %vm268, %v3094, 0
      %v3192 = vsel %vm268, %v3095, 0
      %v3195 = vsel %vm268, %v3096, 0
      %v3198 = vsel %vm268, %v3097, 0
      %v3201 = vsel %vm268, %v3098, 0
      %v3204 = vsel %vm268, %v3099, 0
      %v3207 = vsel %vm268, %v3100, 0
      %v3210 = vsel %vm268, %v3101, 0
      %v3213 = vsel %vm268, %v3102, 0
      %v3216 = vsel %vm268, %v3103, 0
      %v3219 = vsel %vm268, %v3104, 0
      %v3222 = vsel %vm268, %v3105, 0
      %v3225 = vsel %vm268, %v3106, 0
      %v3228 = vsel %vm268, %v3107, 0
      %v3231 = vsel %vm268, %v3108, 0
      %v3234 = vsel %vm268, %v3109, 0
      %v3237 = vsel %vm268, %v3110, 0
      %v3240 = vsel %vm268, %v3111, 0
      %v3243 = vsel %vm268, %v3112, 0
      %v3246 = vsel %vm268, %v3113, 0
      %v3249 = vsel %vm268, %v3114, 0
      %v3252 = vsel %vm268, %v3115, 0
      %v3255 = vsel %vm268, %v3116, 0
      %v3258 = vsel %vm268, %v3117, 0
      %v3261 = vsel %vm268, %v3118, 0
      %v3264 = vsel %vm268, %v3119, 0
      %v3267 = vsel %vm268, %v3120, 0
      %v3270 = vsel %vm268, %v3121, 0
      %v3273 = vsel %vm268, %v3122, 0
      %v3276 = vsel %vm268, %v3123, 0
      %v3279 = vsel %vm268, %v3124, 0
      %v3282 = vsel %vm268, %v3125, 0
      %v3285 = vsel %vm268, %v3126, 0
      %v3288 = vsel %vm268, %v3127, 0
      %v3291 = vsel %vm268, %v3128, 0
      %3293 = vmatprep.subr.mxu0 0.0
      %3294 = vmatpush1.msra.mxu0 %v3130
      %3295 = vmatprep.subr.mxu0 0.0
      %3296 = vmatpush1.msra.mxu0 0.0
      %3297 = vmatprep.subr.mxu0 0.0
      %3298 = vmatpush1.msra.mxu0 0.0
      %3299 = vmatprep.subr.mxu0 0.0
      %3300 = vmatpush1.msra.mxu0 0.0
      %3301 = vmatprep.subr.mxu0 0.0
      %3302 = vmatpush1.msra.mxu0 0.0
      %3303 = vmatprep.subr.mxu0 0.0
      %3304 = vmatpush1.msra.mxu0 0.0
      %3305 = vmatprep.subr.mxu0 0.0
      %3306 = vmatpush1.msra.mxu0 0.0
      %3307 = vmatprep.subr.mxu0 0.0
      %3308 = vmatpush1.msra.mxu0 0.0
      %3309 = vmatprep.subr.mxu0 0.0
      %3310 = vmatpush1.msra.mxu0 0.0
      %3311 = vmatprep.subr.mxu0 0.0
      %3312 = vmatpush1.msra.mxu0 0.0
      %3313 = vmatprep.subr.mxu0 0.0
      %3314 = vmatpush1.msra.mxu0 0.0
      %3315 = vmatprep.subr.mxu0 0.0
      %3316 = vmatpush1.msra.mxu0 0.0
      %3317 = vmatprep.subr.mxu0 0.0
      %3318 = vmatpush1.msra.mxu0 0.0
      %3319 = vmatprep.subr.mxu0 0.0
      %3320 = vmatpush1.msra.mxu0 0.0
      %3321 = vmatprep.subr.mxu0 0.0
      %3322 = vmatpush1.msra.mxu0 0.0
      %3323 = vmatprep.subr.mxu0 0.0
      %3324 = vmatpush1.msra.mxu0 0.0
      %3325 = vmatprep.subr.mxu0 0.0
      %3326 = vmatpush1.msra.mxu0 0.0
      %3327 = vmatprep.subr.mxu0 0.0
      %3328 = vmatpush1.msra.mxu0 0.0
      %3329 = vmatprep.subr.mxu0 0.0
      %3330 = vmatpush1.msra.mxu0 0.0
      %3331 = vmatprep.subr.mxu0 0.0
      %3332 = vmatpush1.msra.mxu0 0.0
      %3333 = vmatprep.subr.mxu0 0.0
      %3334 = vmatpush1.msra.mxu0 0.0
      %3335 = vmatprep.subr.mxu0 0.0
      %3336 = vmatpush1.msra.mxu0 0.0
      %3337 = vmatprep.subr.mxu0 0.0
      %3338 = vmatpush1.msra.mxu0 0.0
      %3339 = vmatprep.subr.mxu0 0.0
      %3340 = vmatpush1.msra.mxu0 0.0
      %3341 = vmatprep.subr.mxu0 0.0
      %3342 = vmatpush1.msra.mxu0 0.0
      %3343 = vmatprep.subr.mxu0 0.0
      %3344 = vmatpush1.msra.mxu0 0.0
      %3345 = vmatprep.subr.mxu0 0.0
      %3346 = vmatpush1.msra.mxu0 0.0
      %3347 = vmatprep.subr.mxu0 0.0
      %3348 = vmatpush1.msra.mxu0 0.0
      %3349 = vmatprep.subr.mxu0 0.0
      %3350 = vmatpush1.msra.mxu0 0.0
      %3351 = vmatprep.subr.mxu0 0.0
      %3352 = vmatpush1.msra.mxu0 0.0
      %3353 = vmatprep.subr.mxu0 0.0
      %3354 = vmatpush1.msra.mxu0 0.0
      %3355 = vmatprep.subr.mxu0 0.0
      %3356 = vmatpush1.msra.mxu0 0.0
      %3357 = vmatprep.mubr.f32.mxu0 0.0
      %3358 = vmatmul.mubr.f32.gmra.mrb[0].mxu0 %v3132
      %v3359 = vpop.f32.mrb[0].mxu0
      %v3360 = vpop.f32.mrb[0].mxu0
      %3361 = vmatprep.mubr.f32.mxu0 0.0
      %3362 = vmatmul.mubr.f32.gmra.mrb[0].mxu0 %v3135
      %v3363 = vpop.f32.mrb[0].mxu0
      %v3364 = vpop.f32.mrb[0].mxu0
      %3365 = vmatprep.mubr.f32.mxu0 0.0
      %3366 = vmatmul.mubr.f32.gmra.mrb[0].mxu0 %v3138
      %v3367 = vpop.f32.mrb[0].mxu0
      %v3368 = vpop.f32.mrb[0].mxu0
      %3369 = vmatprep.mubr.f32.mxu0 0.0
      %3370 = vmatmul.mubr.f32.gmra.mrb[0].mxu0 %v3141
      %v3371 = vpop.f32.mrb[0].mxu0
      %v3372 = vadd.f32 0.0, %v3371
      %v3373 = vpop.f32.mrb[0].mxu0
      %3374 = vmatprep.mubr.f32.mxu0 0.0
      %3375 = vmatmul.mubr.f32.gmra.mrb[0].mxu0 %v3144
      %v3376 = vpop.f32.mrb[0].mxu0
      %v3377 = vadd.f32 0.0, %v3376
      %v3378 = vpop.f32.mrb[0].mxu0
      %3379 = vmatprep.mubr.f32.mxu0 0.0
      %3380 = vmatmul.mubr.f32.gmra.mrb[0].mxu0 %v3147
      %v3381 = vpop.f32.mrb[0].mxu0
      %v3382 = vadd.f32 0.0, %v3381
      %v3383 = vpop.f32.mrb[0].mxu0
      %3384 = vmatprep.mubr.f32.mxu0 0.0
      %3385 = vmatmul.mubr.f32.gmra.mrb[0].mxu0 %v3150
      %v3386 = vpop.f32.mrb[0].mxu0
      %v3387 = vadd.f32 0.0, %v3386
      %v3388 = vpop.f32.mrb[0].mxu0
      %3389 = vmatprep.mubr.f32.mxu0 0.0
      %3390 = vmatmul.mubr.f32.gmra.mrb[0].mxu0 %v3153
      %v3391 = vpop.f32.mrb[0].mxu0
      %v3392 = vadd.f32 0.0, %v3391
      %v3393 = vpop.f32.mrb[0].mxu0
      %3394 = vmatprep.mubr.f32.mxu0 0.0
      %3395 = vmatmul.mubr.f32.gmra.mrb[0].mxu0 %v3156
      %v3396 = vpop.f32.mrb[0].mxu0
      %v3397 = vadd.f32 0.0, %v3396
      %v3398 = vpop.f32.mrb[0].mxu0
      %3399 = vmatprep.mubr.f32.mxu0 0.0
      %3400 = vmatmul.mubr.f32.gmra.mrb[0].mxu0 %v3159
      %v3401 = vpop.f32.mrb[0].mxu0
      %v3402 = vadd.f32 0.0, %v3401
      %v3403 = vpop.f32.mrb[0].mxu0
      %3404 = vmatprep.mubr.f32.mxu0 0.0
      %3405 = vmatmul.mubr.f32.gmra.mrb[0].mxu0 %v3162
      %v3406 = vpop.f32.mrb[0].mxu0
      %v3407 = vadd.f32 0.0, %v3406
      %v3408 = vpop.f32.mrb[0].mxu0
      %3409 = vmatprep.mubr.f32.mxu0 0.0
      %3410 = vmatmul.mubr.f32.gmra.mrb[0].mxu0 %v3165
      %v3411 = vpop.f32.mrb[0].mxu0
      %v3412 = vadd.f32 0.0, %v3411
      %v3413 = vpop.f32.mrb[0].mxu0
      %3414 = vmatprep.mubr.f32.mxu0 0.0
      %3415 = vmatmul.mubr.f32.gmra.mrb[0].mxu0 %v3168
      %v3416 = vpop.f32.mrb[0].mxu0
      %v3417 = vadd.f32 0.0, %v3416
      %v3418 = vpop.f32.mrb[0].mxu0
      %3419 = vmatprep.mubr.f32.mxu0 0.0
      %3420 = vmatmul.mubr.f32.gmra.mrb[0].mxu0 %v3171
      %v3421 = vpop.f32.mrb[0].mxu0
      %v3422 = vadd.f32 0.0, %v3421
      %v3423 = vpop.f32.mrb[0].mxu0
      %3424 = vmatprep.mubr.f32.mxu0 0.0
      %3425 = vmatmul.mubr.f32.gmra.mrb[0].mxu0 %v3174
      %v3426 = vpop.f32.mrb[0].mxu0
      %v3427 = vadd.f32 0.0, %v3426
      %v3428 = vpop.f32.mrb[0].mxu0
      %3429 = vmatprep.mubr.f32.mxu0 0.0
      %3430 = vmatmul.mubr.f32.gmra.mrb[0].mxu0 %v3177
      %v3431 = vpop.f32.mrb[0].mxu0
      %v3432 = vadd.f32 0.0, %v3431
      %v3433 = vpop.f32.mrb[0].mxu0
      %3434 = vmatprep.mubr.f32.mxu0 0.0
      %3435 = vmatmul.mubr.f32.gmra.mrb[0].mxu0 %v3180
      %v3436 = vpop.f32.mrb[0].mxu0
      %v3437 = vadd.f32 0.0, %v3436
      %v3438 = vpop.f32.mrb[0].mxu0
      %3439 = vmatprep.mubr.f32.mxu0 0.0
      %3440 = vmatmul.mubr.f32.gmra.mrb[0].mxu0 %v3183
      %v3441 = vpop.f32.mrb[0].mxu0
      %v3442 = vadd.f32 0.0, %v3441
      %v3443 = vpop.f32.mrb[0].mxu0
      %3444 = vmatprep.mubr.f32.mxu0 0.0
      %3445 = vmatmul.mubr.f32.gmra.mrb[0].mxu0 %v3186
      %v3446 = vpop.f32.mrb[0].mxu0
      %v3447 = vadd.f32 0.0, %v3446
      %v3448 = vpop.f32.mrb[0].mxu0
      %3449 = vmatprep.mubr.f32.mxu0 0.0
      %3450 = vmatmul.mubr.f32.gmra.mrb[0].mxu0 %v3189
      %v3451 = vpop.f32.mrb[0].mxu0
      %v3452 = vadd.f32 0.0, %v3451
      %v3453 = vpop.f32.mrb[0].mxu0
      %3454 = vmatprep.mubr.f32.mxu0 0.0
      %3455 = vmatmul.mubr.f32.gmra.mrb[0].mxu0 %v3192
      %v3456 = vpop.f32.mrb[0].mxu0
      %v3457 = vadd.f32 0.0, %v3456
      %v3458 = vpop.f32.mrb[0].mxu0
      %3459 = vmatprep.mubr.f32.mxu0 0.0
      %3460 = vmatmul.mubr.f32.gmra.mrb[0].mxu0 %v3195
      %v3461 = vpop.f32.mrb[0].mxu0
      %v3462 = vadd.f32 0.0, %v3461
      %v3463 = vpop.f32.mrb[0].mxu0
      %3464 = vmatprep.mubr.f32.mxu0 0.0
      %3465 = vmatmul.mubr.f32.gmra.mrb[0].mxu0 %v3198
      %v3466 = vpop.f32.mrb[0].mxu0
      %v3467 = vadd.f32 0.0, %v3466
      %v3468 = vpop.f32.mrb[0].mxu0
      %3469 = vmatprep.mubr.f32.mxu0 0.0
      %3470 = vmatmul.mubr.f32.gmra.mrb[0].mxu0 %v3201
      %v3471 = vpop.f32.mrb[0].mxu0
      %v3472 = vadd.f32 0.0, %v3471
      %v3473 = vpop.f32.mrb[0].mxu0
      %3474 = vmatprep.mubr.f32.mxu0 0.0
      %3475 = vmatmul.mubr.f32.gmra.mrb[0].mxu0 %v3204
      %v3476 = vpop.f32.mrb[0].mxu0
      %v3477 = vadd.f32 0.0, %v3476
      %v3478 = vpop.f32.mrb[0].mxu0
      %3479 = vmatprep.mubr.f32.mxu0 0.0
      %3480 = vmatmul.mubr.f32.gmra.mrb[0].mxu0 %v3207
      %v3481 = vpop.f32.mrb[0].mxu0
      %v3482 = vadd.f32 0.0, %v3481
      %v3483 = vpop.f32.mrb[0].mxu0
      %3484 = vmatprep.mubr.f32.mxu0 0.0
      %3485 = vmatmul.mubr.f32.gmra.mrb[0].mxu0 %v3210
      %v3486 = vpop.f32.mrb[0].mxu0
      %v3487 = vadd.f32 0.0, %v3486
      %v3488 = vpop.f32.mrb[0].mxu0
      %3489 = vmatprep.mubr.f32.mxu0 0.0
      %3490 = vmatmul.mubr.f32.gmra.mrb[0].mxu0 %v3213
      %v3491 = vpop.f32.mrb[0].mxu0
      %v3492 = vadd.f32 0.0, %v3491
      %v3493 = vpop.f32.mrb[0].mxu0
      %3494 = vmatprep.mubr.f32.mxu0 0.0
      %3495 = vmatmul.mubr.f32.gmra.mrb[0].mxu0 %v3216
      %v3496 = vpop.f32.mrb[0].mxu0
      %v3497 = vadd.f32 0.0, %v3496
      %v3498 = vpop.f32.mrb[0].mxu0
      %3499 = vmatprep.mubr.f32.mxu0 0.0
      %3500 = vmatmul.mubr.f32.gmra.mrb[0].mxu0 %v3219
      %v3501 = vpop.f32.mrb[0].mxu0
      %v3502 = vadd.f32 0.0, %v3501
      %v3503 = vpop.f32.mrb[0].mxu0
      %3504 = vmatprep.mubr.f32.mxu0 0.0
      %3505 = vmatmul.mubr.f32.gmra.mrb[0].mxu0 %v3222
      %v3506 = vpop.f32.mrb[0].mxu0
      %v3507 = vadd.f32 0.0, %v3506
      %v3508 = vpop.f32.mrb[0].mxu0
      %3509 = vmatprep.mubr.f32.mxu0 0.0
      %3510 = vmatmul.mubr.f32.gmra.mrb[0].mxu0 %v3225
      %v3511 = vpop.f32.mrb[0].mxu0
      %v3512 = vadd.f32 0.0, %v3511
      %v3513 = vpop.f32.mrb[0].mxu0
      %3514 = vmatprep.mubr.f32.mxu0 0.0
      %3515 = vmatmul.mubr.f32.gmra.mrb[0].mxu0 %v3228
      %v3516 = vpop.f32.mrb[0].mxu0
      %v3517 = vadd.f32 0.0, %v3516
      %v3518 = vpop.f32.mrb[0].mxu0
      %3519 = vmatprep.mubr.f32.mxu0 0.0
      %3520 = vmatmul.mubr.f32.gmra.mrb[0].mxu0 %v3231
      %v3521 = vpop.f32.mrb[0].mxu0
      %v3522 = vadd.f32 0.0, %v3521
      %v3523 = vpop.f32.mrb[0].mxu0
      %3524 = vmatprep.mubr.f32.mxu0 0.0
      %3525 = vmatmul.mubr.f32.gmra.mrb[0].mxu0 %v3234
      %v3526 = vpop.f32.mrb[0].mxu0
      %v3527 = vadd.f32 0.0, %v3526
      %v3528 = vpop.f32.mrb[0].mxu0
      %3529 = vmatprep.mubr.f32.mxu0 0.0
      %3530 = vmatmul.mubr.f32.gmra.mrb[0].mxu0 %v3237
      %v3531 = vpop.f32.mrb[0].mxu0
      %v3532 = vadd.f32 0.0, %v3531
      %v3533 = vpop.f32.mrb[0].mxu0
      %3534 = vmatprep.mubr.f32.mxu0 0.0
      %3535 = vmatmul.mubr.f32.gmra.mrb[0].mxu0 %v3240
      %v3536 = vpop.f32.mrb[0].mxu0
      %v3537 = vadd.f32 0.0, %v3536
      %v3538 = vpop.f32.mrb[0].mxu0
      %3539 = vmatprep.mubr.f32.mxu0 0.0
      %3540 = vmatmul.mubr.f32.gmra.mrb[0].mxu0 %v3243
      %v3541 = vpop.f32.mrb[0].mxu0
      %v3542 = vadd.f32 0.0, %v3541
      %v3543 = vpop.f32.mrb[0].mxu0
      %3544 = vmatprep.mubr.f32.mxu0 0.0
      %3545 = vmatmul.mubr.f32.gmra.mrb[0].mxu0 %v3246
      %v3546 = vpop.f32.mrb[0].mxu0
      %v3547 = vadd.f32 0.0, %v3546
      %v3548 = vpop.f32.mrb[0].mxu0
      %3549 = vmatprep.mubr.f32.mxu0 0.0
      %3550 = vmatmul.mubr.f32.gmra.mrb[0].mxu0 %v3249
      %v3551 = vpop.f32.mrb[0].mxu0
      %v3552 = vadd.f32 0.0, %v3551
      %v3553 = vpop.f32.mrb[0].mxu0
      %3554 = vmatprep.mubr.f32.mxu0 0.0
      %3555 = vmatmul.mubr.f32.gmra.mrb[0].mxu0 %v3252
      %v3556 = vpop.f32.mrb[0].mxu0
      %v3557 = vadd.f32 0.0, %v3556
      %v3558 = vpop.f32.mrb[0].mxu0
      %3559 = vmatprep.mubr.f32.mxu0 0.0
      %3560 = vmatmul.mubr.f32.gmra.mrb[0].mxu0 %v3255
      %v3561 = vpop.f32.mrb[0].mxu0
      %v3562 = vadd.f32 0.0, %v3561
      %v3563 = vpop.f32.mrb[0].mxu0
      %3564 = vmatprep.mubr.f32.mxu0 0.0
      %3565 = vmatmul.mubr.f32.gmra.mrb[0].mxu0 %v3258
      %v3566 = vpop.f32.mrb[0].mxu0
      %v3567 = vadd.f32 0.0, %v3566
      %v3568 = vpop.f32.mrb[0].mxu0
      %3569 = vmatprep.mubr.f32.mxu0 0.0
      %3570 = vmatmul.mubr.f32.gmra.mrb[0].mxu0 %v3261
      %v3571 = vpop.f32.mrb[0].mxu0
      %v3572 = vadd.f32 0.0, %v3571
      %v3573 = vpop.f32.mrb[0].mxu0
      %3574 = vmatprep.mubr.f32.mxu0 0.0
      %3575 = vmatmul.mubr.f32.gmra.mrb[0].mxu0 %v3264
      %v3576 = vpop.f32.mrb[0].mxu0
      %v3577 = vadd.f32 0.0, %v3576
      %v3578 = vpop.f32.mrb[0].mxu0
      %3579 = vmatprep.mubr.f32.mxu0 0.0
      %3580 = vmatmul.mubr.f32.gmra.mrb[0].mxu0 %v3267
      %v3581 = vpop.f32.mrb[0].mxu0
      %v3582 = vadd.f32 0.0, %v3581
      %v3583 = vpop.f32.mrb[0].mxu0
      %3584 = vmatprep.mubr.f32.mxu0 0.0
      %3585 = vmatmul.mubr.f32.gmra.mrb[0].mxu0 %v3270
      %v3586 = vpop.f32.mrb[0].mxu0
      %v3587 = vadd.f32 0.0, %v3586
      %v3588 = vpop.f32.mrb[0].mxu0
      %3589 = vmatprep.mubr.f32.mxu0 0.0
      %3590 = vmatmul.mubr.f32.gmra.mrb[0].mxu0 %v3273
      %v3591 = vpop.f32.mrb[0].mxu0
      %v3592 = vadd.f32 0.0, %v3591
      %v3593 = vpop.f32.mrb[0].mxu0
      %3594 = vmatprep.mubr.f32.mxu0 0.0
      %3595 = vmatmul.mubr.f32.gmra.mrb[0].mxu0 %v3276
      %v3596 = vpop.f32.mrb[0].mxu0
      %v3597 = vadd.f32 0.0, %v3596
      %v3598 = vpop.f32.mrb[0].mxu0
      %3599 = vmatprep.mubr.f32.mxu0 0.0
      %3600 = vmatmul.mubr.f32.gmra.mrb[0].mxu0 %v3279
      %v3601 = vpop.f32.mrb[0].mxu0
      %v3602 = vadd.f32 0.0, %v3601
      %v3603 = vpop.f32.mrb[0].mxu0
      %3604 = vmatprep.mubr.f32.mxu0 0.0
      %3605 = vmatmul.mubr.f32.gmra.mrb[0].mxu0 %v3282
      %v3606 = vpop.f32.mrb[0].mxu0
      %v3607 = vadd.f32 0.0, %v3606
      %v3608 = vpop.f32.mrb[0].mxu0
      %3609 = vmatprep.mubr.f32.mxu0 0.0
      %3610 = vmatmul.mubr.f32.gmra.mrb[0].mxu0 %v3285
      %v3611 = vpop.f32.mrb[0].mxu0
      %v3612 = vpop.f32.mrb[0].mxu0
      %3613 = vmatprep.mubr.f32.mxu0 0.0
      %3614 = vmatmul.mubr.f32.gmra.mrb[0].mxu0 %v3288
      %v3615 = vpop.f32.mrb[0].mxu0
      %v3616 = vpop.f32.mrb[0].mxu0
      %3617 = vmatprep.mubr.f32.mxu0 0.0
      %3618 = vmatmul.mubr.f32.gmra.mrb[0].mxu0 %v3291
      %v3619 = vpop.f32.mrb[0].mxu0
      %v3620 = vpop.f32.mrb[0].mxu0
      %3621 = vdwg.mxu0
      %v3622 = vld [vmem:[#allocation2] sm:$0xff]
      %v3623 = vld [vmem:[#allocation2 + $0x8] sm:$0xff]
      %v3624 = vld [vmem:[#allocation2 + $0x10] sm:$0xff]
      %v3625 = vld [vmem:[#allocation2 + $0x18] sm:$0xff]
      %v3626 = vld [vmem:[#allocation2 + $0x20] sm:$0xff]
      %v3627 = vld [vmem:[#allocation2 + $0x28] sm:$0xff]
      %v3628 = vld [vmem:[#allocation2 + $0x30] sm:$0xff]
      %v3629 = vld [vmem:[#allocation2 + $0x38] sm:$0xff]
      %v3630 = vld [vmem:[#allocation2 + $0x40] sm:$0xff]
      %v3631 = vld [vmem:[#allocation2 + $0x48] sm:$0xff]
      %v3632 = vld [vmem:[#allocation2 + $0x50] sm:$0xff]
      %v3633 = vld [vmem:[#allocation2 + $0x58] sm:$0xff]
      %v3634 = vld [vmem:[#allocation2 + $0x60] sm:$0xff]
      %v3635 = vld [vmem:[#allocation2 + $0x68] sm:$0xff]
      %v3636 = vld [vmem:[#allocation2 + $0x70] sm:$0xff]
      %v3637 = vld [vmem:[#allocation2 + $0x78] sm:$0xff]
      %v3638 = vld [vmem:[#allocation2 + $0x80] sm:$0xff]
      %v3639 = vld [vmem:[#allocation2 + $0x88] sm:$0xff]
      %v3640 = vld [vmem:[#allocation2 + $0x90] sm:$0xff]
      %v3641 = vld [vmem:[#allocation2 + $0x98] sm:$0xff]
      %v3642 = vld [vmem:[#allocation2 + $0xa0] sm:$0xff]
      %v3643 = vld [vmem:[#allocation2 + $0xa8] sm:$0xff]
      %v3644 = vld [vmem:[#allocation2 + $0xb0] sm:$0xff]
      %v3645 = vld [vmem:[#allocation2 + $0xb8] sm:$0xff]
      %v3646 = vld [vmem:[#allocation2 + $0xc0] sm:$0xff]
      %v3647 = vld [vmem:[#allocation2 + $0xc8] sm:$0xff]
      %v3648 = vld [vmem:[#allocation2 + $0xd0] sm:$0xff]
      %v3649 = vld [vmem:[#allocation2 + $0xd8] sm:$0xff]
      %v3650 = vld [vmem:[#allocation2 + $0xe0] sm:$0xff]
      %v3651 = vld [vmem:[#allocation2 + $0xe8] sm:$0xff]
      %v3652 = vld [vmem:[#allocation2 + $0xf0] sm:$0xff]
      %v3653 = vld [vmem:[#allocation2 + $0xf8] sm:$0xff]
      %v3702 = vrot.slane %v3372, 1
      %v3703 = vrot.slane %v3377, 1
      %v3704 = vsel %vm1467, %v3702, %v3703
      %v3705 = vrot.slane %v3382, 1
      %v3706 = vsel %vm1467, %v3703, %v3705
      %v3707 = vrot.slane %v3387, 1
      %v3708 = vrot.slane %v3392, 1
      %v3709 = vsel %vm1467, %v3707, %v3708
      %v3710 = vrot.slane %v3397, 1
      %v3711 = vsel %vm1467, %v3708, %v3710
      %v3712 = vrot.slane %v3402, 1
      %v3713 = vrot.slane %v3407, 1
      %v3714 = vsel %vm1467, %v3712, %v3713
      %v3715 = vrot.slane %v3412, 1
      %v3716 = vsel %vm1467, %v3713, %v3715
      %v3717 = vrot.slane %v3417, 1
      %v3718 = vrot.slane %v3422, 1
      %v3719 = vsel %vm1467, %v3717, %v3718
      %v3720 = vrot.slane %v3427, 1
      %v3721 = vsel %vm1467, %v3718, %v3720
      %v3722 = vrot.slane %v3432, 1
      %v3723 = vrot.slane %v3437, 1
      %v3724 = vsel %vm1467, %v3722, %v3723
      %v3725 = vrot.slane %v3442, 1
      %v3726 = vsel %vm1467, %v3723, %v3725
      %v3727 = vrot.slane %v3447, 1
      %v3728 = vrot.slane %v3452, 1
      %v3729 = vsel %vm1467, %v3727, %v3728
      %v3730 = vrot.slane %v3457, 1
      %v3731 = vsel %vm1467, %v3728, %v3730
      %v3732 = vrot.slane %v3462, 1
      %v3733 = vrot.slane %v3467, 1
      %v3734 = vsel %vm1467, %v3732, %v3733
      %v3735 = vrot.slane %v3472, 1
      %v3736 = vsel %vm1467, %v3733, %v3735
      %v3737 = vrot.slane %v3477, 1
      %v3738 = vrot.slane %v3482, 1
      %v3739 = vsel %vm1467, %v3737, %v3738
      %v3740 = vrot.slane %v3487, 1
      %v3741 = vsel %vm1467, %v3738, %v3740
      %v3742 = vrot.slane %v3492, 1
      %v3743 = vrot.slane %v3497, 1
      %v3744 = vsel %vm1467, %v3742, %v3743
      %v3745 = vrot.slane %v3502, 1
      %v3746 = vsel %vm1467, %v3743, %v3745
      %v3747 = vrot.slane %v3507, 1
      %v3748 = vrot.slane %v3512, 1
      %v3749 = vsel %vm1467, %v3747, %v3748
      %v3750 = vrot.slane %v3517, 1
      %v3751 = vsel %vm1467, %v3748, %v3750
      %v3752 = vrot.slane %v3522, 1
      %v3753 = vrot.slane %v3527, 1
      %v3754 = vsel %vm1467, %v3752, %v3753
      %v3755 = vrot.slane %v3532, 1
      %v3756 = vsel %vm1467, %v3753, %v3755
      %v3757 = vrot.slane %v3537, 1
      %v3758 = vrot.slane %v3542, 1
      %v3759 = vsel %vm1467, %v3757, %v3758
      %v3760 = vrot.slane %v3547, 1
      %v3761 = vsel %vm1467, %v3758, %v3760
      %v3762 = vrot.slane %v3552, 1
      %v3763 = vrot.slane %v3557, 1
      %v3764 = vsel %vm1467, %v3762, %v3763
      %v3765 = vrot.slane %v3562, 1
      %v3766 = vsel %vm1467, %v3763, %v3765
      %v3767 = vrot.slane %v3567, 1
      %v3768 = vrot.slane %v3572, 1
      %v3769 = vsel %vm1467, %v3767, %v3768
      %v3770 = vrot.slane %v3577, 1
      %v3771 = vsel %vm1467, %v3768, %v3770
      %v3772 = vrot.slane %v3582, 1
      %v3773 = vrot.slane %v3587, 1
      %v3774 = vsel %vm1467, %v3772, %v3773
      %v3775 = vrot.slane %v3592, 1
      %v3776 = vsel %vm1467, %v3773, %v3775
      %v3777 = vrot.slane %v3597, 1
      %v3778 = vrot.slane %v3602, 1
      %v3779 = vsel %vm1467, %v3777, %v3778
      %v3780 = vrot.slane %v3607, 1
      %v3781 = vsel %vm1467, %v3778, %v3780
      %v3814 = vadd.f32 %v3622, %v3704
      %v3815 = vadd.f32 %v3623, %v3706
      %v3816 = vadd.f32 %v3624, %v3709
      %v3817 = vadd.f32 %v3625, %v3711
      %v3818 = vadd.f32 %v3626, %v3714
      %v3819 = vadd.f32 %v3627, %v3716
      %v3820 = vadd.f32 %v3628, %v3719
      %v3821 = vadd.f32 %v3629, %v3721
      %v3822 = vadd.f32 %v3630, %v3724
      %v3823 = vadd.f32 %v3631, %v3726
      %v3824 = vadd.f32 %v3632, %v3729
      %v3825 = vadd.f32 %v3633, %v3731
      %v3826 = vadd.f32 %v3634, %v3734
      %v3827 = vadd.f32 %v3635, %v3736
      %v3828 = vadd.f32 %v3636, %v3739
      %v3829 = vadd.f32 %v3637, %v3741
      %v3830 = vadd.f32 %v3638, %v3744
      %v3831 = vadd.f32 %v3639, %v3746
      %v3832 = vadd.f32 %v3640, %v3749
      %v3833 = vadd.f32 %v3641, %v3751
      %v3834 = vadd.f32 %v3642, %v3754
      %v3835 = vadd.f32 %v3643, %v3756
      %v3836 = vadd.f32 %v3644, %v3759
      %v3837 = vadd.f32 %v3645, %v3761
      %v3838 = vadd.f32 %v3646, %v3764
      %v3839 = vadd.f32 %v3647, %v3766
      %v3840 = vadd.f32 %v3648, %v3769
      %v3841 = vadd.f32 %v3649, %v3771
      %v3842 = vadd.f32 %v3650, %v3774
      %v3843 = vadd.f32 %v3651, %v3776
      %v3844 = vadd.f32 %v3652, %v3779
      %v3845 = vadd.f32 %v3653, %v3781
      %3846 = vst [vmem:[#allocation2] sm:$0xff] %v3814
      %3847 = vst [vmem:[#allocation2 + $0x8] sm:$0xff] %v3815
      %3848 = vst [vmem:[#allocation2 + $0x10] sm:$0xff] %v3816
      %3849 = vst [vmem:[#allocation2 + $0x18] sm:$0xff] %v3817
      %3850 = vst [vmem:[#allocation2 + $0x20] sm:$0xff] %v3818
      %3851 = vst [vmem:[#allocation2 + $0x28] sm:$0xff] %v3819
      %3852 = vst [vmem:[#allocation2 + $0x30] sm:$0xff] %v3820
      %3853 = vst [vmem:[#allocation2 + $0x38] sm:$0xff] %v3821
      %3854 = vst [vmem:[#allocation2 + $0x40] sm:$0xff] %v3822
      %3855 = vst [vmem:[#allocation2 + $0x48] sm:$0xff] %v3823
      %3856 = vst [vmem:[#allocation2 + $0x50] sm:$0xff] %v3824
      %3857 = vst [vmem:[#allocation2 + $0x58] sm:$0xff] %v3825
      %3858 = vst [vmem:[#allocation2 + $0x60] sm:$0xff] %v3826
      %3859 = vst [vmem:[#allocation2 + $0x68] sm:$0xff] %v3827
      %3860 = vst [vmem:[#allocation2 + $0x70] sm:$0xff] %v3828
      %3861 = vst [vmem:[#allocation2 + $0x78] sm:$0xff] %v3829
      %3862 = vst [vmem:[#allocation2 + $0x80] sm:$0xff] %v3830
      %3863 = vst [vmem:[#allocation2 + $0x88] sm:$0xff] %v3831
      %3864 = vst [vmem:[#allocation2 + $0x90] sm:$0xff] %v3832
      %3865 = vst [vmem:[#allocation2 + $0x98] sm:$0xff] %v3833
      %3866 = vst [vmem:[#allocation2 + $0xa0] sm:$0xff] %v3834
      %3867 = vst [vmem:[#allocation2 + $0xa8] sm:$0xff] %v3835
      %3868 = vst [vmem:[#allocation2 + $0xb0] sm:$0xff] %v3836
      %3869 = vst [vmem:[#allocation2 + $0xb8] sm:$0xff] %v3837
      %3870 = vst [vmem:[#allocation2 + $0xc0] sm:$0xff] %v3838
      %3871 = vst [vmem:[#allocation2 + $0xc8] sm:$0xff] %v3839
      %3872 = vst [vmem:[#allocation2 + $0xd0] sm:$0xff] %v3840
      %3873 = vst [vmem:[#allocation2 + $0xd8] sm:$0xff] %v3841
      %3874 = vst [vmem:[#allocation2 + $0xe0] sm:$0xff] %v3842
      %3875 = vst [vmem:[#allocation2 + $0xe8] sm:$0xff] %v3843
      %3876 = vst [vmem:[#allocation2 + $0xf0] sm:$0xff] %v3844
      %3877 = vst [vmem:[#allocation2 + $0xf8] sm:$0xff] %v3845
      %v3878 = vld [vmem:[%s168] sm:$0xff]
      %v3879 = vld [vmem:[%s168 + $0x8] sm:$0xff]
      %v3880 = vld [vmem:[%s168 + $0x10] sm:$0xff]
      %v3881 = vld [vmem:[%s168 + $0x18] sm:$0xff]
      %v3882 = vld [vmem:[%s168 + $0x20] sm:$0xff]
      %v3883 = vld [vmem:[%s168 + $0x28] sm:$0xff]
      %v3884 = vld [vmem:[%s168 + $0x30] sm:$0xff]
      %v3885 = vld [vmem:[%s168 + $0x38] sm:$0xff]
      %v3886 = vld [vmem:[%s168 + $0x40] sm:$0xff]
      %v3887 = vld [vmem:[%s168 + $0x48] sm:$0xff]
      %v3888 = vld [vmem:[%s168 + $0x50] sm:$0xff]
      %v3889 = vld [vmem:[%s168 + $0x58] sm:$0xff]
      %v3890 = vld [vmem:[%s168 + $0x60] sm:$0xff]
      %v3891 = vld [vmem:[%s168 + $0x68] sm:$0xff]
      %v3892 = vld [vmem:[%s168 + $0x70] sm:$0xff]
      %v3893 = vld [vmem:[%s168 + $0x78] sm:$0xff]
      %v3894 = vld [vmem:[%s168 + $0x80] sm:$0xff]
      %v3895 = vld [vmem:[%s168 + $0x88] sm:$0xff]
      %v3896 = vld [vmem:[%s168 + $0x90] sm:$0xff]
      %v3897 = vld [vmem:[%s168 + $0x98] sm:$0xff]
      %v3898 = vld [vmem:[%s168 + $0xa0] sm:$0xff]
      %v3899 = vld [vmem:[%s168 + $0xa8] sm:$0xff]
      %v3900 = vld [vmem:[%s168 + $0xb0] sm:$0xff]
      %v3901 = vld [vmem:[%s168 + $0xb8] sm:$0xff]
      %v3902 = vld [vmem:[%s168 + $0xc0] sm:$0xff]
      %v3903 = vld [vmem:[%s168 + $0xc8] sm:$0xff]
      %v3904 = vld [vmem:[%s168 + $0xd0] sm:$0xff]
      %v3905 = vld [vmem:[%s168 + $0xd8] sm:$0xff]
      %v3906 = vld [vmem:[%s168 + $0xe0] sm:$0xff]
      %v3907 = vld [vmem:[%s168 + $0xe8] sm:$0xff]
      %v3908 = vld [vmem:[%s168 + $0xf0] sm:$0xff]
      %v3909 = vld [vmem:[%s168 + $0xf8] sm:$0xff]
      %v3910 = vld [vmem:[%s168 + $0x100] sm:$0xff]
      %v3911 = vld [vmem:[%s168 + $0x108] sm:$0xff]
      %v3912 = vld [vmem:[%s168 + $0x110] sm:$0xff]
      %v3913 = vld [vmem:[%s168 + $0x118] sm:$0xff]
      %v3914 = vld [vmem:[%s168 + $0x120] sm:$0xff]
      %v3915 = vld [vmem:[%s168 + $0x128] sm:$0xff]
      %v3916 = vld [vmem:[%s168 + $0x130] sm:$0xff]
      %v3917 = vld [vmem:[%s168 + $0x138] sm:$0xff]
      %v3918 = vld [vmem:[%s168 + $0x140] sm:$0xff]
      %v3919 = vld [vmem:[%s168 + $0x148] sm:$0xff]
      %v3920 = vld [vmem:[%s168 + $0x150] sm:$0xff]
      %v3921 = vld [vmem:[%s168 + $0x158] sm:$0xff]
      %v3922 = vld [vmem:[%s168 + $0x160] sm:$0xff]
      %v3923 = vld [vmem:[%s168 + $0x168] sm:$0xff]
      %v3924 = vld [vmem:[%s168 + $0x170] sm:$0xff]
      %v3925 = vld [vmem:[%s168 + $0x178] sm:$0xff]
      %v3926 = vld [vmem:[%s168 + $0x180] sm:$0xff]
      %v3927 = vld [vmem:[%s168 + $0x188] sm:$0xff]
      %v3928 = vld [vmem:[%s168 + $0x190] sm:$0xff]
      %v3929 = vld [vmem:[%s168 + $0x198] sm:$0xff]
      %v3930 = vld [vmem:[%s168 + $0x1a0] sm:$0xff]
      %v3931 = vld [vmem:[%s168 + $0x1a8] sm:$0xff]
      %s3932 = scalar_lea.vmem %s172, 40
      %v3933 = vld [vmem:[%s3932] sm:$0xff]
      %v3935 = vsel %vm268, %v3878, 0
      %v3938 = vsel %vm268, %v3879, 0
      %v3941 = vsel %vm268, %v3880, 0
      %v3944 = vsel %vm268, %v3881, 0
      %v3947 = vsel %vm268, %v3882, 0
      %v3950 = vsel %vm268, %v3883, 0
      %v3953 = vsel %vm268, %v3884, 0
      %v3956 = vsel %vm268, %v3885, 0
      %v3959 = vsel %vm268, %v3886, 0
      %v3962 = vsel %vm268, %v3887, 0
      %v3965 = vsel %vm268, %v3888, 0
      %v3968 = vsel %vm268, %v3889, 0
      %v3971 = vsel %vm268, %v3890, 0
      %v3974 = vsel %vm268, %v3891, 0
      %v3977 = vsel %vm268, %v3892, 0
      %v3980 = vsel %vm268, %v3893, 0
      %v3983 = vsel %vm268, %v3894, 0
      %v3986 = vsel %vm268, %v3895, 0
      %v3989 = vsel %vm268, %v3896, 0
      %v3992 = vsel %vm268, %v3897, 0
      %v3995 = vsel %vm268, %v3898, 0
      %v3998 = vsel %vm268, %v3899, 0
      %v4001 = vsel %vm268, %v3900, 0
      %v4004 = vsel %vm268, %v3901, 0
      %v4007 = vsel %vm268, %v3902, 0
      %v4010 = vsel %vm268, %v3903, 0
      %v4013 = vsel %vm268, %v3904, 0
      %v4016 = vsel %vm268, %v3905, 0
      %v4019 = vsel %vm268, %v3906, 0
      %v4022 = vsel %vm268, %v3907, 0
      %v4025 = vsel %vm268, %v3908, 0
      %v4028 = vsel %vm268, %v3909, 0
      %v4031 = vsel %vm268, %v3910, 0
      %v4034 = vsel %vm268, %v3911, 0
      %v4037 = vsel %vm268, %v3912, 0
      %v4040 = vsel %vm268, %v3913, 0
      %v4043 = vsel %vm268, %v3914, 0
      %v4046 = vsel %vm268, %v3915, 0
      %v4049 = vsel %vm268, %v3916, 0
      %v4052 = vsel %vm268, %v3917, 0
      %v4055 = vsel %vm268, %v3918, 0
      %v4058 = vsel %vm268, %v3919, 0
      %v4061 = vsel %vm268, %v3920, 0
      %v4064 = vsel %vm268, %v3921, 0
      %v4067 = vsel %vm268, %v3922, 0
      %v4070 = vsel %vm268, %v3923, 0
      %v4073 = vsel %vm268, %v3924, 0
      %v4076 = vsel %vm268, %v3925, 0
      %v4079 = vsel %vm268, %v3926, 0
      %v4082 = vsel %vm268, %v3927, 0
      %v4085 = vsel %vm268, %v3928, 0
      %v4088 = vsel %vm268, %v3929, 0
      %v4091 = vsel %vm268, %v3930, 0
      %v4094 = vsel %vm268, %v3931, 0
      %4096 = vmatprep.subr.mxu0 0.0
      %4097 = vmatpush1.msra.mxu0 %v3933
      %4098 = vmatprep.subr.mxu0 0.0
      %4099 = vmatpush1.msra.mxu0 0.0
      %4100 = vmatprep.subr.mxu0 0.0
      %4101 = vmatpush1.msra.mxu0 0.0
      %4102 = vmatprep.subr.mxu0 0.0
      %4103 = vmatpush1.msra.mxu0 0.0
      %4104 = vmatprep.subr.mxu0 0.0
      %4105 = vmatpush1.msra.mxu0 0.0
      %4106 = vmatprep.subr.mxu0 0.0
      %4107 = vmatpush1.msra.mxu0 0.0
      %4108 = vmatprep.subr.mxu0 0.0
      %4109 = vmatpush1.msra.mxu0 0.0
      %4110 = vmatprep.subr.mxu0 0.0
      %4111 = vmatpush1.msra.mxu0 0.0
      %4112 = vmatprep.subr.mxu0 0.0
      %4113 = vmatpush1.msra.mxu0 0.0
      %4114 = vmatprep.subr.mxu0 0.0
      %4115 = vmatpush1.msra.mxu0 0.0
      %4116 = vmatprep.subr.mxu0 0.0
      %4117 = vmatpush1.msra.mxu0 0.0
      %4118 = vmatprep.subr.mxu0 0.0
      %4119 = vmatpush1.msra.mxu0 0.0
      %4120 = vmatprep.subr.mxu0 0.0
      %4121 = vmatpush1.msra.mxu0 0.0
      %4122 = vmatprep.subr.mxu0 0.0
      %4123 = vmatpush1.msra.mxu0 0.0
      %4124 = vmatprep.subr.mxu0 0.0
      %4125 = vmatpush1.msra.mxu0 0.0
      %4126 = vmatprep.subr.mxu0 0.0
      %4127 = vmatpush1.msra.mxu0 0.0
      %4128 = vmatprep.subr.mxu0 0.0
      %4129 = vmatpush1.msra.mxu0 0.0
      %4130 = vmatprep.subr.mxu0 0.0
      %4131 = vmatpush1.msra.mxu0 0.0
      %4132 = vmatprep.subr.mxu0 0.0
      %4133 = vmatpush1.msra.mxu0 0.0
      %4134 = vmatprep.subr.mxu0 0.0
      %4135 = vmatpush1.msra.mxu0 0.0
      %4136 = vmatprep.subr.mxu0 0.0
      %4137 = vmatpush1.msra.mxu0 0.0
      %4138 = vmatprep.subr.mxu0 0.0
      %4139 = vmatpush1.msra.mxu0 0.0
      %4140 = vmatprep.subr.mxu0 0.0
      %4141 = vmatpush1.msra.mxu0 0.0
      %4142 = vmatprep.subr.mxu0 0.0
      %4143 = vmatpush1.msra.mxu0 0.0
      %4144 = vmatprep.subr.mxu0 0.0
      %4145 = vmatpush1.msra.mxu0 0.0
      %4146 = vmatprep.subr.mxu0 0.0
      %4147 = vmatpush1.msra.mxu0 0.0
      %4148 = vmatprep.subr.mxu0 0.0
      %4149 = vmatpush1.msra.mxu0 0.0
      %4150 = vmatprep.subr.mxu0 0.0
      %4151 = vmatpush1.msra.mxu0 0.0
      %4152 = vmatprep.subr.mxu0 0.0
      %4153 = vmatpush1.msra.mxu0 0.0
      %4154 = vmatprep.subr.mxu0 0.0
      %4155 = vmatpush1.msra.mxu0 0.0
      %4156 = vmatprep.subr.mxu0 0.0
      %4157 = vmatpush1.msra.mxu0 0.0
      %4158 = vmatprep.subr.mxu0 0.0
      %4159 = vmatpush1.msra.mxu0 0.0
      %4160 = vmatprep.mubr.f32.mxu0 0.0
      %4161 = vmatmul.mubr.f32.gmra.mrb[0].mxu0 %v3935
      %v4162 = vpop.f32.mrb[0].mxu0
      %v4163 = vpop.f32.mrb[0].mxu0
      %4164 = vmatprep.mubr.f32.mxu0 0.0
      %4165 = vmatmul.mubr.f32.gmra.mrb[0].mxu0 %v3938
      %v4166 = vpop.f32.mrb[0].mxu0
      %v4167 = vpop.f32.mrb[0].mxu0
      %4168 = vmatprep.mubr.f32.mxu0 0.0
      %4169 = vmatmul.mubr.f32.gmra.mrb[0].mxu0 %v3941
      %v4170 = vpop.f32.mrb[0].mxu0
      %v4171 = vpop.f32.mrb[0].mxu0
      %4172 = vmatprep.mubr.f32.mxu0 0.0
      %4173 = vmatmul.mubr.f32.gmra.mrb[0].mxu0 %v3944
      %v4174 = vpop.f32.mrb[0].mxu0
      %v4175 = vadd.f32 0.0, %v4174
      %v4176 = vpop.f32.mrb[0].mxu0
      %4177 = vmatprep.mubr.f32.mxu0 0.0
      %4178 = vmatmul.mubr.f32.gmra.mrb[0].mxu0 %v3947
      %v4179 = vpop.f32.mrb[0].mxu0
      %v4180 = vadd.f32 0.0, %v4179
      %v4181 = vpop.f32.mrb[0].mxu0
      %4182 = vmatprep.mubr.f32.mxu0 0.0
      %4183 = vmatmul.mubr.f32.gmra.mrb[0].mxu0 %v3950
      %v4184 = vpop.f32.mrb[0].mxu0
      %v4185 = vadd.f32 0.0, %v4184
      %v4186 = vpop.f32.mrb[0].mxu0
      %4187 = vmatprep.mubr.f32.mxu0 0.0
      %4188 = vmatmul.mubr.f32.gmra.mrb[0].mxu0 %v3953
      %v4189 = vpop.f32.mrb[0].mxu0
      %v4190 = vadd.f32 0.0, %v4189
      %v4191 = vpop.f32.mrb[0].mxu0
      %4192 = vmatprep.mubr.f32.mxu0 0.0
      %4193 = vmatmul.mubr.f32.gmra.mrb[0].mxu0 %v3956
      %v4194 = vpop.f32.mrb[0].mxu0
      %v4195 = vadd.f32 0.0, %v4194
      %v4196 = vpop.f32.mrb[0].mxu0
      %4197 = vmatprep.mubr.f32.mxu0 0.0
      %4198 = vmatmul.mubr.f32.gmra.mrb[0].mxu0 %v3959
      %v4199 = vpop.f32.mrb[0].mxu0
      %v4200 = vadd.f32 0.0, %v4199
      %v4201 = vpop.f32.mrb[0].mxu0
      %4202 = vmatprep.mubr.f32.mxu0 0.0
      %4203 = vmatmul.mubr.f32.gmra.mrb[0].mxu0 %v3962
      %v4204 = vpop.f32.mrb[0].mxu0
      %v4205 = vadd.f32 0.0, %v4204
      %v4206 = vpop.f32.mrb[0].mxu0
      %4207 = vmatprep.mubr.f32.mxu0 0.0
      %4208 = vmatmul.mubr.f32.gmra.mrb[0].mxu0 %v3965
      %v4209 = vpop.f32.mrb[0].mxu0
      %v4210 = vadd.f32 0.0, %v4209
      %v4211 = vpop.f32.mrb[0].mxu0
      %4212 = vmatprep.mubr.f32.mxu0 0.0
      %4213 = vmatmul.mubr.f32.gmra.mrb[0].mxu0 %v3968
      %v4214 = vpop.f32.mrb[0].mxu0
      %v4215 = vadd.f32 0.0, %v4214
      %v4216 = vpop.f32.mrb[0].mxu0
      %4217 = vmatprep.mubr.f32.mxu0 0.0
      %4218 = vmatmul.mubr.f32.gmra.mrb[0].mxu0 %v3971
      %v4219 = vpop.f32.mrb[0].mxu0
      %v4220 = vadd.f32 0.0, %v4219
      %v4221 = vpop.f32.mrb[0].mxu0
      %4222 = vmatprep.mubr.f32.mxu0 0.0
      %4223 = vmatmul.mubr.f32.gmra.mrb[0].mxu0 %v3974
      %v4224 = vpop.f32.mrb[0].mxu0
      %v4225 = vadd.f32 0.0, %v4224
      %v4226 = vpop.f32.mrb[0].mxu0
      %4227 = vmatprep.mubr.f32.mxu0 0.0
      %4228 = vmatmul.mubr.f32.gmra.mrb[0].mxu0 %v3977
      %v4229 = vpop.f32.mrb[0].mxu0
      %v4230 = vadd.f32 0.0, %v4229
      %v4231 = vpop.f32.mrb[0].mxu0
      %4232 = vmatprep.mubr.f32.mxu0 0.0
      %4233 = vmatmul.mubr.f32.gmra.mrb[0].mxu0 %v3980
      %v4234 = vpop.f32.mrb[0].mxu0
      %v4235 = vadd.f32 0.0, %v4234
      %v4236 = vpop.f32.mrb[0].mxu0
      %4237 = vmatprep.mubr.f32.mxu0 0.0
      %4238 = vmatmul.mubr.f32.gmra.mrb[0].mxu0 %v3983
      %v4239 = vpop.f32.mrb[0].mxu0
      %v4240 = vadd.f32 0.0, %v4239
      %v4241 = vpop.f32.mrb[0].mxu0
      %4242 = vmatprep.mubr.f32.mxu0 0.0
      %4243 = vmatmul.mubr.f32.gmra.mrb[0].mxu0 %v3986
      %v4244 = vpop.f32.mrb[0].mxu0
      %v4245 = vadd.f32 0.0, %v4244
      %v4246 = vpop.f32.mrb[0].mxu0
      %4247 = vmatprep.mubr.f32.mxu0 0.0
      %4248 = vmatmul.mubr.f32.gmra.mrb[0].mxu0 %v3989
      %v4249 = vpop.f32.mrb[0].mxu0
      %v4250 = vadd.f32 0.0, %v4249
      %v4251 = vpop.f32.mrb[0].mxu0
      %4252 = vmatprep.mubr.f32.mxu0 0.0
      %4253 = vmatmul.mubr.f32.gmra.mrb[0].mxu0 %v3992
      %v4254 = vpop.f32.mrb[0].mxu0
      %v4255 = vadd.f32 0.0, %v4254
      %v4256 = vpop.f32.mrb[0].mxu0
      %4257 = vmatprep.mubr.f32.mxu0 0.0
      %4258 = vmatmul.mubr.f32.gmra.mrb[0].mxu0 %v3995
      %v4259 = vpop.f32.mrb[0].mxu0
      %v4260 = vadd.f32 0.0, %v4259
      %v4261 = vpop.f32.mrb[0].mxu0
      %4262 = vmatprep.mubr.f32.mxu0 0.0
      %4263 = vmatmul.mubr.f32.gmra.mrb[0].mxu0 %v3998
      %v4264 = vpop.f32.mrb[0].mxu0
      %v4265 = vadd.f32 0.0, %v4264
      %v4266 = vpop.f32.mrb[0].mxu0
      %4267 = vmatprep.mubr.f32.mxu0 0.0
      %4268 = vmatmul.mubr.f32.gmra.mrb[0].mxu0 %v4001
      %v4269 = vpop.f32.mrb[0].mxu0
      %v4270 = vadd.f32 0.0, %v4269
      %v4271 = vpop.f32.mrb[0].mxu0
      %4272 = vmatprep.mubr.f32.mxu0 0.0
      %4273 = vmatmul.mubr.f32.gmra.mrb[0].mxu0 %v4004
      %v4274 = vpop.f32.mrb[0].mxu0
      %v4275 = vadd.f32 0.0, %v4274
      %v4276 = vpop.f32.mrb[0].mxu0
      %4277 = vmatprep.mubr.f32.mxu0 0.0
      %4278 = vmatmul.mubr.f32.gmra.mrb[0].mxu0 %v4007
      %v4279 = vpop.f32.mrb[0].mxu0
      %v4280 = vadd.f32 0.0, %v4279
      %v4281 = vpop.f32.mrb[0].mxu0
      %4282 = vmatprep.mubr.f32.mxu0 0.0
      %4283 = vmatmul.mubr.f32.gmra.mrb[0].mxu0 %v4010
      %v4284 = vpop.f32.mrb[0].mxu0
      %v4285 = vadd.f32 0.0, %v4284
      %v4286 = vpop.f32.mrb[0].mxu0
      %4287 = vmatprep.mubr.f32.mxu0 0.0
      %4288 = vmatmul.mubr.f32.gmra.mrb[0].mxu0 %v4013
      %v4289 = vpop.f32.mrb[0].mxu0
      %v4290 = vadd.f32 0.0, %v4289
      %v4291 = vpop.f32.mrb[0].mxu0
      %4292 = vmatprep.mubr.f32.mxu0 0.0
      %4293 = vmatmul.mubr.f32.gmra.mrb[0].mxu0 %v4016
      %v4294 = vpop.f32.mrb[0].mxu0
      %v4295 = vadd.f32 0.0, %v4294
      %v4296 = vpop.f32.mrb[0].mxu0
      %4297 = vmatprep.mubr.f32.mxu0 0.0
      %4298 = vmatmul.mubr.f32.gmra.mrb[0].mxu0 %v4019
      %v4299 = vpop.f32.mrb[0].mxu0
      %v4300 = vadd.f32 0.0, %v4299
      %v4301 = vpop.f32.mrb[0].mxu0
      %4302 = vmatprep.mubr.f32.mxu0 0.0
      %4303 = vmatmul.mubr.f32.gmra.mrb[0].mxu0 %v4022
      %v4304 = vpop.f32.mrb[0].mxu0
      %v4305 = vadd.f32 0.0, %v4304
      %v4306 = vpop.f32.mrb[0].mxu0
      %4307 = vmatprep.mubr.f32.mxu0 0.0
      %4308 = vmatmul.mubr.f32.gmra.mrb[0].mxu0 %v4025
      %v4309 = vpop.f32.mrb[0].mxu0
      %v4310 = vadd.f32 0.0, %v4309
      %v4311 = vpop.f32.mrb[0].mxu0
      %4312 = vmatprep.mubr.f32.mxu0 0.0
      %4313 = vmatmul.mubr.f32.gmra.mrb[0].mxu0 %v4028
      %v4314 = vpop.f32.mrb[0].mxu0
      %v4315 = vadd.f32 0.0, %v4314
      %v4316 = vpop.f32.mrb[0].mxu0
      %4317 = vmatprep.mubr.f32.mxu0 0.0
      %4318 = vmatmul.mubr.f32.gmra.mrb[0].mxu0 %v4031
      %v4319 = vpop.f32.mrb[0].mxu0
      %v4320 = vadd.f32 0.0, %v4319
      %v4321 = vpop.f32.mrb[0].mxu0
      %4322 = vmatprep.mubr.f32.mxu0 0.0
      %4323 = vmatmul.mubr.f32.gmra.mrb[0].mxu0 %v4034
      %v4324 = vpop.f32.mrb[0].mxu0
      %v4325 = vadd.f32 0.0, %v4324
      %v4326 = vpop.f32.mrb[0].mxu0
      %4327 = vmatprep.mubr.f32.mxu0 0.0
      %4328 = vmatmul.mubr.f32.gmra.mrb[0].mxu0 %v4037
      %v4329 = vpop.f32.mrb[0].mxu0
      %v4330 = vadd.f32 0.0, %v4329
      %v4331 = vpop.f32.mrb[0].mxu0
      %4332 = vmatprep.mubr.f32.mxu0 0.0
      %4333 = vmatmul.mubr.f32.gmra.mrb[0].mxu0 %v4040
      %v4334 = vpop.f32.mrb[0].mxu0
      %v4335 = vadd.f32 0.0, %v4334
      %v4336 = vpop.f32.mrb[0].mxu0
      %4337 = vmatprep.mubr.f32.mxu0 0.0
      %4338 = vmatmul.mubr.f32.gmra.mrb[0].mxu0 %v4043
      %v4339 = vpop.f32.mrb[0].mxu0
      %v4340 = vadd.f32 0.0, %v4339
      %v4341 = vpop.f32.mrb[0].mxu0
      %4342 = vmatprep.mubr.f32.mxu0 0.0
      %4343 = vmatmul.mubr.f32.gmra.mrb[0].mxu0 %v4046
      %v4344 = vpop.f32.mrb[0].mxu0
      %v4345 = vadd.f32 0.0, %v4344
      %v4346 = vpop.f32.mrb[0].mxu0
      %4347 = vmatprep.mubr.f32.mxu0 0.0
      %4348 = vmatmul.mubr.f32.gmra.mrb[0].mxu0 %v4049
      %v4349 = vpop.f32.mrb[0].mxu0
      %v4350 = vadd.f32 0.0, %v4349
      %v4351 = vpop.f32.mrb[0].mxu0
      %4352 = vmatprep.mubr.f32.mxu0 0.0
      %4353 = vmatmul.mubr.f32.gmra.mrb[0].mxu0 %v4052
      %v4354 = vpop.f32.mrb[0].mxu0
      %v4355 = vadd.f32 0.0, %v4354
      %v4356 = vpop.f32.mrb[0].mxu0
      %4357 = vmatprep.mubr.f32.mxu0 0.0
      %4358 = vmatmul.mubr.f32.gmra.mrb[0].mxu0 %v4055
      %v4359 = vpop.f32.mrb[0].mxu0
      %v4360 = vadd.f32 0.0, %v4359
      %v4361 = vpop.f32.mrb[0].mxu0
      %4362 = vmatprep.mubr.f32.mxu0 0.0
      %4363 = vmatmul.mubr.f32.gmra.mrb[0].mxu0 %v4058
      %v4364 = vpop.f32.mrb[0].mxu0
      %v4365 = vadd.f32 0.0, %v4364
      %v4366 = vpop.f32.mrb[0].mxu0
      %4367 = vmatprep.mubr.f32.mxu0 0.0
      %4368 = vmatmul.mubr.f32.gmra.mrb[0].mxu0 %v4061
      %v4369 = vpop.f32.mrb[0].mxu0
      %v4370 = vadd.f32 0.0, %v4369
      %v4371 = vpop.f32.mrb[0].mxu0
      %4372 = vmatprep.mubr.f32.mxu0 0.0
      %4373 = vmatmul.mubr.f32.gmra.mrb[0].mxu0 %v4064
      %v4374 = vpop.f32.mrb[0].mxu0
      %v4375 = vadd.f32 0.0, %v4374
      %v4376 = vpop.f32.mrb[0].mxu0
      %4377 = vmatprep.mubr.f32.mxu0 0.0
      %4378 = vmatmul.mubr.f32.gmra.mrb[0].mxu0 %v4067
      %v4379 = vpop.f32.mrb[0].mxu0
      %v4380 = vadd.f32 0.0, %v4379
      %v4381 = vpop.f32.mrb[0].mxu0
      %4382 = vmatprep.mubr.f32.mxu0 0.0
      %4383 = vmatmul.mubr.f32.gmra.mrb[0].mxu0 %v4070
      %v4384 = vpop.f32.mrb[0].mxu0
      %v4385 = vadd.f32 0.0, %v4384
      %v4386 = vpop.f32.mrb[0].mxu0
      %4387 = vmatprep.mubr.f32.mxu0 0.0
      %4388 = vmatmul.mubr.f32.gmra.mrb[0].mxu0 %v4073
      %v4389 = vpop.f32.mrb[0].mxu0
      %v4390 = vadd.f32 0.0, %v4389
      %v4391 = vpop.f32.mrb[0].mxu0
      %4392 = vmatprep.mubr.f32.mxu0 0.0
      %4393 = vmatmul.mubr.f32.gmra.mrb[0].mxu0 %v4076
      %v4394 = vpop.f32.mrb[0].mxu0
      %v4395 = vadd.f32 0.0, %v4394
      %v4396 = vpop.f32.mrb[0].mxu0
      %4397 = vmatprep.mubr.f32.mxu0 0.0
      %4398 = vmatmul.mubr.f32.gmra.mrb[0].mxu0 %v4079
      %v4399 = vpop.f32.mrb[0].mxu0
      %v4400 = vadd.f32 0.0, %v4399
      %v4401 = vpop.f32.mrb[0].mxu0
      %4402 = vmatprep.mubr.f32.mxu0 0.0
      %4403 = vmatmul.mubr.f32.gmra.mrb[0].mxu0 %v4082
      %v4404 = vpop.f32.mrb[0].mxu0
      %v4405 = vadd.f32 0.0, %v4404
      %v4406 = vpop.f32.mrb[0].mxu0
      %4407 = vmatprep.mubr.f32.mxu0 0.0
      %4408 = vmatmul.mubr.f32.gmra.mrb[0].mxu0 %v4085
      %v4409 = vpop.f32.mrb[0].mxu0
      %v4410 = vadd.f32 0.0, %v4409
      %v4411 = vpop.f32.mrb[0].mxu0
      %4412 = vmatprep.mubr.f32.mxu0 0.0
      %4413 = vmatmul.mubr.f32.gmra.mrb[0].mxu0 %v4088
      %v4414 = vpop.f32.mrb[0].mxu0
      %v4415 = vpop.f32.mrb[0].mxu0
      %4416 = vmatprep.mubr.f32.mxu0 0.0
      %4417 = vmatmul.mubr.f32.gmra.mrb[0].mxu0 %v4091
      %v4418 = vpop.f32.mrb[0].mxu0
      %v4419 = vpop.f32.mrb[0].mxu0
      %4420 = vmatprep.mubr.f32.mxu0 0.0
      %4421 = vmatmul.mubr.f32.gmra.mrb[0].mxu0 %v4094
      %v4422 = vpop.f32.mrb[0].mxu0
      %v4423 = vpop.f32.mrb[0].mxu0
      %4424 = vdwg.mxu0
      %v4425 = vld [vmem:[#allocation2] sm:$0xff]
      %v4426 = vld [vmem:[#allocation2 + $0x8] sm:$0xff]
      %v4427 = vld [vmem:[#allocation2 + $0x10] sm:$0xff]
      %v4428 = vld [vmem:[#allocation2 + $0x18] sm:$0xff]
      %v4429 = vld [vmem:[#allocation2 + $0x20] sm:$0xff]
      %v4430 = vld [vmem:[#allocation2 + $0x28] sm:$0xff]
      %v4431 = vld [vmem:[#allocation2 + $0x30] sm:$0xff]
      %v4432 = vld [vmem:[#allocation2 + $0x38] sm:$0xff]
      %v4433 = vld [vmem:[#allocation2 + $0x40] sm:$0xff]
      %v4434 = vld [vmem:[#allocation2 + $0x48] sm:$0xff]
      %v4435 = vld [vmem:[#allocation2 + $0x50] sm:$0xff]
      %v4436 = vld [vmem:[#allocation2 + $0x58] sm:$0xff]
      %v4437 = vld [vmem:[#allocation2 + $0x60] sm:$0xff]
      %v4438 = vld [vmem:[#allocation2 + $0x68] sm:$0xff]
      %v4439 = vld [vmem:[#allocation2 + $0x70] sm:$0xff]
      %v4440 = vld [vmem:[#allocation2 + $0x78] sm:$0xff]
      %v4441 = vld [vmem:[#allocation2 + $0x80] sm:$0xff]
      %v4442 = vld [vmem:[#allocation2 + $0x88] sm:$0xff]
      %v4443 = vld [vmem:[#allocation2 + $0x90] sm:$0xff]
      %v4444 = vld [vmem:[#allocation2 + $0x98] sm:$0xff]
      %v4445 = vld [vmem:[#allocation2 + $0xa0] sm:$0xff]
      %v4446 = vld [vmem:[#allocation2 + $0xa8] sm:$0xff]
      %v4447 = vld [vmem:[#allocation2 + $0xb0] sm:$0xff]
      %v4448 = vld [vmem:[#allocation2 + $0xb8] sm:$0xff]
      %v4449 = vld [vmem:[#allocation2 + $0xc0] sm:$0xff]
      %v4450 = vld [vmem:[#allocation2 + $0xc8] sm:$0xff]
      %v4451 = vld [vmem:[#allocation2 + $0xd0] sm:$0xff]
      %v4452 = vld [vmem:[#allocation2 + $0xd8] sm:$0xff]
      %v4453 = vld [vmem:[#allocation2 + $0xe0] sm:$0xff]
      %v4454 = vld [vmem:[#allocation2 + $0xe8] sm:$0xff]
      %v4455 = vld [vmem:[#allocation2 + $0xf0] sm:$0xff]
      %v4456 = vld [vmem:[#allocation2 + $0xf8] sm:$0xff]
      %v4505 = vrot.slane %v4175, 2
      %v4506 = vrot.slane %v4180, 2
      %v4507 = vsel %vm2271, %v4505, %v4506
      %v4508 = vrot.slane %v4185, 2
      %v4509 = vsel %vm2271, %v4506, %v4508
      %v4510 = vrot.slane %v4190, 2
      %v4511 = vrot.slane %v4195, 2
      %v4512 = vsel %vm2271, %v4510, %v4511
      %v4513 = vrot.slane %v4200, 2
      %v4514 = vsel %vm2271, %v4511, %v4513
      %v4515 = vrot.slane %v4205, 2
      %v4516 = vrot.slane %v4210, 2
      %v4517 = vsel %vm2271, %v4515, %v4516
      %v4518 = vrot.slane %v4215, 2
      %v4519 = vsel %vm2271, %v4516, %v4518
      %v4520 = vrot.slane %v4220, 2
      %v4521 = vrot.slane %v4225, 2
      %v4522 = vsel %vm2271, %v4520, %v4521
      %v4523 = vrot.slane %v4230, 2
      %v4524 = vsel %vm2271, %v4521, %v4523
      %v4525 = vrot.slane %v4235, 2
      %v4526 = vrot.slane %v4240, 2
      %v4527 = vsel %vm2271, %v4525, %v4526
      %v4528 = vrot.slane %v4245, 2
      %v4529 = vsel %vm2271, %v4526, %v4528
      %v4530 = vrot.slane %v4250, 2
      %v4531 = vrot.slane %v4255, 2
      %v4532 = vsel %vm2271, %v4530, %v4531
      %v4533 = vrot.slane %v4260, 2
      %v4534 = vsel %vm2271, %v4531, %v4533
      %v4535 = vrot.slane %v4265, 2
      %v4536 = vrot.slane %v4270, 2
      %v4537 = vsel %vm2271, %v4535, %v4536
      %v4538 = vrot.slane %v4275, 2
      %v4539 = vsel %vm2271, %v4536, %v4538
      %v4540 = vrot.slane %v4280, 2
      %v4541 = vrot.slane %v4285, 2
      %v4542 = vsel %vm2271, %v4540, %v4541
      %v4543 = vrot.slane %v4290, 2
      %v4544 = vsel %vm2271, %v4541, %v4543
      %v4545 = vrot.slane %v4295, 2
      %v4546 = vrot.slane %v4300, 2
      %v4547 = vsel %vm2271, %v4545, %v4546
      %v4548 = vrot.slane %v4305, 2
      %v4549 = vsel %vm2271, %v4546, %v4548
      %v4550 = vrot.slane %v4310, 2
      %v4551 = vrot.slane %v4315, 2
      %v4552 = vsel %vm2271, %v4550, %v4551
      %v4553 = vrot.slane %v4320, 2
      %v4554 = vsel %vm2271, %v4551, %v4553
      %v4555 = vrot.slane %v4325, 2
      %v4556 = vrot.slane %v4330, 2
      %v4557 = vsel %vm2271, %v4555, %v4556
      %v4558 = vrot.slane %v4335, 2
      %v4559 = vsel %vm2271, %v4556, %v4558
      %v4560 = vrot.slane %v4340, 2
      %v4561 = vrot.slane %v4345, 2
      %v4562 = vsel %vm2271, %v4560, %v4561
      %v4563 = vrot.slane %v4350, 2
      %v4564 = vsel %vm2271, %v4561, %v4563
      %v4565 = vrot.slane %v4355, 2
      %v4566 = vrot.slane %v4360, 2
      %v4567 = vsel %vm2271, %v4565, %v4566
      %v4568 = vrot.slane %v4365, 2
      %v4569 = vsel %vm2271, %v4566, %v4568
      %v4570 = vrot.slane %v4370, 2
      %v4571 = vrot.slane %v4375, 2
      %v4572 = vsel %vm2271, %v4570, %v4571
      %v4573 = vrot.slane %v4380, 2
      %v4574 = vsel %vm2271, %v4571, %v4573
      %v4575 = vrot.slane %v4385, 2
      %v4576 = vrot.slane %v4390, 2
      %v4577 = vsel %vm2271, %v4575, %v4576
      %v4578 = vrot.slane %v4395, 2
      %v4579 = vsel %vm2271, %v4576, %v4578
      %v4580 = vrot.slane %v4400, 2
      %v4581 = vrot.slane %v4405, 2
      %v4582 = vsel %vm2271, %v4580, %v4581
      %v4583 = vrot.slane %v4410, 2
      %v4584 = vsel %vm2271, %v4581, %v4583
      %v4617 = vadd.f32 %v4425, %v4507
      %v4618 = vadd.f32 %v4426, %v4509
      %v4619 = vadd.f32 %v4427, %v4512
      %v4620 = vadd.f32 %v4428, %v4514
      %v4621 = vadd.f32 %v4429, %v4517
      %v4622 = vadd.f32 %v4430, %v4519
      %v4623 = vadd.f32 %v4431, %v4522
      %v4624 = vadd.f32 %v4432, %v4524
      %v4625 = vadd.f32 %v4433, %v4527
      %v4626 = vadd.f32 %v4434, %v4529
      %v4627 = vadd.f32 %v4435, %v4532
      %v4628 = vadd.f32 %v4436, %v4534
      %v4629 = vadd.f32 %v4437, %v4537
      %v4630 = vadd.f32 %v4438, %v4539
      %v4631 = vadd.f32 %v4439, %v4542
      %v4632 = vadd.f32 %v4440, %v4544
      %v4633 = vadd.f32 %v4441, %v4547
      %v4634 = vadd.f32 %v4442, %v4549
      %v4635 = vadd.f32 %v4443, %v4552
      %v4636 = vadd.f32 %v4444, %v4554
      %v4637 = vadd.f32 %v4445, %v4557
      %v4638 = vadd.f32 %v4446, %v4559
      %v4639 = vadd.f32 %v4447, %v4562
      %v4640 = vadd.f32 %v4448, %v4564
      %v4641 = vadd.f32 %v4449, %v4567
      %v4642 = vadd.f32 %v4450, %v4569
      %v4643 = vadd.f32 %v4451, %v4572
      %v4644 = vadd.f32 %v4452, %v4574
      %v4645 = vadd.f32 %v4453, %v4577
      %v4646 = vadd.f32 %v4454, %v4579
      %v4647 = vadd.f32 %v4455, %v4582
      %v4648 = vadd.f32 %v4456, %v4584
      %4649 = vst [vmem:[#allocation2] sm:$0xff] %v4617
      %4650 = vst [vmem:[#allocation2 + $0x8] sm:$0xff] %v4618
      %4651 = vst [vmem:[#allocation2 + $0x10] sm:$0xff] %v4619
      %4652 = vst [vmem:[#allocation2 + $0x18] sm:$0xff] %v4620
      %4653 = vst [vmem:[#allocation2 + $0x20] sm:$0xff] %v4621
      %4654 = vst [vmem:[#allocation2 + $0x28] sm:$0xff] %v4622
      %4655 = vst [vmem:[#allocation2 + $0x30] sm:$0xff] %v4623
      %4656 = vst [vmem:[#allocation2 + $0x38] sm:$0xff] %v4624
      %4657 = vst [vmem:[#allocation2 + $0x40] sm:$0xff] %v4625
      %4658 = vst [vmem:[#allocation2 + $0x48] sm:$0xff] %v4626
      %4659 = vst [vmem:[#allocation2 + $0x50] sm:$0xff] %v4627
      %4660 = vst [vmem:[#allocation2 + $0x58] sm:$0xff] %v4628
      %4661 = vst [vmem:[#allocation2 + $0x60] sm:$0xff] %v4629
      %4662 = vst [vmem:[#allocation2 + $0x68] sm:$0xff] %v4630
      %4663 = vst [vmem:[#allocation2 + $0x70] sm:$0xff] %v4631
      %4664 = vst [vmem:[#allocation2 + $0x78] sm:$0xff] %v4632
      %4665 = vst [vmem:[#allocation2 + $0x80] sm:$0xff] %v4633
      %4666 = vst [vmem:[#allocation2 + $0x88] sm:$0xff] %v4634
      %4667 = vst [vmem:[#allocation2 + $0x90] sm:$0xff] %v4635
      %4668 = vst [vmem:[#allocation2 + $0x98] sm:$0xff] %v4636
      %4669 = vst [vmem:[#allocation2 + $0xa0] sm:$0xff] %v4637
      %4670 = vst [vmem:[#allocation2 + $0xa8] sm:$0xff] %v4638
      %4671 = vst [vmem:[#allocation2 + $0xb0] sm:$0xff] %v4639
      %4672 = vst [vmem:[#allocation2 + $0xb8] sm:$0xff] %v4640
      %4673 = vst [vmem:[#allocation2 + $0xc0] sm:$0xff] %v4641
      %4674 = vst [vmem:[#allocation2 + $0xc8] sm:$0xff] %v4642
      %4675 = vst [vmem:[#allocation2 + $0xd0] sm:$0xff] %v4643
      %4676 = vst [vmem:[#allocation2 + $0xd8] sm:$0xff] %v4644
      %4677 = vst [vmem:[#allocation2 + $0xe0] sm:$0xff] %v4645
      %4678 = vst [vmem:[#allocation2 + $0xe8] sm:$0xff] %v4646
      %4679 = vst [vmem:[#allocation2 + $0xf0] sm:$0xff] %v4647
      %4680 = vst [vmem:[#allocation2 + $0xf8] sm:$0xff] %v4648
      %v4681 = vld [vmem:[%s168] sm:$0xff]
      %v4682 = vld [vmem:[%s168 + $0x8] sm:$0xff]
      %v4683 = vld [vmem:[%s168 + $0x10] sm:$0xff]
      %v4684 = vld [vmem:[%s168 + $0x18] sm:$0xff]
      %v4685 = vld [vmem:[%s168 + $0x20] sm:$0xff]
      %v4686 = vld [vmem:[%s168 + $0x28] sm:$0xff]
      %v4687 = vld [vmem:[%s168 + $0x30] sm:$0xff]
      %v4688 = vld [vmem:[%s168 + $0x38] sm:$0xff]
      %v4689 = vld [vmem:[%s168 + $0x40] sm:$0xff]
      %v4690 = vld [vmem:[%s168 + $0x48] sm:$0xff]
      %v4691 = vld [vmem:[%s168 + $0x50] sm:$0xff]
      %v4692 = vld [vmem:[%s168 + $0x58] sm:$0xff]
      %v4693 = vld [vmem:[%s168 + $0x60] sm:$0xff]
      %v4694 = vld [vmem:[%s168 + $0x68] sm:$0xff]
      %v4695 = vld [vmem:[%s168 + $0x70] sm:$0xff]
      %v4696 = vld [vmem:[%s168 + $0x78] sm:$0xff]
      %v4697 = vld [vmem:[%s168 + $0x80] sm:$0xff]
      %v4698 = vld [vmem:[%s168 + $0x88] sm:$0xff]
      %v4699 = vld [vmem:[%s168 + $0x90] sm:$0xff]
      %v4700 = vld [vmem:[%s168 + $0x98] sm:$0xff]
      %v4701 = vld [vmem:[%s168 + $0xa0] sm:$0xff]
      %v4702 = vld [vmem:[%s168 + $0xa8] sm:$0xff]
      %v4703 = vld [vmem:[%s168 + $0xb0] sm:$0xff]
      %v4704 = vld [vmem:[%s168 + $0xb8] sm:$0xff]
      %v4705 = vld [vmem:[%s168 + $0xc0] sm:$0xff]
      %v4706 = vld [vmem:[%s168 + $0xc8] sm:$0xff]
      %v4707 = vld [vmem:[%s168 + $0xd0] sm:$0xff]
      %v4708 = vld [vmem:[%s168 + $0xd8] sm:$0xff]
      %v4709 = vld [vmem:[%s168 + $0xe0] sm:$0xff]
      %v4710 = vld [vmem:[%s168 + $0xe8] sm:$0xff]
      %v4711 = vld [vmem:[%s168 + $0xf0] sm:$0xff]
      %v4712 = vld [vmem:[%s168 + $0xf8] sm:$0xff]
      %v4713 = vld [vmem:[%s168 + $0x100] sm:$0xff]
      %v4714 = vld [vmem:[%s168 + $0x108] sm:$0xff]
      %v4715 = vld [vmem:[%s168 + $0x110] sm:$0xff]
      %v4716 = vld [vmem:[%s168 + $0x118] sm:$0xff]
      %v4717 = vld [vmem:[%s168 + $0x120] sm:$0xff]
      %v4718 = vld [vmem:[%s168 + $0x128] sm:$0xff]
      %v4719 = vld [vmem:[%s168 + $0x130] sm:$0xff]
      %v4720 = vld [vmem:[%s168 + $0x138] sm:$0xff]
      %v4721 = vld [vmem:[%s168 + $0x140] sm:$0xff]
      %v4722 = vld [vmem:[%s168 + $0x148] sm:$0xff]
      %v4723 = vld [vmem:[%s168 + $0x150] sm:$0xff]
      %v4724 = vld [vmem:[%s168 + $0x158] sm:$0xff]
      %v4725 = vld [vmem:[%s168 + $0x160] sm:$0xff]
      %v4726 = vld [vmem:[%s168 + $0x168] sm:$0xff]
      %v4727 = vld [vmem:[%s168 + $0x170] sm:$0xff]
      %v4728 = vld [vmem:[%s168 + $0x178] sm:$0xff]
      %v4729 = vld [vmem:[%s168 + $0x180] sm:$0xff]
      %v4730 = vld [vmem:[%s168 + $0x188] sm:$0xff]
      %v4731 = vld [vmem:[%s168 + $0x190] sm:$0xff]
      %v4732 = vld [vmem:[%s168 + $0x198] sm:$0xff]
      %v4733 = vld [vmem:[%s168 + $0x1a0] sm:$0xff]
      %v4734 = vld [vmem:[%s168 + $0x1a8] sm:$0xff]
      %s4735 = scalar_lea.vmem %s172, 48
      %v4736 = vld [vmem:[%s4735] sm:$0xff]
      %v4738 = vsel %vm268, %v4681, 0
      %v4741 = vsel %vm268, %v4682, 0
      %v4744 = vsel %vm268, %v4683, 0
      %v4747 = vsel %vm268, %v4684, 0
      %v4750 = vsel %vm268, %v4685, 0
      %v4753 = vsel %vm268, %v4686, 0
      %v4756 = vsel %vm268, %v4687, 0
      %v4759 = vsel %vm268, %v4688, 0
      %v4762 = vsel %vm268, %v4689, 0
      %v4765 = vsel %vm268, %v4690, 0
      %v4768 = vsel %vm268, %v4691, 0
      %v4771 = vsel %vm268, %v4692, 0
      %v4774 = vsel %vm268, %v4693, 0
      %v4777 = vsel %vm268, %v4694, 0
      %v4780 = vsel %vm268, %v4695, 0
      %v4783 = vsel %vm268, %v4696, 0
      %v4786 = vsel %vm268, %v4697, 0
      %v4789 = vsel %vm268, %v4698, 0
      %v4792 = vsel %vm268, %v4699, 0
      %v4795 = vsel %vm268, %v4700, 0
      %v4798 = vsel %vm268, %v4701, 0
      %v4801 = vsel %vm268, %v4702, 0
      %v4804 = vsel %vm268, %v4703, 0
      %v4807 = vsel %vm268, %v4704, 0
      %v4810 = vsel %vm268, %v4705, 0
      %v4813 = vsel %vm268, %v4706, 0
      %v4816 = vsel %vm268, %v4707, 0
      %v4819 = vsel %vm268, %v4708, 0
      %v4822 = vsel %vm268, %v4709, 0
      %v4825 = vsel %vm268, %v4710, 0
      %v4828 = vsel %vm268, %v4711, 0
      %v4831 = vsel %vm268, %v4712, 0
      %v4834 = vsel %vm268, %v4713, 0
      %v4837 = vsel %vm268, %v4714, 0
      %v4840 = vsel %vm268, %v4715, 0
      %v4843 = vsel %vm268, %v4716, 0
      %v4846 = vsel %vm268, %v4717, 0
      %v4849 = vsel %vm268, %v4718, 0
      %v4852 = vsel %vm268, %v4719, 0
      %v4855 = vsel %vm268, %v4720, 0
      %v4858 = vsel %vm268, %v4721, 0
      %v4861 = vsel %vm268, %v4722, 0
      %v4864 = vsel %vm268, %v4723, 0
      %v4867 = vsel %vm268, %v4724, 0
      %v4870 = vsel %vm268, %v4725, 0
      %v4873 = vsel %vm268, %v4726, 0
      %v4876 = vsel %vm268, %v4727, 0
      %v4879 = vsel %vm268, %v4728, 0
      %v4882 = vsel %vm268, %v4729, 0
      %v4885 = vsel %vm268, %v4730, 0
      %v4888 = vsel %vm268, %v4731, 0
      %v4891 = vsel %vm268, %v4732, 0
      %v4894 = vsel %vm268, %v4733, 0
      %v4897 = vsel %vm268, %v4734, 0
      %4899 = vmatprep.subr.mxu0 0.0
      %4900 = vmatpush1.msra.mxu0 %v4736
      %4901 = vmatprep.subr.mxu0 0.0
      %4902 = vmatpush1.msra.mxu0 0.0
      %4903 = vmatprep.subr.mxu0 0.0
      %4904 = vmatpush1.msra.mxu0 0.0
      %4905 = vmatprep.subr.mxu0 0.0
      %4906 = vmatpush1.msra.mxu0 0.0
      %4907 = vmatprep.subr.mxu0 0.0
      %4908 = vmatpush1.msra.mxu0 0.0
      %4909 = vmatprep.subr.mxu0 0.0
      %4910 = vmatpush1.msra.mxu0 0.0
      %4911 = vmatprep.subr.mxu0 0.0
      %4912 = vmatpush1.msra.mxu0 0.0
      %4913 = vmatprep.subr.mxu0 0.0
      %4914 = vmatpush1.msra.mxu0 0.0
      %4915 = vmatprep.subr.mxu0 0.0
      %4916 = vmatpush1.msra.mxu0 0.0
      %4917 = vmatprep.subr.mxu0 0.0
      %4918 = vmatpush1.msra.mxu0 0.0
      %4919 = vmatprep.subr.mxu0 0.0
      %4920 = vmatpush1.msra.mxu0 0.0
      %4921 = vmatprep.subr.mxu0 0.0
      %4922 = vmatpush1.msra.mxu0 0.0
      %4923 = vmatprep.subr.mxu0 0.0
      %4924 = vmatpush1.msra.mxu0 0.0
      %4925 = vmatprep.subr.mxu0 0.0
      %4926 = vmatpush1.msra.mxu0 0.0
      %4927 = vmatprep.subr.mxu0 0.0
      %4928 = vmatpush1.msra.mxu0 0.0
      %4929 = vmatprep.subr.mxu0 0.0
      %4930 = vmatpush1.msra.mxu0 0.0
      %4931 = vmatprep.subr.mxu0 0.0
      %4932 = vmatpush1.msra.mxu0 0.0
      %4933 = vmatprep.subr.mxu0 0.0
      %4934 = vmatpush1.msra.mxu0 0.0
      %4935 = vmatprep.subr.mxu0 0.0
      %4936 = vmatpush1.msra.mxu0 0.0
      %4937 = vmatprep.subr.mxu0 0.0
      %4938 = vmatpush1.msra.mxu0 0.0
      %4939 = vmatprep.subr.mxu0 0.0
      %4940 = vmatpush1.msra.mxu0 0.0
      %4941 = vmatprep.subr.mxu0 0.0
      %4942 = vmatpush1.msra.mxu0 0.0
      %4943 = vmatprep.subr.mxu0 0.0
      %4944 = vmatpush1.msra.mxu0 0.0
      %4945 = vmatprep.subr.mxu0 0.0
      %4946 = vmatpush1.msra.mxu0 0.0
      %4947 = vmatprep.subr.mxu0 0.0
      %4948 = vmatpush1.msra.mxu0 0.0
      %4949 = vmatprep.subr.mxu0 0.0
      %4950 = vmatpush1.msra.mxu0 0.0
      %4951 = vmatprep.subr.mxu0 0.0
      %4952 = vmatpush1.msra.mxu0 0.0
      %4953 = vmatprep.subr.mxu0 0.0
      %4954 = vmatpush1.msra.mxu0 0.0
      %4955 = vmatprep.subr.mxu0 0.0
      %4956 = vmatpush1.msra.mxu0 0.0
      %4957 = vmatprep.subr.mxu0 0.0
      %4958 = vmatpush1.msra.mxu0 0.0
      %4959 = vmatprep.subr.mxu0 0.0
      %4960 = vmatpush1.msra.mxu0 0.0
      %4961 = vmatprep.subr.mxu0 0.0
      %4962 = vmatpush1.msra.mxu0 0.0
      %4963 = vmatprep.mubr.f32.mxu0 0.0
      %4964 = vmatmul.mubr.f32.gmra.mrb[0].mxu0 %v4738
      %v4965 = vpop.f32.mrb[0].mxu0
      %v4966 = vpop.f32.mrb[0].mxu0
      %4967 = vmatprep.mubr.f32.mxu0 0.0
      %4968 = vmatmul.mubr.f32.gmra.mrb[0].mxu0 %v4741
      %v4969 = vpop.f32.mrb[0].mxu0
      %v4970 = vpop.f32.mrb[0].mxu0
      %4971 = vmatprep.mubr.f32.mxu0 0.0
      %4972 = vmatmul.mubr.f32.gmra.mrb[0].mxu0 %v4744
      %v4973 = vpop.f32.mrb[0].mxu0
      %v4974 = vpop.f32.mrb[0].mxu0
      %4975 = vmatprep.mubr.f32.mxu0 0.0
      %4976 = vmatmul.mubr.f32.gmra.mrb[0].mxu0 %v4747
      %v4977 = vpop.f32.mrb[0].mxu0
      %v4978 = vpop.f32.mrb[0].mxu0
      %4979 = vmatprep.mubr.f32.mxu0 0.0
      %4980 = vmatmul.mubr.f32.gmra.mrb[0].mxu0 %v4750
      %v4981 = vpop.f32.mrb[0].mxu0
      %v4982 = vpop.f32.mrb[0].mxu0
      %4983 = vmatprep.mubr.f32.mxu0 0.0
      %4984 = vmatmul.mubr.f32.gmra.mrb[0].mxu0 %v4753
      %v4985 = vpop.f32.mrb[0].mxu0
      %v4986 = vpop.f32.mrb[0].mxu0
      %4987 = vmatprep.mubr.f32.mxu0 0.0
      %4988 = vmatmul.mubr.f32.gmra.mrb[0].mxu0 %v4756
      %v4989 = vpop.f32.mrb[0].mxu0
      %v4990 = vadd.f32 0.0, %v4989
      %v4991 = vpop.f32.mrb[0].mxu0
      %4992 = vmatprep.mubr.f32.mxu0 0.0
      %4993 = vmatmul.mubr.f32.gmra.mrb[0].mxu0 %v4759
      %v4994 = vpop.f32.mrb[0].mxu0
      %v4995 = vadd.f32 0.0, %v4994
      %v4996 = vpop.f32.mrb[0].mxu0
      %4997 = vmatprep.mubr.f32.mxu0 0.0
      %4998 = vmatmul.mubr.f32.gmra.mrb[0].mxu0 %v4762
      %v4999 = vpop.f32.mrb[0].mxu0
      %v5000 = vpop.f32.mrb[0].mxu0
      %5001 = vmatprep.mubr.f32.mxu0 0.0
      %5002 = vmatmul.mubr.f32.gmra.mrb[0].mxu0 %v4765
      %v5003 = vpop.f32.mrb[0].mxu0
      %v5004 = vadd.f32 0.0, %v5003
      %v5005 = vpop.f32.mrb[0].mxu0
      %5006 = vmatprep.mubr.f32.mxu0 0.0
      %5007 = vmatmul.mubr.f32.gmra.mrb[0].mxu0 %v4768
      %v5008 = vpop.f32.mrb[0].mxu0
      %v5009 = vadd.f32 0.0, %v5008
      %v5010 = vpop.f32.mrb[0].mxu0
      %5011 = vmatprep.mubr.f32.mxu0 0.0
      %5012 = vmatmul.mubr.f32.gmra.mrb[0].mxu0 %v4771
      %v5013 = vpop.f32.mrb[0].mxu0
      %v5014 = vpop.f32.mrb[0].mxu0
      %5015 = vmatprep.mubr.f32.mxu0 0.0
      %5016 = vmatmul.mubr.f32.gmra.mrb[0].mxu0 %v4774
      %v5017 = vpop.f32.mrb[0].mxu0
      %v5018 = vadd.f32 0.0, %v5017
      %v5019 = vpop.f32.mrb[0].mxu0
      %5020 = vmatprep.mubr.f32.mxu0 0.0
      %5021 = vmatmul.mubr.f32.gmra.mrb[0].mxu0 %v4777
      %v5022 = vpop.f32.mrb[0].mxu0
      %v5023 = vadd.f32 0.0, %v5022
      %v5024 = vpop.f32.mrb[0].mxu0
      %5025 = vmatprep.mubr.f32.mxu0 0.0
      %5026 = vmatmul.mubr.f32.gmra.mrb[0].mxu0 %v4780
      %v5027 = vpop.f32.mrb[0].mxu0
      %v5028 = vpop.f32.mrb[0].mxu0
      %5029 = vmatprep.mubr.f32.mxu0 0.0
      %5030 = vmatmul.mubr.f32.gmra.mrb[0].mxu0 %v4783
      %v5031 = vpop.f32.mrb[0].mxu0
      %v5032 = vadd.f32 0.0, %v5031
      %v5033 = vpop.f32.mrb[0].mxu0
      %5034 = vmatprep.mubr.f32.mxu0 0.0
      %5035 = vmatmul.mubr.f32.gmra.mrb[0].mxu0 %v4786
      %v5036 = vpop.f32.mrb[0].mxu0
      %v5037 = vadd.f32 0.0, %v5036
      %v5038 = vpop.f32.mrb[0].mxu0
      %5039 = vmatprep.mubr.f32.mxu0 0.0
      %5040 = vmatmul.mubr.f32.gmra.mrb[0].mxu0 %v4789
      %v5041 = vpop.f32.mrb[0].mxu0
      %v5042 = vpop.f32.mrb[0].mxu0
      %5043 = vmatprep.mubr.f32.mxu0 0.0
      %5044 = vmatmul.mubr.f32.gmra.mrb[0].mxu0 %v4792
      %v5045 = vpop.f32.mrb[0].mxu0
      %v5046 = vadd.f32 0.0, %v5045
      %v5047 = vpop.f32.mrb[0].mxu0
      %5048 = vmatprep.mubr.f32.mxu0 0.0
      %5049 = vmatmul.mubr.f32.gmra.mrb[0].mxu0 %v4795
      %v5050 = vpop.f32.mrb[0].mxu0
      %v5051 = vadd.f32 0.0, %v5050
      %v5052 = vpop.f32.mrb[0].mxu0
      %5053 = vmatprep.mubr.f32.mxu0 0.0
      %5054 = vmatmul.mubr.f32.gmra.mrb[0].mxu0 %v4798
      %v5055 = vpop.f32.mrb[0].mxu0
      %v5056 = vpop.f32.mrb[0].mxu0
      %5057 = vmatprep.mubr.f32.mxu0 0.0
      %5058 = vmatmul.mubr.f32.gmra.mrb[0].mxu0 %v4801
      %v5059 = vpop.f32.mrb[0].mxu0
      %v5060 = vadd.f32 0.0, %v5059
      %v5061 = vpop.f32.mrb[0].mxu0
      %5062 = vmatprep.mubr.f32.mxu0 0.0
      %5063 = vmatmul.mubr.f32.gmra.mrb[0].mxu0 %v4804
      %v5064 = vpop.f32.mrb[0].mxu0
      %v5065 = vadd.f32 0.0, %v5064
      %v5066 = vpop.f32.mrb[0].mxu0
      %5067 = vmatprep.mubr.f32.mxu0 0.0
      %5068 = vmatmul.mubr.f32.gmra.mrb[0].mxu0 %v4807
      %v5069 = vpop.f32.mrb[0].mxu0
      %v5070 = vpop.f32.mrb[0].mxu0
      %5071 = vmatprep.mubr.f32.mxu0 0.0
      %5072 = vmatmul.mubr.f32.gmra.mrb[0].mxu0 %v4810
      %v5073 = vpop.f32.mrb[0].mxu0
      %v5074 = vadd.f32 0.0, %v5073
      %v5075 = vpop.f32.mrb[0].mxu0
      %5076 = vmatprep.mubr.f32.mxu0 0.0
      %5077 = vmatmul.mubr.f32.gmra.mrb[0].mxu0 %v4813
      %v5078 = vpop.f32.mrb[0].mxu0
      %v5079 = vadd.f32 0.0, %v5078
      %v5080 = vpop.f32.mrb[0].mxu0
      %5081 = vmatprep.mubr.f32.mxu0 0.0
      %5082 = vmatmul.mubr.f32.gmra.mrb[0].mxu0 %v4816
      %v5083 = vpop.f32.mrb[0].mxu0
      %v5084 = vpop.f32.mrb[0].mxu0
      %5085 = vmatprep.mubr.f32.mxu0 0.0
      %5086 = vmatmul.mubr.f32.gmra.mrb[0].mxu0 %v4819
      %v5087 = vpop.f32.mrb[0].mxu0
      %v5088 = vadd.f32 0.0, %v5087
      %v5089 = vpop.f32.mrb[0].mxu0
      %5090 = vmatprep.mubr.f32.mxu0 0.0
      %5091 = vmatmul.mubr.f32.gmra.mrb[0].mxu0 %v4822
      %v5092 = vpop.f32.mrb[0].mxu0
      %v5093 = vadd.f32 0.0, %v5092
      %v5094 = vpop.f32.mrb[0].mxu0
      %5095 = vmatprep.mubr.f32.mxu0 0.0
      %5096 = vmatmul.mubr.f32.gmra.mrb[0].mxu0 %v4825
      %v5097 = vpop.f32.mrb[0].mxu0
      %v5098 = vpop.f32.mrb[0].mxu0
      %5099 = vmatprep.mubr.f32.mxu0 0.0
      %5100 = vmatmul.mubr.f32.gmra.mrb[0].mxu0 %v4828
      %v5101 = vpop.f32.mrb[0].mxu0
      %v5102 = vadd.f32 0.0, %v5101
      %v5103 = vpop.f32.mrb[0].mxu0
      %5104 = vmatprep.mubr.f32.mxu0 0.0
      %5105 = vmatmul.mubr.f32.gmra.mrb[0].mxu0 %v4831
      %v5106 = vpop.f32.mrb[0].mxu0
      %v5107 = vadd.f32 0.0, %v5106
      %v5108 = vpop.f32.mrb[0].mxu0
      %5109 = vmatprep.mubr.f32.mxu0 0.0
      %5110 = vmatmul.mubr.f32.gmra.mrb[0].mxu0 %v4834
      %v5111 = vpop.f32.mrb[0].mxu0
      %v5112 = vpop.f32.mrb[0].mxu0
      %5113 = vmatprep.mubr.f32.mxu0 0.0
      %5114 = vmatmul.mubr.f32.gmra.mrb[0].mxu0 %v4837
      %v5115 = vpop.f32.mrb[0].mxu0
      %v5116 = vadd.f32 0.0, %v5115
      %v5117 = vpop.f32.mrb[0].mxu0
      %5118 = vmatprep.mubr.f32.mxu0 0.0
      %5119 = vmatmul.mubr.f32.gmra.mrb[0].mxu0 %v4840
      %v5120 = vpop.f32.mrb[0].mxu0
      %v5121 = vadd.f32 0.0, %v5120
      %v5122 = vpop.f32.mrb[0].mxu0
      %5123 = vmatprep.mubr.f32.mxu0 0.0
      %5124 = vmatmul.mubr.f32.gmra.mrb[0].mxu0 %v4843
      %v5125 = vpop.f32.mrb[0].mxu0
      %v5126 = vpop.f32.mrb[0].mxu0
      %5127 = vmatprep.mubr.f32.mxu0 0.0
      %5128 = vmatmul.mubr.f32.gmra.mrb[0].mxu0 %v4846
      %v5129 = vpop.f32.mrb[0].mxu0
      %v5130 = vadd.f32 0.0, %v5129
      %v5131 = vpop.f32.mrb[0].mxu0
      %5132 = vmatprep.mubr.f32.mxu0 0.0
      %5133 = vmatmul.mubr.f32.gmra.mrb[0].mxu0 %v4849
      %v5134 = vpop.f32.mrb[0].mxu0
      %v5135 = vadd.f32 0.0, %v5134
      %v5136 = vpop.f32.mrb[0].mxu0
      %5137 = vmatprep.mubr.f32.mxu0 0.0
      %5138 = vmatmul.mubr.f32.gmra.mrb[0].mxu0 %v4852
      %v5139 = vpop.f32.mrb[0].mxu0
      %v5140 = vpop.f32.mrb[0].mxu0
      %5141 = vmatprep.mubr.f32.mxu0 0.0
      %5142 = vmatmul.mubr.f32.gmra.mrb[0].mxu0 %v4855
      %v5143 = vpop.f32.mrb[0].mxu0
      %v5144 = vadd.f32 0.0, %v5143
      %v5145 = vpop.f32.mrb[0].mxu0
      %5146 = vmatprep.mubr.f32.mxu0 0.0
      %5147 = vmatmul.mubr.f32.gmra.mrb[0].mxu0 %v4858
      %v5148 = vpop.f32.mrb[0].mxu0
      %v5149 = vadd.f32 0.0, %v5148
      %v5150 = vpop.f32.mrb[0].mxu0
      %5151 = vmatprep.mubr.f32.mxu0 0.0
      %5152 = vmatmul.mubr.f32.gmra.mrb[0].mxu0 %v4861
      %v5153 = vpop.f32.mrb[0].mxu0
      %v5154 = vpop.f32.mrb[0].mxu0
      %5155 = vmatprep.mubr.f32.mxu0 0.0
      %5156 = vmatmul.mubr.f32.gmra.mrb[0].mxu0 %v4864
      %v5157 = vpop.f32.mrb[0].mxu0
      %v5158 = vadd.f32 0.0, %v5157
      %v5159 = vpop.f32.mrb[0].mxu0
      %5160 = vmatprep.mubr.f32.mxu0 0.0
      %5161 = vmatmul.mubr.f32.gmra.mrb[0].mxu0 %v4867
      %v5162 = vpop.f32.mrb[0].mxu0
      %v5163 = vadd.f32 0.0, %v5162
      %v5164 = vpop.f32.mrb[0].mxu0
      %5165 = vmatprep.mubr.f32.mxu0 0.0
      %5166 = vmatmul.mubr.f32.gmra.mrb[0].mxu0 %v4870
      %v5167 = vpop.f32.mrb[0].mxu0
      %v5168 = vpop.f32.mrb[0].mxu0
      %5169 = vmatprep.mubr.f32.mxu0 0.0
      %5170 = vmatmul.mubr.f32.gmra.mrb[0].mxu0 %v4873
      %v5171 = vpop.f32.mrb[0].mxu0
      %v5172 = vadd.f32 0.0, %v5171
      %v5173 = vpop.f32.mrb[0].mxu0
      %5174 = vmatprep.mubr.f32.mxu0 0.0
      %5175 = vmatmul.mubr.f32.gmra.mrb[0].mxu0 %v4876
      %v5176 = vpop.f32.mrb[0].mxu0
      %v5177 = vadd.f32 0.0, %v5176
      %v5178 = vpop.f32.mrb[0].mxu0
      %5179 = vmatprep.mubr.f32.mxu0 0.0
      %5180 = vmatmul.mubr.f32.gmra.mrb[0].mxu0 %v4879
      %v5181 = vpop.f32.mrb[0].mxu0
      %v5182 = vpop.f32.mrb[0].mxu0
      %5183 = vmatprep.mubr.f32.mxu0 0.0
      %5184 = vmatmul.mubr.f32.gmra.mrb[0].mxu0 %v4882
      %v5185 = vpop.f32.mrb[0].mxu0
      %v5186 = vadd.f32 0.0, %v5185
      %v5187 = vpop.f32.mrb[0].mxu0
      %5188 = vmatprep.mubr.f32.mxu0 0.0
      %5189 = vmatmul.mubr.f32.gmra.mrb[0].mxu0 %v4885
      %v5190 = vpop.f32.mrb[0].mxu0
      %v5191 = vadd.f32 0.0, %v5190
      %v5192 = vpop.f32.mrb[0].mxu0
      %5193 = vmatprep.mubr.f32.mxu0 0.0
      %5194 = vmatmul.mubr.f32.gmra.mrb[0].mxu0 %v4888
      %v5195 = vpop.f32.mrb[0].mxu0
      %v5196 = vpop.f32.mrb[0].mxu0
      %5197 = vmatprep.mubr.f32.mxu0 0.0
      %5198 = vmatmul.mubr.f32.gmra.mrb[0].mxu0 %v4891
      %v5199 = vpop.f32.mrb[0].mxu0
      %v5200 = vadd.f32 0.0, %v5199
      %v5201 = vpop.f32.mrb[0].mxu0
      %5202 = vmatprep.mubr.f32.mxu0 0.0
      %5203 = vmatmul.mubr.f32.gmra.mrb[0].mxu0 %v4894
      %v5204 = vpop.f32.mrb[0].mxu0
      %v5205 = vadd.f32 0.0, %v5204
      %v5206 = vpop.f32.mrb[0].mxu0
      %5207 = vmatprep.mubr.f32.mxu0 0.0
      %5208 = vmatmul.mubr.f32.gmra.mrb[0].mxu0 %v4897
      %v5209 = vpop.f32.mrb[0].mxu0
      %v5210 = vpop.f32.mrb[0].mxu0
      %5211 = vdwg.mxu0
      %v5212 = vld [vmem:[#allocation2] sm:$0xff]
      %v5213 = vld [vmem:[#allocation2 + $0x8] sm:$0xff]
      %v5214 = vld [vmem:[#allocation2 + $0x10] sm:$0xff]
      %v5215 = vld [vmem:[#allocation2 + $0x18] sm:$0xff]
      %v5216 = vld [vmem:[#allocation2 + $0x20] sm:$0xff]
      %v5217 = vld [vmem:[#allocation2 + $0x28] sm:$0xff]
      %v5218 = vld [vmem:[#allocation2 + $0x30] sm:$0xff]
      %v5219 = vld [vmem:[#allocation2 + $0x38] sm:$0xff]
      %v5220 = vld [vmem:[#allocation2 + $0x40] sm:$0xff]
      %v5221 = vld [vmem:[#allocation2 + $0x48] sm:$0xff]
      %v5222 = vld [vmem:[#allocation2 + $0x50] sm:$0xff]
      %v5223 = vld [vmem:[#allocation2 + $0x58] sm:$0xff]
      %v5224 = vld [vmem:[#allocation2 + $0x60] sm:$0xff]
      %v5225 = vld [vmem:[#allocation2 + $0x68] sm:$0xff]
      %v5226 = vld [vmem:[#allocation2 + $0x70] sm:$0xff]
      %v5227 = vld [vmem:[#allocation2 + $0x78] sm:$0xff]
      %v5228 = vld [vmem:[#allocation2 + $0x80] sm:$0xff]
      %v5229 = vld [vmem:[#allocation2 + $0x88] sm:$0xff]
      %v5230 = vld [vmem:[#allocation2 + $0x90] sm:$0xff]
      %v5231 = vld [vmem:[#allocation2 + $0x98] sm:$0xff]
      %v5232 = vld [vmem:[#allocation2 + $0xa0] sm:$0xff]
      %v5233 = vld [vmem:[#allocation2 + $0xa8] sm:$0xff]
      %v5234 = vld [vmem:[#allocation2 + $0xb0] sm:$0xff]
      %v5235 = vld [vmem:[#allocation2 + $0xb8] sm:$0xff]
      %v5236 = vld [vmem:[#allocation2 + $0xc0] sm:$0xff]
      %v5237 = vld [vmem:[#allocation2 + $0xc8] sm:$0xff]
      %v5238 = vld [vmem:[#allocation2 + $0xd0] sm:$0xff]
      %v5239 = vld [vmem:[#allocation2 + $0xd8] sm:$0xff]
      %v5240 = vld [vmem:[#allocation2 + $0xe0] sm:$0xff]
      %v5241 = vld [vmem:[#allocation2 + $0xe8] sm:$0xff]
      %v5242 = vld [vmem:[#allocation2 + $0xf0] sm:$0xff]
      %v5243 = vld [vmem:[#allocation2 + $0xf8] sm:$0xff]
      %v5244 = vadd.f32 %v5212, %v4990
      %v5245 = vadd.f32 %v5213, %v4995
      %v5246 = vadd.f32 %v5214, %v5004
      %v5247 = vadd.f32 %v5215, %v5009
      %v5248 = vadd.f32 %v5216, %v5018
      %v5249 = vadd.f32 %v5217, %v5023
      %v5250 = vadd.f32 %v5218, %v5032
      %v5251 = vadd.f32 %v5219, %v5037
      %v5252 = vadd.f32 %v5220, %v5046
      %v5253 = vadd.f32 %v5221, %v5051
      %v5254 = vadd.f32 %v5222, %v5060
      %v5255 = vadd.f32 %v5223, %v5065
      %v5256 = vadd.f32 %v5224, %v5074
      %v5257 = vadd.f32 %v5225, %v5079
      %v5258 = vadd.f32 %v5226, %v5088
      %v5259 = vadd.f32 %v5227, %v5093
      %v5260 = vadd.f32 %v5228, %v5102
      %v5261 = vadd.f32 %v5229, %v5107
      %v5262 = vadd.f32 %v5230, %v5116
      %v5263 = vadd.f32 %v5231, %v5121
      %v5264 = vadd.f32 %v5232, %v5130
      %v5265 = vadd.f32 %v5233, %v5135
      %v5266 = vadd.f32 %v5234, %v5144
      %v5267 = vadd.f32 %v5235, %v5149
      %v5268 = vadd.f32 %v5236, %v5158
      %v5269 = vadd.f32 %v5237, %v5163
      %v5270 = vadd.f32 %v5238, %v5172
      %v5271 = vadd.f32 %v5239, %v5177
      %v5272 = vadd.f32 %v5240, %v5186
      %v5273 = vadd.f32 %v5241, %v5191
      %v5274 = vadd.f32 %v5242, %v5200
      %v5275 = vadd.f32 %v5243, %v5205
      %5276 = vst [vmem:[#allocation2] sm:$0xff] %v5244
      %5277 = vst [vmem:[#allocation2 + $0x8] sm:$0xff] %v5245
      %5278 = vst [vmem:[#allocation2 + $0x10] sm:$0xff] %v5246
      %5279 = vst [vmem:[#allocation2 + $0x18] sm:$0xff] %v5247
      %5280 = vst [vmem:[#allocation2 + $0x20] sm:$0xff] %v5248
      %5281 = vst [vmem:[#allocation2 + $0x28] sm:$0xff] %v5249
      %5282 = vst [vmem:[#allocation2 + $0x30] sm:$0xff] %v5250
      %5283 = vst [vmem:[#allocation2 + $0x38] sm:$0xff] %v5251
      %5284 = vst [vmem:[#allocation2 + $0x40] sm:$0xff] %v5252
      %5285 = vst [vmem:[#allocation2 + $0x48] sm:$0xff] %v5253
      %5286 = vst [vmem:[#allocation2 + $0x50] sm:$0xff] %v5254
      %5287 = vst [vmem:[#allocation2 + $0x58] sm:$0xff] %v5255
      %5288 = vst [vmem:[#allocation2 + $0x60] sm:$0xff] %v5256
      %5289 = vst [vmem:[#allocation2 + $0x68] sm:$0xff] %v5257
      %5290 = vst [vmem:[#allocation2 + $0x70] sm:$0xff] %v5258
      %5291 = vst [vmem:[#allocation2 + $0x78] sm:$0xff] %v5259
      %5292 = vst [vmem:[#allocation2 + $0x80] sm:$0xff] %v5260
      %5293 = vst [vmem:[#allocation2 + $0x88] sm:$0xff] %v5261
      %5294 = vst [vmem:[#allocation2 + $0x90] sm:$0xff] %v5262
      %5295 = vst [vmem:[#allocation2 + $0x98] sm:$0xff] %v5263
      %5296 = vst [vmem:[#allocation2 + $0xa0] sm:$0xff] %v5264
      %5297 = vst [vmem:[#allocation2 + $0xa8] sm:$0xff] %v5265
      %5298 = vst [vmem:[#allocation2 + $0xb0] sm:$0xff] %v5266
      %5299 = vst [vmem:[#allocation2 + $0xb8] sm:$0xff] %v5267
      %5300 = vst [vmem:[#allocation2 + $0xc0] sm:$0xff] %v5268
      %5301 = vst [vmem:[#allocation2 + $0xc8] sm:$0xff] %v5269
      %5302 = vst [vmem:[#allocation2 + $0xd0] sm:$0xff] %v5270
      %5303 = vst [vmem:[#allocation2 + $0xd8] sm:$0xff] %v5271
      %5304 = vst [vmem:[#allocation2 + $0xe0] sm:$0xff] %v5272
      %5305 = vst [vmem:[#allocation2 + $0xe8] sm:$0xff] %v5273
      %5306 = vst [vmem:[#allocation2 + $0xf0] sm:$0xff] %v5274
      %5307 = vst [vmem:[#allocation2 + $0xf8] sm:$0xff] %v5275
      %v5308 = vld [vmem:[%s168] sm:$0xff]
      %v5309 = vld [vmem:[%s168 + $0x8] sm:$0xff]
      %v5310 = vld [vmem:[%s168 + $0x10] sm:$0xff]
      %v5311 = vld [vmem:[%s168 + $0x18] sm:$0xff]
      %v5312 = vld [vmem:[%s168 + $0x20] sm:$0xff]
      %v5313 = vld [vmem:[%s168 + $0x28] sm:$0xff]
      %v5314 = vld [vmem:[%s168 + $0x30] sm:$0xff]
      %v5315 = vld [vmem:[%s168 + $0x38] sm:$0xff]
      %v5316 = vld [vmem:[%s168 + $0x40] sm:$0xff]
      %v5317 = vld [vmem:[%s168 + $0x48] sm:$0xff]
      %v5318 = vld [vmem:[%s168 + $0x50] sm:$0xff]
      %v5319 = vld [vmem:[%s168 + $0x58] sm:$0xff]
      %v5320 = vld [vmem:[%s168 + $0x60] sm:$0xff]
      %v5321 = vld [vmem:[%s168 + $0x68] sm:$0xff]
      %v5322 = vld [vmem:[%s168 + $0x70] sm:$0xff]
      %v5323 = vld [vmem:[%s168 + $0x78] sm:$0xff]
      %v5324 = vld [vmem:[%s168 + $0x80] sm:$0xff]
      %v5325 = vld [vmem:[%s168 + $0x88] sm:$0xff]
      %v5326 = vld [vmem:[%s168 + $0x90] sm:$0xff]
      %v5327 = vld [vmem:[%s168 + $0x98] sm:$0xff]
      %v5328 = vld [vmem:[%s168 + $0xa0] sm:$0xff]
      %v5329 = vld [vmem:[%s168 + $0xa8] sm:$0xff]
      %v5330 = vld [vmem:[%s168 + $0xb0] sm:$0xff]
      %v5331 = vld [vmem:[%s168 + $0xb8] sm:$0xff]
      %v5332 = vld [vmem:[%s168 + $0xc0] sm:$0xff]
      %v5333 = vld [vmem:[%s168 + $0xc8] sm:$0xff]
      %v5334 = vld [vmem:[%s168 + $0xd0] sm:$0xff]
      %v5335 = vld [vmem:[%s168 + $0xd8] sm:$0xff]
      %v5336 = vld [vmem:[%s168 + $0xe0] sm:$0xff]
      %v5337 = vld [vmem:[%s168 + $0xe8] sm:$0xff]
      %v5338 = vld [vmem:[%s168 + $0xf0] sm:$0xff]
      %v5339 = vld [vmem:[%s168 + $0xf8] sm:$0xff]
      %v5340 = vld [vmem:[%s168 + $0x100] sm:$0xff]
      %v5341 = vld [vmem:[%s168 + $0x108] sm:$0xff]
      %v5342 = vld [vmem:[%s168 + $0x110] sm:$0xff]
      %v5343 = vld [vmem:[%s168 + $0x118] sm:$0xff]
      %v5344 = vld [vmem:[%s168 + $0x120] sm:$0xff]
      %v5345 = vld [vmem:[%s168 + $0x128] sm:$0xff]
      %v5346 = vld [vmem:[%s168 + $0x130] sm:$0xff]
      %v5347 = vld [vmem:[%s168 + $0x138] sm:$0xff]
      %v5348 = vld [vmem:[%s168 + $0x140] sm:$0xff]
      %v5349 = vld [vmem:[%s168 + $0x148] sm:$0xff]
      %v5350 = vld [vmem:[%s168 + $0x150] sm:$0xff]
      %v5351 = vld [vmem:[%s168 + $0x158] sm:$0xff]
      %v5352 = vld [vmem:[%s168 + $0x160] sm:$0xff]
      %v5353 = vld [vmem:[%s168 + $0x168] sm:$0xff]
      %v5354 = vld [vmem:[%s168 + $0x170] sm:$0xff]
      %v5355 = vld [vmem:[%s168 + $0x178] sm:$0xff]
      %v5356 = vld [vmem:[%s168 + $0x180] sm:$0xff]
      %v5357 = vld [vmem:[%s168 + $0x188] sm:$0xff]
      %v5358 = vld [vmem:[%s168 + $0x190] sm:$0xff]
      %v5359 = vld [vmem:[%s168 + $0x198] sm:$0xff]
      %v5360 = vld [vmem:[%s168 + $0x1a0] sm:$0xff]
      %v5361 = vld [vmem:[%s168 + $0x1a8] sm:$0xff]
      %s5362 = scalar_lea.vmem %s172, 56
      %v5363 = vld [vmem:[%s5362] sm:$0xff]
      %v5365 = vsel %vm268, %v5308, 0
      %v5368 = vsel %vm268, %v5309, 0
      %v5371 = vsel %vm268, %v5310, 0
      %v5374 = vsel %vm268, %v5311, 0
      %v5377 = vsel %vm268, %v5312, 0
      %v5380 = vsel %vm268, %v5313, 0
      %v5383 = vsel %vm268, %v5314, 0
      %v5386 = vsel %vm268, %v5315, 0
      %v5389 = vsel %vm268, %v5316, 0
      %v5392 = vsel %vm268, %v5317, 0
      %v5395 = vsel %vm268, %v5318, 0
      %v5398 = vsel %vm268, %v5319, 0
      %v5401 = vsel %vm268, %v5320, 0
      %v5404 = vsel %vm268, %v5321, 0
      %v5407 = vsel %vm268, %v5322, 0
      %v5410 = vsel %vm268, %v5323, 0
      %v5413 = vsel %vm268, %v5324, 0
      %v5416 = vsel %vm268, %v5325, 0
      %v5419 = vsel %vm268, %v5326, 0
      %v5422 = vsel %vm268, %v5327, 0
      %v5425 = vsel %vm268, %v5328, 0
      %v5428 = vsel %vm268, %v5329, 0
      %v5431 = vsel %vm268, %v5330, 0
      %v5434 = vsel %vm268, %v5331, 0
      %v5437 = vsel %vm268, %v5332, 0
      %v5440 = vsel %vm268, %v5333, 0
      %v5443 = vsel %vm268, %v5334, 0
      %v5446 = vsel %vm268, %v5335, 0
      %v5449 = vsel %vm268, %v5336, 0
      %v5452 = vsel %vm268, %v5337, 0
      %v5455 = vsel %vm268, %v5338, 0
      %v5458 = vsel %vm268, %v5339, 0
      %v5461 = vsel %vm268, %v5340, 0
      %v5464 = vsel %vm268, %v5341, 0
      %v5467 = vsel %vm268, %v5342, 0
      %v5470 = vsel %vm268, %v5343, 0
      %v5473 = vsel %vm268, %v5344, 0
      %v5476 = vsel %vm268, %v5345, 0
      %v5479 = vsel %vm268, %v5346, 0
      %v5482 = vsel %vm268, %v5347, 0
      %v5485 = vsel %vm268, %v5348, 0
      %v5488 = vsel %vm268, %v5349, 0
      %v5491 = vsel %vm268, %v5350, 0
      %v5494 = vsel %vm268, %v5351, 0
      %v5497 = vsel %vm268, %v5352, 0
      %v5500 = vsel %vm268, %v5353, 0
      %v5503 = vsel %vm268, %v5354, 0
      %v5506 = vsel %vm268, %v5355, 0
      %v5509 = vsel %vm268, %v5356, 0
      %v5512 = vsel %vm268, %v5357, 0
      %v5515 = vsel %vm268, %v5358, 0
      %v5518 = vsel %vm268, %v5359, 0
      %v5521 = vsel %vm268, %v5360, 0
      %v5524 = vsel %vm268, %v5361, 0
      %5526 = vmatprep.subr.mxu0 0.0
      %5527 = vmatpush1.msra.mxu0 %v5363
      %5528 = vmatprep.subr.mxu0 0.0
      %5529 = vmatpush1.msra.mxu0 0.0
      %5530 = vmatprep.subr.mxu0 0.0
      %5531 = vmatpush1.msra.mxu0 0.0
      %5532 = vmatprep.subr.mxu0 0.0
      %5533 = vmatpush1.msra.mxu0 0.0
      %5534 = vmatprep.subr.mxu0 0.0
      %5535 = vmatpush1.msra.mxu0 0.0
      %5536 = vmatprep.subr.mxu0 0.0
      %5537 = vmatpush1.msra.mxu0 0.0
      %5538 = vmatprep.subr.mxu0 0.0
      %5539 = vmatpush1.msra.mxu0 0.0
      %5540 = vmatprep.subr.mxu0 0.0
      %5541 = vmatpush1.msra.mxu0 0.0
      %5542 = vmatprep.subr.mxu0 0.0
      %5543 = vmatpush1.msra.mxu0 0.0
      %5544 = vmatprep.subr.mxu0 0.0
      %5545 = vmatpush1.msra.mxu0 0.0
      %5546 = vmatprep.subr.mxu0 0.0
      %5547 = vmatpush1.msra.mxu0 0.0
      %5548 = vmatprep.subr.mxu0 0.0
      %5549 = vmatpush1.msra.mxu0 0.0
      %5550 = vmatprep.subr.mxu0 0.0
      %5551 = vmatpush1.msra.mxu0 0.0
      %5552 = vmatprep.subr.mxu0 0.0
      %5553 = vmatpush1.msra.mxu0 0.0
      %5554 = vmatprep.subr.mxu0 0.0
      %5555 = vmatpush1.msra.mxu0 0.0
      %5556 = vmatprep.subr.mxu0 0.0
      %5557 = vmatpush1.msra.mxu0 0.0
      %5558 = vmatprep.subr.mxu0 0.0
      %5559 = vmatpush1.msra.mxu0 0.0
      %5560 = vmatprep.subr.mxu0 0.0
      %5561 = vmatpush1.msra.mxu0 0.0
      %5562 = vmatprep.subr.mxu0 0.0
      %5563 = vmatpush1.msra.mxu0 0.0
      %5564 = vmatprep.subr.mxu0 0.0
      %5565 = vmatpush1.msra.mxu0 0.0
      %5566 = vmatprep.subr.mxu0 0.0
      %5567 = vmatpush1.msra.mxu0 0.0
      %5568 = vmatprep.subr.mxu0 0.0
      %5569 = vmatpush1.msra.mxu0 0.0
      %5570 = vmatprep.subr.mxu0 0.0
      %5571 = vmatpush1.msra.mxu0 0.0
      %5572 = vmatprep.subr.mxu0 0.0
      %5573 = vmatpush1.msra.mxu0 0.0
      %5574 = vmatprep.subr.mxu0 0.0
      %5575 = vmatpush1.msra.mxu0 0.0
      %5576 = vmatprep.subr.mxu0 0.0
      %5577 = vmatpush1.msra.mxu0 0.0
      %5578 = vmatprep.subr.mxu0 0.0
      %5579 = vmatpush1.msra.mxu0 0.0
      %5580 = vmatprep.subr.mxu0 0.0
      %5581 = vmatpush1.msra.mxu0 0.0
      %5582 = vmatprep.subr.mxu0 0.0
      %5583 = vmatpush1.msra.mxu0 0.0
      %5584 = vmatprep.subr.mxu0 0.0
      %5585 = vmatpush1.msra.mxu0 0.0
      %5586 = vmatprep.subr.mxu0 0.0
      %5587 = vmatpush1.msra.mxu0 0.0
      %5588 = vmatprep.subr.mxu0 0.0
      %5589 = vmatpush1.msra.mxu0 0.0
      %5590 = vmatprep.mubr.f32.mxu0 0.0
      %5591 = vmatmul.mubr.f32.gmra.mrb[0].mxu0 %v5365
      %v5592 = vpop.f32.mrb[0].mxu0
      %v5593 = vpop.f32.mrb[0].mxu0
      %5594 = vmatprep.mubr.f32.mxu0 0.0
      %5595 = vmatmul.mubr.f32.gmra.mrb[0].mxu0 %v5368
      %v5596 = vpop.f32.mrb[0].mxu0
      %v5597 = vpop.f32.mrb[0].mxu0
      %5598 = vmatprep.mubr.f32.mxu0 0.0
      %5599 = vmatmul.mubr.f32.gmra.mrb[0].mxu0 %v5371
      %v5600 = vpop.f32.mrb[0].mxu0
      %v5601 = vpop.f32.mrb[0].mxu0
      %5602 = vmatprep.mubr.f32.mxu0 0.0
      %5603 = vmatmul.mubr.f32.gmra.mrb[0].mxu0 %v5374
      %v5604 = vpop.f32.mrb[0].mxu0
      %v5605 = vpop.f32.mrb[0].mxu0
      %5606 = vmatprep.mubr.f32.mxu0 0.0
      %5607 = vmatmul.mubr.f32.gmra.mrb[0].mxu0 %v5377
      %v5608 = vpop.f32.mrb[0].mxu0
      %v5609 = vpop.f32.mrb[0].mxu0
      %5610 = vmatprep.mubr.f32.mxu0 0.0
      %5611 = vmatmul.mubr.f32.gmra.mrb[0].mxu0 %v5380
      %v5612 = vpop.f32.mrb[0].mxu0
      %v5613 = vpop.f32.mrb[0].mxu0
      %5614 = vmatprep.mubr.f32.mxu0 0.0
      %5615 = vmatmul.mubr.f32.gmra.mrb[0].mxu0 %v5383
      %v5616 = vpop.f32.mrb[0].mxu0
      %v5617 = vadd.f32 0.0, %v5616
      %v5618 = vpop.f32.mrb[0].mxu0
      %5619 = vmatprep.mubr.f32.mxu0 0.0
      %5620 = vmatmul.mubr.f32.gmra.mrb[0].mxu0 %v5386
      %v5621 = vpop.f32.mrb[0].mxu0
      %v5622 = vadd.f32 0.0, %v5621
      %v5623 = vpop.f32.mrb[0].mxu0
      %5624 = vmatprep.mubr.f32.mxu0 0.0
      %5625 = vmatmul.mubr.f32.gmra.mrb[0].mxu0 %v5389
      %v5626 = vpop.f32.mrb[0].mxu0
      %v5627 = vadd.f32 0.0, %v5626
      %v5628 = vpop.f32.mrb[0].mxu0
      %5629 = vmatprep.mubr.f32.mxu0 0.0
      %5630 = vmatmul.mubr.f32.gmra.mrb[0].mxu0 %v5392
      %v5631 = vpop.f32.mrb[0].mxu0
      %v5632 = vadd.f32 0.0, %v5631
      %v5633 = vpop.f32.mrb[0].mxu0
      %5634 = vmatprep.mubr.f32.mxu0 0.0
      %5635 = vmatmul.mubr.f32.gmra.mrb[0].mxu0 %v5395
      %v5636 = vpop.f32.mrb[0].mxu0
      %v5637 = vadd.f32 0.0, %v5636
      %v5638 = vpop.f32.mrb[0].mxu0
      %5639 = vmatprep.mubr.f32.mxu0 0.0
      %5640 = vmatmul.mubr.f32.gmra.mrb[0].mxu0 %v5398
      %v5641 = vpop.f32.mrb[0].mxu0
      %v5642 = vadd.f32 0.0, %v5641
      %v5643 = vpop.f32.mrb[0].mxu0
      %5644 = vmatprep.mubr.f32.mxu0 0.0
      %5645 = vmatmul.mubr.f32.gmra.mrb[0].mxu0 %v5401
      %v5646 = vpop.f32.mrb[0].mxu0
      %v5647 = vadd.f32 0.0, %v5646
      %v5648 = vpop.f32.mrb[0].mxu0
      %5649 = vmatprep.mubr.f32.mxu0 0.0
      %5650 = vmatmul.mubr.f32.gmra.mrb[0].mxu0 %v5404
      %v5651 = vpop.f32.mrb[0].mxu0
      %v5652 = vadd.f32 0.0, %v5651
      %v5653 = vpop.f32.mrb[0].mxu0
      %5654 = vmatprep.mubr.f32.mxu0 0.0
      %5655 = vmatmul.mubr.f32.gmra.mrb[0].mxu0 %v5407
      %v5656 = vpop.f32.mrb[0].mxu0
      %v5657 = vadd.f32 0.0, %v5656
      %v5658 = vpop.f32.mrb[0].mxu0
      %5659 = vmatprep.mubr.f32.mxu0 0.0
      %5660 = vmatmul.mubr.f32.gmra.mrb[0].mxu0 %v5410
      %v5661 = vpop.f32.mrb[0].mxu0
      %v5662 = vadd.f32 0.0, %v5661
      %v5663 = vpop.f32.mrb[0].mxu0
      %5664 = vmatprep.mubr.f32.mxu0 0.0
      %5665 = vmatmul.mubr.f32.gmra.mrb[0].mxu0 %v5413
      %v5666 = vpop.f32.mrb[0].mxu0
      %v5667 = vadd.f32 0.0, %v5666
      %v5668 = vpop.f32.mrb[0].mxu0
      %5669 = vmatprep.mubr.f32.mxu0 0.0
      %5670 = vmatmul.mubr.f32.gmra.mrb[0].mxu0 %v5416
      %v5671 = vpop.f32.mrb[0].mxu0
      %v5672 = vadd.f32 0.0, %v5671
      %v5673 = vpop.f32.mrb[0].mxu0
      %5674 = vmatprep.mubr.f32.mxu0 0.0
      %5675 = vmatmul.mubr.f32.gmra.mrb[0].mxu0 %v5419
      %v5676 = vpop.f32.mrb[0].mxu0
      %v5677 = vadd.f32 0.0, %v5676
      %v5678 = vpop.f32.mrb[0].mxu0
      %5679 = vmatprep.mubr.f32.mxu0 0.0
      %5680 = vmatmul.mubr.f32.gmra.mrb[0].mxu0 %v5422
      %v5681 = vpop.f32.mrb[0].mxu0
      %v5682 = vadd.f32 0.0, %v5681
      %v5683 = vpop.f32.mrb[0].mxu0
      %5684 = vmatprep.mubr.f32.mxu0 0.0
      %5685 = vmatmul.mubr.f32.gmra.mrb[0].mxu0 %v5425
      %v5686 = vpop.f32.mrb[0].mxu0
      %v5687 = vadd.f32 0.0, %v5686
      %v5688 = vpop.f32.mrb[0].mxu0
      %5689 = vmatprep.mubr.f32.mxu0 0.0
      %5690 = vmatmul.mubr.f32.gmra.mrb[0].mxu0 %v5428
      %v5691 = vpop.f32.mrb[0].mxu0
      %v5692 = vadd.f32 0.0, %v5691
      %v5693 = vpop.f32.mrb[0].mxu0
      %5694 = vmatprep.mubr.f32.mxu0 0.0
      %5695 = vmatmul.mubr.f32.gmra.mrb[0].mxu0 %v5431
      %v5696 = vpop.f32.mrb[0].mxu0
      %v5697 = vadd.f32 0.0, %v5696
      %v5698 = vpop.f32.mrb[0].mxu0
      %5699 = vmatprep.mubr.f32.mxu0 0.0
      %5700 = vmatmul.mubr.f32.gmra.mrb[0].mxu0 %v5434
      %v5701 = vpop.f32.mrb[0].mxu0
      %v5702 = vadd.f32 0.0, %v5701
      %v5703 = vpop.f32.mrb[0].mxu0
      %5704 = vmatprep.mubr.f32.mxu0 0.0
      %5705 = vmatmul.mubr.f32.gmra.mrb[0].mxu0 %v5437
      %v5706 = vpop.f32.mrb[0].mxu0
      %v5707 = vadd.f32 0.0, %v5706
      %v5708 = vpop.f32.mrb[0].mxu0
      %5709 = vmatprep.mubr.f32.mxu0 0.0
      %5710 = vmatmul.mubr.f32.gmra.mrb[0].mxu0 %v5440
      %v5711 = vpop.f32.mrb[0].mxu0
      %v5712 = vadd.f32 0.0, %v5711
      %v5713 = vpop.f32.mrb[0].mxu0
      %5714 = vmatprep.mubr.f32.mxu0 0.0
      %5715 = vmatmul.mubr.f32.gmra.mrb[0].mxu0 %v5443
      %v5716 = vpop.f32.mrb[0].mxu0
      %v5717 = vadd.f32 0.0, %v5716
      %v5718 = vpop.f32.mrb[0].mxu0
      %5719 = vmatprep.mubr.f32.mxu0 0.0
      %5720 = vmatmul.mubr.f32.gmra.mrb[0].mxu0 %v5446
      %v5721 = vpop.f32.mrb[0].mxu0
      %v5722 = vadd.f32 0.0, %v5721
      %v5723 = vpop.f32.mrb[0].mxu0
      %5724 = vmatprep.mubr.f32.mxu0 0.0
      %5725 = vmatmul.mubr.f32.gmra.mrb[0].mxu0 %v5449
      %v5726 = vpop.f32.mrb[0].mxu0
      %v5727 = vadd.f32 0.0, %v5726
      %v5728 = vpop.f32.mrb[0].mxu0
      %5729 = vmatprep.mubr.f32.mxu0 0.0
      %5730 = vmatmul.mubr.f32.gmra.mrb[0].mxu0 %v5452
      %v5731 = vpop.f32.mrb[0].mxu0
      %v5732 = vadd.f32 0.0, %v5731
      %v5733 = vpop.f32.mrb[0].mxu0
      %5734 = vmatprep.mubr.f32.mxu0 0.0
      %5735 = vmatmul.mubr.f32.gmra.mrb[0].mxu0 %v5455
      %v5736 = vpop.f32.mrb[0].mxu0
      %v5737 = vadd.f32 0.0, %v5736
      %v5738 = vpop.f32.mrb[0].mxu0
      %5739 = vmatprep.mubr.f32.mxu0 0.0
      %5740 = vmatmul.mubr.f32.gmra.mrb[0].mxu0 %v5458
      %v5741 = vpop.f32.mrb[0].mxu0
      %v5742 = vadd.f32 0.0, %v5741
      %v5743 = vpop.f32.mrb[0].mxu0
      %5744 = vmatprep.mubr.f32.mxu0 0.0
      %5745 = vmatmul.mubr.f32.gmra.mrb[0].mxu0 %v5461
      %v5746 = vpop.f32.mrb[0].mxu0
      %v5747 = vadd.f32 0.0, %v5746
      %v5748 = vpop.f32.mrb[0].mxu0
      %5749 = vmatprep.mubr.f32.mxu0 0.0
      %5750 = vmatmul.mubr.f32.gmra.mrb[0].mxu0 %v5464
      %v5751 = vpop.f32.mrb[0].mxu0
      %v5752 = vadd.f32 0.0, %v5751
      %v5753 = vpop.f32.mrb[0].mxu0
      %5754 = vmatprep.mubr.f32.mxu0 0.0
      %5755 = vmatmul.mubr.f32.gmra.mrb[0].mxu0 %v5467
      %v5756 = vpop.f32.mrb[0].mxu0
      %v5757 = vadd.f32 0.0, %v5756
      %v5758 = vpop.f32.mrb[0].mxu0
      %5759 = vmatprep.mubr.f32.mxu0 0.0
      %5760 = vmatmul.mubr.f32.gmra.mrb[0].mxu0 %v5470
      %v5761 = vpop.f32.mrb[0].mxu0
      %v5762 = vadd.f32 0.0, %v5761
      %v5763 = vpop.f32.mrb[0].mxu0
      %5764 = vmatprep.mubr.f32.mxu0 0.0
      %5765 = vmatmul.mubr.f32.gmra.mrb[0].mxu0 %v5473
      %v5766 = vpop.f32.mrb[0].mxu0
      %v5767 = vadd.f32 0.0, %v5766
      %v5768 = vpop.f32.mrb[0].mxu0
      %5769 = vmatprep.mubr.f32.mxu0 0.0
      %5770 = vmatmul.mubr.f32.gmra.mrb[0].mxu0 %v5476
      %v5771 = vpop.f32.mrb[0].mxu0
      %v5772 = vadd.f32 0.0, %v5771
      %v5773 = vpop.f32.mrb[0].mxu0
      %5774 = vmatprep.mubr.f32.mxu0 0.0
      %5775 = vmatmul.mubr.f32.gmra.mrb[0].mxu0 %v5479
      %v5776 = vpop.f32.mrb[0].mxu0
      %v5777 = vadd.f32 0.0, %v5776
      %v5778 = vpop.f32.mrb[0].mxu0
      %5779 = vmatprep.mubr.f32.mxu0 0.0
      %5780 = vmatmul.mubr.f32.gmra.mrb[0].mxu0 %v5482
      %v5781 = vpop.f32.mrb[0].mxu0
      %v5782 = vadd.f32 0.0, %v5781
      %v5783 = vpop.f32.mrb[0].mxu0
      %5784 = vmatprep.mubr.f32.mxu0 0.0
      %5785 = vmatmul.mubr.f32.gmra.mrb[0].mxu0 %v5485
      %v5786 = vpop.f32.mrb[0].mxu0
      %v5787 = vadd.f32 0.0, %v5786
      %v5788 = vpop.f32.mrb[0].mxu0
      %5789 = vmatprep.mubr.f32.mxu0 0.0
      %5790 = vmatmul.mubr.f32.gmra.mrb[0].mxu0 %v5488
      %v5791 = vpop.f32.mrb[0].mxu0
      %v5792 = vadd.f32 0.0, %v5791
      %v5793 = vpop.f32.mrb[0].mxu0
      %5794 = vmatprep.mubr.f32.mxu0 0.0
      %5795 = vmatmul.mubr.f32.gmra.mrb[0].mxu0 %v5491
      %v5796 = vpop.f32.mrb[0].mxu0
      %v5797 = vadd.f32 0.0, %v5796
      %v5798 = vpop.f32.mrb[0].mxu0
      %5799 = vmatprep.mubr.f32.mxu0 0.0
      %5800 = vmatmul.mubr.f32.gmra.mrb[0].mxu0 %v5494
      %v5801 = vpop.f32.mrb[0].mxu0
      %v5802 = vadd.f32 0.0, %v5801
      %v5803 = vpop.f32.mrb[0].mxu0
      %5804 = vmatprep.mubr.f32.mxu0 0.0
      %5805 = vmatmul.mubr.f32.gmra.mrb[0].mxu0 %v5497
      %v5806 = vpop.f32.mrb[0].mxu0
      %v5807 = vadd.f32 0.0, %v5806
      %v5808 = vpop.f32.mrb[0].mxu0
      %5809 = vmatprep.mubr.f32.mxu0 0.0
      %5810 = vmatmul.mubr.f32.gmra.mrb[0].mxu0 %v5500
      %v5811 = vpop.f32.mrb[0].mxu0
      %v5812 = vadd.f32 0.0, %v5811
      %v5813 = vpop.f32.mrb[0].mxu0
      %5814 = vmatprep.mubr.f32.mxu0 0.0
      %5815 = vmatmul.mubr.f32.gmra.mrb[0].mxu0 %v5503
      %v5816 = vpop.f32.mrb[0].mxu0
      %v5817 = vadd.f32 0.0, %v5816
      %v5818 = vpop.f32.mrb[0].mxu0
      %5819 = vmatprep.mubr.f32.mxu0 0.0
      %5820 = vmatmul.mubr.f32.gmra.mrb[0].mxu0 %v5506
      %v5821 = vpop.f32.mrb[0].mxu0
      %v5822 = vadd.f32 0.0, %v5821
      %v5823 = vpop.f32.mrb[0].mxu0
      %5824 = vmatprep.mubr.f32.mxu0 0.0
      %5825 = vmatmul.mubr.f32.gmra.mrb[0].mxu0 %v5509
      %v5826 = vpop.f32.mrb[0].mxu0
      %v5827 = vadd.f32 0.0, %v5826
      %v5828 = vpop.f32.mrb[0].mxu0
      %5829 = vmatprep.mubr.f32.mxu0 0.0
      %5830 = vmatmul.mubr.f32.gmra.mrb[0].mxu0 %v5512
      %v5831 = vpop.f32.mrb[0].mxu0
      %v5832 = vadd.f32 0.0, %v5831
      %v5833 = vpop.f32.mrb[0].mxu0
      %5834 = vmatprep.mubr.f32.mxu0 0.0
      %5835 = vmatmul.mubr.f32.gmra.mrb[0].mxu0 %v5515
      %v5836 = vpop.f32.mrb[0].mxu0
      %v5837 = vadd.f32 0.0, %v5836
      %v5838 = vpop.f32.mrb[0].mxu0
      %5839 = vmatprep.mubr.f32.mxu0 0.0
      %5840 = vmatmul.mubr.f32.gmra.mrb[0].mxu0 %v5518
      %v5841 = vpop.f32.mrb[0].mxu0
      %v5842 = vadd.f32 0.0, %v5841
      %v5843 = vpop.f32.mrb[0].mxu0
      %5844 = vmatprep.mubr.f32.mxu0 0.0
      %5845 = vmatmul.mubr.f32.gmra.mrb[0].mxu0 %v5521
      %v5846 = vpop.f32.mrb[0].mxu0
      %v5847 = vadd.f32 0.0, %v5846
      %v5848 = vpop.f32.mrb[0].mxu0
      %5849 = vmatprep.mubr.f32.mxu0 0.0
      %5850 = vmatmul.mubr.f32.gmra.mrb[0].mxu0 %v5524
      %v5851 = vpop.f32.mrb[0].mxu0
      %v5852 = vadd.f32 0.0, %v5851
      %v5853 = vpop.f32.mrb[0].mxu0
      %5854 = vdwg.mxu0
      %v5855 = vld [vmem:[#allocation2] sm:$0xff]
      %v5856 = vld [vmem:[#allocation2 + $0x8] sm:$0xff]
      %v5857 = vld [vmem:[#allocation2 + $0x10] sm:$0xff]
      %v5858 = vld [vmem:[#allocation2 + $0x18] sm:$0xff]
      %v5859 = vld [vmem:[#allocation2 + $0x20] sm:$0xff]
      %v5860 = vld [vmem:[#allocation2 + $0x28] sm:$0xff]
      %v5861 = vld [vmem:[#allocation2 + $0x30] sm:$0xff]
      %v5862 = vld [vmem:[#allocation2 + $0x38] sm:$0xff]
      %v5863 = vld [vmem:[#allocation2 + $0x40] sm:$0xff]
      %v5864 = vld [vmem:[#allocation2 + $0x48] sm:$0xff]
      %v5865 = vld [vmem:[#allocation2 + $0x50] sm:$0xff]
      %v5866 = vld [vmem:[#allocation2 + $0x58] sm:$0xff]
      %v5867 = vld [vmem:[#allocation2 + $0x60] sm:$0xff]
      %v5868 = vld [vmem:[#allocation2 + $0x68] sm:$0xff]
      %v5869 = vld [vmem:[#allocation2 + $0x70] sm:$0xff]
      %v5870 = vld [vmem:[#allocation2 + $0x78] sm:$0xff]
      %v5871 = vld [vmem:[#allocation2 + $0x80] sm:$0xff]
      %v5872 = vld [vmem:[#allocation2 + $0x88] sm:$0xff]
      %v5873 = vld [vmem:[#allocation2 + $0x90] sm:$0xff]
      %v5874 = vld [vmem:[#allocation2 + $0x98] sm:$0xff]
      %v5875 = vld [vmem:[#allocation2 + $0xa0] sm:$0xff]
      %v5876 = vld [vmem:[#allocation2 + $0xa8] sm:$0xff]
      %v5877 = vld [vmem:[#allocation2 + $0xb0] sm:$0xff]
      %v5878 = vld [vmem:[#allocation2 + $0xb8] sm:$0xff]
      %v5879 = vld [vmem:[#allocation2 + $0xc0] sm:$0xff]
      %v5880 = vld [vmem:[#allocation2 + $0xc8] sm:$0xff]
      %v5881 = vld [vmem:[#allocation2 + $0xd0] sm:$0xff]
      %v5882 = vld [vmem:[#allocation2 + $0xd8] sm:$0xff]
      %v5883 = vld [vmem:[#allocation2 + $0xe0] sm:$0xff]
      %v5884 = vld [vmem:[#allocation2 + $0xe8] sm:$0xff]
      %v5885 = vld [vmem:[#allocation2 + $0xf0] sm:$0xff]
      %v5886 = vld [vmem:[#allocation2 + $0xf8] sm:$0xff]
      %v5935 = vrot.slane %v5617, 1
      %v5936 = vrot.slane %v5622, 1
      %v5937 = vsel %vm1467, %v5935, %v5936
      %v5938 = vrot.slane %v5627, 1
      %v5939 = vsel %vm1467, %v5936, %v5938
      %v5940 = vrot.slane %v5632, 1
      %v5941 = vrot.slane %v5637, 1
      %v5942 = vsel %vm1467, %v5940, %v5941
      %v5943 = vrot.slane %v5642, 1
      %v5944 = vsel %vm1467, %v5941, %v5943
      %v5945 = vrot.slane %v5647, 1
      %v5946 = vrot.slane %v5652, 1
      %v5947 = vsel %vm1467, %v5945, %v5946
      %v5948 = vrot.slane %v5657, 1
      %v5949 = vsel %vm1467, %v5946, %v5948
      %v5950 = vrot.slane %v5662, 1
      %v5951 = vrot.slane %v5667, 1
      %v5952 = vsel %vm1467, %v5950, %v5951
      %v5953 = vrot.slane %v5672, 1
      %v5954 = vsel %vm1467, %v5951, %v5953
      %v5955 = vrot.slane %v5677, 1
      %v5956 = vrot.slane %v5682, 1
      %v5957 = vsel %vm1467, %v5955, %v5956
      %v5958 = vrot.slane %v5687, 1
      %v5959 = vsel %vm1467, %v5956, %v5958
      %v5960 = vrot.slane %v5692, 1
      %v5961 = vrot.slane %v5697, 1
      %v5962 = vsel %vm1467, %v5960, %v5961
      %v5963 = vrot.slane %v5702, 1
      %v5964 = vsel %vm1467, %v5961, %v5963
      %v5965 = vrot.slane %v5707, 1
      %v5966 = vrot.slane %v5712, 1
      %v5967 = vsel %vm1467, %v5965, %v5966
      %v5968 = vrot.slane %v5717, 1
      %v5969 = vsel %vm1467, %v5966, %v5968
      %v5970 = vrot.slane %v5722, 1
      %v5971 = vrot.slane %v5727, 1
      %v5972 = vsel %vm1467, %v5970, %v5971
      %v5973 = vrot.slane %v5732, 1
      %v5974 = vsel %vm1467, %v5971, %v5973
      %v5975 = vrot.slane %v5737, 1
      %v5976 = vrot.slane %v5742, 1
      %v5977 = vsel %vm1467, %v5975, %v5976
      %v5978 = vrot.slane %v5747, 1
      %v5979 = vsel %vm1467, %v5976, %v5978
      %v5980 = vrot.slane %v5752, 1
      %v5981 = vrot.slane %v5757, 1
      %v5982 = vsel %vm1467, %v5980, %v5981
      %v5983 = vrot.slane %v5762, 1
      %v5984 = vsel %vm1467, %v5981, %v5983
      %v5985 = vrot.slane %v5767, 1
      %v5986 = vrot.slane %v5772, 1
      %v5987 = vsel %vm1467, %v5985, %v5986
      %v5988 = vrot.slane %v5777, 1
      %v5989 = vsel %vm1467, %v5986, %v5988
      %v5990 = vrot.slane %v5782, 1
      %v5991 = vrot.slane %v5787, 1
      %v5992 = vsel %vm1467, %v5990, %v5991
      %v5993 = vrot.slane %v5792, 1
      %v5994 = vsel %vm1467, %v5991, %v5993
      %v5995 = vrot.slane %v5797, 1
      %v5996 = vrot.slane %v5802, 1
      %v5997 = vsel %vm1467, %v5995, %v5996
      %v5998 = vrot.slane %v5807, 1
      %v5999 = vsel %vm1467, %v5996, %v5998
      %v6000 = vrot.slane %v5812, 1
      %v6001 = vrot.slane %v5817, 1
      %v6002 = vsel %vm1467, %v6000, %v6001
      %v6003 = vrot.slane %v5822, 1
      %v6004 = vsel %vm1467, %v6001, %v6003
      %v6005 = vrot.slane %v5827, 1
      %v6006 = vrot.slane %v5832, 1
      %v6007 = vsel %vm1467, %v6005, %v6006
      %v6008 = vrot.slane %v5837, 1
      %v6009 = vsel %vm1467, %v6006, %v6008
      %v6010 = vrot.slane %v5842, 1
      %v6011 = vrot.slane %v5847, 1
      %v6012 = vsel %vm1467, %v6010, %v6011
      %v6013 = vrot.slane %v5852, 1
      %v6014 = vsel %vm1467, %v6011, %v6013
      %v6047 = vadd.f32 %v5855, %v5937
      %v6048 = vadd.f32 %v5856, %v5939
      %v6049 = vadd.f32 %v5857, %v5942
      %v6050 = vadd.f32 %v5858, %v5944
      %v6051 = vadd.f32 %v5859, %v5947
      %v6052 = vadd.f32 %v5860, %v5949
      %v6053 = vadd.f32 %v5861, %v5952
      %v6054 = vadd.f32 %v5862, %v5954
      %v6055 = vadd.f32 %v5863, %v5957
      %v6056 = vadd.f32 %v5864, %v5959
      %v6057 = vadd.f32 %v5865, %v5962
      %v6058 = vadd.f32 %v5866, %v5964
      %v6059 = vadd.f32 %v5867, %v5967
      %v6060 = vadd.f32 %v5868, %v5969
      %v6061 = vadd.f32 %v5869, %v5972
      %v6062 = vadd.f32 %v5870, %v5974
      %v6063 = vadd.f32 %v5871, %v5977
      %v6064 = vadd.f32 %v5872, %v5979
      %v6065 = vadd.f32 %v5873, %v5982
      %v6066 = vadd.f32 %v5874, %v5984
      %v6067 = vadd.f32 %v5875, %v5987
      %v6068 = vadd.f32 %v5876, %v5989
      %v6069 = vadd.f32 %v5877, %v5992
      %v6070 = vadd.f32 %v5878, %v5994
      %v6071 = vadd.f32 %v5879, %v5997
      %v6072 = vadd.f32 %v5880, %v5999
      %v6073 = vadd.f32 %v5881, %v6002
      %v6074 = vadd.f32 %v5882, %v6004
      %v6075 = vadd.f32 %v5883, %v6007
      %v6076 = vadd.f32 %v5884, %v6009
      %v6077 = vadd.f32 %v5885, %v6012
      %v6078 = vadd.f32 %v5886, %v6014
      %6079 = vst [vmem:[#allocation2] sm:$0xff] %v6047
      %6080 = vst [vmem:[#allocation2 + $0x8] sm:$0xff] %v6048
      %6081 = vst [vmem:[#allocation2 + $0x10] sm:$0xff] %v6049
      %6082 = vst [vmem:[#allocation2 + $0x18] sm:$0xff] %v6050
      %6083 = vst [vmem:[#allocation2 + $0x20] sm:$0xff] %v6051
      %6084 = vst [vmem:[#allocation2 + $0x28] sm:$0xff] %v6052
      %6085 = vst [vmem:[#allocation2 + $0x30] sm:$0xff] %v6053
      %6086 = vst [vmem:[#allocation2 + $0x38] sm:$0xff] %v6054
      %6087 = vst [vmem:[#allocation2 + $0x40] sm:$0xff] %v6055
      %6088 = vst [vmem:[#allocation2 + $0x48] sm:$0xff] %v6056
      %6089 = vst [vmem:[#allocation2 + $0x50] sm:$0xff] %v6057
      %6090 = vst [vmem:[#allocation2 + $0x58] sm:$0xff] %v6058
      %6091 = vst [vmem:[#allocation2 + $0x60] sm:$0xff] %v6059
      %6092 = vst [vmem:[#allocation2 + $0x68] sm:$0xff] %v6060
      %6093 = vst [vmem:[#allocation2 + $0x70] sm:$0xff] %v6061
      %6094 = vst [vmem:[#allocation2 + $0x78] sm:$0xff] %v6062
      %6095 = vst [vmem:[#allocation2 + $0x80] sm:$0xff] %v6063
      %6096 = vst [vmem:[#allocation2 + $0x88] sm:$0xff] %v6064
      %6097 = vst [vmem:[#allocation2 + $0x90] sm:$0xff] %v6065
      %6098 = vst [vmem:[#allocation2 + $0x98] sm:$0xff] %v6066
      %6099 = vst [vmem:[#allocation2 + $0xa0] sm:$0xff] %v6067
      %6100 = vst [vmem:[#allocation2 + $0xa8] sm:$0xff] %v6068
      %6101 = vst [vmem:[#allocation2 + $0xb0] sm:$0xff] %v6069
      %6102 = vst [vmem:[#allocation2 + $0xb8] sm:$0xff] %v6070
      %6103 = vst [vmem:[#allocation2 + $0xc0] sm:$0xff] %v6071
      %6104 = vst [vmem:[#allocation2 + $0xc8] sm:$0xff] %v6072
      %6105 = vst [vmem:[#allocation2 + $0xd0] sm:$0xff] %v6073
      %6106 = vst [vmem:[#allocation2 + $0xd8] sm:$0xff] %v6074
      %6107 = vst [vmem:[#allocation2 + $0xe0] sm:$0xff] %v6075
      %6108 = vst [vmem:[#allocation2 + $0xe8] sm:$0xff] %v6076
      %6109 = vst [vmem:[#allocation2 + $0xf0] sm:$0xff] %v6077
      %6110 = vst [vmem:[#allocation2 + $0xf8] sm:$0xff] %v6078
      %v6111 = vld [vmem:[%s168] sm:$0xff]
      %v6112 = vld [vmem:[%s168 + $0x8] sm:$0xff]
      %v6113 = vld [vmem:[%s168 + $0x10] sm:$0xff]
      %v6114 = vld [vmem:[%s168 + $0x18] sm:$0xff]
      %v6115 = vld [vmem:[%s168 + $0x20] sm:$0xff]
      %v6116 = vld [vmem:[%s168 + $0x28] sm:$0xff]
      %v6117 = vld [vmem:[%s168 + $0x30] sm:$0xff]
      %v6118 = vld [vmem:[%s168 + $0x38] sm:$0xff]
      %v6119 = vld [vmem:[%s168 + $0x40] sm:$0xff]
      %v6120 = vld [vmem:[%s168 + $0x48] sm:$0xff]
      %v6121 = vld [vmem:[%s168 + $0x50] sm:$0xff]
      %v6122 = vld [vmem:[%s168 + $0x58] sm:$0xff]
      %v6123 = vld [vmem:[%s168 + $0x60] sm:$0xff]
      %v6124 = vld [vmem:[%s168 + $0x68] sm:$0xff]
      %v6125 = vld [vmem:[%s168 + $0x70] sm:$0xff]
      %v6126 = vld [vmem:[%s168 + $0x78] sm:$0xff]
      %v6127 = vld [vmem:[%s168 + $0x80] sm:$0xff]
      %v6128 = vld [vmem:[%s168 + $0x88] sm:$0xff]
      %v6129 = vld [vmem:[%s168 + $0x90] sm:$0xff]
      %v6130 = vld [vmem:[%s168 + $0x98] sm:$0xff]
      %v6131 = vld [vmem:[%s168 + $0xa0] sm:$0xff]
      %v6132 = vld [vmem:[%s168 + $0xa8] sm:$0xff]
      %v6133 = vld [vmem:[%s168 + $0xb0] sm:$0xff]
      %v6134 = vld [vmem:[%s168 + $0xb8] sm:$0xff]
      %v6135 = vld [vmem:[%s168 + $0xc0] sm:$0xff]
      %v6136 = vld [vmem:[%s168 + $0xc8] sm:$0xff]
      %v6137 = vld [vmem:[%s168 + $0xd0] sm:$0xff]
      %v6138 = vld [vmem:[%s168 + $0xd8] sm:$0xff]
      %v6139 = vld [vmem:[%s168 + $0xe0] sm:$0xff]
      %v6140 = vld [vmem:[%s168 + $0xe8] sm:$0xff]
      %v6141 = vld [vmem:[%s168 + $0xf0] sm:$0xff]
      %v6142 = vld [vmem:[%s168 + $0xf8] sm:$0xff]
      %v6143 = vld [vmem:[%s168 + $0x100] sm:$0xff]
      %v6144 = vld [vmem:[%s168 + $0x108] sm:$0xff]
      %v6145 = vld [vmem:[%s168 + $0x110] sm:$0xff]
      %v6146 = vld [vmem:[%s168 + $0x118] sm:$0xff]
      %v6147 = vld [vmem:[%s168 + $0x120] sm:$0xff]
      %v6148 = vld [vmem:[%s168 + $0x128] sm:$0xff]
      %v6149 = vld [vmem:[%s168 + $0x130] sm:$0xff]
      %v6150 = vld [vmem:[%s168 + $0x138] sm:$0xff]
      %v6151 = vld [vmem:[%s168 + $0x140] sm:$0xff]
      %v6152 = vld [vmem:[%s168 + $0x148] sm:$0xff]
      %v6153 = vld [vmem:[%s168 + $0x150] sm:$0xff]
      %v6154 = vld [vmem:[%s168 + $0x158] sm:$0xff]
      %v6155 = vld [vmem:[%s168 + $0x160] sm:$0xff]
      %v6156 = vld [vmem:[%s168 + $0x168] sm:$0xff]
      %v6157 = vld [vmem:[%s168 + $0x170] sm:$0xff]
      %v6158 = vld [vmem:[%s168 + $0x178] sm:$0xff]
      %v6159 = vld [vmem:[%s168 + $0x180] sm:$0xff]
      %v6160 = vld [vmem:[%s168 + $0x188] sm:$0xff]
      %v6161 = vld [vmem:[%s168 + $0x190] sm:$0xff]
      %v6162 = vld [vmem:[%s168 + $0x198] sm:$0xff]
      %v6163 = vld [vmem:[%s168 + $0x1a0] sm:$0xff]
      %v6164 = vld [vmem:[%s168 + $0x1a8] sm:$0xff]
      %s6165 = scalar_lea.vmem %s172, 64
      %v6166 = vld [vmem:[%s6165] sm:$0xff]
      %v6168 = vsel %vm268, %v6111, 0
      %v6171 = vsel %vm268, %v6112, 0
      %v6174 = vsel %vm268, %v6113, 0
      %v6177 = vsel %vm268, %v6114, 0
      %v6180 = vsel %vm268, %v6115, 0
      %v6183 = vsel %vm268, %v6116, 0
      %v6186 = vsel %vm268, %v6117, 0
      %v6189 = vsel %vm268, %v6118, 0
      %v6192 = vsel %vm268, %v6119, 0
      %v6195 = vsel %vm268, %v6120, 0
      %v6198 = vsel %vm268, %v6121, 0
      %v6201 = vsel %vm268, %v6122, 0
      %v6204 = vsel %vm268, %v6123, 0
      %v6207 = vsel %vm268, %v6124, 0
      %v6210 = vsel %vm268, %v6125, 0
      %v6213 = vsel %vm268, %v6126, 0
      %v6216 = vsel %vm268, %v6127, 0
      %v6219 = vsel %vm268, %v6128, 0
      %v6222 = vsel %vm268, %v6129, 0
      %v6225 = vsel %vm268, %v6130, 0
      %v6228 = vsel %vm268, %v6131, 0
      %v6231 = vsel %vm268, %v6132, 0
      %v6234 = vsel %vm268, %v6133, 0
      %v6237 = vsel %vm268, %v6134, 0
      %v6240 = vsel %vm268, %v6135, 0
      %v6243 = vsel %vm268, %v6136, 0
      %v6246 = vsel %vm268, %v6137, 0
      %v6249 = vsel %vm268, %v6138, 0
      %v6252 = vsel %vm268, %v6139, 0
      %v6255 = vsel %vm268, %v6140, 0
      %v6258 = vsel %vm268, %v6141, 0
      %v6261 = vsel %vm268, %v6142, 0
      %v6264 = vsel %vm268, %v6143, 0
      %v6267 = vsel %vm268, %v6144, 0
      %v6270 = vsel %vm268, %v6145, 0
      %v6273 = vsel %vm268, %v6146, 0
      %v6276 = vsel %vm268, %v6147, 0
      %v6279 = vsel %vm268, %v6148, 0
      %v6282 = vsel %vm268, %v6149, 0
      %v6285 = vsel %vm268, %v6150, 0
      %v6288 = vsel %vm268, %v6151, 0
      %v6291 = vsel %vm268, %v6152, 0
      %v6294 = vsel %vm268, %v6153, 0
      %v6297 = vsel %vm268, %v6154, 0
      %v6300 = vsel %vm268, %v6155, 0
      %v6303 = vsel %vm268, %v6156, 0
      %v6306 = vsel %vm268, %v6157, 0
      %v6309 = vsel %vm268, %v6158, 0
      %v6312 = vsel %vm268, %v6159, 0
      %v6315 = vsel %vm268, %v6160, 0
      %v6318 = vsel %vm268, %v6161, 0
      %v6321 = vsel %vm268, %v6162, 0
      %v6324 = vsel %vm268, %v6163, 0
      %v6327 = vsel %vm268, %v6164, 0
      %6329 = vmatprep.subr.mxu0 0.0
      %6330 = vmatpush1.msra.mxu0 %v6166
      %6331 = vmatprep.subr.mxu0 0.0
      %6332 = vmatpush1.msra.mxu0 0.0
      %6333 = vmatprep.subr.mxu0 0.0
      %6334 = vmatpush1.msra.mxu0 0.0
      %6335 = vmatprep.subr.mxu0 0.0
      %6336 = vmatpush1.msra.mxu0 0.0
      %6337 = vmatprep.subr.mxu0 0.0
      %6338 = vmatpush1.msra.mxu0 0.0
      %6339 = vmatprep.subr.mxu0 0.0
      %6340 = vmatpush1.msra.mxu0 0.0
      %6341 = vmatprep.subr.mxu0 0.0
      %6342 = vmatpush1.msra.mxu0 0.0
      %6343 = vmatprep.subr.mxu0 0.0
      %6344 = vmatpush1.msra.mxu0 0.0
      %6345 = vmatprep.subr.mxu0 0.0
      %6346 = vmatpush1.msra.mxu0 0.0
      %6347 = vmatprep.subr.mxu0 0.0
      %6348 = vmatpush1.msra.mxu0 0.0
      %6349 = vmatprep.subr.mxu0 0.0
      %6350 = vmatpush1.msra.mxu0 0.0
      %6351 = vmatprep.subr.mxu0 0.0
      %6352 = vmatpush1.msra.mxu0 0.0
      %6353 = vmatprep.subr.mxu0 0.0
      %6354 = vmatpush1.msra.mxu0 0.0
      %6355 = vmatprep.subr.mxu0 0.0
      %6356 = vmatpush1.msra.mxu0 0.0
      %6357 = vmatprep.subr.mxu0 0.0
      %6358 = vmatpush1.msra.mxu0 0.0
      %6359 = vmatprep.subr.mxu0 0.0
      %6360 = vmatpush1.msra.mxu0 0.0
      %6361 = vmatprep.subr.mxu0 0.0
      %6362 = vmatpush1.msra.mxu0 0.0
      %6363 = vmatprep.subr.mxu0 0.0
      %6364 = vmatpush1.msra.mxu0 0.0
      %6365 = vmatprep.subr.mxu0 0.0
      %6366 = vmatpush1.msra.mxu0 0.0
      %6367 = vmatprep.subr.mxu0 0.0
      %6368 = vmatpush1.msra.mxu0 0.0
      %6369 = vmatprep.subr.mxu0 0.0
      %6370 = vmatpush1.msra.mxu0 0.0
      %6371 = vmatprep.subr.mxu0 0.0
      %6372 = vmatpush1.msra.mxu0 0.0
      %6373 = vmatprep.subr.mxu0 0.0
      %6374 = vmatpush1.msra.mxu0 0.0
      %6375 = vmatprep.subr.mxu0 0.0
      %6376 = vmatpush1.msra.mxu0 0.0
      %6377 = vmatprep.subr.mxu0 0.0
      %6378 = vmatpush1.msra.mxu0 0.0
      %6379 = vmatprep.subr.mxu0 0.0
      %6380 = vmatpush1.msra.mxu0 0.0
      %6381 = vmatprep.subr.mxu0 0.0
      %6382 = vmatpush1.msra.mxu0 0.0
      %6383 = vmatprep.subr.mxu0 0.0
      %6384 = vmatpush1.msra.mxu0 0.0
      %6385 = vmatprep.subr.mxu0 0.0
      %6386 = vmatpush1.msra.mxu0 0.0
      %6387 = vmatprep.subr.mxu0 0.0
      %6388 = vmatpush1.msra.mxu0 0.0
      %6389 = vmatprep.subr.mxu0 0.0
      %6390 = vmatpush1.msra.mxu0 0.0
      %6391 = vmatprep.subr.mxu0 0.0
      %6392 = vmatpush1.msra.mxu0 0.0
      %6393 = vmatprep.mubr.f32.mxu0 0.0
      %6394 = vmatmul.mubr.f32.gmra.mrb[0].mxu0 %v6168
      %v6395 = vpop.f32.mrb[0].mxu0
      %v6396 = vpop.f32.mrb[0].mxu0
      %6397 = vmatprep.mubr.f32.mxu0 0.0
      %6398 = vmatmul.mubr.f32.gmra.mrb[0].mxu0 %v6171
      %v6399 = vpop.f32.mrb[0].mxu0
      %v6400 = vpop.f32.mrb[0].mxu0
      %6401 = vmatprep.mubr.f32.mxu0 0.0
      %6402 = vmatmul.mubr.f32.gmra.mrb[0].mxu0 %v6174
      %v6403 = vpop.f32.mrb[0].mxu0
      %v6404 = vpop.f32.mrb[0].mxu0
      %6405 = vmatprep.mubr.f32.mxu0 0.0
      %6406 = vmatmul.mubr.f32.gmra.mrb[0].mxu0 %v6177
      %v6407 = vpop.f32.mrb[0].mxu0
      %v6408 = vpop.f32.mrb[0].mxu0
      %6409 = vmatprep.mubr.f32.mxu0 0.0
      %6410 = vmatmul.mubr.f32.gmra.mrb[0].mxu0 %v6180
      %v6411 = vpop.f32.mrb[0].mxu0
      %v6412 = vpop.f32.mrb[0].mxu0
      %6413 = vmatprep.mubr.f32.mxu0 0.0
      %6414 = vmatmul.mubr.f32.gmra.mrb[0].mxu0 %v6183
      %v6415 = vpop.f32.mrb[0].mxu0
      %v6416 = vpop.f32.mrb[0].mxu0
      %6417 = vmatprep.mubr.f32.mxu0 0.0
      %6418 = vmatmul.mubr.f32.gmra.mrb[0].mxu0 %v6186
      %v6419 = vpop.f32.mrb[0].mxu0
      %v6420 = vadd.f32 0.0, %v6419
      %v6421 = vpop.f32.mrb[0].mxu0
      %6422 = vmatprep.mubr.f32.mxu0 0.0
      %6423 = vmatmul.mubr.f32.gmra.mrb[0].mxu0 %v6189
      %v6424 = vpop.f32.mrb[0].mxu0
      %v6425 = vadd.f32 0.0, %v6424
      %v6426 = vpop.f32.mrb[0].mxu0
      %6427 = vmatprep.mubr.f32.mxu0 0.0
      %6428 = vmatmul.mubr.f32.gmra.mrb[0].mxu0 %v6192
      %v6429 = vpop.f32.mrb[0].mxu0
      %v6430 = vadd.f32 0.0, %v6429
      %v6431 = vpop.f32.mrb[0].mxu0
      %6432 = vmatprep.mubr.f32.mxu0 0.0
      %6433 = vmatmul.mubr.f32.gmra.mrb[0].mxu0 %v6195
      %v6434 = vpop.f32.mrb[0].mxu0
      %v6435 = vadd.f32 0.0, %v6434
      %v6436 = vpop.f32.mrb[0].mxu0
      %6437 = vmatprep.mubr.f32.mxu0 0.0
      %6438 = vmatmul.mubr.f32.gmra.mrb[0].mxu0 %v6198
      %v6439 = vpop.f32.mrb[0].mxu0
      %v6440 = vadd.f32 0.0, %v6439
      %v6441 = vpop.f32.mrb[0].mxu0
      %6442 = vmatprep.mubr.f32.mxu0 0.0
      %6443 = vmatmul.mubr.f32.gmra.mrb[0].mxu0 %v6201
      %v6444 = vpop.f32.mrb[0].mxu0
      %v6445 = vadd.f32 0.0, %v6444
      %v6446 = vpop.f32.mrb[0].mxu0
      %6447 = vmatprep.mubr.f32.mxu0 0.0
      %6448 = vmatmul.mubr.f32.gmra.mrb[0].mxu0 %v6204
      %v6449 = vpop.f32.mrb[0].mxu0
      %v6450 = vadd.f32 0.0, %v6449
      %v6451 = vpop.f32.mrb[0].mxu0
      %6452 = vmatprep.mubr.f32.mxu0 0.0
      %6453 = vmatmul.mubr.f32.gmra.mrb[0].mxu0 %v6207
      %v6454 = vpop.f32.mrb[0].mxu0
      %v6455 = vadd.f32 0.0, %v6454
      %v6456 = vpop.f32.mrb[0].mxu0
      %6457 = vmatprep.mubr.f32.mxu0 0.0
      %6458 = vmatmul.mubr.f32.gmra.mrb[0].mxu0 %v6210
      %v6459 = vpop.f32.mrb[0].mxu0
      %v6460 = vadd.f32 0.0, %v6459
      %v6461 = vpop.f32.mrb[0].mxu0
      %6462 = vmatprep.mubr.f32.mxu0 0.0
      %6463 = vmatmul.mubr.f32.gmra.mrb[0].mxu0 %v6213
      %v6464 = vpop.f32.mrb[0].mxu0
      %v6465 = vadd.f32 0.0, %v6464
      %v6466 = vpop.f32.mrb[0].mxu0
      %6467 = vmatprep.mubr.f32.mxu0 0.0
      %6468 = vmatmul.mubr.f32.gmra.mrb[0].mxu0 %v6216
      %v6469 = vpop.f32.mrb[0].mxu0
      %v6470 = vadd.f32 0.0, %v6469
      %v6471 = vpop.f32.mrb[0].mxu0
      %6472 = vmatprep.mubr.f32.mxu0 0.0
      %6473 = vmatmul.mubr.f32.gmra.mrb[0].mxu0 %v6219
      %v6474 = vpop.f32.mrb[0].mxu0
      %v6475 = vadd.f32 0.0, %v6474
      %v6476 = vpop.f32.mrb[0].mxu0
      %6477 = vmatprep.mubr.f32.mxu0 0.0
      %6478 = vmatmul.mubr.f32.gmra.mrb[0].mxu0 %v6222
      %v6479 = vpop.f32.mrb[0].mxu0
      %v6480 = vadd.f32 0.0, %v6479
      %v6481 = vpop.f32.mrb[0].mxu0
      %6482 = vmatprep.mubr.f32.mxu0 0.0
      %6483 = vmatmul.mubr.f32.gmra.mrb[0].mxu0 %v6225
      %v6484 = vpop.f32.mrb[0].mxu0
      %v6485 = vadd.f32 0.0, %v6484
      %v6486 = vpop.f32.mrb[0].mxu0
      %6487 = vmatprep.mubr.f32.mxu0 0.0
      %6488 = vmatmul.mubr.f32.gmra.mrb[0].mxu0 %v6228
      %v6489 = vpop.f32.mrb[0].mxu0
      %v6490 = vadd.f32 0.0, %v6489
      %v6491 = vpop.f32.mrb[0].mxu0
      %6492 = vmatprep.mubr.f32.mxu0 0.0
      %6493 = vmatmul.mubr.f32.gmra.mrb[0].mxu0 %v6231
      %v6494 = vpop.f32.mrb[0].mxu0
      %v6495 = vadd.f32 0.0, %v6494
      %v6496 = vpop.f32.mrb[0].mxu0
      %6497 = vmatprep.mubr.f32.mxu0 0.0
      %6498 = vmatmul.mubr.f32.gmra.mrb[0].mxu0 %v6234
      %v6499 = vpop.f32.mrb[0].mxu0
      %v6500 = vadd.f32 0.0, %v6499
      %v6501 = vpop.f32.mrb[0].mxu0
      %6502 = vmatprep.mubr.f32.mxu0 0.0
      %6503 = vmatmul.mubr.f32.gmra.mrb[0].mxu0 %v6237
      %v6504 = vpop.f32.mrb[0].mxu0
      %v6505 = vadd.f32 0.0, %v6504
      %v6506 = vpop.f32.mrb[0].mxu0
      %6507 = vmatprep.mubr.f32.mxu0 0.0
      %6508 = vmatmul.mubr.f32.gmra.mrb[0].mxu0 %v6240
      %v6509 = vpop.f32.mrb[0].mxu0
      %v6510 = vadd.f32 0.0, %v6509
      %v6511 = vpop.f32.mrb[0].mxu0
      %6512 = vmatprep.mubr.f32.mxu0 0.0
      %6513 = vmatmul.mubr.f32.gmra.mrb[0].mxu0 %v6243
      %v6514 = vpop.f32.mrb[0].mxu0
      %v6515 = vadd.f32 0.0, %v6514
      %v6516 = vpop.f32.mrb[0].mxu0
      %6517 = vmatprep.mubr.f32.mxu0 0.0
      %6518 = vmatmul.mubr.f32.gmra.mrb[0].mxu0 %v6246
      %v6519 = vpop.f32.mrb[0].mxu0
      %v6520 = vadd.f32 0.0, %v6519
      %v6521 = vpop.f32.mrb[0].mxu0
      %6522 = vmatprep.mubr.f32.mxu0 0.0
      %6523 = vmatmul.mubr.f32.gmra.mrb[0].mxu0 %v6249
      %v6524 = vpop.f32.mrb[0].mxu0
      %v6525 = vadd.f32 0.0, %v6524
      %v6526 = vpop.f32.mrb[0].mxu0
      %6527 = vmatprep.mubr.f32.mxu0 0.0
      %6528 = vmatmul.mubr.f32.gmra.mrb[0].mxu0 %v6252
      %v6529 = vpop.f32.mrb[0].mxu0
      %v6530 = vadd.f32 0.0, %v6529
      %v6531 = vpop.f32.mrb[0].mxu0
      %6532 = vmatprep.mubr.f32.mxu0 0.0
      %6533 = vmatmul.mubr.f32.gmra.mrb[0].mxu0 %v6255
      %v6534 = vpop.f32.mrb[0].mxu0
      %v6535 = vadd.f32 0.0, %v6534
      %v6536 = vpop.f32.mrb[0].mxu0
      %6537 = vmatprep.mubr.f32.mxu0 0.0
      %6538 = vmatmul.mubr.f32.gmra.mrb[0].mxu0 %v6258
      %v6539 = vpop.f32.mrb[0].mxu0
      %v6540 = vadd.f32 0.0, %v6539
      %v6541 = vpop.f32.mrb[0].mxu0
      %6542 = vmatprep.mubr.f32.mxu0 0.0
      %6543 = vmatmul.mubr.f32.gmra.mrb[0].mxu0 %v6261
      %v6544 = vpop.f32.mrb[0].mxu0
      %v6545 = vadd.f32 0.0, %v6544
      %v6546 = vpop.f32.mrb[0].mxu0
      %6547 = vmatprep.mubr.f32.mxu0 0.0
      %6548 = vmatmul.mubr.f32.gmra.mrb[0].mxu0 %v6264
      %v6549 = vpop.f32.mrb[0].mxu0
      %v6550 = vadd.f32 0.0, %v6549
      %v6551 = vpop.f32.mrb[0].mxu0
      %6552 = vmatprep.mubr.f32.mxu0 0.0
      %6553 = vmatmul.mubr.f32.gmra.mrb[0].mxu0 %v6267
      %v6554 = vpop.f32.mrb[0].mxu0
      %v6555 = vadd.f32 0.0, %v6554
      %v6556 = vpop.f32.mrb[0].mxu0
      %6557 = vmatprep.mubr.f32.mxu0 0.0
      %6558 = vmatmul.mubr.f32.gmra.mrb[0].mxu0 %v6270
      %v6559 = vpop.f32.mrb[0].mxu0
      %v6560 = vadd.f32 0.0, %v6559
      %v6561 = vpop.f32.mrb[0].mxu0
      %6562 = vmatprep.mubr.f32.mxu0 0.0
      %6563 = vmatmul.mubr.f32.gmra.mrb[0].mxu0 %v6273
      %v6564 = vpop.f32.mrb[0].mxu0
      %v6565 = vadd.f32 0.0, %v6564
      %v6566 = vpop.f32.mrb[0].mxu0
      %6567 = vmatprep.mubr.f32.mxu0 0.0
      %6568 = vmatmul.mubr.f32.gmra.mrb[0].mxu0 %v6276
      %v6569 = vpop.f32.mrb[0].mxu0
      %v6570 = vadd.f32 0.0, %v6569
      %v6571 = vpop.f32.mrb[0].mxu0
      %6572 = vmatprep.mubr.f32.mxu0 0.0
      %6573 = vmatmul.mubr.f32.gmra.mrb[0].mxu0 %v6279
      %v6574 = vpop.f32.mrb[0].mxu0
      %v6575 = vadd.f32 0.0, %v6574
      %v6576 = vpop.f32.mrb[0].mxu0
      %6577 = vmatprep.mubr.f32.mxu0 0.0
      %6578 = vmatmul.mubr.f32.gmra.mrb[0].mxu0 %v6282
      %v6579 = vpop.f32.mrb[0].mxu0
      %v6580 = vadd.f32 0.0, %v6579
      %v6581 = vpop.f32.mrb[0].mxu0
      %6582 = vmatprep.mubr.f32.mxu0 0.0
      %6583 = vmatmul.mubr.f32.gmra.mrb[0].mxu0 %v6285
      %v6584 = vpop.f32.mrb[0].mxu0
      %v6585 = vadd.f32 0.0, %v6584
      %v6586 = vpop.f32.mrb[0].mxu0
      %6587 = vmatprep.mubr.f32.mxu0 0.0
      %6588 = vmatmul.mubr.f32.gmra.mrb[0].mxu0 %v6288
      %v6589 = vpop.f32.mrb[0].mxu0
      %v6590 = vadd.f32 0.0, %v6589
      %v6591 = vpop.f32.mrb[0].mxu0
      %6592 = vmatprep.mubr.f32.mxu0 0.0
      %6593 = vmatmul.mubr.f32.gmra.mrb[0].mxu0 %v6291
      %v6594 = vpop.f32.mrb[0].mxu0
      %v6595 = vadd.f32 0.0, %v6594
      %v6596 = vpop.f32.mrb[0].mxu0
      %6597 = vmatprep.mubr.f32.mxu0 0.0
      %6598 = vmatmul.mubr.f32.gmra.mrb[0].mxu0 %v6294
      %v6599 = vpop.f32.mrb[0].mxu0
      %v6600 = vadd.f32 0.0, %v6599
      %v6601 = vpop.f32.mrb[0].mxu0
      %6602 = vmatprep.mubr.f32.mxu0 0.0
      %6603 = vmatmul.mubr.f32.gmra.mrb[0].mxu0 %v6297
      %v6604 = vpop.f32.mrb[0].mxu0
      %v6605 = vadd.f32 0.0, %v6604
      %v6606 = vpop.f32.mrb[0].mxu0
      %6607 = vmatprep.mubr.f32.mxu0 0.0
      %6608 = vmatmul.mubr.f32.gmra.mrb[0].mxu0 %v6300
      %v6609 = vpop.f32.mrb[0].mxu0
      %v6610 = vadd.f32 0.0, %v6609
      %v6611 = vpop.f32.mrb[0].mxu0
      %6612 = vmatprep.mubr.f32.mxu0 0.0
      %6613 = vmatmul.mubr.f32.gmra.mrb[0].mxu0 %v6303
      %v6614 = vpop.f32.mrb[0].mxu0
      %v6615 = vadd.f32 0.0, %v6614
      %v6616 = vpop.f32.mrb[0].mxu0
      %6617 = vmatprep.mubr.f32.mxu0 0.0
      %6618 = vmatmul.mubr.f32.gmra.mrb[0].mxu0 %v6306
      %v6619 = vpop.f32.mrb[0].mxu0
      %v6620 = vadd.f32 0.0, %v6619
      %v6621 = vpop.f32.mrb[0].mxu0
      %6622 = vmatprep.mubr.f32.mxu0 0.0
      %6623 = vmatmul.mubr.f32.gmra.mrb[0].mxu0 %v6309
      %v6624 = vpop.f32.mrb[0].mxu0
      %v6625 = vadd.f32 0.0, %v6624
      %v6626 = vpop.f32.mrb[0].mxu0
      %6627 = vmatprep.mubr.f32.mxu0 0.0
      %6628 = vmatmul.mubr.f32.gmra.mrb[0].mxu0 %v6312
      %v6629 = vpop.f32.mrb[0].mxu0
      %v6630 = vadd.f32 0.0, %v6629
      %v6631 = vpop.f32.mrb[0].mxu0
      %6632 = vmatprep.mubr.f32.mxu0 0.0
      %6633 = vmatmul.mubr.f32.gmra.mrb[0].mxu0 %v6315
      %v6634 = vpop.f32.mrb[0].mxu0
      %v6635 = vadd.f32 0.0, %v6634
      %v6636 = vpop.f32.mrb[0].mxu0
      %6637 = vmatprep.mubr.f32.mxu0 0.0
      %6638 = vmatmul.mubr.f32.gmra.mrb[0].mxu0 %v6318
      %v6639 = vpop.f32.mrb[0].mxu0
      %v6640 = vadd.f32 0.0, %v6639
      %v6641 = vpop.f32.mrb[0].mxu0
      %6642 = vmatprep.mubr.f32.mxu0 0.0
      %6643 = vmatmul.mubr.f32.gmra.mrb[0].mxu0 %v6321
      %v6644 = vpop.f32.mrb[0].mxu0
      %v6645 = vadd.f32 0.0, %v6644
      %v6646 = vpop.f32.mrb[0].mxu0
      %6647 = vmatprep.mubr.f32.mxu0 0.0
      %6648 = vmatmul.mubr.f32.gmra.mrb[0].mxu0 %v6324
      %v6649 = vpop.f32.mrb[0].mxu0
      %v6650 = vadd.f32 0.0, %v6649
      %v6651 = vpop.f32.mrb[0].mxu0
      %6652 = vmatprep.mubr.f32.mxu0 0.0
      %6653 = vmatmul.mubr.f32.gmra.mrb[0].mxu0 %v6327
      %v6654 = vpop.f32.mrb[0].mxu0
      %v6655 = vadd.f32 0.0, %v6654
      %v6656 = vpop.f32.mrb[0].mxu0
      %6657 = vdwg.mxu0
      %v6658 = vld [vmem:[#allocation2] sm:$0xff]
      %v6659 = vld [vmem:[#allocation2 + $0x8] sm:$0xff]
      %v6660 = vld [vmem:[#allocation2 + $0x10] sm:$0xff]
      %v6661 = vld [vmem:[#allocation2 + $0x18] sm:$0xff]
      %v6662 = vld [vmem:[#allocation2 + $0x20] sm:$0xff]
      %v6663 = vld [vmem:[#allocation2 + $0x28] sm:$0xff]
      %v6664 = vld [vmem:[#allocation2 + $0x30] sm:$0xff]
      %v6665 = vld [vmem:[#allocation2 + $0x38] sm:$0xff]
      %v6666 = vld [vmem:[#allocation2 + $0x40] sm:$0xff]
      %v6667 = vld [vmem:[#allocation2 + $0x48] sm:$0xff]
      %v6668 = vld [vmem:[#allocation2 + $0x50] sm:$0xff]
      %v6669 = vld [vmem:[#allocation2 + $0x58] sm:$0xff]
      %v6670 = vld [vmem:[#allocation2 + $0x60] sm:$0xff]
      %v6671 = vld [vmem:[#allocation2 + $0x68] sm:$0xff]
      %v6672 = vld [vmem:[#allocation2 + $0x70] sm:$0xff]
      %v6673 = vld [vmem:[#allocation2 + $0x78] sm:$0xff]
      %v6674 = vld [vmem:[#allocation2 + $0x80] sm:$0xff]
      %v6675 = vld [vmem:[#allocation2 + $0x88] sm:$0xff]
      %v6676 = vld [vmem:[#allocation2 + $0x90] sm:$0xff]
      %v6677 = vld [vmem:[#allocation2 + $0x98] sm:$0xff]
      %v6678 = vld [vmem:[#allocation2 + $0xa0] sm:$0xff]
      %v6679 = vld [vmem:[#allocation2 + $0xa8] sm:$0xff]
      %v6680 = vld [vmem:[#allocation2 + $0xb0] sm:$0xff]
      %v6681 = vld [vmem:[#allocation2 + $0xb8] sm:$0xff]
      %v6682 = vld [vmem:[#allocation2 + $0xc0] sm:$0xff]
      %v6683 = vld [vmem:[#allocation2 + $0xc8] sm:$0xff]
      %v6684 = vld [vmem:[#allocation2 + $0xd0] sm:$0xff]
      %v6685 = vld [vmem:[#allocation2 + $0xd8] sm:$0xff]
      %v6686 = vld [vmem:[#allocation2 + $0xe0] sm:$0xff]
      %v6687 = vld [vmem:[#allocation2 + $0xe8] sm:$0xff]
      %v6688 = vld [vmem:[#allocation2 + $0xf0] sm:$0xff]
      %v6689 = vld [vmem:[#allocation2 + $0xf8] sm:$0xff]
      %v6738 = vrot.slane %v6420, 2
      %v6739 = vrot.slane %v6425, 2
      %v6740 = vsel %vm2271, %v6738, %v6739
      %v6741 = vrot.slane %v6430, 2
      %v6742 = vsel %vm2271, %v6739, %v6741
      %v6743 = vrot.slane %v6435, 2
      %v6744 = vrot.slane %v6440, 2
      %v6745 = vsel %vm2271, %v6743, %v6744
      %v6746 = vrot.slane %v6445, 2
      %v6747 = vsel %vm2271, %v6744, %v6746
      %v6748 = vrot.slane %v6450, 2
      %v6749 = vrot.slane %v6455, 2
      %v6750 = vsel %vm2271, %v6748, %v6749
      %v6751 = vrot.slane %v6460, 2
      %v6752 = vsel %vm2271, %v6749, %v6751
      %v6753 = vrot.slane %v6465, 2
      %v6754 = vrot.slane %v6470, 2
      %v6755 = vsel %vm2271, %v6753, %v6754
      %v6756 = vrot.slane %v6475, 2
      %v6757 = vsel %vm2271, %v6754, %v6756
      %v6758 = vrot.slane %v6480, 2
      %v6759 = vrot.slane %v6485, 2
      %v6760 = vsel %vm2271, %v6758, %v6759
      %v6761 = vrot.slane %v6490, 2
      %v6762 = vsel %vm2271, %v6759, %v6761
      %v6763 = vrot.slane %v6495, 2
      %v6764 = vrot.slane %v6500, 2
      %v6765 = vsel %vm2271, %v6763, %v6764
      %v6766 = vrot.slane %v6505, 2
      %v6767 = vsel %vm2271, %v6764, %v6766
      %v6768 = vrot.slane %v6510, 2
      %v6769 = vrot.slane %v6515, 2
      %v6770 = vsel %vm2271, %v6768, %v6769
      %v6771 = vrot.slane %v6520, 2
      %v6772 = vsel %vm2271, %v6769, %v6771
      %v6773 = vrot.slane %v6525, 2
      %v6774 = vrot.slane %v6530, 2
      %v6775 = vsel %vm2271, %v6773, %v6774
      %v6776 = vrot.slane %v6535, 2
      %v6777 = vsel %vm2271, %v6774, %v6776
      %v6778 = vrot.slane %v6540, 2
      %v6779 = vrot.slane %v6545, 2
      %v6780 = vsel %vm2271, %v6778, %v6779
      %v6781 = vrot.slane %v6550, 2
      %v6782 = vsel %vm2271, %v6779, %v6781
      %v6783 = vrot.slane %v6555, 2
      %v6784 = vrot.slane %v6560, 2
      %v6785 = vsel %vm2271, %v6783, %v6784
      %v6786 = vrot.slane %v6565, 2
      %v6787 = vsel %vm2271, %v6784, %v6786
      %v6788 = vrot.slane %v6570, 2
      %v6789 = vrot.slane %v6575, 2
      %v6790 = vsel %vm2271, %v6788, %v6789
      %v6791 = vrot.slane %v6580, 2
      %v6792 = vsel %vm2271, %v6789, %v6791
      %v6793 = vrot.slane %v6585, 2
      %v6794 = vrot.slane %v6590, 2
      %v6795 = vsel %vm2271, %v6793, %v6794
      %v6796 = vrot.slane %v6595, 2
      %v6797 = vsel %vm2271, %v6794, %v6796
      %v6798 = vrot.slane %v6600, 2
      %v6799 = vrot.slane %v6605, 2
      %v6800 = vsel %vm2271, %v6798, %v6799
      %v6801 = vrot.slane %v6610, 2
      %v6802 = vsel %vm2271, %v6799, %v6801
      %v6803 = vrot.slane %v6615, 2
      %v6804 = vrot.slane %v6620, 2
      %v6805 = vsel %vm2271, %v6803, %v6804
      %v6806 = vrot.slane %v6625, 2
      %v6807 = vsel %vm2271, %v6804, %v6806
      %v6808 = vrot.slane %v6630, 2
      %v6809 = vrot.slane %v6635, 2
      %v6810 = vsel %vm2271, %v6808, %v6809
      %v6811 = vrot.slane %v6640, 2
      %v6812 = vsel %vm2271, %v6809, %v6811
      %v6813 = vrot.slane %v6645, 2
      %v6814 = vrot.slane %v6650, 2
      %v6815 = vsel %vm2271, %v6813, %v6814
      %v6816 = vrot.slane %v6655, 2
      %v6817 = vsel %vm2271, %v6814, %v6816
      %v6850 = vadd.f32 %v6658, %v6740
      %v6851 = vadd.f32 %v6659, %v6742
      %v6852 = vadd.f32 %v6660, %v6745
      %v6853 = vadd.f32 %v6661, %v6747
      %v6854 = vadd.f32 %v6662, %v6750
      %v6855 = vadd.f32 %v6663, %v6752
      %v6856 = vadd.f32 %v6664, %v6755
      %v6857 = vadd.f32 %v6665, %v6757
      %v6858 = vadd.f32 %v6666, %v6760
      %v6859 = vadd.f32 %v6667, %v6762
      %v6860 = vadd.f32 %v6668, %v6765
      %v6861 = vadd.f32 %v6669, %v6767
      %v6862 = vadd.f32 %v6670, %v6770
      %v6863 = vadd.f32 %v6671, %v6772
      %v6864 = vadd.f32 %v6672, %v6775
      %v6865 = vadd.f32 %v6673, %v6777
      %v6866 = vadd.f32 %v6674, %v6780
      %v6867 = vadd.f32 %v6675, %v6782
      %v6868 = vadd.f32 %v6676, %v6785
      %v6869 = vadd.f32 %v6677, %v6787
      %v6870 = vadd.f32 %v6678, %v6790
      %v6871 = vadd.f32 %v6679, %v6792
      %v6872 = vadd.f32 %v6680, %v6795
      %v6873 = vadd.f32 %v6681, %v6797
      %v6874 = vadd.f32 %v6682, %v6800
      %v6875 = vadd.f32 %v6683, %v6802
      %v6876 = vadd.f32 %v6684, %v6805
      %v6877 = vadd.f32 %v6685, %v6807
      %v6878 = vadd.f32 %v6686, %v6810
      %v6879 = vadd.f32 %v6687, %v6812
      %v6880 = vadd.f32 %v6688, %v6815
      %v6881 = vadd.f32 %v6689, %v6817
      %6882 = vst [vmem:[#allocation2] sm:$0xff] %v6850
      %6883 = vst [vmem:[#allocation2 + $0x8] sm:$0xff] %v6851
      %6884 = vst [vmem:[#allocation2 + $0x10] sm:$0xff] %v6852
      %6885 = vst [vmem:[#allocation2 + $0x18] sm:$0xff] %v6853
      %6886 = vst [vmem:[#allocation2 + $0x20] sm:$0xff] %v6854
      %6887 = vst [vmem:[#allocation2 + $0x28] sm:$0xff] %v6855
      %6888 = vst [vmem:[#allocation2 + $0x30] sm:$0xff] %v6856
      %6889 = vst [vmem:[#allocation2 + $0x38] sm:$0xff] %v6857
      %6890 = vst [vmem:[#allocation2 + $0x40] sm:$0xff] %v6858
      %6891 = vst [vmem:[#allocation2 + $0x48] sm:$0xff] %v6859
      %6892 = vst [vmem:[#allocation2 + $0x50] sm:$0xff] %v6860
      %6893 = vst [vmem:[#allocation2 + $0x58] sm:$0xff] %v6861
      %6894 = vst [vmem:[#allocation2 + $0x60] sm:$0xff] %v6862
      %6895 = vst [vmem:[#allocation2 + $0x68] sm:$0xff] %v6863
      %6896 = vst [vmem:[#allocation2 + $0x70] sm:$0xff] %v6864
      %6897 = vst [vmem:[#allocation2 + $0x78] sm:$0xff] %v6865
      %6898 = vst [vmem:[#allocation2 + $0x80] sm:$0xff] %v6866
      %6899 = vst [vmem:[#allocation2 + $0x88] sm:$0xff] %v6867
      %6900 = vst [vmem:[#allocation2 + $0x90] sm:$0xff] %v6868
      %6901 = vst [vmem:[#allocation2 + $0x98] sm:$0xff] %v6869
      %6902 = vst [vmem:[#allocation2 + $0xa0] sm:$0xff] %v6870
      %6903 = vst [vmem:[#allocation2 + $0xa8] sm:$0xff] %v6871
      %6904 = vst [vmem:[#allocation2 + $0xb0] sm:$0xff] %v6872
      %6905 = vst [vmem:[#allocation2 + $0xb8] sm:$0xff] %v6873
      %6906 = vst [vmem:[#allocation2 + $0xc0] sm:$0xff] %v6874
      %6907 = vst [vmem:[#allocation2 + $0xc8] sm:$0xff] %v6875
      %6908 = vst [vmem:[#allocation2 + $0xd0] sm:$0xff] %v6876
      %6909 = vst [vmem:[#allocation2 + $0xd8] sm:$0xff] %v6877
      %6910 = vst [vmem:[#allocation2 + $0xe0] sm:$0xff] %v6878
      %6911 = vst [vmem:[#allocation2 + $0xe8] sm:$0xff] %v6879
      %6912 = vst [vmem:[#allocation2 + $0xf0] sm:$0xff] %v6880
      %6913 = vst [vmem:[#allocation2 + $0xf8] sm:$0xff] %v6881
      %v6914 = vld [vmem:[#allocation2] sm:$0xff]
      %v6915 = vld [vmem:[#allocation2 + $0x8] sm:$0xff]
      %v6916 = vld [vmem:[#allocation2 + $0x10] sm:$0xff]
      %v6917 = vld [vmem:[#allocation2 + $0x18] sm:$0xff]
      %v6918 = vld [vmem:[#allocation2 + $0x20] sm:$0xff]
      %v6919 = vld [vmem:[#allocation2 + $0x28] sm:$0xff]
      %v6920 = vld [vmem:[#allocation2 + $0x30] sm:$0xff]
      %v6921 = vld [vmem:[#allocation2 + $0x38] sm:$0xff]
      %v6922 = vld [vmem:[#allocation2 + $0x40] sm:$0xff]
      %v6923 = vld [vmem:[#allocation2 + $0x48] sm:$0xff]
      %v6924 = vld [vmem:[#allocation2 + $0x50] sm:$0xff]
      %v6925 = vld [vmem:[#allocation2 + $0x58] sm:$0xff]
      %v6926 = vld [vmem:[#allocation2 + $0x60] sm:$0xff]
      %v6927 = vld [vmem:[#allocation2 + $0x68] sm:$0xff]
      %v6928 = vld [vmem:[#allocation2 + $0x70] sm:$0xff]
      %v6929 = vld [vmem:[#allocation2 + $0x78] sm:$0xff]
      %v6930 = vld [vmem:[#allocation2 + $0x80] sm:$0xff]
      %v6931 = vld [vmem:[#allocation2 + $0x88] sm:$0xff]
      %v6932 = vld [vmem:[#allocation2 + $0x90] sm:$0xff]
      %v6933 = vld [vmem:[#allocation2 + $0x98] sm:$0xff]
      %v6934 = vld [vmem:[#allocation2 + $0xa0] sm:$0xff]
      %v6935 = vld [vmem:[#allocation2 + $0xa8] sm:$0xff]
      %v6936 = vld [vmem:[#allocation2 + $0xb0] sm:$0xff]
      %v6937 = vld [vmem:[#allocation2 + $0xb8] sm:$0xff]
      %v6938 = vld [vmem:[#allocation2 + $0xc0] sm:$0xff]
      %v6939 = vld [vmem:[#allocation2 + $0xc8] sm:$0xff]
      %v6940 = vld [vmem:[#allocation2 + $0xd0] sm:$0xff]
      %v6941 = vld [vmem:[#allocation2 + $0xd8] sm:$0xff]
      %v6942 = vld [vmem:[#allocation2 + $0xe0] sm:$0xff]
      %v6943 = vld [vmem:[#allocation2 + $0xe8] sm:$0xff]
      %v6944 = vld [vmem:[#allocation2 + $0xf0] sm:$0xff]
      %v6945 = vld [vmem:[#allocation2 + $0xf8] sm:$0xff]
      %6946 = vst [vmem:[%s180] sm:$0xff] %v6914
      %6947 = vst [vmem:[%s180 + $0x8] sm:$0xff] %v6915
      %6948 = vst [vmem:[%s180 + $0x10] sm:$0xff] %v6916
      %6949 = vst [vmem:[%s180 + $0x18] sm:$0xff] %v6917
      %6950 = vst [vmem:[%s180 + $0x20] sm:$0xff] %v6918
      %6951 = vst [vmem:[%s180 + $0x28] sm:$0xff] %v6919
      %6952 = vst [vmem:[%s180 + $0x30] sm:$0xff] %v6920
      %6953 = vst [vmem:[%s180 + $0x38] sm:$0xff] %v6921
      %6954 = vst [vmem:[%s180 + $0x40] sm:$0xff] %v6922
      %6955 = vst [vmem:[%s180 + $0x48] sm:$0xff] %v6923
      %6956 = vst [vmem:[%s180 + $0x50] sm:$0xff] %v6924
      %6957 = vst [vmem:[%s180 + $0x58] sm:$0xff] %v6925
      %6958 = vst [vmem:[%s180 + $0x60] sm:$0xff] %v6926
      %6959 = vst [vmem:[%s180 + $0x68] sm:$0xff] %v6927
      %6960 = vst [vmem:[%s180 + $0x70] sm:$0xff] %v6928
      %6961 = vst [vmem:[%s180 + $0x78] sm:$0xff] %v6929
      %6962 = vst [vmem:[%s180 + $0x80] sm:$0xff] %v6930
      %6963 = vst [vmem:[%s180 + $0x88] sm:$0xff] %v6931
      %6964 = vst [vmem:[%s180 + $0x90] sm:$0xff] %v6932
      %6965 = vst [vmem:[%s180 + $0x98] sm:$0xff] %v6933
      %6966 = vst [vmem:[%s180 + $0xa0] sm:$0xff] %v6934
      %6967 = vst [vmem:[%s180 + $0xa8] sm:$0xff] %v6935
      %6968 = vst [vmem:[%s180 + $0xb0] sm:$0xff] %v6936
      %6969 = vst [vmem:[%s180 + $0xb8] sm:$0xff] %v6937
      %6970 = vst [vmem:[%s180 + $0xc0] sm:$0xff] %v6938
      %6971 = vst [vmem:[%s180 + $0xc8] sm:$0xff] %v6939
      %6972 = vst [vmem:[%s180 + $0xd0] sm:$0xff] %v6940
      %6973 = vst [vmem:[%s180 + $0xd8] sm:$0xff] %v6941
      %6974 = vst [vmem:[%s180 + $0xe0] sm:$0xff] %v6942
      %6975 = vst [vmem:[%s180 + $0xe8] sm:$0xff] %v6943
      %6976 = vst [vmem:[%s180 + $0xf0] sm:$0xff] %v6944
      %6977 = vst [vmem:[%s180 + $0xf8] sm:$0xff] %v6945
      %p6978 = scmp.lt.s32.totalorder %s17, 1
      %s6979 = scalar_select %p6978, %s17, 1
      %p6980 = scmp.lt.s32.totalorder %s18, 0
      %s6981 = scalar_select %p6980, %s18, 0
      %s6982 = smul.addr %s6979, 32
      %s6983 = sadd.s32 %s6981, %s6982
      %s6984 = smul.addr %s6983, 8
      %s6985 = scalar_lea.vmem %s2, %s6984
      // Predicated region
      $region29: #{conv2d_forward.1} parent=27 // pred_check
        %p6986 = pneg %p97
      $region30: #{conv2d_forward.1} parent=27 // pred_check_branch
        %6988 = sbr.rel (%p6986) target = $region32
      $region31: #{conv2d_forward.1} parent=27 // pred_region
        _
      $region32: #{conv2d_forward.1} parent=27 // pred_fallthru
        _
    $region28: #{conv2d_forward.1} parent=5 // pred_fallthru
      _
    %p6989 = scmp.le.s32.totalorder 2, %s8
    // Predicated region
    $region33: #{conv2d_forward.1} parent=5 // pred_check
      %p6990 = pneg %p6989
    $region34: #{conv2d_forward.1} parent=5 // pred_check_branch
      %6992 = sbr.rel (%p6990) target = $region36
    $region35: #{conv2d_forward.1} parent=5 // pred_region
      %s6993 = ssub.s32 %s8, 2
      // Predicated region
      $region37: #{conv2d_forward.1} parent=35 // pred_check
        %p6994 = pneg %p103
      $region38: #{conv2d_forward.1} parent=35 // pred_check_branch
        %6996 = sbr.rel (%p6994) target = $region40
      $region39: #{conv2d_forward.1} parent=35 // pred_region
        %p6997 = scmp.lt.s32.totalorder %s19, 1
        %s6998 = scalar_select %p6997, %s19, 1
        %p6999 = scmp.lt.s32.totalorder %s20, 0
        %s7000 = scalar_select %p6999, %s20, 0
        %s7001 = smul.addr %s6998, 32
        %s7002 = sadd.s32 %s7000, %s7001
        %s7003 = smul.addr %s7002, 8
        %s7004 = scalar_lea.vmem %s2, %s7003
      $region40: #{conv2d_forward.1} parent=35 // pred_fallthru
        _
    $region36: #{conv2d_forward.1} parent=5 // pred_fallthru
      _
  $region6: #{conv2d_forward.1} parent=0 // loop_footer
    %s12 = sadd.s32 1, %s8
  $region7: #{conv2d_forward.1} parent=0 // loop_footer_branch
    %7 = sbr.rel target = $region3
  $region8: #{conv2d_forward.1} parent=0 // loop_exit
    _

</llo_original>
